<compile_context>
chip_gen: v5e
topology: v5e:2x2
jax: 0.10.0
libtpu: 0.0.40
codegen_flags: <defaults>
</compile_context>

<pallas_src>
import jax
import jax.numpy as jnp
from jax.experimental import pallas as pl
from jax.experimental.pallas import tpu as pltpu


def _round_up(n, m):
    return ((n + m - 1) // m) * m


def _to_kernel_gate_order(w):
    """Reorder PyTorch LSTM gate blocks (i, f, g, o) -> kernel order (i, f, o, g) on axis 0."""
    H = w.shape[0] // 4
    return jnp.concatenate([w[: 2 * H], w[3 * H :], w[2 * H : 3 * H]], axis=0)


def _lstm_pool_kernel(x_ref, wih_ref, whh_ref, b_ref, out_ref):
    # x_ref  : (TB, T, I)   batch-major block of stacked per-layer CLS embeddings (bf16)
    # wih_ref: (I, 4H)      input->gate weights, transposed, gate order (i, f, o, g), bf16
    # whh_ref: (H, 4H)      hidden->gate weights, transposed, gate order (i, f, o, g), bf16
    # b_ref  : (1, 4H)      combined bias b_ih + b_hh (f32, permuted)
    # out_ref: (TB, H)      last hidden state h_T (f32)
    TB, T, I = x_ref.shape
    H = out_ref.shape[-1]

    xblk = x_ref[...]                      # VMEM-resident block; per-step slices are static
    wih = wih_ref[...]
    whh = whh_ref[...]
    bias = b_ref[...].astype(jnp.float32)

    h = jnp.zeros((TB, H), jnp.float32)
    c = jnp.zeros((TB, H), jnp.float32)

    # T (= num_layers) is a small static trip count -> fully unrolled with constant indices.
    # TODO(synk): at very large TB*H a partial unroll (lax.fori_loop(..., unroll=4)) would
    # bound vreg live ranges; full unroll is fine at the sizes used here.
    for t in range(T):
        x_t = xblk[:, t, :].astype(wih.dtype)                                   # (TB, I)
        gates = (jnp.dot(x_t, wih, preferred_element_type=jnp.float32)
                 + jnp.dot(h.astype(whh.dtype), whh,
                           preferred_element_type=jnp.float32)
                 + bias)                                                        # (TB, 4H) f32
        sig = jax.nn.sigmoid(gates[:, : 3 * H])         # i | f | o in one contiguous slab
        i_g = sig[:, 0:H]
        f_g = sig[:, H:2 * H]
        o_g = sig[:, 2 * H:3 * H]
        g_g = jnp.tanh(gates[:, 3 * H:4 * H])
        c = f_g * c + i_g * g_g
        h = o_g * jnp.tanh(c)

    out_ref[...] = h.astype(out_ref.dtype)


def lstm_pooling(all_hidden_states, w_ih, w_hh, b_ih, b_hh, *,
                 num_layers, total_layers, batch_tile=128,
                 compute_dtype=jnp.bfloat16):
    """Pallas implementation of LSTMPooling.forward.

    all_hidden_states: sequence of `total_layers` arrays, each (B, S, input_size)
    w_ih: (4H, I), w_hh: (4H, H), b_ih/b_hh: (4H,)  -- PyTorch nn.LSTM layout (gate order i,f,g,o)
    returns: (B, H) float32   (== out[:, -1, :] of the PyTorch module)
    """
    start = total_layers - num_layers
    # CLS token of the last `num_layers` layers, batch-major: (B, T, I)
    x = jnp.stack([all_hidden_states[i][:, 0, :] for i in range(start, total_layers)], axis=1)
    B, T, I = x.shape
    H = w_hh.shape[1]
    assert w_ih.shape == (4 * H, I) and w_hh.shape == (4 * H, H)
    assert T == num_layers

    # bf16 MXU-native operands (f32 accumulation + f32 gate math inside the kernel).
    x = x.astype(compute_dtype)

    # Batch tile: multiple of the sublane pack (16 for bf16, 8 for f32), capped by batch_tile.
    align = 16 if x.dtype == jnp.bfloat16 else 8
    TB = max(align, (min(batch_tile, _round_up(B, align)) // align) * align)
    # Keep >= 2 grid steps when the batch allows it (v7x megacore sharding of the parallel axis).
    if pl.cdiv(B, TB) == 1 and B >= 2 * align:
        TB = _round_up(pl.cdiv(B, 2), align)
    B_pad = pl.cdiv(B, TB) * TB
    if B_pad != B:
        x = jnp.pad(x, ((0, B_pad - B), (0, 0), (0, 0)))

    # Gate permutation (i,f,g,o) -> (i,f,o,g) + transpose; weights in bf16, bias combined in f32.
    wih_t = _to_kernel_gate_order(w_ih).T.astype(compute_dtype)        # (I, 4H)
    whh_t = _to_kernel_gate_order(w_hh).T.astype(compute_dtype)        # (H, 4H)
    bias = _to_kernel_gate_order(b_ih + b_hh).reshape(1, 4 * H).astype(jnp.float32)

    grid = (B_pad // TB,)

    def run(single_buffer_weights):
        res_kw = {"pipeline_mode": pl.Buffered(1)} if single_buffer_weights else {}
        n_wbuf = 1 if single_buffer_weights else 2
        w_bytes = (wih_t.size * wih_t.dtype.itemsize
                   + whh_t.size * whh_t.dtype.itemsize
                   + bias.size * 4)
        vmem_est = (2 * TB * T * I * x.dtype.itemsize       # double-buffered x block
                    + n_wbuf * w_bytes                      # resident weights / bias
                    + 2 * TB * H * 4                        # double-buffered output block
                    + 6 * TB * 4 * H * 4)                   # per-step gate temporaries (f32)
        cp = {"dimension_semantics": ("parallel",)}
        if vmem_est > (30 << 20):
            cp["vmem_limit_bytes"] = int(min(vmem_est * 5 // 4, 128 << 20))

        return pl.pallas_call(
            _lstm_pool_kernel,
            out_shape=jax.ShapeDtypeStruct((B_pad, H), jnp.float32),
            grid_spec=pltpu.PrefetchScalarGridSpec(
                num_scalar_prefetch=0,
                grid=grid,
                in_specs=[
                    pl.BlockSpec((TB, T, I), lambda b: (b, 0, 0)),            # x (batch-tiled)
                    pl.BlockSpec((I, 4 * H), lambda b: (0, 0), **res_kw),     # W_ih^T (resident)
                    pl.BlockSpec((H, 4 * H), lambda b: (0, 0), **res_kw),     # W_hh^T (resident)
                    pl.BlockSpec((1, 4 * H), lambda b: (0, 0), **res_kw),     # bias   (resident)
                ],
                out_specs=pl.BlockSpec((TB, H), lambda b: (b, 0)),
            ),
            compiler_params=pltpu.CompilerParams(**cp),
        )(x, wih_t, whh_t, bias)

    try:
        # Single-buffer the grid-invariant weights (saves 16-32 MiB at H=1024 -> larger TB).
        out = run(True)
    except Exception:
        # pipeline_mode / Buffered(1) not supported on this jax build -> default buffering.
        out = run(False)
    return out[:B]


def lstm_pooling_ref(all_hidden_states, w_ih, w_hh, b_ih, b_hh, *,
                     num_layers, total_layers, compute_dtype=jnp.float32):
    """Pure-JAX reference mirroring the PyTorch forward (nn.LSTM equations, gate order i,f,g,o)."""
    start = total_layers - num_layers
    hs = jnp.stack([all_hidden_states[i][:, 0, :] for i in range(start, total_layers)], axis=1)
    B, T, I = hs.shape
    H = w_hh.shape[1]
    wih_t = w_ih.T.astype(compute_dtype)
    whh_t = w_hh.T.astype(compute_dtype)
    bias = (b_ih + b_hh).astype(jnp.float32)
    h = jnp.zeros((B, H), jnp.float32)
    c = jnp.zeros((B, H), jnp.float32)
    for t in range(T):
        x_t = hs[:, t, :].astype(compute_dtype)
        gates = (jnp.dot(x_t, wih_t, preferred_element_type=jnp.float32)
                 + jnp.dot(h.astype(compute_dtype), whh_t, preferred_element_type=jnp.float32)
                 + bias)
        i = jax.nn.sigmoid(gates[:, 0:H])
        f = jax.nn.sigmoid(gates[:, H:2 * H])
        g = jnp.tanh(gates[:, 2 * H:3 * H])
        o = jax.nn.sigmoid(gates[:, 3 * H:4 * H])
        c = f * c + i * g
        h = o * jnp.tanh(c)
    return h                                                # == out[:, -1, :]


if __name__ == "__main__":
    key = jax.random.PRNGKey(0)
    k_x, k_wih, k_whh, k_bih, k_bhh = jax.random.split(key, 5)

    # Small shapes consistent with the module (defaults num_layers=24, total_layers=25).
    B, S, I, H = 2, 8, 64, 32
    total_layers, num_layers = 25, 24

    all_hs = jax.random.normal(k_x, (total_layers, B, S, I), dtype=jnp.float32) * 0.5
    all_hidden_states = [all_hs[i] for i in range(total_layers)]

    scale = 0.2
    w_ih = jax.random.normal(k_wih, (4 * H, I), dtype=jnp.float32) * scale
    w_hh = jax.random.normal(k_whh, (4 * H, H), dtype=jnp.float32) * scale
    b_ih = jax.random.normal(k_bih, (4 * H,), dtype=jnp.float32) * scale
    b_hh = jax.random.normal(k_bhh, (4 * H,), dtype=jnp.float32) * scale

    out = lstm_pooling(all_hidden_states, w_ih, w_hh, b_ih, b_hh,
                       num_layers=num_layers, total_layers=total_layers)
    out = jax.block_until_ready(out)
    assert out.shape == (B, H)

    # Tight check vs a reference that mirrors the kernel precision (bf16 matmul inputs, f32 accum).
    ref_bf16 = lstm_pooling_ref(all_hidden_states, w_ih, w_hh, b_ih, b_hh,
                                num_layers=num_layers, total_layers=total_layers,
                                compute_dtype=jnp.bfloat16)
    d_bf16 = float(jnp.max(jnp.abs(out - ref_bf16)))
    assert jnp.allclose(out, ref_bf16, atol=2e-3, rtol=2e-3), f"mismatch vs bf16 reference: {d_bf16}"

    # Loose check vs the full-f32 reference (bf16 MXU operands introduce small rounding).
    ref_f32 = lstm_pooling_ref(all_hidden_states, w_ih, w_hh, b_ih, b_hh,
                               num_layers=num_layers, total_layers=total_layers,
                               compute_dtype=jnp.float32)
    d_f32 = float(jnp.max(jnp.abs(out - ref_f32)))
    assert jnp.allclose(out, ref_f32, atol=5e-2, rtol=5e-2), f"mismatch vs f32 reference: {d_f32}"

    print("KERNEL_OK")
</pallas_src>

<mosaic_0001>
module attributes {stable_mosaic.version = 11 : i64} {
  func.func @_lstm_pool_kernel(%arg0: i32, %arg1: memref<16x24x64xbf16, #tpu.memory_space<vmem>>, %arg2: memref<64x128xbf16, #tpu.memory_space<vmem>>, %arg3: memref<32x128xbf16, #tpu.memory_space<vmem>>, %arg4: memref<1x128xf32, #tpu.memory_space<vmem>>, %arg5: memref<16x32xf32, #tpu.memory_space<vmem>>) attributes {dimension_semantics = [#tpu.dimension_semantics<parallel>], iteration_bounds = array<i64: 1>, scalar_prefetch = 0 : i64, scratch_operands = 0 : i64, tpu.core_type = #tpu.core_type<tc>, window_params = [{transform_indices = @transform_0, window_bounds = array<i64: 16, 24, 64>}, {pipeline_mode = #tpu.pipeline_mode<synchronous>, transform_indices = @transform_1, window_bounds = array<i64: 64, 128>}, {pipeline_mode = #tpu.pipeline_mode<synchronous>, transform_indices = @transform_2, window_bounds = array<i64: 32, 128>}, {pipeline_mode = #tpu.pipeline_mode<synchronous>, transform_indices = @transform_3, window_bounds = array<i64: 1, 128>}, {transform_indices = @transform_4, window_bounds = array<i64: 16, 32>}]} {
    %c0 = arith.constant 0 : index
    %c0_0 = arith.constant 0 : index
    %c0_1 = arith.constant 0 : index
    %0 = vector.load %arg1[%c0, %c0_0, %c0_1] : memref<16x24x64xbf16, #tpu.memory_space<vmem>>, vector<16x24x64xbf16>
    %c0_2 = arith.constant 0 : index
    %c0_3 = arith.constant 0 : index
    %1 = vector.load %arg2[%c0_2, %c0_3] : memref<64x128xbf16, #tpu.memory_space<vmem>>, vector<64x128xbf16>
    %c0_4 = arith.constant 0 : index
    %c0_5 = arith.constant 0 : index
    %2 = vector.load %arg3[%c0_4, %c0_5] : memref<32x128xbf16, #tpu.memory_space<vmem>>, vector<32x128xbf16>
    %c0_6 = arith.constant 0 : index
    %c0_7 = arith.constant 0 : index
    %3 = vector.load %arg4[%c0_6, %c0_7] : memref<1x128xf32, #tpu.memory_space<vmem>>, vector<1x128xf32>
    %cst = arith.constant 0.000000e+00 : f32
    %4 = vector.broadcast %cst : f32 to vector<16x32xf32>
    %cst_8 = arith.constant 0.000000e+00 : f32
    %5 = vector.broadcast %cst_8 : f32 to vector<16x32xf32>
    %6 = vector.extract_strided_slice %0 {offsets = [0, 0, 0], sizes = [16, 1, 64], strides = [1, 1, 1]} : vector<16x24x64xbf16> to vector<16x1x64xbf16>
    %7 = vector.shape_cast %6 : vector<16x1x64xbf16> to vector<16x64xbf16>
    %cst_9 = arith.constant dense<0.000000e+00> : vector<16x128xf32>
    %8 = tpu.matmul %7, %1, %cst_9 {dimension_numbers = #tpu.dot_dimension_numbers<[1], [0], [0], [1], [0, 0, 1, 1], [], []>} : vector<16x64xbf16>, vector<64x128xbf16>, vector<16x128xf32> -> vector<16x128xf32>
    %9 = arith.truncf %4 : vector<16x32xf32> to vector<16x32xbf16>
    %cst_10 = arith.constant dense<0.000000e+00> : vector<16x128xf32>
    %10 = tpu.matmul %9, %2, %cst_10 {dimension_numbers = #tpu.dot_dimension_numbers<[1], [0], [0], [1], [0, 0, 1, 1], [], []>} : vector<16x32xbf16>, vector<32x128xbf16>, vector<16x128xf32> -> vector<16x128xf32>
    %11 = arith.addf %8, %10 : vector<16x128xf32>
    %12 = vector.broadcast %3 : vector<1x128xf32> to vector<16x128xf32>
    %13 = arith.addf %11, %12 : vector<16x128xf32>
    %14 = vector.extract_strided_slice %13 {offsets = [0, 0], sizes = [16, 96], strides = [1, 1]} : vector<16x128xf32> to vector<16x96xf32>
    %15 = arith.negf %14 : vector<16x96xf32>
    %16 = math.exp %15 : vector<16x96xf32>
    %cst_11 = arith.constant 1.000000e+00 : f32
    %17 = vector.broadcast %cst_11 : f32 to vector<16x96xf32>
    %18 = arith.addf %17, %16 : vector<16x96xf32>
    %19 = arith.divf %17, %18 : vector<16x96xf32>
    %20 = vector.extract_strided_slice %19 {offsets = [0, 0], sizes = [16, 32], strides = [1, 1]} : vector<16x96xf32> to vector<16x32xf32>
    %21 = vector.extract_strided_slice %19 {offsets = [0, 32], sizes = [16, 32], strides = [1, 1]} : vector<16x96xf32> to vector<16x32xf32>
    %22 = vector.extract_strided_slice %19 {offsets = [0, 64], sizes = [16, 32], strides = [1, 1]} : vector<16x96xf32> to vector<16x32xf32>
    %23 = vector.extract_strided_slice %13 {offsets = [0, 96], sizes = [16, 32], strides = [1, 1]} : vector<16x128xf32> to vector<16x32xf32>
    %24 = math.tanh %23 : vector<16x32xf32>
    %25 = arith.mulf %21, %5 : vector<16x32xf32>
    %26 = arith.mulf %20, %24 : vector<16x32xf32>
    %27 = arith.addf %25, %26 : vector<16x32xf32>
    %28 = math.tanh %27 : vector<16x32xf32>
    %29 = arith.mulf %22, %28 : vector<16x32xf32>
    %30 = vector.extract_strided_slice %0 {offsets = [0, 1, 0], sizes = [16, 1, 64], strides = [1, 1, 1]} : vector<16x24x64xbf16> to vector<16x1x64xbf16>
    %31 = vector.shape_cast %30 : vector<16x1x64xbf16> to vector<16x64xbf16>
    %cst_12 = arith.constant dense<0.000000e+00> : vector<16x128xf32>
    %32 = tpu.matmul %31, %1, %cst_12 {dimension_numbers = #tpu.dot_dimension_numbers<[1], [0], [0], [1], [0, 0, 1, 1], [], []>} : vector<16x64xbf16>, vector<64x128xbf16>, vector<16x128xf32> -> vector<16x128xf32>
    %33 = arith.truncf %29 : vector<16x32xf32> to vector<16x32xbf16>
    %cst_13 = arith.constant dense<0.000000e+00> : vector<16x128xf32>
    %34 = tpu.matmul %33, %2, %cst_13 {dimension_numbers = #tpu.dot_dimension_numbers<[1], [0], [0], [1], [0, 0, 1, 1], [], []>} : vector<16x32xbf16>, vector<32x128xbf16>, vector<16x128xf32> -> vector<16x128xf32>
    %35 = arith.addf %32, %34 : vector<16x128xf32>
    %36 = vector.broadcast %3 : vector<1x128xf32> to vector<16x128xf32>
    %37 = arith.addf %35, %36 : vector<16x128xf32>
    %38 = vector.extract_strided_slice %37 {offsets = [0, 0], sizes = [16, 96], strides = [1, 1]} : vector<16x128xf32> to vector<16x96xf32>
    %39 = arith.negf %38 : vector<16x96xf32>
    %40 = math.exp %39 : vector<16x96xf32>
    %cst_14 = arith.constant 1.000000e+00 : f32
    %41 = vector.broadcast %cst_14 : f32 to vector<16x96xf32>
    %42 = arith.addf %41, %40 : vector<16x96xf32>
    %43 = arith.divf %41, %42 : vector<16x96xf32>
    %44 = vector.extract_strided_slice %43 {offsets = [0, 0], sizes = [16, 32], strides = [1, 1]} : vector<16x96xf32> to vector<16x32xf32>
    %45 = vector.extract_strided_slice %43 {offsets = [0, 32], sizes = [16, 32], strides = [1, 1]} : vector<16x96xf32> to vector<16x32xf32>
    %46 = vector.extract_strided_slice %43 {offsets = [0, 64], sizes = [16, 32], strides = [1, 1]} : vector<16x96xf32> to vector<16x32xf32>
    %47 = vector.extract_strided_slice %37 {offsets = [0, 96], sizes = [16, 32], strides = [1, 1]} : vector<16x128xf32> to vector<16x32xf32>
    %48 = math.tanh %47 : vector<16x32xf32>
    %49 = arith.mulf %45, %27 : vector<16x32xf32>
    %50 = arith.mulf %44, %48 : vector<16x32xf32>
    %51 = arith.addf %49, %50 : vector<16x32xf32>
    %52 = math.tanh %51 : vector<16x32xf32>
    %53 = arith.mulf %46, %52 : vector<16x32xf32>
    %54 = vector.extract_strided_slice %0 {offsets = [0, 2, 0], sizes = [16, 1, 64], strides = [1, 1, 1]} : vector<16x24x64xbf16> to vector<16x1x64xbf16>
    %55 = vector.shape_cast %54 : vector<16x1x64xbf16> to vector<16x64xbf16>
    %cst_15 = arith.constant dense<0.000000e+00> : vector<16x128xf32>
    %56 = tpu.matmul %55, %1, %cst_15 {dimension_numbers = #tpu.dot_dimension_numbers<[1], [0], [0], [1], [0, 0, 1, 1], [], []>} : vector<16x64xbf16>, vector<64x128xbf16>, vector<16x128xf32> -> vector<16x128xf32>
    %57 = arith.truncf %53 : vector<16x32xf32> to vector<16x32xbf16>
    %cst_16 = arith.constant dense<0.000000e+00> : vector<16x128xf32>
    %58 = tpu.matmul %57, %2, %cst_16 {dimension_numbers = #tpu.dot_dimension_numbers<[1], [0], [0], [1], [0, 0, 1, 1], [], []>} : vector<16x32xbf16>, vector<32x128xbf16>, vector<16x128xf32> -> vector<16x128xf32>
    %59 = arith.addf %56, %58 : vector<16x128xf32>
    %60 = vector.broadcast %3 : vector<1x128xf32> to vector<16x128xf32>
    %61 = arith.addf %59, %60 : vector<16x128xf32>
    %62 = vector.extract_strided_slice %61 {offsets = [0, 0], sizes = [16, 96], strides = [1, 1]} : vector<16x128xf32> to vector<16x96xf32>
    %63 = arith.negf %62 : vector<16x96xf32>
    %64 = math.exp %63 : vector<16x96xf32>
    %cst_17 = arith.constant 1.000000e+00 : f32
    %65 = vector.broadcast %cst_17 : f32 to vector<16x96xf32>
    %66 = arith.addf %65, %64 : vector<16x96xf32>
    %67 = arith.divf %65, %66 : vector<16x96xf32>
    %68 = vector.extract_strided_slice %67 {offsets = [0, 0], sizes = [16, 32], strides = [1, 1]} : vector<16x96xf32> to vector<16x32xf32>
    %69 = vector.extract_strided_slice %67 {offsets = [0, 32], sizes = [16, 32], strides = [1, 1]} : vector<16x96xf32> to vector<16x32xf32>
    %70 = vector.extract_strided_slice %67 {offsets = [0, 64], sizes = [16, 32], strides = [1, 1]} : vector<16x96xf32> to vector<16x32xf32>
    %71 = vector.extract_strided_slice %61 {offsets = [0, 96], sizes = [16, 32], strides = [1, 1]} : vector<16x128xf32> to vector<16x32xf32>
    %72 = math.tanh %71 : vector<16x32xf32>
    %73 = arith.mulf %69, %51 : vector<16x32xf32>
    %74 = arith.mulf %68, %72 : vector<16x32xf32>
    %75 = arith.addf %73, %74 : vector<16x32xf32>
    %76 = math.tanh %75 : vector<16x32xf32>
    %77 = arith.mulf %70, %76 : vector<16x32xf32>
    %78 = vector.extract_strided_slice %0 {offsets = [0, 3, 0], sizes = [16, 1, 64], strides = [1, 1, 1]} : vector<16x24x64xbf16> to vector<16x1x64xbf16>
    %79 = vector.shape_cast %78 : vector<16x1x64xbf16> to vector<16x64xbf16>
    %cst_18 = arith.constant dense<0.000000e+00> : vector<16x128xf32>
    %80 = tpu.matmul %79, %1, %cst_18 {dimension_numbers = #tpu.dot_dimension_numbers<[1], [0], [0], [1], [0, 0, 1, 1], [], []>} : vector<16x64xbf16>, vector<64x128xbf16>, vector<16x128xf32> -> vector<16x128xf32>
    %81 = arith.truncf %77 : vector<16x32xf32> to vector<16x32xbf16>
    %cst_19 = arith.constant dense<0.000000e+00> : vector<16x128xf32>
    %82 = tpu.matmul %81, %2, %cst_19 {dimension_numbers = #tpu.dot_dimension_numbers<[1], [0], [0], [1], [0, 0, 1, 1], [], []>} : vector<16x32xbf16>, vector<32x128xbf16>, vector<16x128xf32> -> vector<16x128xf32>
    %83 = arith.addf %80, %82 : vector<16x128xf32>
    %84 = vector.broadcast %3 : vector<1x128xf32> to vector<16x128xf32>
    %85 = arith.addf %83, %84 : vector<16x128xf32>
    %86 = vector.extract_strided_slice %85 {offsets = [0, 0], sizes = [16, 96], strides = [1, 1]} : vector<16x128xf32> to vector<16x96xf32>
    %87 = arith.negf %86 : vector<16x96xf32>
    %88 = math.exp %87 : vector<16x96xf32>
    %cst_20 = arith.constant 1.000000e+00 : f32
    %89 = vector.broadcast %cst_20 : f32 to vector<16x96xf32>
    %90 = arith.addf %89, %88 : vector<16x96xf32>
    %91 = arith.divf %89, %90 : vector<16x96xf32>
    %92 = vector.extract_strided_slice %91 {offsets = [0, 0], sizes = [16, 32], strides = [1, 1]} : vector<16x96xf32> to vector<16x32xf32>
    %93 = vector.extract_strided_slice %91 {offsets = [0, 32], sizes = [16, 32], strides = [1, 1]} : vector<16x96xf32> to vector<16x32xf32>
    %94 = vector.extract_strided_slice %91 {offsets = [0, 64], sizes = [16, 32], strides = [1, 1]} : vector<16x96xf32> to vector<16x32xf32>
    %95 = vector.extract_strided_slice %85 {offsets = [0, 96], sizes = [16, 32], strides = [1, 1]} : vector<16x128xf32> to vector<16x32xf32>
    %96 = math.tanh %95 : vector<16x32xf32>
    %97 = arith.mulf %93, %75 : vector<16x32xf32>
    %98 = arith.mulf %92, %96 : vector<16x32xf32>
    %99 = arith.addf %97, %98 : vector<16x32xf32>
    %100 = math.tanh %99 : vector<16x32xf32>
    %101 = arith.mulf %94, %100 : vector<16x32xf32>
    %102 = vector.extract_strided_slice %0 {offsets = [0, 4, 0], sizes = [16, 1, 64], strides = [1, 1, 1]} : vector<16x24x64xbf16> to vector<16x1x64xbf16>
    %103 = vector.shape_cast %102 : vector<16x1x64xbf16> to vector<16x64xbf16>
    %cst_21 = arith.constant dense<0.000000e+00> : vector<16x128xf32>
    %104 = tpu.matmul %103, %1, %cst_21 {dimension_numbers = #tpu.dot_dimension_numbers<[1], [0], [0], [1], [0, 0, 1, 1], [], []>} : vector<16x64xbf16>, vector<64x128xbf16>, vector<16x128xf32> -> vector<16x128xf32>
    %105 = arith.truncf %101 : vector<16x32xf32> to vector<16x32xbf16>
    %cst_22 = arith.constant dense<0.000000e+00> : vector<16x128xf32>
    %106 = tpu.matmul %105, %2, %cst_22 {dimension_numbers = #tpu.dot_dimension_numbers<[1], [0], [0], [1], [0, 0, 1, 1], [], []>} : vector<16x32xbf16>, vector<32x128xbf16>, vector<16x128xf32> -> vector<16x128xf32>
    %107 = arith.addf %104, %106 : vector<16x128xf32>
    %108 = vector.broadcast %3 : vector<1x128xf32> to vector<16x128xf32>
    %109 = arith.addf %107, %108 : vector<16x128xf32>
    %110 = vector.extract_strided_slice %109 {offsets = [0, 0], sizes = [16, 96], strides = [1, 1]} : vector<16x128xf32> to vector<16x96xf32>
    %111 = arith.negf %110 : vector<16x96xf32>
    %112 = math.exp %111 : vector<16x96xf32>
    %cst_23 = arith.constant 1.000000e+00 : f32
    %113 = vector.broadcast %cst_23 : f32 to vector<16x96xf32>
    %114 = arith.addf %113, %112 : vector<16x96xf32>
    %115 = arith.divf %113, %114 : vector<16x96xf32>
    %116 = vector.extract_strided_slice %115 {offsets = [0, 0], sizes = [16, 32], strides = [1, 1]} : vector<16x96xf32> to vector<16x32xf32>
    %117 = vector.extract_strided_slice %115 {offsets = [0, 32], sizes = [16, 32], strides = [1, 1]} : vector<16x96xf32> to vector<16x32xf32>
    %118 = vector.extract_strided_slice %115 {offsets = [0, 64], sizes = [16, 32], strides = [1, 1]} : vector<16x96xf32> to vector<16x32xf32>
    %119 = vector.extract_strided_slice %109 {offsets = [0, 96], sizes = [16, 32], strides = [1, 1]} : vector<16x128xf32> to vector<16x32xf32>
    %120 = math.tanh %119 : vector<16x32xf32>
    %121 = arith.mulf %117, %99 : vector<16x32xf32>
    %122 = arith.mulf %116, %120 : vector<16x32xf32>
    %123 = arith.addf %121, %122 : vector<16x32xf32>
    %124 = math.tanh %123 : vector<16x32xf32>
    %125 = arith.mulf %118, %124 : vector<16x32xf32>
    %126 = vector.extract_strided_slice %0 {offsets = [0, 5, 0], sizes = [16, 1, 64], strides = [1, 1, 1]} : vector<16x24x64xbf16> to vector<16x1x64xbf16>
    %127 = vector.shape_cast %126 : vector<16x1x64xbf16> to vector<16x64xbf16>
    %cst_24 = arith.constant dense<0.000000e+00> : vector<16x128xf32>
    %128 = tpu.matmul %127, %1, %cst_24 {dimension_numbers = #tpu.dot_dimension_numbers<[1], [0], [0], [1], [0, 0, 1, 1], [], []>} : vector<16x64xbf16>, vector<64x128xbf16>, vector<16x128xf32> -> vector<16x128xf32>
    %129 = arith.truncf %125 : vector<16x32xf32> to vector<16x32xbf16>
    %cst_25 = arith.constant dense<0.000000e+00> : vector<16x128xf32>
    %130 = tpu.matmul %129, %2, %cst_25 {dimension_numbers = #tpu.dot_dimension_numbers<[1], [0], [0], [1], [0, 0, 1, 1], [], []>} : vector<16x32xbf16>, vector<32x128xbf16>, vector<16x128xf32> -> vector<16x128xf32>
    %131 = arith.addf %128, %130 : vector<16x128xf32>
    %132 = vector.broadcast %3 : vector<1x128xf32> to vector<16x128xf32>
    %133 = arith.addf %131, %132 : vector<16x128xf32>
    %134 = vector.extract_strided_slice %133 {offsets = [0, 0], sizes = [16, 96], strides = [1, 1]} : vector<16x128xf32> to vector<16x96xf32>
    %135 = arith.negf %134 : vector<16x96xf32>
    %136 = math.exp %135 : vector<16x96xf32>
    %cst_26 = arith.constant 1.000000e+00 : f32
    %137 = vector.broadcast %cst_26 : f32 to vector<16x96xf32>
    %138 = arith.addf %137, %136 : vector<16x96xf32>
    %139 = arith.divf %137, %138 : vector<16x96xf32>
    %140 = vector.extract_strided_slice %139 {offsets = [0, 0], sizes = [16, 32], strides = [1, 1]} : vector<16x96xf32> to vector<16x32xf32>
    %141 = vector.extract_strided_slice %139 {offsets = [0, 32], sizes = [16, 32], strides = [1, 1]} : vector<16x96xf32> to vector<16x32xf32>
    %142 = vector.extract_strided_slice %139 {offsets = [0, 64], sizes = [16, 32], strides = [1, 1]} : vector<16x96xf32> to vector<16x32xf32>
    %143 = vector.extract_strided_slice %133 {offsets = [0, 96], sizes = [16, 32], strides = [1, 1]} : vector<16x128xf32> to vector<16x32xf32>
    %144 = math.tanh %143 : vector<16x32xf32>
    %145 = arith.mulf %141, %123 : vector<16x32xf32>
    %146 = arith.mulf %140, %144 : vector<16x32xf32>
    %147 = arith.addf %145, %146 : vector<16x32xf32>
    %148 = math.tanh %147 : vector<16x32xf32>
    %149 = arith.mulf %142, %148 : vector<16x32xf32>
    %150 = vector.extract_strided_slice %0 {offsets = [0, 6, 0], sizes = [16, 1, 64], strides = [1, 1, 1]} : vector<16x24x64xbf16> to vector<16x1x64xbf16>
    %151 = vector.shape_cast %150 : vector<16x1x64xbf16> to vector<16x64xbf16>
    %cst_27 = arith.constant dense<0.000000e+00> : vector<16x128xf32>
    %152 = tpu.matmul %151, %1, %cst_27 {dimension_numbers = #tpu.dot_dimension_numbers<[1], [0], [0], [1], [0, 0, 1, 1], [], []>} : vector<16x64xbf16>, vector<64x128xbf16>, vector<16x128xf32> -> vector<16x128xf32>
    %153 = arith.truncf %149 : vector<16x32xf32> to vector<16x32xbf16>
    %cst_28 = arith.constant dense<0.000000e+00> : vector<16x128xf32>
    %154 = tpu.matmul %153, %2, %cst_28 {dimension_numbers = #tpu.dot_dimension_numbers<[1], [0], [0], [1], [0, 0, 1, 1], [], []>} : vector<16x32xbf16>, vector<32x128xbf16>, vector<16x128xf32> -> vector<16x128xf32>
    %155 = arith.addf %152, %154 : vector<16x128xf32>
    %156 = vector.broadcast %3 : vector<1x128xf32> to vector<16x128xf32>
    %157 = arith.addf %155, %156 : vector<16x128xf32>
    %158 = vector.extract_strided_slice %157 {offsets = [0, 0], sizes = [16, 96], strides = [1, 1]} : vector<16x128xf32> to vector<16x96xf32>
    %159 = arith.negf %158 : vector<16x96xf32>
    %160 = math.exp %159 : vector<16x96xf32>
    %cst_29 = arith.constant 1.000000e+00 : f32
    %161 = vector.broadcast %cst_29 : f32 to vector<16x96xf32>
    %162 = arith.addf %161, %160 : vector<16x96xf32>
    %163 = arith.divf %161, %162 : vector<16x96xf32>
    %164 = vector.extract_strided_slice %163 {offsets = [0, 0], sizes = [16, 32], strides = [1, 1]} : vector<16x96xf32> to vector<16x32xf32>
    %165 = vector.extract_strided_slice %163 {offsets = [0, 32], sizes = [16, 32], strides = [1, 1]} : vector<16x96xf32> to vector<16x32xf32>
    %166 = vector.extract_strided_slice %163 {offsets = [0, 64], sizes = [16, 32], strides = [1, 1]} : vector<16x96xf32> to vector<16x32xf32>
    %167 = vector.extract_strided_slice %157 {offsets = [0, 96], sizes = [16, 32], strides = [1, 1]} : vector<16x128xf32> to vector<16x32xf32>
    %168 = math.tanh %167 : vector<16x32xf32>
    %169 = arith.mulf %165, %147 : vector<16x32xf32>
    %170 = arith.mulf %164, %168 : vector<16x32xf32>
    %171 = arith.addf %169, %170 : vector<16x32xf32>
    %172 = math.tanh %171 : vector<16x32xf32>
    %173 = arith.mulf %166, %172 : vector<16x32xf32>
    %174 = vector.extract_strided_slice %0 {offsets = [0, 7, 0], sizes = [16, 1, 64], strides = [1, 1, 1]} : vector<16x24x64xbf16> to vector<16x1x64xbf16>
    %175 = vector.shape_cast %174 : vector<16x1x64xbf16> to vector<16x64xbf16>
    %cst_30 = arith.constant dense<0.000000e+00> : vector<16x128xf32>
    %176 = tpu.matmul %175, %1, %cst_30 {dimension_numbers = #tpu.dot_dimension_numbers<[1], [0], [0], [1], [0, 0, 1, 1], [], []>} : vector<16x64xbf16>, vector<64x128xbf16>, vector<16x128xf32> -> vector<16x128xf32>
    %177 = arith.truncf %173 : vector<16x32xf32> to vector<16x32xbf16>
    %cst_31 = arith.constant dense<0.000000e+00> : vector<16x128xf32>
    %178 = tpu.matmul %177, %2, %cst_31 {dimension_numbers = #tpu.dot_dimension_numbers<[1], [0], [0], [1], [0, 0, 1, 1], [], []>} : vector<16x32xbf16>, vector<32x128xbf16>, vector<16x128xf32> -> vector<16x128xf32>
    %179 = arith.addf %176, %178 : vector<16x128xf32>
    %180 = vector.broadcast %3 : vector<1x128xf32> to vector<16x128xf32>
    %181 = arith.addf %179, %180 : vector<16x128xf32>
    %182 = vector.extract_strided_slice %181 {offsets = [0, 0], sizes = [16, 96], strides = [1, 1]} : vector<16x128xf32> to vector<16x96xf32>
    %183 = arith.negf %182 : vector<16x96xf32>
    %184 = math.exp %183 : vector<16x96xf32>
    %cst_32 = arith.constant 1.000000e+00 : f32
    %185 = vector.broadcast %cst_32 : f32 to vector<16x96xf32>
    %186 = arith.addf %185, %184 : vector<16x96xf32>
    %187 = arith.divf %185, %186 : vector<16x96xf32>
    %188 = vector.extract_strided_slice %187 {offsets = [0, 0], sizes = [16, 32], strides = [1, 1]} : vector<16x96xf32> to vector<16x32xf32>
    %189 = vector.extract_strided_slice %187 {offsets = [0, 32], sizes = [16, 32], strides = [1, 1]} : vector<16x96xf32> to vector<16x32xf32>
    %190 = vector.extract_strided_slice %187 {offsets = [0, 64], sizes = [16, 32], strides = [1, 1]} : vector<16x96xf32> to vector<16x32xf32>
    %191 = vector.extract_strided_slice %181 {offsets = [0, 96], sizes = [16, 32], strides = [1, 1]} : vector<16x128xf32> to vector<16x32xf32>
    %192 = math.tanh %191 : vector<16x32xf32>
    %193 = arith.mulf %189, %171 : vector<16x32xf32>
    %194 = arith.mulf %188, %192 : vector<16x32xf32>
    %195 = arith.addf %193, %194 : vector<16x32xf32>
    %196 = math.tanh %195 : vector<16x32xf32>
    %197 = arith.mulf %190, %196 : vector<16x32xf32>
    %198 = vector.extract_strided_slice %0 {offsets = [0, 8, 0], sizes = [16, 1, 64], strides = [1, 1, 1]} : vector<16x24x64xbf16> to vector<16x1x64xbf16>
    %199 = vector.shape_cast %198 : vector<16x1x64xbf16> to vector<16x64xbf16>
    %cst_33 = arith.constant dense<0.000000e+00> : vector<16x128xf32>
    %200 = tpu.matmul %199, %1, %cst_33 {dimension_numbers = #tpu.dot_dimension_numbers<[1], [0], [0], [1], [0, 0, 1, 1], [], []>} : vector<16x64xbf16>, vector<64x128xbf16>, vector<16x128xf32> -> vector<16x128xf32>
    %201 = arith.truncf %197 : vector<16x32xf32> to vector<16x32xbf16>
    %cst_34 = arith.constant dense<0.000000e+00> : vector<16x128xf32>
    %202 = tpu.matmul %201, %2, %cst_34 {dimension_numbers = #tpu.dot_dimension_numbers<[1], [0], [0], [1], [0, 0, 1, 1], [], []>} : vector<16x32xbf16>, vector<32x128xbf16>, vector<16x128xf32> -> vector<16x128xf32>
    %203 = arith.addf %200, %202 : vector<16x128xf32>
    %204 = vector.broadcast %3 : vector<1x128xf32> to vector<16x128xf32>
    %205 = arith.addf %203, %204 : vector<16x128xf32>
    %206 = vector.extract_strided_slice %205 {offsets = [0, 0], sizes = [16, 96], strides = [1, 1]} : vector<16x128xf32> to vector<16x96xf32>
    %207 = arith.negf %206 : vector<16x96xf32>
    %208 = math.exp %207 : vector<16x96xf32>
    %cst_35 = arith.constant 1.000000e+00 : f32
    %209 = vector.broadcast %cst_35 : f32 to vector<16x96xf32>
    %210 = arith.addf %209, %208 : vector<16x96xf32>
    %211 = arith.divf %209, %210 : vector<16x96xf32>
    %212 = vector.extract_strided_slice %211 {offsets = [0, 0], sizes = [16, 32], strides = [1, 1]} : vector<16x96xf32> to vector<16x32xf32>
    %213 = vector.extract_strided_slice %211 {offsets = [0, 32], sizes = [16, 32], strides = [1, 1]} : vector<16x96xf32> to vector<16x32xf32>
    %214 = vector.extract_strided_slice %211 {offsets = [0, 64], sizes = [16, 32], strides = [1, 1]} : vector<16x96xf32> to vector<16x32xf32>
    %215 = vector.extract_strided_slice %205 {offsets = [0, 96], sizes = [16, 32], strides = [1, 1]} : vector<16x128xf32> to vector<16x32xf32>
    %216 = math.tanh %215 : vector<16x32xf32>
    %217 = arith.mulf %213, %195 : vector<16x32xf32>
    %218 = arith.mulf %212, %216 : vector<16x32xf32>
    %219 = arith.addf %217, %218 : vector<16x32xf32>
    %220 = math.tanh %219 : vector<16x32xf32>
    %221 = arith.mulf %214, %220 : vector<16x32xf32>
    %222 = vector.extract_strided_slice %0 {offsets = [0, 9, 0], sizes = [16, 1, 64], strides = [1, 1, 1]} : vector<16x24x64xbf16> to vector<16x1x64xbf16>
    %223 = vector.shape_cast %222 : vector<16x1x64xbf16> to vector<16x64xbf16>
    %cst_36 = arith.constant dense<0.000000e+00> : vector<16x128xf32>
    %224 = tpu.matmul %223, %1, %cst_36 {dimension_numbers = #tpu.dot_dimension_numbers<[1], [0], [0], [1], [0, 0, 1, 1], [], []>} : vector<16x64xbf16>, vector<64x128xbf16>, vector<16x128xf32> -> vector<16x128xf32>
    %225 = arith.truncf %221 : vector<16x32xf32> to vector<16x32xbf16>
    %cst_37 = arith.constant dense<0.000000e+00> : vector<16x128xf32>
    %226 = tpu.matmul %225, %2, %cst_37 {dimension_numbers = #tpu.dot_dimension_numbers<[1], [0], [0], [1], [0, 0, 1, 1], [], []>} : vector<16x32xbf16>, vector<32x128xbf16>, vector<16x128xf32> -> vector<16x128xf32>
    %227 = arith.addf %224, %226 : vector<16x128xf32>
    %228 = vector.broadcast %3 : vector<1x128xf32> to vector<16x128xf32>
    %229 = arith.addf %227, %228 : vector<16x128xf32>
    %230 = vector.extract_strided_slice %229 {offsets = [0, 0], sizes = [16, 96], strides = [1, 1]} : vector<16x128xf32> to vector<16x96xf32>
    %231 = arith.negf %230 : vector<16x96xf32>
    %232 = math.exp %231 : vector<16x96xf32>
    %cst_38 = arith.constant 1.000000e+00 : f32
    %233 = vector.broadcast %cst_38 : f32 to vector<16x96xf32>
    %234 = arith.addf %233, %232 : vector<16x96xf32>
    %235 = arith.divf %233, %234 : vector<16x96xf32>
    %236 = vector.extract_strided_slice %235 {offsets = [0, 0], sizes = [16, 32], strides = [1, 1]} : vector<16x96xf32> to vector<16x32xf32>
    %237 = vector.extract_strided_slice %235 {offsets = [0, 32], sizes = [16, 32], strides = [1, 1]} : vector<16x96xf32> to vector<16x32xf32>
    %238 = vector.extract_strided_slice %235 {offsets = [0, 64], sizes = [16, 32], strides = [1, 1]} : vector<16x96xf32> to vector<16x32xf32>
    %239 = vector.extract_strided_slice %229 {offsets = [0, 96], sizes = [16, 32], strides = [1, 1]} : vector<16x128xf32> to vector<16x32xf32>
    %240 = math.tanh %239 : vector<16x32xf32>
    %241 = arith.mulf %237, %219 : vector<16x32xf32>
    %242 = arith.mulf %236, %240 : vector<16x32xf32>
    %243 = arith.addf %241, %242 : vector<16x32xf32>
    %244 = math.tanh %243 : vector<16x32xf32>
    %245 = arith.mulf %238, %244 : vector<16x32xf32>
    %246 = vector.extract_strided_slice %0 {offsets = [0, 10, 0], sizes = [16, 1, 64], strides = [1, 1, 1]} : vector<16x24x64xbf16> to vector<16x1x64xbf16>
    %247 = vector.shape_cast %246 : vector<16x1x64xbf16> to vector<16x64xbf16>
    %cst_39 = arith.constant dense<0.000000e+00> : vector<16x128xf32>
    %248 = tpu.matmul %247, %1, %cst_39 {dimension_numbers = #tpu.dot_dimension_numbers<[1], [0], [0], [1], [0, 0, 1, 1], [], []>} : vector<16x64xbf16>, vector<64x128xbf16>, vector<16x128xf32> -> vector<16x128xf32>
    %249 = arith.truncf %245 : vector<16x32xf32> to vector<16x32xbf16>
    %cst_40 = arith.constant dense<0.000000e+00> : vector<16x128xf32>
    %250 = tpu.matmul %249, %2, %cst_40 {dimension_numbers = #tpu.dot_dimension_numbers<[1], [0], [0], [1], [0, 0, 1, 1], [], []>} : vector<16x32xbf16>, vector<32x128xbf16>, vector<16x128xf32> -> vector<16x128xf32>
    %251 = arith.addf %248, %250 : vector<16x128xf32>
    %252 = vector.broadcast %3 : vector<1x128xf32> to vector<16x128xf32>
    %253 = arith.addf %251, %252 : vector<16x128xf32>
    %254 = vector.extract_strided_slice %253 {offsets = [0, 0], sizes = [16, 96], strides = [1, 1]} : vector<16x128xf32> to vector<16x96xf32>
    %255 = arith.negf %254 : vector<16x96xf32>
    %256 = math.exp %255 : vector<16x96xf32>
    %cst_41 = arith.constant 1.000000e+00 : f32
    %257 = vector.broadcast %cst_41 : f32 to vector<16x96xf32>
    %258 = arith.addf %257, %256 : vector<16x96xf32>
    %259 = arith.divf %257, %258 : vector<16x96xf32>
    %260 = vector.extract_strided_slice %259 {offsets = [0, 0], sizes = [16, 32], strides = [1, 1]} : vector<16x96xf32> to vector<16x32xf32>
    %261 = vector.extract_strided_slice %259 {offsets = [0, 32], sizes = [16, 32], strides = [1, 1]} : vector<16x96xf32> to vector<16x32xf32>
    %262 = vector.extract_strided_slice %259 {offsets = [0, 64], sizes = [16, 32], strides = [1, 1]} : vector<16x96xf32> to vector<16x32xf32>
    %263 = vector.extract_strided_slice %253 {offsets = [0, 96], sizes = [16, 32], strides = [1, 1]} : vector<16x128xf32> to vector<16x32xf32>
    %264 = math.tanh %263 : vector<16x32xf32>
    %265 = arith.mulf %261, %243 : vector<16x32xf32>
    %266 = arith.mulf %260, %264 : vector<16x32xf32>
    %267 = arith.addf %265, %266 : vector<16x32xf32>
    %268 = math.tanh %267 : vector<16x32xf32>
    %269 = arith.mulf %262, %268 : vector<16x32xf32>
    %270 = vector.extract_strided_slice %0 {offsets = [0, 11, 0], sizes = [16, 1, 64], strides = [1, 1, 1]} : vector<16x24x64xbf16> to vector<16x1x64xbf16>
    %271 = vector.shape_cast %270 : vector<16x1x64xbf16> to vector<16x64xbf16>
    %cst_42 = arith.constant dense<0.000000e+00> : vector<16x128xf32>
    %272 = tpu.matmul %271, %1, %cst_42 {dimension_numbers = #tpu.dot_dimension_numbers<[1], [0], [0], [1], [0, 0, 1, 1], [], []>} : vector<16x64xbf16>, vector<64x128xbf16>, vector<16x128xf32> -> vector<16x128xf32>
    %273 = arith.truncf %269 : vector<16x32xf32> to vector<16x32xbf16>
    %cst_43 = arith.constant dense<0.000000e+00> : vector<16x128xf32>
    %274 = tpu.matmul %273, %2, %cst_43 {dimension_numbers = #tpu.dot_dimension_numbers<[1], [0], [0], [1], [0, 0, 1, 1], [], []>} : vector<16x32xbf16>, vector<32x128xbf16>, vector<16x128xf32> -> vector<16x128xf32>
    %275 = arith.addf %272, %274 : vector<16x128xf32>
    %276 = vector.broadcast %3 : vector<1x128xf32> to vector<16x128xf32>
    %277 = arith.addf %275, %276 : vector<16x128xf32>
    %278 = vector.extract_strided_slice %277 {offsets = [0, 0], sizes = [16, 96], strides = [1, 1]} : vector<16x128xf32> to vector<16x96xf32>
    %279 = arith.negf %278 : vector<16x96xf32>
    %280 = math.exp %279 : vector<16x96xf32>
    %cst_44 = arith.constant 1.000000e+00 : f32
    %281 = vector.broadcast %cst_44 : f32 to vector<16x96xf32>
    %282 = arith.addf %281, %280 : vector<16x96xf32>
    %283 = arith.divf %281, %282 : vector<16x96xf32>
    %284 = vector.extract_strided_slice %283 {offsets = [0, 0], sizes = [16, 32], strides = [1, 1]} : vector<16x96xf32> to vector<16x32xf32>
    %285 = vector.extract_strided_slice %283 {offsets = [0, 32], sizes = [16, 32], strides = [1, 1]} : vector<16x96xf32> to vector<16x32xf32>
    %286 = vector.extract_strided_slice %283 {offsets = [0, 64], sizes = [16, 32], strides = [1, 1]} : vector<16x96xf32> to vector<16x32xf32>
    %287 = vector.extract_strided_slice %277 {offsets = [0, 96], sizes = [16, 32], strides = [1, 1]} : vector<16x128xf32> to vector<16x32xf32>
    %288 = math.tanh %287 : vector<16x32xf32>
    %289 = arith.mulf %285, %267 : vector<16x32xf32>
    %290 = arith.mulf %284, %288 : vector<16x32xf32>
    %291 = arith.addf %289, %290 : vector<16x32xf32>
    %292 = math.tanh %291 : vector<16x32xf32>
    %293 = arith.mulf %286, %292 : vector<16x32xf32>
    %294 = vector.extract_strided_slice %0 {offsets = [0, 12, 0], sizes = [16, 1, 64], strides = [1, 1, 1]} : vector<16x24x64xbf16> to vector<16x1x64xbf16>
    %295 = vector.shape_cast %294 : vector<16x1x64xbf16> to vector<16x64xbf16>
    %cst_45 = arith.constant dense<0.000000e+00> : vector<16x128xf32>
    %296 = tpu.matmul %295, %1, %cst_45 {dimension_numbers = #tpu.dot_dimension_numbers<[1], [0], [0], [1], [0, 0, 1, 1], [], []>} : vector<16x64xbf16>, vector<64x128xbf16>, vector<16x128xf32> -> vector<16x128xf32>
    %297 = arith.truncf %293 : vector<16x32xf32> to vector<16x32xbf16>
    %cst_46 = arith.constant dense<0.000000e+00> : vector<16x128xf32>
    %298 = tpu.matmul %297, %2, %cst_46 {dimension_numbers = #tpu.dot_dimension_numbers<[1], [0], [0], [1], [0, 0, 1, 1], [], []>} : vector<16x32xbf16>, vector<32x128xbf16>, vector<16x128xf32> -> vector<16x128xf32>
    %299 = arith.addf %296, %298 : vector<16x128xf32>
    %300 = vector.broadcast %3 : vector<1x128xf32> to vector<16x128xf32>
    %301 = arith.addf %299, %300 : vector<16x128xf32>
    %302 = vector.extract_strided_slice %301 {offsets = [0, 0], sizes = [16, 96], strides = [1, 1]} : vector<16x128xf32> to vector<16x96xf32>
    %303 = arith.negf %302 : vector<16x96xf32>
    %304 = math.exp %303 : vector<16x96xf32>
    %cst_47 = arith.constant 1.000000e+00 : f32
    %305 = vector.broadcast %cst_47 : f32 to vector<16x96xf32>
    %306 = arith.addf %305, %304 : vector<16x96xf32>
    %307 = arith.divf %305, %306 : vector<16x96xf32>
    %308 = vector.extract_strided_slice %307 {offsets = [0, 0], sizes = [16, 32], strides = [1, 1]} : vector<16x96xf32> to vector<16x32xf32>
    %309 = vector.extract_strided_slice %307 {offsets = [0, 32], sizes = [16, 32], strides = [1, 1]} : vector<16x96xf32> to vector<16x32xf32>
    %310 = vector.extract_strided_slice %307 {offsets = [0, 64], sizes = [16, 32], strides = [1, 1]} : vector<16x96xf32> to vector<16x32xf32>
    %311 = vector.extract_strided_slice %301 {offsets = [0, 96], sizes = [16, 32], strides = [1, 1]} : vector<16x128xf32> to vector<16x32xf32>
    %312 = math.tanh %311 : vector<16x32xf32>
    %313 = arith.mulf %309, %291 : vector<16x32xf32>
    %314 = arith.mulf %308, %312 : vector<16x32xf32>
    %315 = arith.addf %313, %314 : vector<16x32xf32>
    %316 = math.tanh %315 : vector<16x32xf32>
    %317 = arith.mulf %310, %316 : vector<16x32xf32>
    %318 = vector.extract_strided_slice %0 {offsets = [0, 13, 0], sizes = [16, 1, 64], strides = [1, 1, 1]} : vector<16x24x64xbf16> to vector<16x1x64xbf16>
    %319 = vector.shape_cast %318 : vector<16x1x64xbf16> to vector<16x64xbf16>
    %cst_48 = arith.constant dense<0.000000e+00> : vector<16x128xf32>
    %320 = tpu.matmul %319, %1, %cst_48 {dimension_numbers = #tpu.dot_dimension_numbers<[1], [0], [0], [1], [0, 0, 1, 1], [], []>} : vector<16x64xbf16>, vector<64x128xbf16>, vector<16x128xf32> -> vector<16x128xf32>
    %321 = arith.truncf %317 : vector<16x32xf32> to vector<16x32xbf16>
    %cst_49 = arith.constant dense<0.000000e+00> : vector<16x128xf32>
    %322 = tpu.matmul %321, %2, %cst_49 {dimension_numbers = #tpu.dot_dimension_numbers<[1], [0], [0], [1], [0, 0, 1, 1], [], []>} : vector<16x32xbf16>, vector<32x128xbf16>, vector<16x128xf32> -> vector<16x128xf32>
    %323 = arith.addf %320, %322 : vector<16x128xf32>
    %324 = vector.broadcast %3 : vector<1x128xf32> to vector<16x128xf32>
    %325 = arith.addf %323, %324 : vector<16x128xf32>
    %326 = vector.extract_strided_slice %325 {offsets = [0, 0], sizes = [16, 96], strides = [1, 1]} : vector<16x128xf32> to vector<16x96xf32>
    %327 = arith.negf %326 : vector<16x96xf32>
    %328 = math.exp %327 : vector<16x96xf32>
    %cst_50 = arith.constant 1.000000e+00 : f32
    %329 = vector.broadcast %cst_50 : f32 to vector<16x96xf32>
    %330 = arith.addf %329, %328 : vector<16x96xf32>
    %331 = arith.divf %329, %330 : vector<16x96xf32>
    %332 = vector.extract_strided_slice %331 {offsets = [0, 0], sizes = [16, 32], strides = [1, 1]} : vector<16x96xf32> to vector<16x32xf32>
    %333 = vector.extract_strided_slice %331 {offsets = [0, 32], sizes = [16, 32], strides = [1, 1]} : vector<16x96xf32> to vector<16x32xf32>
    %334 = vector.extract_strided_slice %331 {offsets = [0, 64], sizes = [16, 32], strides = [1, 1]} : vector<16x96xf32> to vector<16x32xf32>
    %335 = vector.extract_strided_slice %325 {offsets = [0, 96], sizes = [16, 32], strides = [1, 1]} : vector<16x128xf32> to vector<16x32xf32>
    %336 = math.tanh %335 : vector<16x32xf32>
    %337 = arith.mulf %333, %315 : vector<16x32xf32>
    %338 = arith.mulf %332, %336 : vector<16x32xf32>
    %339 = arith.addf %337, %338 : vector<16x32xf32>
    %340 = math.tanh %339 : vector<16x32xf32>
    %341 = arith.mulf %334, %340 : vector<16x32xf32>
    %342 = vector.extract_strided_slice %0 {offsets = [0, 14, 0], sizes = [16, 1, 64], strides = [1, 1, 1]} : vector<16x24x64xbf16> to vector<16x1x64xbf16>
    %343 = vector.shape_cast %342 : vector<16x1x64xbf16> to vector<16x64xbf16>
    %cst_51 = arith.constant dense<0.000000e+00> : vector<16x128xf32>
    %344 = tpu.matmul %343, %1, %cst_51 {dimension_numbers = #tpu.dot_dimension_numbers<[1], [0], [0], [1], [0, 0, 1, 1], [], []>} : vector<16x64xbf16>, vector<64x128xbf16>, vector<16x128xf32> -> vector<16x128xf32>
    %345 = arith.truncf %341 : vector<16x32xf32> to vector<16x32xbf16>
    %cst_52 = arith.constant dense<0.000000e+00> : vector<16x128xf32>
    %346 = tpu.matmul %345, %2, %cst_52 {dimension_numbers = #tpu.dot_dimension_numbers<[1], [0], [0], [1], [0, 0, 1, 1], [], []>} : vector<16x32xbf16>, vector<32x128xbf16>, vector<16x128xf32> -> vector<16x128xf32>
    %347 = arith.addf %344, %346 : vector<16x128xf32>
    %348 = vector.broadcast %3 : vector<1x128xf32> to vector<16x128xf32>
    %349 = arith.addf %347, %348 : vector<16x128xf32>
    %350 = vector.extract_strided_slice %349 {offsets = [0, 0], sizes = [16, 96], strides = [1, 1]} : vector<16x128xf32> to vector<16x96xf32>
    %351 = arith.negf %350 : vector<16x96xf32>
    %352 = math.exp %351 : vector<16x96xf32>
    %cst_53 = arith.constant 1.000000e+00 : f32
    %353 = vector.broadcast %cst_53 : f32 to vector<16x96xf32>
    %354 = arith.addf %353, %352 : vector<16x96xf32>
    %355 = arith.divf %353, %354 : vector<16x96xf32>
    %356 = vector.extract_strided_slice %355 {offsets = [0, 0], sizes = [16, 32], strides = [1, 1]} : vector<16x96xf32> to vector<16x32xf32>
    %357 = vector.extract_strided_slice %355 {offsets = [0, 32], sizes = [16, 32], strides = [1, 1]} : vector<16x96xf32> to vector<16x32xf32>
    %358 = vector.extract_strided_slice %355 {offsets = [0, 64], sizes = [16, 32], strides = [1, 1]} : vector<16x96xf32> to vector<16x32xf32>
    %359 = vector.extract_strided_slice %349 {offsets = [0, 96], sizes = [16, 32], strides = [1, 1]} : vector<16x128xf32> to vector<16x32xf32>
    %360 = math.tanh %359 : vector<16x32xf32>
    %361 = arith.mulf %357, %339 : vector<16x32xf32>
    %362 = arith.mulf %356, %360 : vector<16x32xf32>
    %363 = arith.addf %361, %362 : vector<16x32xf32>
    %364 = math.tanh %363 : vector<16x32xf32>
    %365 = arith.mulf %358, %364 : vector<16x32xf32>
    %366 = vector.extract_strided_slice %0 {offsets = [0, 15, 0], sizes = [16, 1, 64], strides = [1, 1, 1]} : vector<16x24x64xbf16> to vector<16x1x64xbf16>
    %367 = vector.shape_cast %366 : vector<16x1x64xbf16> to vector<16x64xbf16>
    %cst_54 = arith.constant dense<0.000000e+00> : vector<16x128xf32>
    %368 = tpu.matmul %367, %1, %cst_54 {dimension_numbers = #tpu.dot_dimension_numbers<[1], [0], [0], [1], [0, 0, 1, 1], [], []>} : vector<16x64xbf16>, vector<64x128xbf16>, vector<16x128xf32> -> vector<16x128xf32>
    %369 = arith.truncf %365 : vector<16x32xf32> to vector<16x32xbf16>
    %cst_55 = arith.constant dense<0.000000e+00> : vector<16x128xf32>
    %370 = tpu.matmul %369, %2, %cst_55 {dimension_numbers = #tpu.dot_dimension_numbers<[1], [0], [0], [1], [0, 0, 1, 1], [], []>} : vector<16x32xbf16>, vector<32x128xbf16>, vector<16x128xf32> -> vector<16x128xf32>
    %371 = arith.addf %368, %370 : vector<16x128xf32>
    %372 = vector.broadcast %3 : vector<1x128xf32> to vector<16x128xf32>
    %373 = arith.addf %371, %372 : vector<16x128xf32>
    %374 = vector.extract_strided_slice %373 {offsets = [0, 0], sizes = [16, 96], strides = [1, 1]} : vector<16x128xf32> to vector<16x96xf32>
    %375 = arith.negf %374 : vector<16x96xf32>
    %376 = math.exp %375 : vector<16x96xf32>
    %cst_56 = arith.constant 1.000000e+00 : f32
    %377 = vector.broadcast %cst_56 : f32 to vector<16x96xf32>
    %378 = arith.addf %377, %376 : vector<16x96xf32>
    %379 = arith.divf %377, %378 : vector<16x96xf32>
    %380 = vector.extract_strided_slice %379 {offsets = [0, 0], sizes = [16, 32], strides = [1, 1]} : vector<16x96xf32> to vector<16x32xf32>
    %381 = vector.extract_strided_slice %379 {offsets = [0, 32], sizes = [16, 32], strides = [1, 1]} : vector<16x96xf32> to vector<16x32xf32>
    %382 = vector.extract_strided_slice %379 {offsets = [0, 64], sizes = [16, 32], strides = [1, 1]} : vector<16x96xf32> to vector<16x32xf32>
    %383 = vector.extract_strided_slice %373 {offsets = [0, 96], sizes = [16, 32], strides = [1, 1]} : vector<16x128xf32> to vector<16x32xf32>
    %384 = math.tanh %383 : vector<16x32xf32>
    %385 = arith.mulf %381, %363 : vector<16x32xf32>
    %386 = arith.mulf %380, %384 : vector<16x32xf32>
    %387 = arith.addf %385, %386 : vector<16x32xf32>
    %388 = math.tanh %387 : vector<16x32xf32>
    %389 = arith.mulf %382, %388 : vector<16x32xf32>
    %390 = vector.extract_strided_slice %0 {offsets = [0, 16, 0], sizes = [16, 1, 64], strides = [1, 1, 1]} : vector<16x24x64xbf16> to vector<16x1x64xbf16>
    %391 = vector.shape_cast %390 : vector<16x1x64xbf16> to vector<16x64xbf16>
    %cst_57 = arith.constant dense<0.000000e+00> : vector<16x128xf32>
    %392 = tpu.matmul %391, %1, %cst_57 {dimension_numbers = #tpu.dot_dimension_numbers<[1], [0], [0], [1], [0, 0, 1, 1], [], []>} : vector<16x64xbf16>, vector<64x128xbf16>, vector<16x128xf32> -> vector<16x128xf32>
    %393 = arith.truncf %389 : vector<16x32xf32> to vector<16x32xbf16>
    %cst_58 = arith.constant dense<0.000000e+00> : vector<16x128xf32>
    %394 = tpu.matmul %393, %2, %cst_58 {dimension_numbers = #tpu.dot_dimension_numbers<[1], [0], [0], [1], [0, 0, 1, 1], [], []>} : vector<16x32xbf16>, vector<32x128xbf16>, vector<16x128xf32> -> vector<16x128xf32>
    %395 = arith.addf %392, %394 : vector<16x128xf32>
    %396 = vector.broadcast %3 : vector<1x128xf32> to vector<16x128xf32>
    %397 = arith.addf %395, %396 : vector<16x128xf32>
    %398 = vector.extract_strided_slice %397 {offsets = [0, 0], sizes = [16, 96], strides = [1, 1]} : vector<16x128xf32> to vector<16x96xf32>
    %399 = arith.negf %398 : vector<16x96xf32>
    %400 = math.exp %399 : vector<16x96xf32>
    %cst_59 = arith.constant 1.000000e+00 : f32
    %401 = vector.broadcast %cst_59 : f32 to vector<16x96xf32>
    %402 = arith.addf %401, %400 : vector<16x96xf32>
    %403 = arith.divf %401, %402 : vector<16x96xf32>
    %404 = vector.extract_strided_slice %403 {offsets = [0, 0], sizes = [16, 32], strides = [1, 1]} : vector<16x96xf32> to vector<16x32xf32>
    %405 = vector.extract_strided_slice %403 {offsets = [0, 32], sizes = [16, 32], strides = [1, 1]} : vector<16x96xf32> to vector<16x32xf32>
    %406 = vector.extract_strided_slice %403 {offsets = [0, 64], sizes = [16, 32], strides = [1, 1]} : vector<16x96xf32> to vector<16x32xf32>
    %407 = vector.extract_strided_slice %397 {offsets = [0, 96], sizes = [16, 32], strides = [1, 1]} : vector<16x128xf32> to vector<16x32xf32>
    %408 = math.tanh %407 : vector<16x32xf32>
    %409 = arith.mulf %405, %387 : vector<16x32xf32>
    %410 = arith.mulf %404, %408 : vector<16x32xf32>
    %411 = arith.addf %409, %410 : vector<16x32xf32>
    %412 = math.tanh %411 : vector<16x32xf32>
    %413 = arith.mulf %406, %412 : vector<16x32xf32>
    %414 = vector.extract_strided_slice %0 {offsets = [0, 17, 0], sizes = [16, 1, 64], strides = [1, 1, 1]} : vector<16x24x64xbf16> to vector<16x1x64xbf16>
    %415 = vector.shape_cast %414 : vector<16x1x64xbf16> to vector<16x64xbf16>
    %cst_60 = arith.constant dense<0.000000e+00> : vector<16x128xf32>
    %416 = tpu.matmul %415, %1, %cst_60 {dimension_numbers = #tpu.dot_dimension_numbers<[1], [0], [0], [1], [0, 0, 1, 1], [], []>} : vector<16x64xbf16>, vector<64x128xbf16>, vector<16x128xf32> -> vector<16x128xf32>
    %417 = arith.truncf %413 : vector<16x32xf32> to vector<16x32xbf16>
    %cst_61 = arith.constant dense<0.000000e+00> : vector<16x128xf32>
    %418 = tpu.matmul %417, %2, %cst_61 {dimension_numbers = #tpu.dot_dimension_numbers<[1], [0], [0], [1], [0, 0, 1, 1], [], []>} : vector<16x32xbf16>, vector<32x128xbf16>, vector<16x128xf32> -> vector<16x128xf32>
    %419 = arith.addf %416, %418 : vector<16x128xf32>
    %420 = vector.broadcast %3 : vector<1x128xf32> to vector<16x128xf32>
    %421 = arith.addf %419, %420 : vector<16x128xf32>
    %422 = vector.extract_strided_slice %421 {offsets = [0, 0], sizes = [16, 96], strides = [1, 1]} : vector<16x128xf32> to vector<16x96xf32>
    %423 = arith.negf %422 : vector<16x96xf32>
    %424 = math.exp %423 : vector<16x96xf32>
    %cst_62 = arith.constant 1.000000e+00 : f32
    %425 = vector.broadcast %cst_62 : f32 to vector<16x96xf32>
    %426 = arith.addf %425, %424 : vector<16x96xf32>
    %427 = arith.divf %425, %426 : vector<16x96xf32>
    %428 = vector.extract_strided_slice %427 {offsets = [0, 0], sizes = [16, 32], strides = [1, 1]} : vector<16x96xf32> to vector<16x32xf32>
    %429 = vector.extract_strided_slice %427 {offsets = [0, 32], sizes = [16, 32], strides = [1, 1]} : vector<16x96xf32> to vector<16x32xf32>
    %430 = vector.extract_strided_slice %427 {offsets = [0, 64], sizes = [16, 32], strides = [1, 1]} : vector<16x96xf32> to vector<16x32xf32>
    %431 = vector.extract_strided_slice %421 {offsets = [0, 96], sizes = [16, 32], strides = [1, 1]} : vector<16x128xf32> to vector<16x32xf32>
    %432 = math.tanh %431 : vector<16x32xf32>
    %433 = arith.mulf %429, %411 : vector<16x32xf32>
    %434 = arith.mulf %428, %432 : vector<16x32xf32>
    %435 = arith.addf %433, %434 : vector<16x32xf32>
    %436 = math.tanh %435 : vector<16x32xf32>
    %437 = arith.mulf %430, %436 : vector<16x32xf32>
    %438 = vector.extract_strided_slice %0 {offsets = [0, 18, 0], sizes = [16, 1, 64], strides = [1, 1, 1]} : vector<16x24x64xbf16> to vector<16x1x64xbf16>
    %439 = vector.shape_cast %438 : vector<16x1x64xbf16> to vector<16x64xbf16>
    %cst_63 = arith.constant dense<0.000000e+00> : vector<16x128xf32>
    %440 = tpu.matmul %439, %1, %cst_63 {dimension_numbers = #tpu.dot_dimension_numbers<[1], [0], [0], [1], [0, 0, 1, 1], [], []>} : vector<16x64xbf16>, vector<64x128xbf16>, vector<16x128xf32> -> vector<16x128xf32>
    %441 = arith.truncf %437 : vector<16x32xf32> to vector<16x32xbf16>
    %cst_64 = arith.constant dense<0.000000e+00> : vector<16x128xf32>
    %442 = tpu.matmul %441, %2, %cst_64 {dimension_numbers = #tpu.dot_dimension_numbers<[1], [0], [0], [1], [0, 0, 1, 1], [], []>} : vector<16x32xbf16>, vector<32x128xbf16>, vector<16x128xf32> -> vector<16x128xf32>
    %443 = arith.addf %440, %442 : vector<16x128xf32>
    %444 = vector.broadcast %3 : vector<1x128xf32> to vector<16x128xf32>
    %445 = arith.addf %443, %444 : vector<16x128xf32>
    %446 = vector.extract_strided_slice %445 {offsets = [0, 0], sizes = [16, 96], strides = [1, 1]} : vector<16x128xf32> to vector<16x96xf32>
    %447 = arith.negf %446 : vector<16x96xf32>
    %448 = math.exp %447 : vector<16x96xf32>
    %cst_65 = arith.constant 1.000000e+00 : f32
    %449 = vector.broadcast %cst_65 : f32 to vector<16x96xf32>
    %450 = arith.addf %449, %448 : vector<16x96xf32>
    %451 = arith.divf %449, %450 : vector<16x96xf32>
    %452 = vector.extract_strided_slice %451 {offsets = [0, 0], sizes = [16, 32], strides = [1, 1]} : vector<16x96xf32> to vector<16x32xf32>
    %453 = vector.extract_strided_slice %451 {offsets = [0, 32], sizes = [16, 32], strides = [1, 1]} : vector<16x96xf32> to vector<16x32xf32>
    %454 = vector.extract_strided_slice %451 {offsets = [0, 64], sizes = [16, 32], strides = [1, 1]} : vector<16x96xf32> to vector<16x32xf32>
    %455 = vector.extract_strided_slice %445 {offsets = [0, 96], sizes = [16, 32], strides = [1, 1]} : vector<16x128xf32> to vector<16x32xf32>
    %456 = math.tanh %455 : vector<16x32xf32>
    %457 = arith.mulf %453, %435 : vector<16x32xf32>
    %458 = arith.mulf %452, %456 : vector<16x32xf32>
    %459 = arith.addf %457, %458 : vector<16x32xf32>
    %460 = math.tanh %459 : vector<16x32xf32>
    %461 = arith.mulf %454, %460 : vector<16x32xf32>
    %462 = vector.extract_strided_slice %0 {offsets = [0, 19, 0], sizes = [16, 1, 64], strides = [1, 1, 1]} : vector<16x24x64xbf16> to vector<16x1x64xbf16>
    %463 = vector.shape_cast %462 : vector<16x1x64xbf16> to vector<16x64xbf16>
    %cst_66 = arith.constant dense<0.000000e+00> : vector<16x128xf32>
    %464 = tpu.matmul %463, %1, %cst_66 {dimension_numbers = #tpu.dot_dimension_numbers<[1], [0], [0], [1], [0, 0, 1, 1], [], []>} : vector<16x64xbf16>, vector<64x128xbf16>, vector<16x128xf32> -> vector<16x128xf32>
    %465 = arith.truncf %461 : vector<16x32xf32> to vector<16x32xbf16>
    %cst_67 = arith.constant dense<0.000000e+00> : vector<16x128xf32>
    %466 = tpu.matmul %465, %2, %cst_67 {dimension_numbers = #tpu.dot_dimension_numbers<[1], [0], [0], [1], [0, 0, 1, 1], [], []>} : vector<16x32xbf16>, vector<32x128xbf16>, vector<16x128xf32> -> vector<16x128xf32>
    %467 = arith.addf %464, %466 : vector<16x128xf32>
    %468 = vector.broadcast %3 : vector<1x128xf32> to vector<16x128xf32>
    %469 = arith.addf %467, %468 : vector<16x128xf32>
    %470 = vector.extract_strided_slice %469 {offsets = [0, 0], sizes = [16, 96], strides = [1, 1]} : vector<16x128xf32> to vector<16x96xf32>
    %471 = arith.negf %470 : vector<16x96xf32>
    %472 = math.exp %471 : vector<16x96xf32>
    %cst_68 = arith.constant 1.000000e+00 : f32
    %473 = vector.broadcast %cst_68 : f32 to vector<16x96xf32>
    %474 = arith.addf %473, %472 : vector<16x96xf32>
    %475 = arith.divf %473, %474 : vector<16x96xf32>
    %476 = vector.extract_strided_slice %475 {offsets = [0, 0], sizes = [16, 32], strides = [1, 1]} : vector<16x96xf32> to vector<16x32xf32>
    %477 = vector.extract_strided_slice %475 {offsets = [0, 32], sizes = [16, 32], strides = [1, 1]} : vector<16x96xf32> to vector<16x32xf32>
    %478 = vector.extract_strided_slice %475 {offsets = [0, 64], sizes = [16, 32], strides = [1, 1]} : vector<16x96xf32> to vector<16x32xf32>
    %479 = vector.extract_strided_slice %469 {offsets = [0, 96], sizes = [16, 32], strides = [1, 1]} : vector<16x128xf32> to vector<16x32xf32>
    %480 = math.tanh %479 : vector<16x32xf32>
    %481 = arith.mulf %477, %459 : vector<16x32xf32>
    %482 = arith.mulf %476, %480 : vector<16x32xf32>
    %483 = arith.addf %481, %482 : vector<16x32xf32>
    %484 = math.tanh %483 : vector<16x32xf32>
    %485 = arith.mulf %478, %484 : vector<16x32xf32>
    %486 = vector.extract_strided_slice %0 {offsets = [0, 20, 0], sizes = [16, 1, 64], strides = [1, 1, 1]} : vector<16x24x64xbf16> to vector<16x1x64xbf16>
    %487 = vector.shape_cast %486 : vector<16x1x64xbf16> to vector<16x64xbf16>
    %cst_69 = arith.constant dense<0.000000e+00> : vector<16x128xf32>
    %488 = tpu.matmul %487, %1, %cst_69 {dimension_numbers = #tpu.dot_dimension_numbers<[1], [0], [0], [1], [0, 0, 1, 1], [], []>} : vector<16x64xbf16>, vector<64x128xbf16>, vector<16x128xf32> -> vector<16x128xf32>
    %489 = arith.truncf %485 : vector<16x32xf32> to vector<16x32xbf16>
    %cst_70 = arith.constant dense<0.000000e+00> : vector<16x128xf32>
    %490 = tpu.matmul %489, %2, %cst_70 {dimension_numbers = #tpu.dot_dimension_numbers<[1], [0], [0], [1], [0, 0, 1, 1], [], []>} : vector<16x32xbf16>, vector<32x128xbf16>, vector<16x128xf32> -> vector<16x128xf32>
    %491 = arith.addf %488, %490 : vector<16x128xf32>
    %492 = vector.broadcast %3 : vector<1x128xf32> to vector<16x128xf32>
    %493 = arith.addf %491, %492 : vector<16x128xf32>
    %494 = vector.extract_strided_slice %493 {offsets = [0, 0], sizes = [16, 96], strides = [1, 1]} : vector<16x128xf32> to vector<16x96xf32>
    %495 = arith.negf %494 : vector<16x96xf32>
    %496 = math.exp %495 : vector<16x96xf32>
    %cst_71 = arith.constant 1.000000e+00 : f32
    %497 = vector.broadcast %cst_71 : f32 to vector<16x96xf32>
    %498 = arith.addf %497, %496 : vector<16x96xf32>
    %499 = arith.divf %497, %498 : vector<16x96xf32>
    %500 = vector.extract_strided_slice %499 {offsets = [0, 0], sizes = [16, 32], strides = [1, 1]} : vector<16x96xf32> to vector<16x32xf32>
    %501 = vector.extract_strided_slice %499 {offsets = [0, 32], sizes = [16, 32], strides = [1, 1]} : vector<16x96xf32> to vector<16x32xf32>
    %502 = vector.extract_strided_slice %499 {offsets = [0, 64], sizes = [16, 32], strides = [1, 1]} : vector<16x96xf32> to vector<16x32xf32>
    %503 = vector.extract_strided_slice %493 {offsets = [0, 96], sizes = [16, 32], strides = [1, 1]} : vector<16x128xf32> to vector<16x32xf32>
    %504 = math.tanh %503 : vector<16x32xf32>
    %505 = arith.mulf %501, %483 : vector<16x32xf32>
    %506 = arith.mulf %500, %504 : vector<16x32xf32>
    %507 = arith.addf %505, %506 : vector<16x32xf32>
    %508 = math.tanh %507 : vector<16x32xf32>
    %509 = arith.mulf %502, %508 : vector<16x32xf32>
    %510 = vector.extract_strided_slice %0 {offsets = [0, 21, 0], sizes = [16, 1, 64], strides = [1, 1, 1]} : vector<16x24x64xbf16> to vector<16x1x64xbf16>
    %511 = vector.shape_cast %510 : vector<16x1x64xbf16> to vector<16x64xbf16>
    %cst_72 = arith.constant dense<0.000000e+00> : vector<16x128xf32>
    %512 = tpu.matmul %511, %1, %cst_72 {dimension_numbers = #tpu.dot_dimension_numbers<[1], [0], [0], [1], [0, 0, 1, 1], [], []>} : vector<16x64xbf16>, vector<64x128xbf16>, vector<16x128xf32> -> vector<16x128xf32>
    %513 = arith.truncf %509 : vector<16x32xf32> to vector<16x32xbf16>
    %cst_73 = arith.constant dense<0.000000e+00> : vector<16x128xf32>
    %514 = tpu.matmul %513, %2, %cst_73 {dimension_numbers = #tpu.dot_dimension_numbers<[1], [0], [0], [1], [0, 0, 1, 1], [], []>} : vector<16x32xbf16>, vector<32x128xbf16>, vector<16x128xf32> -> vector<16x128xf32>
    %515 = arith.addf %512, %514 : vector<16x128xf32>
    %516 = vector.broadcast %3 : vector<1x128xf32> to vector<16x128xf32>
    %517 = arith.addf %515, %516 : vector<16x128xf32>
    %518 = vector.extract_strided_slice %517 {offsets = [0, 0], sizes = [16, 96], strides = [1, 1]} : vector<16x128xf32> to vector<16x96xf32>
    %519 = arith.negf %518 : vector<16x96xf32>
    %520 = math.exp %519 : vector<16x96xf32>
    %cst_74 = arith.constant 1.000000e+00 : f32
    %521 = vector.broadcast %cst_74 : f32 to vector<16x96xf32>
    %522 = arith.addf %521, %520 : vector<16x96xf32>
    %523 = arith.divf %521, %522 : vector<16x96xf32>
    %524 = vector.extract_strided_slice %523 {offsets = [0, 0], sizes = [16, 32], strides = [1, 1]} : vector<16x96xf32> to vector<16x32xf32>
    %525 = vector.extract_strided_slice %523 {offsets = [0, 32], sizes = [16, 32], strides = [1, 1]} : vector<16x96xf32> to vector<16x32xf32>
    %526 = vector.extract_strided_slice %523 {offsets = [0, 64], sizes = [16, 32], strides = [1, 1]} : vector<16x96xf32> to vector<16x32xf32>
    %527 = vector.extract_strided_slice %517 {offsets = [0, 96], sizes = [16, 32], strides = [1, 1]} : vector<16x128xf32> to vector<16x32xf32>
    %528 = math.tanh %527 : vector<16x32xf32>
    %529 = arith.mulf %525, %507 : vector<16x32xf32>
    %530 = arith.mulf %524, %528 : vector<16x32xf32>
    %531 = arith.addf %529, %530 : vector<16x32xf32>
    %532 = math.tanh %531 : vector<16x32xf32>
    %533 = arith.mulf %526, %532 : vector<16x32xf32>
    %534 = vector.extract_strided_slice %0 {offsets = [0, 22, 0], sizes = [16, 1, 64], strides = [1, 1, 1]} : vector<16x24x64xbf16> to vector<16x1x64xbf16>
    %535 = vector.shape_cast %534 : vector<16x1x64xbf16> to vector<16x64xbf16>
    %cst_75 = arith.constant dense<0.000000e+00> : vector<16x128xf32>
    %536 = tpu.matmul %535, %1, %cst_75 {dimension_numbers = #tpu.dot_dimension_numbers<[1], [0], [0], [1], [0, 0, 1, 1], [], []>} : vector<16x64xbf16>, vector<64x128xbf16>, vector<16x128xf32> -> vector<16x128xf32>
    %537 = arith.truncf %533 : vector<16x32xf32> to vector<16x32xbf16>
    %cst_76 = arith.constant dense<0.000000e+00> : vector<16x128xf32>
    %538 = tpu.matmul %537, %2, %cst_76 {dimension_numbers = #tpu.dot_dimension_numbers<[1], [0], [0], [1], [0, 0, 1, 1], [], []>} : vector<16x32xbf16>, vector<32x128xbf16>, vector<16x128xf32> -> vector<16x128xf32>
    %539 = arith.addf %536, %538 : vector<16x128xf32>
    %540 = vector.broadcast %3 : vector<1x128xf32> to vector<16x128xf32>
    %541 = arith.addf %539, %540 : vector<16x128xf32>
    %542 = vector.extract_strided_slice %541 {offsets = [0, 0], sizes = [16, 96], strides = [1, 1]} : vector<16x128xf32> to vector<16x96xf32>
    %543 = arith.negf %542 : vector<16x96xf32>
    %544 = math.exp %543 : vector<16x96xf32>
    %cst_77 = arith.constant 1.000000e+00 : f32
    %545 = vector.broadcast %cst_77 : f32 to vector<16x96xf32>
    %546 = arith.addf %545, %544 : vector<16x96xf32>
    %547 = arith.divf %545, %546 : vector<16x96xf32>
    %548 = vector.extract_strided_slice %547 {offsets = [0, 0], sizes = [16, 32], strides = [1, 1]} : vector<16x96xf32> to vector<16x32xf32>
    %549 = vector.extract_strided_slice %547 {offsets = [0, 32], sizes = [16, 32], strides = [1, 1]} : vector<16x96xf32> to vector<16x32xf32>
    %550 = vector.extract_strided_slice %547 {offsets = [0, 64], sizes = [16, 32], strides = [1, 1]} : vector<16x96xf32> to vector<16x32xf32>
    %551 = vector.extract_strided_slice %541 {offsets = [0, 96], sizes = [16, 32], strides = [1, 1]} : vector<16x128xf32> to vector<16x32xf32>
    %552 = math.tanh %551 : vector<16x32xf32>
    %553 = arith.mulf %549, %531 : vector<16x32xf32>
    %554 = arith.mulf %548, %552 : vector<16x32xf32>
    %555 = arith.addf %553, %554 : vector<16x32xf32>
    %556 = math.tanh %555 : vector<16x32xf32>
    %557 = arith.mulf %550, %556 : vector<16x32xf32>
    %558 = vector.extract_strided_slice %0 {offsets = [0, 23, 0], sizes = [16, 1, 64], strides = [1, 1, 1]} : vector<16x24x64xbf16> to vector<16x1x64xbf16>
    %559 = vector.shape_cast %558 : vector<16x1x64xbf16> to vector<16x64xbf16>
    %cst_78 = arith.constant dense<0.000000e+00> : vector<16x128xf32>
    %560 = tpu.matmul %559, %1, %cst_78 {dimension_numbers = #tpu.dot_dimension_numbers<[1], [0], [0], [1], [0, 0, 1, 1], [], []>} : vector<16x64xbf16>, vector<64x128xbf16>, vector<16x128xf32> -> vector<16x128xf32>
    %561 = arith.truncf %557 : vector<16x32xf32> to vector<16x32xbf16>
    %cst_79 = arith.constant dense<0.000000e+00> : vector<16x128xf32>
    %562 = tpu.matmul %561, %2, %cst_79 {dimension_numbers = #tpu.dot_dimension_numbers<[1], [0], [0], [1], [0, 0, 1, 1], [], []>} : vector<16x32xbf16>, vector<32x128xbf16>, vector<16x128xf32> -> vector<16x128xf32>
    %563 = arith.addf %560, %562 : vector<16x128xf32>
    %564 = vector.broadcast %3 : vector<1x128xf32> to vector<16x128xf32>
    %565 = arith.addf %563, %564 : vector<16x128xf32>
    %566 = vector.extract_strided_slice %565 {offsets = [0, 0], sizes = [16, 96], strides = [1, 1]} : vector<16x128xf32> to vector<16x96xf32>
    %567 = arith.negf %566 : vector<16x96xf32>
    %568 = math.exp %567 : vector<16x96xf32>
    %cst_80 = arith.constant 1.000000e+00 : f32
    %569 = vector.broadcast %cst_80 : f32 to vector<16x96xf32>
    %570 = arith.addf %569, %568 : vector<16x96xf32>
    %571 = arith.divf %569, %570 : vector<16x96xf32>
    %572 = vector.extract_strided_slice %571 {offsets = [0, 0], sizes = [16, 32], strides = [1, 1]} : vector<16x96xf32> to vector<16x32xf32>
    %573 = vector.extract_strided_slice %571 {offsets = [0, 32], sizes = [16, 32], strides = [1, 1]} : vector<16x96xf32> to vector<16x32xf32>
    %574 = vector.extract_strided_slice %571 {offsets = [0, 64], sizes = [16, 32], strides = [1, 1]} : vector<16x96xf32> to vector<16x32xf32>
    %575 = vector.extract_strided_slice %565 {offsets = [0, 96], sizes = [16, 32], strides = [1, 1]} : vector<16x128xf32> to vector<16x32xf32>
    %576 = math.tanh %575 : vector<16x32xf32>
    %577 = arith.mulf %573, %555 : vector<16x32xf32>
    %578 = arith.mulf %572, %576 : vector<16x32xf32>
    %579 = arith.addf %577, %578 : vector<16x32xf32>
    %580 = math.tanh %579 : vector<16x32xf32>
    %581 = arith.mulf %574, %580 : vector<16x32xf32>
    %c0_81 = arith.constant 0 : index
    %c0_82 = arith.constant 0 : index
    %582 = vector.load %arg5[%c0_81, %c0_82] : memref<16x32xf32, #tpu.memory_space<vmem>>, vector<16x32xf32>
    tpu.vector_store %arg5[%c0_81, %c0_82], %581 {strides = array<i32>} : memref<16x32xf32, #tpu.memory_space<vmem>>, vector<16x32xf32>,
    return
  }
  func.func @transform_0(%arg0: i32) -> (i32, i32, i32) {
    %c0_i32 = arith.constant 0 : i32
    %c0_i32_0 = arith.constant 0 : i32
    %c0_i32_1 = arith.constant 0 : i32
    return %arg0, %c0_i32, %c0_i32_0 : i32, i32, i32
  }
  func.func @transform_1(%arg0: i32) -> (i32, i32) {
    %c0_i32 = arith.constant 0 : i32
    %c0_i32_0 = arith.constant 0 : i32
    %c0_i32_1 = arith.constant 0 : i32
    return %c0_i32, %c0_i32_0 : i32, i32
  }
  func.func @transform_2(%arg0: i32) -> (i32, i32) {
    %c0_i32 = arith.constant 0 : i32
    %c0_i32_0 = arith.constant 0 : i32
    %c0_i32_1 = arith.constant 0 : i32
    return %c0_i32, %c0_i32_0 : i32, i32
  }
  func.func @transform_3(%arg0: i32) -> (i32, i32) {
    %c0_i32 = arith.constant 0 : i32
    %c0_i32_0 = arith.constant 0 : i32
    %c0_i32_1 = arith.constant 0 : i32
    return %c0_i32, %c0_i32_0 : i32, i32
  }
  func.func @transform_4(%arg0: i32) -> (i32, i32) {
    %c0_i32 = arith.constant 0 : i32
    %c0_i32_0 = arith.constant 0 : i32
    return %arg0, %c0_i32 : i32, i32
  }
}

module attributes {stable_mosaic.version = 11 : i64} {
  func.func @_lstm_pool_kernel(%arg0: i32, %arg1: memref<16x24x64xbf16, #tpu.memory_space<vmem>>, %arg2: memref<64x128xbf16, #tpu.memory_space<vmem>>, %arg3: memref<32x128xbf16, #tpu.memory_space<vmem>>, %arg4: memref<1x128xf32, #tpu.memory_space<vmem>>, %arg5: memref<16x32xf32, #tpu.memory_space<vmem>>) attributes {dimension_semantics = [#tpu.dimension_semantics<parallel>], iteration_bounds = array<i64: 1>, scalar_prefetch = 0 : i64, scratch_operands = 0 : i64, tpu.core_type = #tpu.core_type<tc>, window_params = [{transform_indices = @transform_0, window_bounds = array<i64: 16, 24, 64>}, {pipeline_mode = #tpu.pipeline_mode<synchronous>, transform_indices = @transform_1, window_bounds = array<i64: 64, 128>}, {pipeline_mode = #tpu.pipeline_mode<synchronous>, transform_indices = @transform_2, window_bounds = array<i64: 32, 128>}, {pipeline_mode = #tpu.pipeline_mode<synchronous>, transform_indices = @transform_3, window_bounds = array<i64: 1, 128>}, {transform_indices = @transform_4, window_bounds = array<i64: 16, 32>}]} {
    %c0 = arith.constant 0 : index
    %c0_0 = arith.constant 0 : index
    %c0_1 = arith.constant 0 : index
    %0 = vector.load %arg1[%c0, %c0_0, %c0_1] : memref<16x24x64xbf16, #tpu.memory_space<vmem>>, vector<16x24x64xbf16>
    %c0_2 = arith.constant 0 : index
    %c0_3 = arith.constant 0 : index
    %1 = vector.load %arg2[%c0_2, %c0_3] : memref<64x128xbf16, #tpu.memory_space<vmem>>, vector<64x128xbf16>
    %c0_4 = arith.constant 0 : index
    %c0_5 = arith.constant 0 : index
    %2 = vector.load %arg3[%c0_4, %c0_5] : memref<32x128xbf16, #tpu.memory_space<vmem>>, vector<32x128xbf16>
    %c0_6 = arith.constant 0 : index
    %c0_7 = arith.constant 0 : index
    %3 = vector.load %arg4[%c0_6, %c0_7] : memref<1x128xf32, #tpu.memory_space<vmem>>, vector<1x128xf32>
    %cst = arith.constant 0.000000e+00 : f32
    %4 = vector.broadcast %cst : f32 to vector<16x32xf32>
    %cst_8 = arith.constant 0.000000e+00 : f32
    %5 = vector.broadcast %cst_8 : f32 to vector<16x32xf32>
    %6 = vector.extract_strided_slice %0 {offsets = [0, 0, 0], sizes = [16, 1, 64], strides = [1, 1, 1]} : vector<16x24x64xbf16> to vector<16x1x64xbf16>
    %7 = vector.shape_cast %6 : vector<16x1x64xbf16> to vector<16x64xbf16>
    %cst_9 = arith.constant dense<0.000000e+00> : vector<16x128xf32>
    %8 = tpu.matmul %7, %1, %cst_9 {dimension_numbers = #tpu.dot_dimension_numbers<[1], [0], [0], [1], [0, 0, 1, 1], [], []>} : vector<16x64xbf16>, vector<64x128xbf16>, vector<16x128xf32> -> vector<16x128xf32>
    %9 = arith.truncf %4 : vector<16x32xf32> to vector<16x32xbf16>
    %cst_10 = arith.constant dense<0.000000e+00> : vector<16x128xf32>
    %10 = tpu.matmul %9, %2, %cst_10 {dimension_numbers = #tpu.dot_dimension_numbers<[1], [0], [0], [1], [0, 0, 1, 1], [], []>} : vector<16x32xbf16>, vector<32x128xbf16>, vector<16x128xf32> -> vector<16x128xf32>
    %11 = arith.addf %8, %10 : vector<16x128xf32>
    %12 = vector.broadcast %3 : vector<1x128xf32> to vector<16x128xf32>
    %13 = arith.addf %11, %12 : vector<16x128xf32>
    %14 = vector.extract_strided_slice %13 {offsets = [0, 0], sizes = [16, 96], strides = [1, 1]} : vector<16x128xf32> to vector<16x96xf32>
    %15 = arith.negf %14 : vector<16x96xf32>
    %16 = math.exp %15 : vector<16x96xf32>
    %cst_11 = arith.constant 1.000000e+00 : f32
    %17 = vector.broadcast %cst_11 : f32 to vector<16x96xf32>
    %18 = arith.addf %17, %16 : vector<16x96xf32>
    %19 = arith.divf %17, %18 : vector<16x96xf32>
    %20 = vector.extract_strided_slice %19 {offsets = [0, 0], sizes = [16, 32], strides = [1, 1]} : vector<16x96xf32> to vector<16x32xf32>
    %21 = vector.extract_strided_slice %19 {offsets = [0, 32], sizes = [16, 32], strides = [1, 1]} : vector<16x96xf32> to vector<16x32xf32>
    %22 = vector.extract_strided_slice %19 {offsets = [0, 64], sizes = [16, 32], strides = [1, 1]} : vector<16x96xf32> to vector<16x32xf32>
    %23 = vector.extract_strided_slice %13 {offsets = [0, 96], sizes = [16, 32], strides = [1, 1]} : vector<16x128xf32> to vector<16x32xf32>
    %24 = math.tanh %23 : vector<16x32xf32>
    %25 = arith.mulf %21, %5 : vector<16x32xf32>
    %26 = arith.mulf %20, %24 : vector<16x32xf32>
    %27 = arith.addf %25, %26 : vector<16x32xf32>
    %28 = math.tanh %27 : vector<16x32xf32>
    %29 = arith.mulf %22, %28 : vector<16x32xf32>
    %30 = vector.extract_strided_slice %0 {offsets = [0, 1, 0], sizes = [16, 1, 64], strides = [1, 1, 1]} : vector<16x24x64xbf16> to vector<16x1x64xbf16>
    %31 = vector.shape_cast %30 : vector<16x1x64xbf16> to vector<16x64xbf16>
    %cst_12 = arith.constant dense<0.000000e+00> : vector<16x128xf32>
    %32 = tpu.matmul %31, %1, %cst_12 {dimension_numbers = #tpu.dot_dimension_numbers<[1], [0], [0], [1], [0, 0, 1, 1], [], []>} : vector<16x64xbf16>, vector<64x128xbf16>, vector<16x128xf32> -> vector<16x128xf32>
    %33 = arith.truncf %29 : vector<16x32xf32> to vector<16x32xbf16>
    %cst_13 = arith.constant dense<0.000000e+00> : vector<16x128xf32>
    %34 = tpu.matmul %33, %2, %cst_13 {dimension_numbers = #tpu.dot_dimension_numbers<[1], [0], [0], [1], [0, 0, 1, 1], [], []>} : vector<16x32xbf16>, vector<32x128xbf16>, vector<16x128xf32> -> vector<16x128xf32>
    %35 = arith.addf %32, %34 : vector<16x128xf32>
    %36 = vector.broadcast %3 : vector<1x128xf32> to vector<16x128xf32>
    %37 = arith.addf %35, %36 : vector<16x128xf32>
    %38 = vector.extract_strided_slice %37 {offsets = [0, 0], sizes = [16, 96], strides = [1, 1]} : vector<16x128xf32> to vector<16x96xf32>
    %39 = arith.negf %38 : vector<16x96xf32>
    %40 = math.exp %39 : vector<16x96xf32>
    %cst_14 = arith.constant 1.000000e+00 : f32
    %41 = vector.broadcast %cst_14 : f32 to vector<16x96xf32>
    %42 = arith.addf %41, %40 : vector<16x96xf32>
    %43 = arith.divf %41, %42 : vector<16x96xf32>
    %44 = vector.extract_strided_slice %43 {offsets = [0, 0], sizes = [16, 32], strides = [1, 1]} : vector<16x96xf32> to vector<16x32xf32>
    %45 = vector.extract_strided_slice %43 {offsets = [0, 32], sizes = [16, 32], strides = [1, 1]} : vector<16x96xf32> to vector<16x32xf32>
    %46 = vector.extract_strided_slice %43 {offsets = [0, 64], sizes = [16, 32], strides = [1, 1]} : vector<16x96xf32> to vector<16x32xf32>
    %47 = vector.extract_strided_slice %37 {offsets = [0, 96], sizes = [16, 32], strides = [1, 1]} : vector<16x128xf32> to vector<16x32xf32>
    %48 = math.tanh %47 : vector<16x32xf32>
    %49 = arith.mulf %45, %27 : vector<16x32xf32>
    %50 = arith.mulf %44, %48 : vector<16x32xf32>
    %51 = arith.addf %49, %50 : vector<16x32xf32>
    %52 = math.tanh %51 : vector<16x32xf32>
    %53 = arith.mulf %46, %52 : vector<16x32xf32>
    %54 = vector.extract_strided_slice %0 {offsets = [0, 2, 0], sizes = [16, 1, 64], strides = [1, 1, 1]} : vector<16x24x64xbf16> to vector<16x1x64xbf16>
    %55 = vector.shape_cast %54 : vector<16x1x64xbf16> to vector<16x64xbf16>
    %cst_15 = arith.constant dense<0.000000e+00> : vector<16x128xf32>
    %56 = tpu.matmul %55, %1, %cst_15 {dimension_numbers = #tpu.dot_dimension_numbers<[1], [0], [0], [1], [0, 0, 1, 1], [], []>} : vector<16x64xbf16>, vector<64x128xbf16>, vector<16x128xf32> -> vector<16x128xf32>
    %57 = arith.truncf %53 : vector<16x32xf32> to vector<16x32xbf16>
    %cst_16 = arith.constant dense<0.000000e+00> : vector<16x128xf32>
    %58 = tpu.matmul %57, %2, %cst_16 {dimension_numbers = #tpu.dot_dimension_numbers<[1], [0], [0], [1], [0, 0, 1, 1], [], []>} : vector<16x32xbf16>, vector<32x128xbf16>, vector<16x128xf32> -> vector<16x128xf32>
    %59 = arith.addf %56, %58 : vector<16x128xf32>
    %60 = vector.broadcast %3 : vector<1x128xf32> to vector<16x128xf32>
    %61 = arith.addf %59, %60 : vector<16x128xf32>
    %62 = vector.extract_strided_slice %61 {offsets = [0, 0], sizes = [16, 96], strides = [1, 1]} : vector<16x128xf32> to vector<16x96xf32>
    %63 = arith.negf %62 : vector<16x96xf32>
    %64 = math.exp %63 : vector<16x96xf32>
    %cst_17 = arith.constant 1.000000e+00 : f32
    %65 = vector.broadcast %cst_17 : f32 to vector<16x96xf32>
    %66 = arith.addf %65, %64 : vector<16x96xf32>
    %67 = arith.divf %65, %66 : vector<16x96xf32>
    %68 = vector.extract_strided_slice %67 {offsets = [0, 0], sizes = [16, 32], strides = [1, 1]} : vector<16x96xf32> to vector<16x32xf32>
    %69 = vector.extract_strided_slice %67 {offsets = [0, 32], sizes = [16, 32], strides = [1, 1]} : vector<16x96xf32> to vector<16x32xf32>
    %70 = vector.extract_strided_slice %67 {offsets = [0, 64], sizes = [16, 32], strides = [1, 1]} : vector<16x96xf32> to vector<16x32xf32>
    %71 = vector.extract_strided_slice %61 {offsets = [0, 96], sizes = [16, 32], strides = [1, 1]} : vector<16x128xf32> to vector<16x32xf32>
    %72 = math.tanh %71 : vector<16x32xf32>
    %73 = arith.mulf %69, %51 : vector<16x32xf32>
    %74 = arith.mulf %68, %72 : vector<16x32xf32>
    %75 = arith.addf %73, %74 : vector<16x32xf32>
    %76 = math.tanh %75 : vector<16x32xf32>
    %77 = arith.mulf %70, %76 : vector<16x32xf32>
    %78 = vector.extract_strided_slice %0 {offsets = [0, 3, 0], sizes = [16, 1, 64], strides = [1, 1, 1]} : vector<16x24x64xbf16> to vector<16x1x64xbf16>
    %79 = vector.shape_cast %78 : vector<16x1x64xbf16> to vector<16x64xbf16>
    %cst_18 = arith.constant dense<0.000000e+00> : vector<16x128xf32>
    %80 = tpu.matmul %79, %1, %cst_18 {dimension_numbers = #tpu.dot_dimension_numbers<[1], [0], [0], [1], [0, 0, 1, 1], [], []>} : vector<16x64xbf16>, vector<64x128xbf16>, vector<16x128xf32> -> vector<16x128xf32>
    %81 = arith.truncf %77 : vector<16x32xf32> to vector<16x32xbf16>
    %cst_19 = arith.constant dense<0.000000e+00> : vector<16x128xf32>
    %82 = tpu.matmul %81, %2, %cst_19 {dimension_numbers = #tpu.dot_dimension_numbers<[1], [0], [0], [1], [0, 0, 1, 1], [], []>} : vector<16x32xbf16>, vector<32x128xbf16>, vector<16x128xf32> -> vector<16x128xf32>
    %83 = arith.addf %80, %82 : vector<16x128xf32>
    %84 = vector.broadcast %3 : vector<1x128xf32> to vector<16x128xf32>
    %85 = arith.addf %83, %84 : vector<16x128xf32>
    %86 = vector.extract_strided_slice %85 {offsets = [0, 0], sizes = [16, 96], strides = [1, 1]} : vector<16x128xf32> to vector<16x96xf32>
    %87 = arith.negf %86 : vector<16x96xf32>
    %88 = math.exp %87 : vector<16x96xf32>
    %cst_20 = arith.constant 1.000000e+00 : f32
    %89 = vector.broadcast %cst_20 : f32 to vector<16x96xf32>
    %90 = arith.addf %89, %88 : vector<16x96xf32>
    %91 = arith.divf %89, %90 : vector<16x96xf32>
    %92 = vector.extract_strided_slice %91 {offsets = [0, 0], sizes = [16, 32], strides = [1, 1]} : vector<16x96xf32> to vector<16x32xf32>
    %93 = vector.extract_strided_slice %91 {offsets = [0, 32], sizes = [16, 32], strides = [1, 1]} : vector<16x96xf32> to vector<16x32xf32>
    %94 = vector.extract_strided_slice %91 {offsets = [0, 64], sizes = [16, 32], strides = [1, 1]} : vector<16x96xf32> to vector<16x32xf32>
    %95 = vector.extract_strided_slice %85 {offsets = [0, 96], sizes = [16, 32], strides = [1, 1]} : vector<16x128xf32> to vector<16x32xf32>
    %96 = math.tanh %95 : vector<16x32xf32>
    %97 = arith.mulf %93, %75 : vector<16x32xf32>
    %98 = arith.mulf %92, %96 : vector<16x32xf32>
    %99 = arith.addf %97, %98 : vector<16x32xf32>
    %100 = math.tanh %99 : vector<16x32xf32>
    %101 = arith.mulf %94, %100 : vector<16x32xf32>
    %102 = vector.extract_strided_slice %0 {offsets = [0, 4, 0], sizes = [16, 1, 64], strides = [1, 1, 1]} : vector<16x24x64xbf16> to vector<16x1x64xbf16>
    %103 = vector.shape_cast %102 : vector<16x1x64xbf16> to vector<16x64xbf16>
    %cst_21 = arith.constant dense<0.000000e+00> : vector<16x128xf32>
    %104 = tpu.matmul %103, %1, %cst_21 {dimension_numbers = #tpu.dot_dimension_numbers<[1], [0], [0], [1], [0, 0, 1, 1], [], []>} : vector<16x64xbf16>, vector<64x128xbf16>, vector<16x128xf32> -> vector<16x128xf32>
    %105 = arith.truncf %101 : vector<16x32xf32> to vector<16x32xbf16>
    %cst_22 = arith.constant dense<0.000000e+00> : vector<16x128xf32>
    %106 = tpu.matmul %105, %2, %cst_22 {dimension_numbers = #tpu.dot_dimension_numbers<[1], [0], [0], [1], [0, 0, 1, 1], [], []>} : vector<16x32xbf16>, vector<32x128xbf16>, vector<16x128xf32> -> vector<16x128xf32>
    %107 = arith.addf %104, %106 : vector<16x128xf32>
    %108 = vector.broadcast %3 : vector<1x128xf32> to vector<16x128xf32>
    %109 = arith.addf %107, %108 : vector<16x128xf32>
    %110 = vector.extract_strided_slice %109 {offsets = [0, 0], sizes = [16, 96], strides = [1, 1]} : vector<16x128xf32> to vector<16x96xf32>
    %111 = arith.negf %110 : vector<16x96xf32>
    %112 = math.exp %111 : vector<16x96xf32>
    %cst_23 = arith.constant 1.000000e+00 : f32
    %113 = vector.broadcast %cst_23 : f32 to vector<16x96xf32>
    %114 = arith.addf %113, %112 : vector<16x96xf32>
    %115 = arith.divf %113, %114 : vector<16x96xf32>
    %116 = vector.extract_strided_slice %115 {offsets = [0, 0], sizes = [16, 32], strides = [1, 1]} : vector<16x96xf32> to vector<16x32xf32>
    %117 = vector.extract_strided_slice %115 {offsets = [0, 32], sizes = [16, 32], strides = [1, 1]} : vector<16x96xf32> to vector<16x32xf32>
    %118 = vector.extract_strided_slice %115 {offsets = [0, 64], sizes = [16, 32], strides = [1, 1]} : vector<16x96xf32> to vector<16x32xf32>
    %119 = vector.extract_strided_slice %109 {offsets = [0, 96], sizes = [16, 32], strides = [1, 1]} : vector<16x128xf32> to vector<16x32xf32>
    %120 = math.tanh %119 : vector<16x32xf32>
    %121 = arith.mulf %117, %99 : vector<16x32xf32>
    %122 = arith.mulf %116, %120 : vector<16x32xf32>
    %123 = arith.addf %121, %122 : vector<16x32xf32>
    %124 = math.tanh %123 : vector<16x32xf32>
    %125 = arith.mulf %118, %124 : vector<16x32xf32>
    %126 = vector.extract_strided_slice %0 {offsets = [0, 5, 0], sizes = [16, 1, 64], strides = [1, 1, 1]} : vector<16x24x64xbf16> to vector<16x1x64xbf16>
    %127 = vector.shape_cast %126 : vector<16x1x64xbf16> to vector<16x64xbf16>
    %cst_24 = arith.constant dense<0.000000e+00> : vector<16x128xf32>
    %128 = tpu.matmul %127, %1, %cst_24 {dimension_numbers = #tpu.dot_dimension_numbers<[1], [0], [0], [1], [0, 0, 1, 1], [], []>} : vector<16x64xbf16>, vector<64x128xbf16>, vector<16x128xf32> -> vector<16x128xf32>
    %129 = arith.truncf %125 : vector<16x32xf32> to vector<16x32xbf16>
    %cst_25 = arith.constant dense<0.000000e+00> : vector<16x128xf32>
    %130 = tpu.matmul %129, %2, %cst_25 {dimension_numbers = #tpu.dot_dimension_numbers<[1], [0], [0], [1], [0, 0, 1, 1], [], []>} : vector<16x32xbf16>, vector<32x128xbf16>, vector<16x128xf32> -> vector<16x128xf32>
    %131 = arith.addf %128, %130 : vector<16x128xf32>
    %132 = vector.broadcast %3 : vector<1x128xf32> to vector<16x128xf32>
    %133 = arith.addf %131, %132 : vector<16x128xf32>
    %134 = vector.extract_strided_slice %133 {offsets = [0, 0], sizes = [16, 96], strides = [1, 1]} : vector<16x128xf32> to vector<16x96xf32>
    %135 = arith.negf %134 : vector<16x96xf32>
    %136 = math.exp %135 : vector<16x96xf32>
    %cst_26 = arith.constant 1.000000e+00 : f32
    %137 = vector.broadcast %cst_26 : f32 to vector<16x96xf32>
    %138 = arith.addf %137, %136 : vector<16x96xf32>
    %139 = arith.divf %137, %138 : vector<16x96xf32>
    %140 = vector.extract_strided_slice %139 {offsets = [0, 0], sizes = [16, 32], strides = [1, 1]} : vector<16x96xf32> to vector<16x32xf32>
    %141 = vector.extract_strided_slice %139 {offsets = [0, 32], sizes = [16, 32], strides = [1, 1]} : vector<16x96xf32> to vector<16x32xf32>
    %142 = vector.extract_strided_slice %139 {offsets = [0, 64], sizes = [16, 32], strides = [1, 1]} : vector<16x96xf32> to vector<16x32xf32>
    %143 = vector.extract_strided_slice %133 {offsets = [0, 96], sizes = [16, 32], strides = [1, 1]} : vector<16x128xf32> to vector<16x32xf32>
    %144 = math.tanh %143 : vector<16x32xf32>
    %145 = arith.mulf %141, %123 : vector<16x32xf32>
    %146 = arith.mulf %140, %144 : vector<16x32xf32>
    %147 = arith.addf %145, %146 : vector<16x32xf32>
    %148 = math.tanh %147 : vector<16x32xf32>
    %149 = arith.mulf %142, %148 : vector<16x32xf32>
    %150 = vector.extract_strided_slice %0 {offsets = [0, 6, 0], sizes = [16, 1, 64], strides = [1, 1, 1]} : vector<16x24x64xbf16> to vector<16x1x64xbf16>
    %151 = vector.shape_cast %150 : vector<16x1x64xbf16> to vector<16x64xbf16>
    %cst_27 = arith.constant dense<0.000000e+00> : vector<16x128xf32>
    %152 = tpu.matmul %151, %1, %cst_27 {dimension_numbers = #tpu.dot_dimension_numbers<[1], [0], [0], [1], [0, 0, 1, 1], [], []>} : vector<16x64xbf16>, vector<64x128xbf16>, vector<16x128xf32> -> vector<16x128xf32>
    %153 = arith.truncf %149 : vector<16x32xf32> to vector<16x32xbf16>
    %cst_28 = arith.constant dense<0.000000e+00> : vector<16x128xf32>
    %154 = tpu.matmul %153, %2, %cst_28 {dimension_numbers = #tpu.dot_dimension_numbers<[1], [0], [0], [1], [0, 0, 1, 1], [], []>} : vector<16x32xbf16>, vector<32x128xbf16>, vector<16x128xf32> -> vector<16x128xf32>
    %155 = arith.addf %152, %154 : vector<16x128xf32>
    %156 = vector.broadcast %3 : vector<1x128xf32> to vector<16x128xf32>
    %157 = arith.addf %155, %156 : vector<16x128xf32>
    %158 = vector.extract_strided_slice %157 {offsets = [0, 0], sizes = [16, 96], strides = [1, 1]} : vector<16x128xf32> to vector<16x96xf32>
    %159 = arith.negf %158 : vector<16x96xf32>
    %160 = math.exp %159 : vector<16x96xf32>
    %cst_29 = arith.constant 1.000000e+00 : f32
    %161 = vector.broadcast %cst_29 : f32 to vector<16x96xf32>
    %162 = arith.addf %161, %160 : vector<16x96xf32>
    %163 = arith.divf %161, %162 : vector<16x96xf32>
    %164 = vector.extract_strided_slice %163 {offsets = [0, 0], sizes = [16, 32], strides = [1, 1]} : vector<16x96xf32> to vector<16x32xf32>
    %165 = vector.extract_strided_slice %163 {offsets = [0, 32], sizes = [16, 32], strides = [1, 1]} : vector<16x96xf32> to vector<16x32xf32>
    %166 = vector.extract_strided_slice %163 {offsets = [0, 64], sizes = [16, 32], strides = [1, 1]} : vector<16x96xf32> to vector<16x32xf32>
    %167 = vector.extract_strided_slice %157 {offsets = [0, 96], sizes = [16, 32], strides = [1, 1]} : vector<16x128xf32> to vector<16x32xf32>
    %168 = math.tanh %167 : vector<16x32xf32>
    %169 = arith.mulf %165, %147 : vector<16x32xf32>
    %170 = arith.mulf %164, %168 : vector<16x32xf32>
    %171 = arith.addf %169, %170 : vector<16x32xf32>
    %172 = math.tanh %171 : vector<16x32xf32>
    %173 = arith.mulf %166, %172 : vector<16x32xf32>
    %174 = vector.extract_strided_slice %0 {offsets = [0, 7, 0], sizes = [16, 1, 64], strides = [1, 1, 1]} : vector<16x24x64xbf16> to vector<16x1x64xbf16>
    %175 = vector.shape_cast %174 : vector<16x1x64xbf16> to vector<16x64xbf16>
    %cst_30 = arith.constant dense<0.000000e+00> : vector<16x128xf32>
    %176 = tpu.matmul %175, %1, %cst_30 {dimension_numbers = #tpu.dot_dimension_numbers<[1], [0], [0], [1], [0, 0, 1, 1], [], []>} : vector<16x64xbf16>, vector<64x128xbf16>, vector<16x128xf32> -> vector<16x128xf32>
    %177 = arith.truncf %173 : vector<16x32xf32> to vector<16x32xbf16>
    %cst_31 = arith.constant dense<0.000000e+00> : vector<16x128xf32>
    %178 = tpu.matmul %177, %2, %cst_31 {dimension_numbers = #tpu.dot_dimension_numbers<[1], [0], [0], [1], [0, 0, 1, 1], [], []>} : vector<16x32xbf16>, vector<32x128xbf16>, vector<16x128xf32> -> vector<16x128xf32>
    %179 = arith.addf %176, %178 : vector<16x128xf32>
    %180 = vector.broadcast %3 : vector<1x128xf32> to vector<16x128xf32>
    %181 = arith.addf %179, %180 : vector<16x128xf32>
    %182 = vector.extract_strided_slice %181 {offsets = [0, 0], sizes = [16, 96], strides = [1, 1]} : vector<16x128xf32> to vector<16x96xf32>
    %183 = arith.negf %182 : vector<16x96xf32>
    %184 = math.exp %183 : vector<16x96xf32>
    %cst_32 = arith.constant 1.000000e+00 : f32
    %185 = vector.broadcast %cst_32 : f32 to vector<16x96xf32>
    %186 = arith.addf %185, %184 : vector<16x96xf32>
    %187 = arith.divf %185, %186 : vector<16x96xf32>
    %188 = vector.extract_strided_slice %187 {offsets = [0, 0], sizes = [16, 32], strides = [1, 1]} : vector<16x96xf32> to vector<16x32xf32>
    %189 = vector.extract_strided_slice %187 {offsets = [0, 32], sizes = [16, 32], strides = [1, 1]} : vector<16x96xf32> to vector<16x32xf32>
    %190 = vector.extract_strided_slice %187 {offsets = [0, 64], sizes = [16, 32], strides = [1, 1]} : vector<16x96xf32> to vector<16x32xf32>
    %191 = vector.extract_strided_slice %181 {offsets = [0, 96], sizes = [16, 32], strides = [1, 1]} : vector<16x128xf32> to vector<16x32xf32>
    %192 = math.tanh %191 : vector<16x32xf32>
    %193 = arith.mulf %189, %171 : vector<16x32xf32>
    %194 = arith.mulf %188, %192 : vector<16x32xf32>
    %195 = arith.addf %193, %194 : vector<16x32xf32>
    %196 = math.tanh %195 : vector<16x32xf32>
    %197 = arith.mulf %190, %196 : vector<16x32xf32>
    %198 = vector.extract_strided_slice %0 {offsets = [0, 8, 0], sizes = [16, 1, 64], strides = [1, 1, 1]} : vector<16x24x64xbf16> to vector<16x1x64xbf16>
    %199 = vector.shape_cast %198 : vector<16x1x64xbf16> to vector<16x64xbf16>
    %cst_33 = arith.constant dense<0.000000e+00> : vector<16x128xf32>
    %200 = tpu.matmul %199, %1, %cst_33 {dimension_numbers = #tpu.dot_dimension_numbers<[1], [0], [0], [1], [0, 0, 1, 1], [], []>} : vector<16x64xbf16>, vector<64x128xbf16>, vector<16x128xf32> -> vector<16x128xf32>
    %201 = arith.truncf %197 : vector<16x32xf32> to vector<16x32xbf16>
    %cst_34 = arith.constant dense<0.000000e+00> : vector<16x128xf32>
    %202 = tpu.matmul %201, %2, %cst_34 {dimension_numbers = #tpu.dot_dimension_numbers<[1], [0], [0], [1], [0, 0, 1, 1], [], []>} : vector<16x32xbf16>, vector<32x128xbf16>, vector<16x128xf32> -> vector<16x128xf32>
    %203 = arith.addf %200, %202 : vector<16x128xf32>
    %204 = vector.broadcast %3 : vector<1x128xf32> to vector<16x128xf32>
    %205 = arith.addf %203, %204 : vector<16x128xf32>
    %206 = vector.extract_strided_slice %205 {offsets = [0, 0], sizes = [16, 96], strides = [1, 1]} : vector<16x128xf32> to vector<16x96xf32>
    %207 = arith.negf %206 : vector<16x96xf32>
    %208 = math.exp %207 : vector<16x96xf32>
    %cst_35 = arith.constant 1.000000e+00 : f32
    %209 = vector.broadcast %cst_35 : f32 to vector<16x96xf32>
    %210 = arith.addf %209, %208 : vector<16x96xf32>
    %211 = arith.divf %209, %210 : vector<16x96xf32>
    %212 = vector.extract_strided_slice %211 {offsets = [0, 0], sizes = [16, 32], strides = [1, 1]} : vector<16x96xf32> to vector<16x32xf32>
    %213 = vector.extract_strided_slice %211 {offsets = [0, 32], sizes = [16, 32], strides = [1, 1]} : vector<16x96xf32> to vector<16x32xf32>
    %214 = vector.extract_strided_slice %211 {offsets = [0, 64], sizes = [16, 32], strides = [1, 1]} : vector<16x96xf32> to vector<16x32xf32>
    %215 = vector.extract_strided_slice %205 {offsets = [0, 96], sizes = [16, 32], strides = [1, 1]} : vector<16x128xf32> to vector<16x32xf32>
    %216 = math.tanh %215 : vector<16x32xf32>
    %217 = arith.mulf %213, %195 : vector<16x32xf32>
    %218 = arith.mulf %212, %216 : vector<16x32xf32>
    %219 = arith.addf %217, %218 : vector<16x32xf32>
    %220 = math.tanh %219 : vector<16x32xf32>
    %221 = arith.mulf %214, %220 : vector<16x32xf32>
    %222 = vector.extract_strided_slice %0 {offsets = [0, 9, 0], sizes = [16, 1, 64], strides = [1, 1, 1]} : vector<16x24x64xbf16> to vector<16x1x64xbf16>
    %223 = vector.shape_cast %222 : vector<16x1x64xbf16> to vector<16x64xbf16>
    %cst_36 = arith.constant dense<0.000000e+00> : vector<16x128xf32>
    %224 = tpu.matmul %223, %1, %cst_36 {dimension_numbers = #tpu.dot_dimension_numbers<[1], [0], [0], [1], [0, 0, 1, 1], [], []>} : vector<16x64xbf16>, vector<64x128xbf16>, vector<16x128xf32> -> vector<16x128xf32>
    %225 = arith.truncf %221 : vector<16x32xf32> to vector<16x32xbf16>
    %cst_37 = arith.constant dense<0.000000e+00> : vector<16x128xf32>
    %226 = tpu.matmul %225, %2, %cst_37 {dimension_numbers = #tpu.dot_dimension_numbers<[1], [0], [0], [1], [0, 0, 1, 1], [], []>} : vector<16x32xbf16>, vector<32x128xbf16>, vector<16x128xf32> -> vector<16x128xf32>
    %227 = arith.addf %224, %226 : vector<16x128xf32>
    %228 = vector.broadcast %3 : vector<1x128xf32> to vector<16x128xf32>
    %229 = arith.addf %227, %228 : vector<16x128xf32>
    %230 = vector.extract_strided_slice %229 {offsets = [0, 0], sizes = [16, 96], strides = [1, 1]} : vector<16x128xf32> to vector<16x96xf32>
    %231 = arith.negf %230 : vector<16x96xf32>
    %232 = math.exp %231 : vector<16x96xf32>
    %cst_38 = arith.constant 1.000000e+00 : f32
    %233 = vector.broadcast %cst_38 : f32 to vector<16x96xf32>
    %234 = arith.addf %233, %232 : vector<16x96xf32>
    %235 = arith.divf %233, %234 : vector<16x96xf32>
    %236 = vector.extract_strided_slice %235 {offsets = [0, 0], sizes = [16, 32], strides = [1, 1]} : vector<16x96xf32> to vector<16x32xf32>
    %237 = vector.extract_strided_slice %235 {offsets = [0, 32], sizes = [16, 32], strides = [1, 1]} : vector<16x96xf32> to vector<16x32xf32>
    %238 = vector.extract_strided_slice %235 {offsets = [0, 64], sizes = [16, 32], strides = [1, 1]} : vector<16x96xf32> to vector<16x32xf32>
    %239 = vector.extract_strided_slice %229 {offsets = [0, 96], sizes = [16, 32], strides = [1, 1]} : vector<16x128xf32> to vector<16x32xf32>
    %240 = math.tanh %239 : vector<16x32xf32>
    %241 = arith.mulf %237, %219 : vector<16x32xf32>
    %242 = arith.mulf %236, %240 : vector<16x32xf32>
    %243 = arith.addf %241, %242 : vector<16x32xf32>
    %244 = math.tanh %243 : vector<16x32xf32>
    %245 = arith.mulf %238, %244 : vector<16x32xf32>
    %246 = vector.extract_strided_slice %0 {offsets = [0, 10, 0], sizes = [16, 1, 64], strides = [1, 1, 1]} : vector<16x24x64xbf16> to vector<16x1x64xbf16>
    %247 = vector.shape_cast %246 : vector<16x1x64xbf16> to vector<16x64xbf16>
    %cst_39 = arith.constant dense<0.000000e+00> : vector<16x128xf32>
    %248 = tpu.matmul %247, %1, %cst_39 {dimension_numbers = #tpu.dot_dimension_numbers<[1], [0], [0], [1], [0, 0, 1, 1], [], []>} : vector<16x64xbf16>, vector<64x128xbf16>, vector<16x128xf32> -> vector<16x128xf32>
    %249 = arith.truncf %245 : vector<16x32xf32> to vector<16x32xbf16>
    %cst_40 = arith.constant dense<0.000000e+00> : vector<16x128xf32>
    %250 = tpu.matmul %249, %2, %cst_40 {dimension_numbers = #tpu.dot_dimension_numbers<[1], [0], [0], [1], [0, 0, 1, 1], [], []>} : vector<16x32xbf16>, vector<32x128xbf16>, vector<16x128xf32> -> vector<16x128xf32>
    %251 = arith.addf %248, %250 : vector<16x128xf32>
    %252 = vector.broadcast %3 : vector<1x128xf32> to vector<16x128xf32>
    %253 = arith.addf %251, %252 : vector<16x128xf32>
    %254 = vector.extract_strided_slice %253 {offsets = [0, 0], sizes = [16, 96], strides = [1, 1]} : vector<16x128xf32> to vector<16x96xf32>
    %255 = arith.negf %254 : vector<16x96xf32>
    %256 = math.exp %255 : vector<16x96xf32>
    %cst_41 = arith.constant 1.000000e+00 : f32
    %257 = vector.broadcast %cst_41 : f32 to vector<16x96xf32>
    %258 = arith.addf %257, %256 : vector<16x96xf32>
    %259 = arith.divf %257, %258 : vector<16x96xf32>
    %260 = vector.extract_strided_slice %259 {offsets = [0, 0], sizes = [16, 32], strides = [1, 1]} : vector<16x96xf32> to vector<16x32xf32>
    %261 = vector.extract_strided_slice %259 {offsets = [0, 32], sizes = [16, 32], strides = [1, 1]} : vector<16x96xf32> to vector<16x32xf32>
    %262 = vector.extract_strided_slice %259 {offsets = [0, 64], sizes = [16, 32], strides = [1, 1]} : vector<16x96xf32> to vector<16x32xf32>
    %263 = vector.extract_strided_slice %253 {offsets = [0, 96], sizes = [16, 32], strides = [1, 1]} : vector<16x128xf32> to vector<16x32xf32>
    %264 = math.tanh %263 : vector<16x32xf32>
    %265 = arith.mulf %261, %243 : vector<16x32xf32>
    %266 = arith.mulf %260, %264 : vector<16x32xf32>
    %267 = arith.addf %265, %266 : vector<16x32xf32>
    %268 = math.tanh %267 : vector<16x32xf32>
    %269 = arith.mulf %262, %268 : vector<16x32xf32>
    %270 = vector.extract_strided_slice %0 {offsets = [0, 11, 0], sizes = [16, 1, 64], strides = [1, 1, 1]} : vector<16x24x64xbf16> to vector<16x1x64xbf16>
    %271 = vector.shape_cast %270 : vector<16x1x64xbf16> to vector<16x64xbf16>
    %cst_42 = arith.constant dense<0.000000e+00> : vector<16x128xf32>
    %272 = tpu.matmul %271, %1, %cst_42 {dimension_numbers = #tpu.dot_dimension_numbers<[1], [0], [0], [1], [0, 0, 1, 1], [], []>} : vector<16x64xbf16>, vector<64x128xbf16>, vector<16x128xf32> -> vector<16x128xf32>
    %273 = arith.truncf %269 : vector<16x32xf32> to vector<16x32xbf16>
    %cst_43 = arith.constant dense<0.000000e+00> : vector<16x128xf32>
    %274 = tpu.matmul %273, %2, %cst_43 {dimension_numbers = #tpu.dot_dimension_numbers<[1], [0], [0], [1], [0, 0, 1, 1], [], []>} : vector<16x32xbf16>, vector<32x128xbf16>, vector<16x128xf32> -> vector<16x128xf32>
    %275 = arith.addf %272, %274 : vector<16x128xf32>
    %276 = vector.broadcast %3 : vector<1x128xf32> to vector<16x128xf32>
    %277 = arith.addf %275, %276 : vector<16x128xf32>
    %278 = vector.extract_strided_slice %277 {offsets = [0, 0], sizes = [16, 96], strides = [1, 1]} : vector<16x128xf32> to vector<16x96xf32>
    %279 = arith.negf %278 : vector<16x96xf32>
    %280 = math.exp %279 : vector<16x96xf32>
    %cst_44 = arith.constant 1.000000e+00 : f32
    %281 = vector.broadcast %cst_44 : f32 to vector<16x96xf32>
    %282 = arith.addf %281, %280 : vector<16x96xf32>
    %283 = arith.divf %281, %282 : vector<16x96xf32>
    %284 = vector.extract_strided_slice %283 {offsets = [0, 0], sizes = [16, 32], strides = [1, 1]} : vector<16x96xf32> to vector<16x32xf32>
    %285 = vector.extract_strided_slice %283 {offsets = [0, 32], sizes = [16, 32], strides = [1, 1]} : vector<16x96xf32> to vector<16x32xf32>
    %286 = vector.extract_strided_slice %283 {offsets = [0, 64], sizes = [16, 32], strides = [1, 1]} : vector<16x96xf32> to vector<16x32xf32>
    %287 = vector.extract_strided_slice %277 {offsets = [0, 96], sizes = [16, 32], strides = [1, 1]} : vector<16x128xf32> to vector<16x32xf32>
    %288 = math.tanh %287 : vector<16x32xf32>
    %289 = arith.mulf %285, %267 : vector<16x32xf32>
    %290 = arith.mulf %284, %288 : vector<16x32xf32>
    %291 = arith.addf %289, %290 : vector<16x32xf32>
    %292 = math.tanh %291 : vector<16x32xf32>
    %293 = arith.mulf %286, %292 : vector<16x32xf32>
    %294 = vector.extract_strided_slice %0 {offsets = [0, 12, 0], sizes = [16, 1, 64], strides = [1, 1, 1]} : vector<16x24x64xbf16> to vector<16x1x64xbf16>
    %295 = vector.shape_cast %294 : vector<16x1x64xbf16> to vector<16x64xbf16>
    %cst_45 = arith.constant dense<0.000000e+00> : vector<16x128xf32>
    %296 = tpu.matmul %295, %1, %cst_45 {dimension_numbers = #tpu.dot_dimension_numbers<[1], [0], [0], [1], [0, 0, 1, 1], [], []>} : vector<16x64xbf16>, vector<64x128xbf16>, vector<16x128xf32> -> vector<16x128xf32>
    %297 = arith.truncf %293 : vector<16x32xf32> to vector<16x32xbf16>
    %cst_46 = arith.constant dense<0.000000e+00> : vector<16x128xf32>
    %298 = tpu.matmul %297, %2, %cst_46 {dimension_numbers = #tpu.dot_dimension_numbers<[1], [0], [0], [1], [0, 0, 1, 1], [], []>} : vector<16x32xbf16>, vector<32x128xbf16>, vector<16x128xf32> -> vector<16x128xf32>
    %299 = arith.addf %296, %298 : vector<16x128xf32>
    %300 = vector.broadcast %3 : vector<1x128xf32> to vector<16x128xf32>
    %301 = arith.addf %299, %300 : vector<16x128xf32>
    %302 = vector.extract_strided_slice %301 {offsets = [0, 0], sizes = [16, 96], strides = [1, 1]} : vector<16x128xf32> to vector<16x96xf32>
    %303 = arith.negf %302 : vector<16x96xf32>
    %304 = math.exp %303 : vector<16x96xf32>
    %cst_47 = arith.constant 1.000000e+00 : f32
    %305 = vector.broadcast %cst_47 : f32 to vector<16x96xf32>
    %306 = arith.addf %305, %304 : vector<16x96xf32>
    %307 = arith.divf %305, %306 : vector<16x96xf32>
    %308 = vector.extract_strided_slice %307 {offsets = [0, 0], sizes = [16, 32], strides = [1, 1]} : vector<16x96xf32> to vector<16x32xf32>
    %309 = vector.extract_strided_slice %307 {offsets = [0, 32], sizes = [16, 32], strides = [1, 1]} : vector<16x96xf32> to vector<16x32xf32>
    %310 = vector.extract_strided_slice %307 {offsets = [0, 64], sizes = [16, 32], strides = [1, 1]} : vector<16x96xf32> to vector<16x32xf32>
    %311 = vector.extract_strided_slice %301 {offsets = [0, 96], sizes = [16, 32], strides = [1, 1]} : vector<16x128xf32> to vector<16x32xf32>
    %312 = math.tanh %311 : vector<16x32xf32>
    %313 = arith.mulf %309, %291 : vector<16x32xf32>
    %314 = arith.mulf %308, %312 : vector<16x32xf32>
    %315 = arith.addf %313, %314 : vector<16x32xf32>
    %316 = math.tanh %315 : vector<16x32xf32>
    %317 = arith.mulf %310, %316 : vector<16x32xf32>
    %318 = vector.extract_strided_slice %0 {offsets = [0, 13, 0], sizes = [16, 1, 64], strides = [1, 1, 1]} : vector<16x24x64xbf16> to vector<16x1x64xbf16>
    %319 = vector.shape_cast %318 : vector<16x1x64xbf16> to vector<16x64xbf16>
    %cst_48 = arith.constant dense<0.000000e+00> : vector<16x128xf32>
    %320 = tpu.matmul %319, %1, %cst_48 {dimension_numbers = #tpu.dot_dimension_numbers<[1], [0], [0], [1], [0, 0, 1, 1], [], []>} : vector<16x64xbf16>, vector<64x128xbf16>, vector<16x128xf32> -> vector<16x128xf32>
    %321 = arith.truncf %317 : vector<16x32xf32> to vector<16x32xbf16>
    %cst_49 = arith.constant dense<0.000000e+00> : vector<16x128xf32>
    %322 = tpu.matmul %321, %2, %cst_49 {dimension_numbers = #tpu.dot_dimension_numbers<[1], [0], [0], [1], [0, 0, 1, 1], [], []>} : vector<16x32xbf16>, vector<32x128xbf16>, vector<16x128xf32> -> vector<16x128xf32>
    %323 = arith.addf %320, %322 : vector<16x128xf32>
    %324 = vector.broadcast %3 : vector<1x128xf32> to vector<16x128xf32>
    %325 = arith.addf %323, %324 : vector<16x128xf32>
    %326 = vector.extract_strided_slice %325 {offsets = [0, 0], sizes = [16, 96], strides = [1, 1]} : vector<16x128xf32> to vector<16x96xf32>
    %327 = arith.negf %326 : vector<16x96xf32>
    %328 = math.exp %327 : vector<16x96xf32>
    %cst_50 = arith.constant 1.000000e+00 : f32
    %329 = vector.broadcast %cst_50 : f32 to vector<16x96xf32>
    %330 = arith.addf %329, %328 : vector<16x96xf32>
    %331 = arith.divf %329, %330 : vector<16x96xf32>
    %332 = vector.extract_strided_slice %331 {offsets = [0, 0], sizes = [16, 32], strides = [1, 1]} : vector<16x96xf32> to vector<16x32xf32>
    %333 = vector.extract_strided_slice %331 {offsets = [0, 32], sizes = [16, 32], strides = [1, 1]} : vector<16x96xf32> to vector<16x32xf32>
    %334 = vector.extract_strided_slice %331 {offsets = [0, 64], sizes = [16, 32], strides = [1, 1]} : vector<16x96xf32> to vector<16x32xf32>
    %335 = vector.extract_strided_slice %325 {offsets = [0, 96], sizes = [16, 32], strides = [1, 1]} : vector<16x128xf32> to vector<16x32xf32>
    %336 = math.tanh %335 : vector<16x32xf32>
    %337 = arith.mulf %333, %315 : vector<16x32xf32>
    %338 = arith.mulf %332, %336 : vector<16x32xf32>
    %339 = arith.addf %337, %338 : vector<16x32xf32>
    %340 = math.tanh %339 : vector<16x32xf32>
    %341 = arith.mulf %334, %340 : vector<16x32xf32>
    %342 = vector.extract_strided_slice %0 {offsets = [0, 14, 0], sizes = [16, 1, 64], strides = [1, 1, 1]} : vector<16x24x64xbf16> to vector<16x1x64xbf16>
    %343 = vector.shape_cast %342 : vector<16x1x64xbf16> to vector<16x64xbf16>
    %cst_51 = arith.constant dense<0.000000e+00> : vector<16x128xf32>
    %344 = tpu.matmul %343, %1, %cst_51 {dimension_numbers = #tpu.dot_dimension_numbers<[1], [0], [0], [1], [0, 0, 1, 1], [], []>} : vector<16x64xbf16>, vector<64x128xbf16>, vector<16x128xf32> -> vector<16x128xf32>
    %345 = arith.truncf %341 : vector<16x32xf32> to vector<16x32xbf16>
    %cst_52 = arith.constant dense<0.000000e+00> : vector<16x128xf32>
    %346 = tpu.matmul %345, %2, %cst_52 {dimension_numbers = #tpu.dot_dimension_numbers<[1], [0], [0], [1], [0, 0, 1, 1], [], []>} : vector<16x32xbf16>, vector<32x128xbf16>, vector<16x128xf32> -> vector<16x128xf32>
    %347 = arith.addf %344, %346 : vector<16x128xf32>
    %348 = vector.broadcast %3 : vector<1x128xf32> to vector<16x128xf32>
    %349 = arith.addf %347, %348 : vector<16x128xf32>
    %350 = vector.extract_strided_slice %349 {offsets = [0, 0], sizes = [16, 96], strides = [1, 1]} : vector<16x128xf32> to vector<16x96xf32>
    %351 = arith.negf %350 : vector<16x96xf32>
    %352 = math.exp %351 : vector<16x96xf32>
    %cst_53 = arith.constant 1.000000e+00 : f32
    %353 = vector.broadcast %cst_53 : f32 to vector<16x96xf32>
    %354 = arith.addf %353, %352 : vector<16x96xf32>
    %355 = arith.divf %353, %354 : vector<16x96xf32>
    %356 = vector.extract_strided_slice %355 {offsets = [0, 0], sizes = [16, 32], strides = [1, 1]} : vector<16x96xf32> to vector<16x32xf32>
    %357 = vector.extract_strided_slice %355 {offsets = [0, 32], sizes = [16, 32], strides = [1, 1]} : vector<16x96xf32> to vector<16x32xf32>
    %358 = vector.extract_strided_slice %355 {offsets = [0, 64], sizes = [16, 32], strides = [1, 1]} : vector<16x96xf32> to vector<16x32xf32>
    %359 = vector.extract_strided_slice %349 {offsets = [0, 96], sizes = [16, 32], strides = [1, 1]} : vector<16x128xf32> to vector<16x32xf32>
    %360 = math.tanh %359 : vector<16x32xf32>
    %361 = arith.mulf %357, %339 : vector<16x32xf32>
    %362 = arith.mulf %356, %360 : vector<16x32xf32>
    %363 = arith.addf %361, %362 : vector<16x32xf32>
    %364 = math.tanh %363 : vector<16x32xf32>
    %365 = arith.mulf %358, %364 : vector<16x32xf32>
    %366 = vector.extract_strided_slice %0 {offsets = [0, 15, 0], sizes = [16, 1, 64], strides = [1, 1, 1]} : vector<16x24x64xbf16> to vector<16x1x64xbf16>
    %367 = vector.shape_cast %366 : vector<16x1x64xbf16> to vector<16x64xbf16>
    %cst_54 = arith.constant dense<0.000000e+00> : vector<16x128xf32>
    %368 = tpu.matmul %367, %1, %cst_54 {dimension_numbers = #tpu.dot_dimension_numbers<[1], [0], [0], [1], [0, 0, 1, 1], [], []>} : vector<16x64xbf16>, vector<64x128xbf16>, vector<16x128xf32> -> vector<16x128xf32>
    %369 = arith.truncf %365 : vector<16x32xf32> to vector<16x32xbf16>
    %cst_55 = arith.constant dense<0.000000e+00> : vector<16x128xf32>
    %370 = tpu.matmul %369, %2, %cst_55 {dimension_numbers = #tpu.dot_dimension_numbers<[1], [0], [0], [1], [0, 0, 1, 1], [], []>} : vector<16x32xbf16>, vector<32x128xbf16>, vector<16x128xf32> -> vector<16x128xf32>
    %371 = arith.addf %368, %370 : vector<16x128xf32>
    %372 = vector.broadcast %3 : vector<1x128xf32> to vector<16x128xf32>
    %373 = arith.addf %371, %372 : vector<16x128xf32>
    %374 = vector.extract_strided_slice %373 {offsets = [0, 0], sizes = [16, 96], strides = [1, 1]} : vector<16x128xf32> to vector<16x96xf32>
    %375 = arith.negf %374 : vector<16x96xf32>
    %376 = math.exp %375 : vector<16x96xf32>
    %cst_56 = arith.constant 1.000000e+00 : f32
    %377 = vector.broadcast %cst_56 : f32 to vector<16x96xf32>
    %378 = arith.addf %377, %376 : vector<16x96xf32>
    %379 = arith.divf %377, %378 : vector<16x96xf32>
    %380 = vector.extract_strided_slice %379 {offsets = [0, 0], sizes = [16, 32], strides = [1, 1]} : vector<16x96xf32> to vector<16x32xf32>
    %381 = vector.extract_strided_slice %379 {offsets = [0, 32], sizes = [16, 32], strides = [1, 1]} : vector<16x96xf32> to vector<16x32xf32>
    %382 = vector.extract_strided_slice %379 {offsets = [0, 64], sizes = [16, 32], strides = [1, 1]} : vector<16x96xf32> to vector<16x32xf32>
    %383 = vector.extract_strided_slice %373 {offsets = [0, 96], sizes = [16, 32], strides = [1, 1]} : vector<16x128xf32> to vector<16x32xf32>
    %384 = math.tanh %383 : vector<16x32xf32>
    %385 = arith.mulf %381, %363 : vector<16x32xf32>
    %386 = arith.mulf %380, %384 : vector<16x32xf32>
    %387 = arith.addf %385, %386 : vector<16x32xf32>
    %388 = math.tanh %387 : vector<16x32xf32>
    %389 = arith.mulf %382, %388 : vector<16x32xf32>
    %390 = vector.extract_strided_slice %0 {offsets = [0, 16, 0], sizes = [16, 1, 64], strides = [1, 1, 1]} : vector<16x24x64xbf16> to vector<16x1x64xbf16>
    %391 = vector.shape_cast %390 : vector<16x1x64xbf16> to vector<16x64xbf16>
    %cst_57 = arith.constant dense<0.000000e+00> : vector<16x128xf32>
    %392 = tpu.matmul %391, %1, %cst_57 {dimension_numbers = #tpu.dot_dimension_numbers<[1], [0], [0], [1], [0, 0, 1, 1], [], []>} : vector<16x64xbf16>, vector<64x128xbf16>, vector<16x128xf32> -> vector<16x128xf32>
    %393 = arith.truncf %389 : vector<16x32xf32> to vector<16x32xbf16>
    %cst_58 = arith.constant dense<0.000000e+00> : vector<16x128xf32>
    %394 = tpu.matmul %393, %2, %cst_58 {dimension_numbers = #tpu.dot_dimension_numbers<[1], [0], [0], [1], [0, 0, 1, 1], [], []>} : vector<16x32xbf16>, vector<32x128xbf16>, vector<16x128xf32> -> vector<16x128xf32>
    %395 = arith.addf %392, %394 : vector<16x128xf32>
    %396 = vector.broadcast %3 : vector<1x128xf32> to vector<16x128xf32>
    %397 = arith.addf %395, %396 : vector<16x128xf32>
    %398 = vector.extract_strided_slice %397 {offsets = [0, 0], sizes = [16, 96], strides = [1, 1]} : vector<16x128xf32> to vector<16x96xf32>
    %399 = arith.negf %398 : vector<16x96xf32>
    %400 = math.exp %399 : vector<16x96xf32>
    %cst_59 = arith.constant 1.000000e+00 : f32
    %401 = vector.broadcast %cst_59 : f32 to vector<16x96xf32>
    %402 = arith.addf %401, %400 : vector<16x96xf32>
    %403 = arith.divf %401, %402 : vector<16x96xf32>
    %404 = vector.extract_strided_slice %403 {offsets = [0, 0], sizes = [16, 32], strides = [1, 1]} : vector<16x96xf32> to vector<16x32xf32>
    %405 = vector.extract_strided_slice %403 {offsets = [0, 32], sizes = [16, 32], strides = [1, 1]} : vector<16x96xf32> to vector<16x32xf32>
    %406 = vector.extract_strided_slice %403 {offsets = [0, 64], sizes = [16, 32], strides = [1, 1]} : vector<16x96xf32> to vector<16x32xf32>
    %407 = vector.extract_strided_slice %397 {offsets = [0, 96], sizes = [16, 32], strides = [1, 1]} : vector<16x128xf32> to vector<16x32xf32>
    %408 = math.tanh %407 : vector<16x32xf32>
    %409 = arith.mulf %405, %387 : vector<16x32xf32>
    %410 = arith.mulf %404, %408 : vector<16x32xf32>
    %411 = arith.addf %409, %410 : vector<16x32xf32>
    %412 = math.tanh %411 : vector<16x32xf32>
    %413 = arith.mulf %406, %412 : vector<16x32xf32>
    %414 = vector.extract_strided_slice %0 {offsets = [0, 17, 0], sizes = [16, 1, 64], strides = [1, 1, 1]} : vector<16x24x64xbf16> to vector<16x1x64xbf16>
    %415 = vector.shape_cast %414 : vector<16x1x64xbf16> to vector<16x64xbf16>
    %cst_60 = arith.constant dense<0.000000e+00> : vector<16x128xf32>
    %416 = tpu.matmul %415, %1, %cst_60 {dimension_numbers = #tpu.dot_dimension_numbers<[1], [0], [0], [1], [0, 0, 1, 1], [], []>} : vector<16x64xbf16>, vector<64x128xbf16>, vector<16x128xf32> -> vector<16x128xf32>
    %417 = arith.truncf %413 : vector<16x32xf32> to vector<16x32xbf16>
    %cst_61 = arith.constant dense<0.000000e+00> : vector<16x128xf32>
    %418 = tpu.matmul %417, %2, %cst_61 {dimension_numbers = #tpu.dot_dimension_numbers<[1], [0], [0], [1], [0, 0, 1, 1], [], []>} : vector<16x32xbf16>, vector<32x128xbf16>, vector<16x128xf32> -> vector<16x128xf32>
    %419 = arith.addf %416, %418 : vector<16x128xf32>
    %420 = vector.broadcast %3 : vector<1x128xf32> to vector<16x128xf32>
    %421 = arith.addf %419, %420 : vector<16x128xf32>
    %422 = vector.extract_strided_slice %421 {offsets = [0, 0], sizes = [16, 96], strides = [1, 1]} : vector<16x128xf32> to vector<16x96xf32>
    %423 = arith.negf %422 : vector<16x96xf32>
    %424 = math.exp %423 : vector<16x96xf32>
    %cst_62 = arith.constant 1.000000e+00 : f32
    %425 = vector.broadcast %cst_62 : f32 to vector<16x96xf32>
    %426 = arith.addf %425, %424 : vector<16x96xf32>
    %427 = arith.divf %425, %426 : vector<16x96xf32>
    %428 = vector.extract_strided_slice %427 {offsets = [0, 0], sizes = [16, 32], strides = [1, 1]} : vector<16x96xf32> to vector<16x32xf32>
    %429 = vector.extract_strided_slice %427 {offsets = [0, 32], sizes = [16, 32], strides = [1, 1]} : vector<16x96xf32> to vector<16x32xf32>
    %430 = vector.extract_strided_slice %427 {offsets = [0, 64], sizes = [16, 32], strides = [1, 1]} : vector<16x96xf32> to vector<16x32xf32>
    %431 = vector.extract_strided_slice %421 {offsets = [0, 96], sizes = [16, 32], strides = [1, 1]} : vector<16x128xf32> to vector<16x32xf32>
    %432 = math.tanh %431 : vector<16x32xf32>
    %433 = arith.mulf %429, %411 : vector<16x32xf32>
    %434 = arith.mulf %428, %432 : vector<16x32xf32>
    %435 = arith.addf %433, %434 : vector<16x32xf32>
    %436 = math.tanh %435 : vector<16x32xf32>
    %437 = arith.mulf %430, %436 : vector<16x32xf32>
    %438 = vector.extract_strided_slice %0 {offsets = [0, 18, 0], sizes = [16, 1, 64], strides = [1, 1, 1]} : vector<16x24x64xbf16> to vector<16x1x64xbf16>
    %439 = vector.shape_cast %438 : vector<16x1x64xbf16> to vector<16x64xbf16>
    %cst_63 = arith.constant dense<0.000000e+00> : vector<16x128xf32>
    %440 = tpu.matmul %439, %1, %cst_63 {dimension_numbers = #tpu.dot_dimension_numbers<[1], [0], [0], [1], [0, 0, 1, 1], [], []>} : vector<16x64xbf16>, vector<64x128xbf16>, vector<16x128xf32> -> vector<16x128xf32>
    %441 = arith.truncf %437 : vector<16x32xf32> to vector<16x32xbf16>
    %cst_64 = arith.constant dense<0.000000e+00> : vector<16x128xf32>
    %442 = tpu.matmul %441, %2, %cst_64 {dimension_numbers = #tpu.dot_dimension_numbers<[1], [0], [0], [1], [0, 0, 1, 1], [], []>} : vector<16x32xbf16>, vector<32x128xbf16>, vector<16x128xf32> -> vector<16x128xf32>
    %443 = arith.addf %440, %442 : vector<16x128xf32>
    %444 = vector.broadcast %3 : vector<1x128xf32> to vector<16x128xf32>
    %445 = arith.addf %443, %444 : vector<16x128xf32>
    %446 = vector.extract_strided_slice %445 {offsets = [0, 0], sizes = [16, 96], strides = [1, 1]} : vector<16x128xf32> to vector<16x96xf32>
    %447 = arith.negf %446 : vector<16x96xf32>
    %448 = math.exp %447 : vector<16x96xf32>
    %cst_65 = arith.constant 1.000000e+00 : f32
    %449 = vector.broadcast %cst_65 : f32 to vector<16x96xf32>
    %450 = arith.addf %449, %448 : vector<16x96xf32>
    %451 = arith.divf %449, %450 : vector<16x96xf32>
    %452 = vector.extract_strided_slice %451 {offsets = [0, 0], sizes = [16, 32], strides = [1, 1]} : vector<16x96xf32> to vector<16x32xf32>
    %453 = vector.extract_strided_slice %451 {offsets = [0, 32], sizes = [16, 32], strides = [1, 1]} : vector<16x96xf32> to vector<16x32xf32>
    %454 = vector.extract_strided_slice %451 {offsets = [0, 64], sizes = [16, 32], strides = [1, 1]} : vector<16x96xf32> to vector<16x32xf32>
    %455 = vector.extract_strided_slice %445 {offsets = [0, 96], sizes = [16, 32], strides = [1, 1]} : vector<16x128xf32> to vector<16x32xf32>
    %456 = math.tanh %455 : vector<16x32xf32>
    %457 = arith.mulf %453, %435 : vector<16x32xf32>
    %458 = arith.mulf %452, %456 : vector<16x32xf32>
    %459 = arith.addf %457, %458 : vector<16x32xf32>
    %460 = math.tanh %459 : vector<16x32xf32>
    %461 = arith.mulf %454, %460 : vector<16x32xf32>
    %462 = vector.extract_strided_slice %0 {offsets = [0, 19, 0], sizes = [16, 1, 64], strides = [1, 1, 1]} : vector<16x24x64xbf16> to vector<16x1x64xbf16>
    %463 = vector.shape_cast %462 : vector<16x1x64xbf16> to vector<16x64xbf16>
    %cst_66 = arith.constant dense<0.000000e+00> : vector<16x128xf32>
    %464 = tpu.matmul %463, %1, %cst_66 {dimension_numbers = #tpu.dot_dimension_numbers<[1], [0], [0], [1], [0, 0, 1, 1], [], []>} : vector<16x64xbf16>, vector<64x128xbf16>, vector<16x128xf32> -> vector<16x128xf32>
    %465 = arith.truncf %461 : vector<16x32xf32> to vector<16x32xbf16>
    %cst_67 = arith.constant dense<0.000000e+00> : vector<16x128xf32>
    %466 = tpu.matmul %465, %2, %cst_67 {dimension_numbers = #tpu.dot_dimension_numbers<[1], [0], [0], [1], [0, 0, 1, 1], [], []>} : vector<16x32xbf16>, vector<32x128xbf16>, vector<16x128xf32> -> vector<16x128xf32>
    %467 = arith.addf %464, %466 : vector<16x128xf32>
    %468 = vector.broadcast %3 : vector<1x128xf32> to vector<16x128xf32>
    %469 = arith.addf %467, %468 : vector<16x128xf32>
    %470 = vector.extract_strided_slice %469 {offsets = [0, 0], sizes = [16, 96], strides = [1, 1]} : vector<16x128xf32> to vector<16x96xf32>
    %471 = arith.negf %470 : vector<16x96xf32>
    %472 = math.exp %471 : vector<16x96xf32>
    %cst_68 = arith.constant 1.000000e+00 : f32
    %473 = vector.broadcast %cst_68 : f32 to vector<16x96xf32>
    %474 = arith.addf %473, %472 : vector<16x96xf32>
    %475 = arith.divf %473, %474 : vector<16x96xf32>
    %476 = vector.extract_strided_slice %475 {offsets = [0, 0], sizes = [16, 32], strides = [1, 1]} : vector<16x96xf32> to vector<16x32xf32>
    %477 = vector.extract_strided_slice %475 {offsets = [0, 32], sizes = [16, 32], strides = [1, 1]} : vector<16x96xf32> to vector<16x32xf32>
    %478 = vector.extract_strided_slice %475 {offsets = [0, 64], sizes = [16, 32], strides = [1, 1]} : vector<16x96xf32> to vector<16x32xf32>
    %479 = vector.extract_strided_slice %469 {offsets = [0, 96], sizes = [16, 32], strides = [1, 1]} : vector<16x128xf32> to vector<16x32xf32>
    %480 = math.tanh %479 : vector<16x32xf32>
    %481 = arith.mulf %477, %459 : vector<16x32xf32>
    %482 = arith.mulf %476, %480 : vector<16x32xf32>
    %483 = arith.addf %481, %482 : vector<16x32xf32>
    %484 = math.tanh %483 : vector<16x32xf32>
    %485 = arith.mulf %478, %484 : vector<16x32xf32>
    %486 = vector.extract_strided_slice %0 {offsets = [0, 20, 0], sizes = [16, 1, 64], strides = [1, 1, 1]} : vector<16x24x64xbf16> to vector<16x1x64xbf16>
    %487 = vector.shape_cast %486 : vector<16x1x64xbf16> to vector<16x64xbf16>
    %cst_69 = arith.constant dense<0.000000e+00> : vector<16x128xf32>
    %488 = tpu.matmul %487, %1, %cst_69 {dimension_numbers = #tpu.dot_dimension_numbers<[1], [0], [0], [1], [0, 0, 1, 1], [], []>} : vector<16x64xbf16>, vector<64x128xbf16>, vector<16x128xf32> -> vector<16x128xf32>
    %489 = arith.truncf %485 : vector<16x32xf32> to vector<16x32xbf16>
    %cst_70 = arith.constant dense<0.000000e+00> : vector<16x128xf32>
    %490 = tpu.matmul %489, %2, %cst_70 {dimension_numbers = #tpu.dot_dimension_numbers<[1], [0], [0], [1], [0, 0, 1, 1], [], []>} : vector<16x32xbf16>, vector<32x128xbf16>, vector<16x128xf32> -> vector<16x128xf32>
    %491 = arith.addf %488, %490 : vector<16x128xf32>
    %492 = vector.broadcast %3 : vector<1x128xf32> to vector<16x128xf32>
    %493 = arith.addf %491, %492 : vector<16x128xf32>
    %494 = vector.extract_strided_slice %493 {offsets = [0, 0], sizes = [16, 96], strides = [1, 1]} : vector<16x128xf32> to vector<16x96xf32>
    %495 = arith.negf %494 : vector<16x96xf32>
    %496 = math.exp %495 : vector<16x96xf32>
    %cst_71 = arith.constant 1.000000e+00 : f32
    %497 = vector.broadcast %cst_71 : f32 to vector<16x96xf32>
    %498 = arith.addf %497, %496 : vector<16x96xf32>
    %499 = arith.divf %497, %498 : vector<16x96xf32>
    %500 = vector.extract_strided_slice %499 {offsets = [0, 0], sizes = [16, 32], strides = [1, 1]} : vector<16x96xf32> to vector<16x32xf32>
    %501 = vector.extract_strided_slice %499 {offsets = [0, 32], sizes = [16, 32], strides = [1, 1]} : vector<16x96xf32> to vector<16x32xf32>
    %502 = vector.extract_strided_slice %499 {offsets = [0, 64], sizes = [16, 32], strides = [1, 1]} : vector<16x96xf32> to vector<16x32xf32>
    %503 = vector.extract_strided_slice %493 {offsets = [0, 96], sizes = [16, 32], strides = [1, 1]} : vector<16x128xf32> to vector<16x32xf32>
    %504 = math.tanh %503 : vector<16x32xf32>
    %505 = arith.mulf %501, %483 : vector<16x32xf32>
    %506 = arith.mulf %500, %504 : vector<16x32xf32>
    %507 = arith.addf %505, %506 : vector<16x32xf32>
    %508 = math.tanh %507 : vector<16x32xf32>
    %509 = arith.mulf %502, %508 : vector<16x32xf32>
    %510 = vector.extract_strided_slice %0 {offsets = [0, 21, 0], sizes = [16, 1, 64], strides = [1, 1, 1]} : vector<16x24x64xbf16> to vector<16x1x64xbf16>
    %511 = vector.shape_cast %510 : vector<16x1x64xbf16> to vector<16x64xbf16>
    %cst_72 = arith.constant dense<0.000000e+00> : vector<16x128xf32>
    %512 = tpu.matmul %511, %1, %cst_72 {dimension_numbers = #tpu.dot_dimension_numbers<[1], [0], [0], [1], [0, 0, 1, 1], [], []>} : vector<16x64xbf16>, vector<64x128xbf16>, vector<16x128xf32> -> vector<16x128xf32>
    %513 = arith.truncf %509 : vector<16x32xf32> to vector<16x32xbf16>
    %cst_73 = arith.constant dense<0.000000e+00> : vector<16x128xf32>
    %514 = tpu.matmul %513, %2, %cst_73 {dimension_numbers = #tpu.dot_dimension_numbers<[1], [0], [0], [1], [0, 0, 1, 1], [], []>} : vector<16x32xbf16>, vector<32x128xbf16>, vector<16x128xf32> -> vector<16x128xf32>
    %515 = arith.addf %512, %514 : vector<16x128xf32>
    %516 = vector.broadcast %3 : vector<1x128xf32> to vector<16x128xf32>
    %517 = arith.addf %515, %516 : vector<16x128xf32>
    %518 = vector.extract_strided_slice %517 {offsets = [0, 0], sizes = [16, 96], strides = [1, 1]} : vector<16x128xf32> to vector<16x96xf32>
    %519 = arith.negf %518 : vector<16x96xf32>
    %520 = math.exp %519 : vector<16x96xf32>
    %cst_74 = arith.constant 1.000000e+00 : f32
    %521 = vector.broadcast %cst_74 : f32 to vector<16x96xf32>
    %522 = arith.addf %521, %520 : vector<16x96xf32>
    %523 = arith.divf %521, %522 : vector<16x96xf32>
    %524 = vector.extract_strided_slice %523 {offsets = [0, 0], sizes = [16, 32], strides = [1, 1]} : vector<16x96xf32> to vector<16x32xf32>
    %525 = vector.extract_strided_slice %523 {offsets = [0, 32], sizes = [16, 32], strides = [1, 1]} : vector<16x96xf32> to vector<16x32xf32>
    %526 = vector.extract_strided_slice %523 {offsets = [0, 64], sizes = [16, 32], strides = [1, 1]} : vector<16x96xf32> to vector<16x32xf32>
    %527 = vector.extract_strided_slice %517 {offsets = [0, 96], sizes = [16, 32], strides = [1, 1]} : vector<16x128xf32> to vector<16x32xf32>
    %528 = math.tanh %527 : vector<16x32xf32>
    %529 = arith.mulf %525, %507 : vector<16x32xf32>
    %530 = arith.mulf %524, %528 : vector<16x32xf32>
    %531 = arith.addf %529, %530 : vector<16x32xf32>
    %532 = math.tanh %531 : vector<16x32xf32>
    %533 = arith.mulf %526, %532 : vector<16x32xf32>
    %534 = vector.extract_strided_slice %0 {offsets = [0, 22, 0], sizes = [16, 1, 64], strides = [1, 1, 1]} : vector<16x24x64xbf16> to vector<16x1x64xbf16>
    %535 = vector.shape_cast %534 : vector<16x1x64xbf16> to vector<16x64xbf16>
    %cst_75 = arith.constant dense<0.000000e+00> : vector<16x128xf32>
    %536 = tpu.matmul %535, %1, %cst_75 {dimension_numbers = #tpu.dot_dimension_numbers<[1], [0], [0], [1], [0, 0, 1, 1], [], []>} : vector<16x64xbf16>, vector<64x128xbf16>, vector<16x128xf32> -> vector<16x128xf32>
    %537 = arith.truncf %533 : vector<16x32xf32> to vector<16x32xbf16>
    %cst_76 = arith.constant dense<0.000000e+00> : vector<16x128xf32>
    %538 = tpu.matmul %537, %2, %cst_76 {dimension_numbers = #tpu.dot_dimension_numbers<[1], [0], [0], [1], [0, 0, 1, 1], [], []>} : vector<16x32xbf16>, vector<32x128xbf16>, vector<16x128xf32> -> vector<16x128xf32>
    %539 = arith.addf %536, %538 : vector<16x128xf32>
    %540 = vector.broadcast %3 : vector<1x128xf32> to vector<16x128xf32>
    %541 = arith.addf %539, %540 : vector<16x128xf32>
    %542 = vector.extract_strided_slice %541 {offsets = [0, 0], sizes = [16, 96], strides = [1, 1]} : vector<16x128xf32> to vector<16x96xf32>
    %543 = arith.negf %542 : vector<16x96xf32>
    %544 = math.exp %543 : vector<16x96xf32>
    %cst_77 = arith.constant 1.000000e+00 : f32
    %545 = vector.broadcast %cst_77 : f32 to vector<16x96xf32>
    %546 = arith.addf %545, %544 : vector<16x96xf32>
    %547 = arith.divf %545, %546 : vector<16x96xf32>
    %548 = vector.extract_strided_slice %547 {offsets = [0, 0], sizes = [16, 32], strides = [1, 1]} : vector<16x96xf32> to vector<16x32xf32>
    %549 = vector.extract_strided_slice %547 {offsets = [0, 32], sizes = [16, 32], strides = [1, 1]} : vector<16x96xf32> to vector<16x32xf32>
    %550 = vector.extract_strided_slice %547 {offsets = [0, 64], sizes = [16, 32], strides = [1, 1]} : vector<16x96xf32> to vector<16x32xf32>
    %551 = vector.extract_strided_slice %541 {offsets = [0, 96], sizes = [16, 32], strides = [1, 1]} : vector<16x128xf32> to vector<16x32xf32>
    %552 = math.tanh %551 : vector<16x32xf32>
    %553 = arith.mulf %549, %531 : vector<16x32xf32>
    %554 = arith.mulf %548, %552 : vector<16x32xf32>
    %555 = arith.addf %553, %554 : vector<16x32xf32>
    %556 = math.tanh %555 : vector<16x32xf32>
    %557 = arith.mulf %550, %556 : vector<16x32xf32>
    %558 = vector.extract_strided_slice %0 {offsets = [0, 23, 0], sizes = [16, 1, 64], strides = [1, 1, 1]} : vector<16x24x64xbf16> to vector<16x1x64xbf16>
    %559 = vector.shape_cast %558 : vector<16x1x64xbf16> to vector<16x64xbf16>
    %cst_78 = arith.constant dense<0.000000e+00> : vector<16x128xf32>
    %560 = tpu.matmul %559, %1, %cst_78 {dimension_numbers = #tpu.dot_dimension_numbers<[1], [0], [0], [1], [0, 0, 1, 1], [], []>} : vector<16x64xbf16>, vector<64x128xbf16>, vector<16x128xf32> -> vector<16x128xf32>
    %561 = arith.truncf %557 : vector<16x32xf32> to vector<16x32xbf16>
    %cst_79 = arith.constant dense<0.000000e+00> : vector<16x128xf32>
    %562 = tpu.matmul %561, %2, %cst_79 {dimension_numbers = #tpu.dot_dimension_numbers<[1], [0], [0], [1], [0, 0, 1, 1], [], []>} : vector<16x32xbf16>, vector<32x128xbf16>, vector<16x128xf32> -> vector<16x128xf32>
    %563 = arith.addf %560, %562 : vector<16x128xf32>
    %564 = vector.broadcast %3 : vector<1x128xf32> to vector<16x128xf32>
    %565 = arith.addf %563, %564 : vector<16x128xf32>
    %566 = vector.extract_strided_slice %565 {offsets = [0, 0], sizes = [16, 96], strides = [1, 1]} : vector<16x128xf32> to vector<16x96xf32>
    %567 = arith.negf %566 : vector<16x96xf32>
    %568 = math.exp %567 : vector<16x96xf32>
    %cst_80 = arith.constant 1.000000e+00 : f32
    %569 = vector.broadcast %cst_80 : f32 to vector<16x96xf32>
    %570 = arith.addf %569, %568 : vector<16x96xf32>
    %571 = arith.divf %569, %570 : vector<16x96xf32>
    %572 = vector.extract_strided_slice %571 {offsets = [0, 0], sizes = [16, 32], strides = [1, 1]} : vector<16x96xf32> to vector<16x32xf32>
    %573 = vector.extract_strided_slice %571 {offsets = [0, 32], sizes = [16, 32], strides = [1, 1]} : vector<16x96xf32> to vector<16x32xf32>
    %574 = vector.extract_strided_slice %571 {offsets = [0, 64], sizes = [16, 32], strides = [1, 1]} : vector<16x96xf32> to vector<16x32xf32>
    %575 = vector.extract_strided_slice %565 {offsets = [0, 96], sizes = [16, 32], strides = [1, 1]} : vector<16x128xf32> to vector<16x32xf32>
    %576 = math.tanh %575 : vector<16x32xf32>
    %577 = arith.mulf %573, %555 : vector<16x32xf32>
    %578 = arith.mulf %572, %576 : vector<16x32xf32>
    %579 = arith.addf %577, %578 : vector<16x32xf32>
    %580 = math.tanh %579 : vector<16x32xf32>
    %581 = arith.mulf %574, %580 : vector<16x32xf32>
    %c0_81 = arith.constant 0 : index
    %c0_82 = arith.constant 0 : index
    %582 = vector.load %arg5[%c0_81, %c0_82] : memref<16x32xf32, #tpu.memory_space<vmem>>, vector<16x32xf32>
    tpu.vector_store %arg5[%c0_81, %c0_82], %581 {strides = array<i32>} : memref<16x32xf32, #tpu.memory_space<vmem>>, vector<16x32xf32>,
    return
  }
  func.func @transform_0(%arg0: i32) -> (i32, i32, i32) {
    %c0_i32 = arith.constant 0 : i32
    %c0_i32_0 = arith.constant 0 : i32
    %c0_i32_1 = arith.constant 0 : i32
    return %arg0, %c0_i32, %c0_i32_0 : i32, i32, i32
  }
  func.func @transform_1(%arg0: i32) -> (i32, i32) {
    %c0_i32 = arith.constant 0 : i32
    %c0_i32_0 = arith.constant 0 : i32
    %c0_i32_1 = arith.constant 0 : i32
    return %c0_i32, %c0_i32_0 : i32, i32
  }
  func.func @transform_2(%arg0: i32) -> (i32, i32) {
    %c0_i32 = arith.constant 0 : i32
    %c0_i32_0 = arith.constant 0 : i32
    %c0_i32_1 = arith.constant 0 : i32
    return %c0_i32, %c0_i32_0 : i32, i32
  }
  func.func @transform_3(%arg0: i32) -> (i32, i32) {
    %c0_i32 = arith.constant 0 : i32
    %c0_i32_0 = arith.constant 0 : i32
    %c0_i32_1 = arith.constant 0 : i32
    return %c0_i32, %c0_i32_0 : i32, i32
  }
  func.func @transform_4(%arg0: i32) -> (i32, i32) {
    %c0_i32 = arith.constant 0 : i32
    %c0_i32_0 = arith.constant 0 : i32
    return %arg0, %c0_i32 : i32, i32
  }
}

</mosaic_0001>

<llo_original>
// kernel: tpu_custom_call.1
$region0: #{tpu_custom_call.1}
  #allocation0 [shape = 'u32[]', space=smem, size = 0x4, offset = 0x4, fixed_abs, tag = 'smem constant byte address 0x4 - core index']
  #allocation1 [shape = 'u32[72,128]{1,0:T(1,128)}', space=vmem, size = 0x9000, scoped, tag = 'internal scratch']
  %s0 = inlined_call_operand.hbm [shape: bf16[16,24,64], index: 0, kind: input, shape index: {}]
  %s1 = inlined_call_operand.hbm [shape: bf16[64,128], index: 1, kind: input, shape index: {}]
  %s2 = inlined_call_operand.hbm [shape: bf16[32,128], index: 2, kind: input, shape index: {}]
  %s3 = inlined_call_operand.vmem [shape: f32[1,128], index: 3, kind: input, shape index: {}]
  %s4 = inlined_call_operand.hbm [shape: f32[16,32], index: 4, kind: output, shape index: {}]
  %s5 = sld [smem:[#allocation0]]
  $region38: #{tpu_custom_call.1} parent=0
    _
  %s7 = ssub.s32 1, %s5
  %s8 = scalar_select 0, %s7, %s5
  $region1: #{tpu_custom_call.1} parent=0
    #allocation2 [shape = 'u8[98304]{0}', space=vmem, size = 0x18000, scoped, tag = 'input window, operand 0, single buffered']
    #allocation3 [shape = 's32[1]{0}', space=sflag, size = 0x4, scoped, tag = 'scoped memory for tpu_custom_call.1']
    #allocation4 [shape = 's32[1]{0}', space=sflag, size = 0x4, scoped, tag = 'scoped memory for tpu_custom_call.1']
    #allocation5 [shape = 'u8[16384]{0}', space=vmem, size = 0x4000, scoped, tag = 'input window, operand 1, single buffered']
    #allocation6 [shape = 's32[1]{0}', space=sflag, size = 0x4, scoped, tag = 'scoped memory for tpu_custom_call.1']
    #allocation7 [shape = 'u8[8192]{0}', space=vmem, size = 0x2000, scoped, tag = 'input window, operand 2, single buffered']
    #allocation8 [shape = 'u8[8192]{0}', space=vmem, size = 0x2000, scoped, tag = 'output window, operand 0, single buffered']
    %9 = vsyncpa [#allocation3], 0
    %10 = vsyncpa [#allocation6], 0
    %11 = vsyncpa [#allocation4], 0
    // Predicated region
    $region2: #{tpu_custom_call.1} parent=1 // pred_check
      _
    $region3: #{tpu_custom_call.1} parent=1 // pred_check_branch
      %13 = sbr.rel (0) target = $region5
    $region4: #{tpu_custom_call.1} parent=1 // pred_region
      %15 = vsyncadd [#allocation3], 0
      %s16 = sshll.u32 %s0, 4
      %s17 = int_to_ptr.hbm [resolvable:$true] %s16
      %s18 = sshll.u32 [#allocation2], 4
      %s19 = int_to_ptr.vmem [resolvable:$true] %s18
      %24 = dma.hbm_to_vmem [thread:$0]  %s17, 3072, %s19, [#allocation3], 64, 64, 4
    $region5: #{tpu_custom_call.1} parent=1 // pred_fallthru
      _
    // Predicated region
    $region6: #{tpu_custom_call.1} parent=1 // pred_check
      _
    $region7: #{tpu_custom_call.1} parent=1 // pred_check_branch
      %26 = sbr.rel (0) target = $region9
    $region8: #{tpu_custom_call.1} parent=1 // pred_region
      %28 = vsyncadd [#allocation6], 0
      %s29 = sshll.u32 %s1, 4
      %s30 = int_to_ptr.hbm [resolvable:$true] %s29
      %s31 = sshll.u32 [#allocation5], 4
      %s32 = int_to_ptr.vmem [resolvable:$true] %s31
      %37 = dma.hbm_to_vmem [thread:$0]  %s30, 512, %s32, [#allocation6], 64, 64, 4
    $region9: #{tpu_custom_call.1} parent=1 // pred_fallthru
      _
    // Predicated region
    $region10: #{tpu_custom_call.1} parent=1 // pred_check
      _
    $region11: #{tpu_custom_call.1} parent=1 // pred_check_branch
      %39 = sbr.rel (0) target = $region13
    $region12: #{tpu_custom_call.1} parent=1 // pred_region
      %41 = vsyncadd [#allocation6], 0
      %s42 = sshll.u32 %s2, 4
      %s43 = int_to_ptr.hbm [resolvable:$true] %s42
      %s44 = sshll.u32 [#allocation7], 4
      %s45 = int_to_ptr.vmem [resolvable:$true] %s44
      %50 = dma.hbm_to_vmem [thread:$0]  %s43, 256, %s45, [#allocation6], 64, 64, 4
    $region13: #{tpu_custom_call.1} parent=1 // pred_fallthru
      _
    // Predicated region
    $region14: #{tpu_custom_call.1} parent=1 // pred_check
      _
    $region15: #{tpu_custom_call.1} parent=1 // pred_check_branch
      %52 = sbr.rel (0) target = $region17
    $region16: #{tpu_custom_call.1} parent=1 // pred_region
      _
    $region17: #{tpu_custom_call.1} parent=1 // pred_fallthru
      _
    // Predicated region
    $region18: #{tpu_custom_call.1} parent=1 // pred_check
      _
    $region19: #{tpu_custom_call.1} parent=1 // pred_check_branch
      %54 = sbr.rel (0) target = $region21
    $region20: #{tpu_custom_call.1} parent=1 // pred_region
      %56 = dma.done [#allocation3], 3072
    $region21: #{tpu_custom_call.1} parent=1 // pred_fallthru
      _
    // Predicated region
    $region22: #{tpu_custom_call.1} parent=1 // pred_check
      _
    $region23: #{tpu_custom_call.1} parent=1 // pred_check_branch
      %58 = sbr.rel (0) target = $region25
    $region24: #{tpu_custom_call.1} parent=1 // pred_region
      %60 = dma.done [#allocation6], 512
    $region25: #{tpu_custom_call.1} parent=1 // pred_fallthru
      _
    // Predicated region
    $region26: #{tpu_custom_call.1} parent=1 // pred_check
      _
    $region27: #{tpu_custom_call.1} parent=1 // pred_check_branch
      %62 = sbr.rel (0) target = $region29
    $region28: #{tpu_custom_call.1} parent=1 // pred_region
      %64 = dma.done [#allocation6], 256
    $region29: #{tpu_custom_call.1} parent=1 // pred_fallthru
      _
    %v66 = vld [vmem:[#allocation2] sm:$0xf]
    %v67 = vld [vmem:[#allocation2 + $0x4] sm:$0xf]
    %v68 = vld [vmem:[#allocation2 + $0x8] sm:$0xf]
    %v69 = vld [vmem:[#allocation2 + $0xc] sm:$0xf]
    %v70 = vld [vmem:[#allocation2 + $0x10] sm:$0xf]
    %v71 = vld [vmem:[#allocation2 + $0x14] sm:$0xf]
    %v72 = vld [vmem:[#allocation2 + $0x18] sm:$0xf]
    %v73 = vld [vmem:[#allocation2 + $0x1c] sm:$0xf]
    %v74 = vld [vmem:[#allocation2 + $0x20] sm:$0xf]
    %v75 = vld [vmem:[#allocation2 + $0x24] sm:$0xf]
    %v76 = vld [vmem:[#allocation2 + $0x28] sm:$0xf]
    %v77 = vld [vmem:[#allocation2 + $0x2c] sm:$0xf]
    %v78 = vld [vmem:[#allocation2 + $0x30] sm:$0xf]
    %v79 = vld [vmem:[#allocation2 + $0x34] sm:$0xf]
    %v80 = vld [vmem:[#allocation2 + $0x38] sm:$0xf]
    %v81 = vld [vmem:[#allocation2 + $0x3c] sm:$0xf]
    %v82 = vld [vmem:[#allocation2 + $0x40] sm:$0xf]
    %v83 = vld [vmem:[#allocation2 + $0x44] sm:$0xf]
    %v84 = vld [vmem:[#allocation2 + $0x48] sm:$0xf]
    %v85 = vld [vmem:[#allocation2 + $0x4c] sm:$0xf]
    %v86 = vld [vmem:[#allocation2 + $0x50] sm:$0xf]
    %v87 = vld [vmem:[#allocation2 + $0x54] sm:$0xf]
    %v88 = vld [vmem:[#allocation2 + $0x58] sm:$0xf]
    %v89 = vld [vmem:[#allocation2 + $0x5c] sm:$0xf]
    %v90 = vld [vmem:[#allocation2 + $0x60] sm:$0xf]
    %v91 = vld [vmem:[#allocation2 + $0x64] sm:$0xf]
    %v92 = vld [vmem:[#allocation2 + $0x68] sm:$0xf]
    %v93 = vld [vmem:[#allocation2 + $0x6c] sm:$0xf]
    %v94 = vld [vmem:[#allocation2 + $0x70] sm:$0xf]
    %v95 = vld [vmem:[#allocation2 + $0x74] sm:$0xf]
    %v96 = vld [vmem:[#allocation2 + $0x78] sm:$0xf]
    %v97 = vld [vmem:[#allocation2 + $0x7c] sm:$0xf]
    %v98 = vld [vmem:[#allocation2 + $0x80] sm:$0xf]
    %v99 = vld [vmem:[#allocation2 + $0x84] sm:$0xf]
    %v100 = vld [vmem:[#allocation2 + $0x88] sm:$0xf]
    %v101 = vld [vmem:[#allocation2 + $0x8c] sm:$0xf]
    %v102 = vld [vmem:[#allocation2 + $0x90] sm:$0xf]
    %v103 = vld [vmem:[#allocation2 + $0x94] sm:$0xf]
    %v104 = vld [vmem:[#allocation2 + $0x98] sm:$0xf]
    %v105 = vld [vmem:[#allocation2 + $0x9c] sm:$0xf]
    %v106 = vld [vmem:[#allocation2 + $0xa0] sm:$0xf]
    %v107 = vld [vmem:[#allocation2 + $0xa4] sm:$0xf]
    %v108 = vld [vmem:[#allocation2 + $0xa8] sm:$0xf]
    %v109 = vld [vmem:[#allocation2 + $0xac] sm:$0xf]
    %v110 = vld [vmem:[#allocation2 + $0xb0] sm:$0xf]
    %v111 = vld [vmem:[#allocation2 + $0xb4] sm:$0xf]
    %v112 = vld [vmem:[#allocation2 + $0xb8] sm:$0xf]
    %v113 = vld [vmem:[#allocation2 + $0xbc] sm:$0xf]
    %v114 = vld [vmem:[#allocation5] sm:$0xf]
    %v115 = vld [vmem:[#allocation5 + $0x4] sm:$0xf]
    %v116 = vld [vmem:[#allocation5 + $0x8] sm:$0xf]
    %v117 = vld [vmem:[#allocation5 + $0xc] sm:$0xf]
    %v118 = vld [vmem:[#allocation5 + $0x10] sm:$0xf]
    %v119 = vld [vmem:[#allocation5 + $0x14] sm:$0xf]
    %v120 = vld [vmem:[#allocation5 + $0x18] sm:$0xf]
    %v121 = vld [vmem:[#allocation5 + $0x1c] sm:$0xf]
    %v122 = vld [vmem:[#allocation7] sm:$0xf]
    %v123 = vld [vmem:[#allocation7 + $0x4] sm:$0xf]
    %v124 = vld [vmem:[#allocation7 + $0x8] sm:$0xf]
    %v125 = vld [vmem:[#allocation7 + $0xc] sm:$0xf]
    %v126 = vld [vmem:[%s3] sm:$0x1]
    %v131 = vunpack.c.l.b16 %v122
    %v132 = vunpack.c.l.b16 %v123
    %v133 = vunpack.c.l.b16 %v124
    %v134 = vunpack.c.l.b16 %v125
    %v135 = vpack.c.b16 %v132, %v131
    %v136 = vpack.c.b16 %v134, %v133
    %vm139 = vcmask 261120
    %v141 = vsel %vm139, 0, 0
    %143 = vmatpush.bf16.msra.mxu0 0
    %144 = vmatpush.bf16.msra.mxu0 0
    %145 = vmatpush.bf16.msra.mxu0 0
    %146 = vmatpush.bf16.msra.mxu0 0
    %147 = vmatpush.bf16.msra.mxu0 0
    %148 = vmatpush.bf16.msra.mxu0 0
    %149 = vmatpush.bf16.msra.mxu0 %v136
    %150 = vmatpush.bf16.msra.mxu0 %v135
    %151 = vmatmul.bf16.gmra.mxu0 %v141
    %v152 = vpop.f32.mrf.mxu0
    %v153 = vadd.f32 0.0, %v152
    %v154 = vpop.f32.mrf.mxu0
    %v155 = vadd.f32 0.0, %v154
    %156 = vdwg.mxu0
    %v173 = vunpack.c.l.b16 %v66
    %v174 = vunpack.c.l.b16 %v69
    %v175 = vunpack.c.l.b16 %v72
    %v176 = vunpack.c.l.b16 %v75
    %v177 = vunpack.c.l.b16 %v78
    %v178 = vunpack.c.l.b16 %v81
    %v179 = vunpack.c.l.b16 %v84
    %v180 = vunpack.c.l.b16 %v87
    %v181 = vunpack.c.l.b16 %v90
    %v182 = vunpack.c.l.b16 %v93
    %v183 = vunpack.c.l.b16 %v96
    %v184 = vunpack.c.l.b16 %v99
    %v185 = vunpack.c.l.b16 %v102
    %v186 = vunpack.c.l.b16 %v105
    %v187 = vunpack.c.l.b16 %v108
    %v188 = vunpack.c.l.b16 %v111
    %v189 = vpack.c.b16 %v173, %v173
    %v190 = vpack.c.b16 %v174, %v174
    %v191 = vpack.c.b16 %v175, %v175
    %v192 = vpack.c.b16 %v176, %v176
    %v193 = vpack.c.b16 %v177, %v177
    %v194 = vpack.c.b16 %v178, %v178
    %v195 = vpack.c.b16 %v179, %v179
    %v196 = vpack.c.b16 %v180, %v180
    %v197 = vpack.c.b16 %v181, %v181
    %v198 = vpack.c.b16 %v182, %v182
    %v199 = vpack.c.b16 %v183, %v183
    %v200 = vpack.c.b16 %v184, %v184
    %v201 = vpack.c.b16 %v185, %v185
    %v202 = vpack.c.b16 %v186, %v186
    %v203 = vpack.c.b16 %v187, %v187
    %v204 = vpack.c.b16 %v188, %v188
    %v205 = vunpack.c.l.b16 %v189
    %v206 = vunpack.c.l.b16 %v190
    %v207 = vunpack.c.l.b16 %v191
    %v208 = vunpack.c.l.b16 %v192
    %v209 = vunpack.c.l.b16 %v193
    %v210 = vunpack.c.l.b16 %v194
    %v211 = vunpack.c.l.b16 %v195
    %v212 = vunpack.c.l.b16 %v196
    %v213 = vunpack.c.l.b16 %v197
    %v214 = vunpack.c.l.b16 %v198
    %v215 = vunpack.c.l.b16 %v199
    %v216 = vunpack.c.l.b16 %v200
    %v217 = vunpack.c.l.b16 %v201
    %v218 = vunpack.c.l.b16 %v202
    %v219 = vunpack.c.l.b16 %v203
    %v220 = vunpack.c.l.b16 %v204
    %v221 = vrot.slane %v206, 7
    %vm222 = vcmask 1041409
    %v223 = vsel %vm222, %v221, %v205
    %v224 = vrot.slane %v207, 6
    %vm225 = vcmask 1042434
    %v226 = vsel %vm225, %v224, %v223
    %v227 = vrot.slane %v208, 5
    %vm228 = vcmask 1043459
    %v229 = vsel %vm228, %v227, %v226
    %v230 = vrot.slane %v209, 4
    %vm231 = vcmask 1044484
    %v232 = vsel %vm231, %v230, %v229
    %v233 = vrot.slane %v210, 3
    %vm234 = vcmask 1045509
    %v235 = vsel %vm234, %v233, %v232
    %v236 = vrot.slane %v211, 2
    %vm237 = vcmask 1046534
    %v238 = vsel %vm237, %v236, %v235
    %v239 = vrot.slane %v212, 1
    %vm240 = vcmask 1047559
    %v241 = vsel %vm240, %v239, %v238
    %v242 = vrot.slane %v214, 7
    %v243 = vsel %vm222, %v242, %v213
    %v244 = vrot.slane %v215, 6
    %v245 = vsel %vm225, %v244, %v243
    %v246 = vrot.slane %v216, 5
    %v247 = vsel %vm228, %v246, %v245
    %v248 = vrot.slane %v217, 4
    %v249 = vsel %vm231, %v248, %v247
    %v250 = vrot.slane %v218, 3
    %v251 = vsel %vm234, %v250, %v249
    %v252 = vrot.slane %v219, 2
    %v253 = vsel %vm237, %v252, %v251
    %v254 = vrot.slane %v220, 1
    %v255 = vsel %vm240, %v254, %v253
    %v256 = vpack.c.b16 %v255, %v241
    %v265 = vunpack.c.l.b16 %v114
    %v266 = vunpack.c.l.b16 %v115
    %v267 = vunpack.c.l.b16 %v116
    %v268 = vunpack.c.l.b16 %v117
    %v269 = vunpack.c.l.b16 %v118
    %v270 = vunpack.c.l.b16 %v119
    %v271 = vunpack.c.l.b16 %v120
    %v272 = vunpack.c.l.b16 %v121
    %v273 = vpack.c.b16 %v266, %v265
    %v274 = vpack.c.b16 %v268, %v267
    %v275 = vpack.c.b16 %v270, %v269
    %v276 = vpack.c.b16 %v272, %v271
    %vm281 = vcmask 523264
    %v283 = vsel %vm281, %v256, 0
    %285 = vmatpush.bf16.msra.mxu0 0
    %286 = vmatpush.bf16.msra.mxu0 0
    %287 = vmatpush.bf16.msra.mxu0 0
    %288 = vmatpush.bf16.msra.mxu0 0
    %289 = vmatpush.bf16.msra.mxu0 %v276
    %290 = vmatpush.bf16.msra.mxu0 %v275
    %291 = vmatpush.bf16.msra.mxu0 %v274
    %292 = vmatpush.bf16.msra.mxu0 %v273
    %293 = vmatmul.bf16.gmra.mxu0 %v283
    %v294 = vpop.f32.mrf.mxu0
    %v295 = vadd.f32 %v153, %v294
    %v296 = vpop.f32.mrf.mxu0
    %v297 = vadd.f32 %v155, %v296
    %298 = vdwg.mxu0
    %v300 = vperm.slane %v126, 0
    %v302 = vadd.f32 %v295, %v300
    %v303 = vadd.f32 %v297, %v300
    %v304 = vxor.u32 %v302, 2147483648
    %v305 = vxor.u32 %v303, 2147483648
    %v306 = vmul.f32 %v304, 1.442695
    %v307 = vpow.pop %v306
    %v308 = vmul.f32 %v305, 1.442695
    %v309 = vpow.pop %v308
    %v310 = vadd.f32 %v307, 1.0
    %v311 = vadd.f32 %v309, 1.0
    %v312 = vrcp.pop %v310
    %v313 = vmul.f32 %v310, %v312
    %v314 = vsub.f32 1.0, %v313
    %v315 = vmul.f32 %v312, %v314
    %v316 = vadd.f32 %v312, %v315
    %vm317 = vweird.f32 %v310
    %vm318 = vweird.f32 %v312
    %vm319 = vmor %vm317, %vm318
    %v320 = vsel %vm319, %v312, %v316
    %v321 = vand.u32 2147483647, %v310
    %vm322 = vcmp.eq.f32.partialorder %v321, 8.507059e+37
    %v323 = vand.u32 %v310, 2147483648
    %v324 = vor.u32 1.1754944e-38, %v323
    %v325 = vsel %vm322, %v324, %v320
    %v326 = vmul.f32 1.0, %v325
    %v327 = vrcp.pop %v311
    %v328 = vmul.f32 %v311, %v327
    %v329 = vsub.f32 1.0, %v328
    %v330 = vmul.f32 %v327, %v329
    %v331 = vadd.f32 %v327, %v330
    %vm332 = vweird.f32 %v311
    %vm333 = vweird.f32 %v327
    %vm334 = vmor %vm332, %vm333
    %v335 = vsel %vm334, %v327, %v331
    %v336 = vand.u32 2147483647, %v311
    %vm337 = vcmp.eq.f32.partialorder %v336, 8.507059e+37
    %v338 = vand.u32 %v311, 2147483648
    %v339 = vor.u32 1.1754944e-38, %v338
    %v340 = vsel %vm337, %v339, %v335
    %v341 = vmul.f32 1.0, %v340
    %v342 = vtanh.pop %v302
    %v343 = vtanh.pop %v303
    %v344 = vmul.f32 %v326, 0.0
    %v345 = vmul.f32 %v341, 0.0
    %348 = vrot.lane.b32.xlu0 %v342, 32
    %v349 = vpop.permute.xlu0 %348
    %350 = vrot.lane.b32.xlu0 %v343, 32
    %v351 = vpop.permute.xlu0 %350
    %v354 = vmul.f32 %v326, %v349
    %v355 = vmul.f32 %v341, %v351
    %358 = vrot.lane.b32.xlu0 %v354, 32
    %v359 = vpop.permute.xlu0 %358
    %360 = vrot.lane.b32.xlu0 %v355, 32
    %v361 = vpop.permute.xlu0 %360
    %v364 = vadd.f32 %v344, %v359
    %v365 = vadd.f32 %v345, %v361
    %v366 = vtanh.pop %v364
    %v367 = vtanh.pop %v365
    %370 = vrot.lane.b32.xlu0 %v366, 32
    %v371 = vpop.permute.xlu0 %370
    %372 = vrot.lane.b32.xlu0 %v367, 32
    %v373 = vpop.permute.xlu0 %372
    %v376 = vmul.f32 %v326, %v371
    %v377 = vmul.f32 %v341, %v373
    %v378 = vpack.c.bf16 %v377, %v376
    %380 = vrot.lane.b32.xlu0 %v378, 64
    %v381 = vpop.permute.xlu0 %380
    %v383 = vsel %vm139, %v381, 0
    %385 = vmatpush.bf16.msra.mxu0 0
    %386 = vmatpush.bf16.msra.mxu0 0
    %387 = vmatpush.bf16.msra.mxu0 0
    %388 = vmatpush.bf16.msra.mxu0 0
    %389 = vmatpush.bf16.msra.mxu0 0
    %390 = vmatpush.bf16.msra.mxu0 0
    %391 = vmatpush.bf16.msra.mxu0 %v136
    %392 = vmatpush.bf16.msra.mxu0 %v135
    %393 = vmatmul.bf16.gmra.mxu0 %v383
    %v394 = vpop.f32.mrf.mxu0
    %v395 = vadd.f32 0.0, %v394
    %v396 = vpop.f32.mrf.mxu0
    %v397 = vadd.f32 0.0, %v396
    %398 = vdwg.mxu0
    %v399 = vrot.slane %v205, 1
    %v400 = vsel %vm222, %v206, %v399
    %v401 = vrot.slane %v207, 7
    %v402 = vsel %vm225, %v401, %v400
    %v403 = vrot.slane %v208, 6
    %v404 = vsel %vm228, %v403, %v402
    %v405 = vrot.slane %v209, 5
    %v406 = vsel %vm231, %v405, %v404
    %v407 = vrot.slane %v210, 4
    %v408 = vsel %vm234, %v407, %v406
    %v409 = vrot.slane %v211, 3
    %v410 = vsel %vm237, %v409, %v408
    %v411 = vrot.slane %v212, 2
    %v412 = vsel %vm240, %v411, %v410
    %v413 = vrot.slane %v213, 1
    %v414 = vsel %vm222, %v214, %v413
    %v415 = vrot.slane %v215, 7
    %v416 = vsel %vm225, %v415, %v414
    %v417 = vrot.slane %v216, 6
    %v418 = vsel %vm228, %v417, %v416
    %v419 = vrot.slane %v217, 5
    %v420 = vsel %vm231, %v419, %v418
    %v421 = vrot.slane %v218, 4
    %v422 = vsel %vm234, %v421, %v420
    %v423 = vrot.slane %v219, 3
    %v424 = vsel %vm237, %v423, %v422
    %v425 = vrot.slane %v220, 2
    %v426 = vsel %vm240, %v425, %v424
    %v427 = vpack.c.b16 %v426, %v412
    %v429 = vsel %vm281, %v427, 0
    %431 = vmatpush.bf16.msra.mxu0 0
    %432 = vmatpush.bf16.msra.mxu0 0
    %433 = vmatpush.bf16.msra.mxu0 0
    %434 = vmatpush.bf16.msra.mxu0 0
    %435 = vmatpush.bf16.msra.mxu0 %v276
    %436 = vmatpush.bf16.msra.mxu0 %v275
    %437 = vmatpush.bf16.msra.mxu0 %v274
    %438 = vmatpush.bf16.msra.mxu0 %v273
    %439 = vmatmul.bf16.gmra.mxu0 %v429
    %v440 = vpop.f32.mrf.mxu0
    %v441 = vadd.f32 %v395, %v440
    %v442 = vpop.f32.mrf.mxu0
    %v443 = vadd.f32 %v397, %v442
    %444 = vdwg.mxu0
    %v445 = vadd.f32 %v441, %v300
    %v446 = vadd.f32 %v443, %v300
    %v447 = vxor.u32 %v445, 2147483648
    %v448 = vxor.u32 %v446, 2147483648
    %v449 = vmul.f32 %v447, 1.442695
    %v450 = vpow.pop %v449
    %v451 = vmul.f32 %v448, 1.442695
    %v452 = vpow.pop %v451
    %v453 = vadd.f32 %v450, 1.0
    %v454 = vadd.f32 %v452, 1.0
    %v455 = vrcp.pop %v453
    %v456 = vmul.f32 %v453, %v455
    %v457 = vsub.f32 1.0, %v456
    %v458 = vmul.f32 %v455, %v457
    %v459 = vadd.f32 %v455, %v458
    %vm460 = vweird.f32 %v453
    %vm461 = vweird.f32 %v455
    %vm462 = vmor %vm460, %vm461
    %v463 = vsel %vm462, %v455, %v459
    %v464 = vand.u32 2147483647, %v453
    %vm465 = vcmp.eq.f32.partialorder %v464, 8.507059e+37
    %v466 = vand.u32 %v453, 2147483648
    %v467 = vor.u32 1.1754944e-38, %v466
    %v468 = vsel %vm465, %v467, %v463
    %v469 = vmul.f32 1.0, %v468
    %v470 = vrcp.pop %v454
    %v471 = vmul.f32 %v454, %v470
    %v472 = vsub.f32 1.0, %v471
    %v473 = vmul.f32 %v470, %v472
    %v474 = vadd.f32 %v470, %v473
    %vm475 = vweird.f32 %v454
    %vm476 = vweird.f32 %v470
    %vm477 = vmor %vm475, %vm476
    %v478 = vsel %vm477, %v470, %v474
    %v479 = vand.u32 2147483647, %v454
    %vm480 = vcmp.eq.f32.partialorder %v479, 8.507059e+37
    %v481 = vand.u32 %v454, 2147483648
    %v482 = vor.u32 1.1754944e-38, %v481
    %v483 = vsel %vm480, %v482, %v478
    %v484 = vmul.f32 1.0, %v483
    %v485 = vtanh.pop %v445
    %v486 = vtanh.pop %v446
    %v487 = vmul.f32 %v469, %v364
    %v488 = vmul.f32 %v484, %v365
    %491 = vrot.lane.b32.xlu0 %v485, 32
    %v492 = vpop.permute.xlu0 %491
    %493 = vrot.lane.b32.xlu0 %v486, 32
    %v494 = vpop.permute.xlu0 %493
    %v497 = vmul.f32 %v469, %v492
    %v498 = vmul.f32 %v484, %v494
    %501 = vrot.lane.b32.xlu0 %v497, 32
    %v502 = vpop.permute.xlu0 %501
    %503 = vrot.lane.b32.xlu0 %v498, 32
    %v504 = vpop.permute.xlu0 %503
    %v507 = vadd.f32 %v487, %v502
    %v508 = vadd.f32 %v488, %v504
    %v509 = vtanh.pop %v507
    %v510 = vtanh.pop %v508
    %513 = vrot.lane.b32.xlu0 %v509, 32
    %v514 = vpop.permute.xlu0 %513
    %515 = vrot.lane.b32.xlu0 %v510, 32
    %v516 = vpop.permute.xlu0 %515
    %v519 = vmul.f32 %v469, %v514
    %v520 = vmul.f32 %v484, %v516
    %v521 = vpack.c.bf16 %v520, %v519
    %523 = vrot.lane.b32.xlu0 %v521, 64
    %v524 = vpop.permute.xlu0 %523
    %v526 = vsel %vm139, %v524, 0
    %528 = vmatpush.bf16.msra.mxu0 0
    %529 = vmatpush.bf16.msra.mxu0 0
    %530 = vmatpush.bf16.msra.mxu0 0
    %531 = vmatpush.bf16.msra.mxu0 0
    %532 = vmatpush.bf16.msra.mxu0 0
    %533 = vmatpush.bf16.msra.mxu0 0
    %534 = vmatpush.bf16.msra.mxu0 %v136
    %535 = vmatpush.bf16.msra.mxu0 %v135
    %536 = vmatmul.bf16.gmra.mxu0 %v526
    %v537 = vpop.f32.mrf.mxu0
    %v538 = vadd.f32 0.0, %v537
    %v539 = vpop.f32.mrf.mxu0
    %v540 = vadd.f32 0.0, %v539
    %541 = vdwg.mxu0
    %v542 = vrot.slane %v205, 2
    %v543 = vrot.slane %v206, 1
    %v544 = vsel %vm222, %v543, %v542
    %v545 = vsel %vm225, %v207, %v544
    %v546 = vrot.slane %v208, 7
    %v547 = vsel %vm228, %v546, %v545
    %v548 = vrot.slane %v209, 6
    %v549 = vsel %vm231, %v548, %v547
    %v550 = vrot.slane %v210, 5
    %v551 = vsel %vm234, %v550, %v549
    %v552 = vrot.slane %v211, 4
    %v553 = vsel %vm237, %v552, %v551
    %v554 = vrot.slane %v212, 3
    %v555 = vsel %vm240, %v554, %v553
    %v556 = vrot.slane %v213, 2
    %v557 = vrot.slane %v214, 1
    %v558 = vsel %vm222, %v557, %v556
    %v559 = vsel %vm225, %v215, %v558
    %v560 = vrot.slane %v216, 7
    %v561 = vsel %vm228, %v560, %v559
    %v562 = vrot.slane %v217, 6
    %v563 = vsel %vm231, %v562, %v561
    %v564 = vrot.slane %v218, 5
    %v565 = vsel %vm234, %v564, %v563
    %v566 = vrot.slane %v219, 4
    %v567 = vsel %vm237, %v566, %v565
    %v568 = vrot.slane %v220, 3
    %v569 = vsel %vm240, %v568, %v567
    %v570 = vpack.c.b16 %v569, %v555
    %v572 = vsel %vm281, %v570, 0
    %574 = vmatpush.bf16.msra.mxu0 0
    %575 = vmatpush.bf16.msra.mxu0 0
    %576 = vmatpush.bf16.msra.mxu0 0
    %577 = vmatpush.bf16.msra.mxu0 0
    %578 = vmatpush.bf16.msra.mxu0 %v276
    %579 = vmatpush.bf16.msra.mxu0 %v275
    %580 = vmatpush.bf16.msra.mxu0 %v274
    %581 = vmatpush.bf16.msra.mxu0 %v273
    %582 = vmatmul.bf16.gmra.mxu0 %v572
    %v583 = vpop.f32.mrf.mxu0
    %v584 = vadd.f32 %v538, %v583
    %v585 = vpop.f32.mrf.mxu0
    %v586 = vadd.f32 %v540, %v585
    %587 = vdwg.mxu0
    %v588 = vadd.f32 %v584, %v300
    %v589 = vadd.f32 %v586, %v300
    %v590 = vxor.u32 %v588, 2147483648
    %v591 = vxor.u32 %v589, 2147483648
    %v592 = vmul.f32 %v590, 1.442695
    %v593 = vpow.pop %v592
    %v594 = vmul.f32 %v591, 1.442695
    %v595 = vpow.pop %v594
    %v596 = vadd.f32 %v593, 1.0
    %v597 = vadd.f32 %v595, 1.0
    %v598 = vrcp.pop %v596
    %v599 = vmul.f32 %v596, %v598
    %v600 = vsub.f32 1.0, %v599
    %v601 = vmul.f32 %v598, %v600
    %v602 = vadd.f32 %v598, %v601
    %vm603 = vweird.f32 %v596
    %vm604 = vweird.f32 %v598
    %vm605 = vmor %vm603, %vm604
    %v606 = vsel %vm605, %v598, %v602
    %v607 = vand.u32 2147483647, %v596
    %vm608 = vcmp.eq.f32.partialorder %v607, 8.507059e+37
    %v609 = vand.u32 %v596, 2147483648
    %v610 = vor.u32 1.1754944e-38, %v609
    %v611 = vsel %vm608, %v610, %v606
    %v612 = vmul.f32 1.0, %v611
    %v613 = vrcp.pop %v597
    %v614 = vmul.f32 %v597, %v613
    %v615 = vsub.f32 1.0, %v614
    %v616 = vmul.f32 %v613, %v615
    %v617 = vadd.f32 %v613, %v616
    %vm618 = vweird.f32 %v597
    %vm619 = vweird.f32 %v613
    %vm620 = vmor %vm618, %vm619
    %v621 = vsel %vm620, %v613, %v617
    %v622 = vand.u32 2147483647, %v597
    %vm623 = vcmp.eq.f32.partialorder %v622, 8.507059e+37
    %v624 = vand.u32 %v597, 2147483648
    %v625 = vor.u32 1.1754944e-38, %v624
    %v626 = vsel %vm623, %v625, %v621
    %v627 = vmul.f32 1.0, %v626
    %v628 = vtanh.pop %v588
    %v629 = vtanh.pop %v589
    %v630 = vmul.f32 %v612, %v507
    %v631 = vmul.f32 %v627, %v508
    %634 = vrot.lane.b32.xlu0 %v628, 32
    %v635 = vpop.permute.xlu0 %634
    %636 = vrot.lane.b32.xlu0 %v629, 32
    %v637 = vpop.permute.xlu0 %636
    %v640 = vmul.f32 %v612, %v635
    %v641 = vmul.f32 %v627, %v637
    %644 = vrot.lane.b32.xlu0 %v640, 32
    %v645 = vpop.permute.xlu0 %644
    %646 = vrot.lane.b32.xlu0 %v641, 32
    %v647 = vpop.permute.xlu0 %646
    %v650 = vadd.f32 %v630, %v645
    %v651 = vadd.f32 %v631, %v647
    %v652 = vtanh.pop %v650
    %v653 = vtanh.pop %v651
    %656 = vrot.lane.b32.xlu0 %v652, 32
    %v657 = vpop.permute.xlu0 %656
    %658 = vrot.lane.b32.xlu0 %v653, 32
    %v659 = vpop.permute.xlu0 %658
    %v662 = vmul.f32 %v612, %v657
    %v663 = vmul.f32 %v627, %v659
    %v664 = vpack.c.bf16 %v663, %v662
    %666 = vrot.lane.b32.xlu0 %v664, 64
    %v667 = vpop.permute.xlu0 %666
    %v669 = vsel %vm139, %v667, 0
    %671 = vmatpush.bf16.msra.mxu0 0
    %672 = vmatpush.bf16.msra.mxu0 0
    %673 = vmatpush.bf16.msra.mxu0 0
    %674 = vmatpush.bf16.msra.mxu0 0
    %675 = vmatpush.bf16.msra.mxu0 0
    %676 = vmatpush.bf16.msra.mxu0 0
    %677 = vmatpush.bf16.msra.mxu0 %v136
    %678 = vmatpush.bf16.msra.mxu0 %v135
    %679 = vmatmul.bf16.gmra.mxu0 %v669
    %v680 = vpop.f32.mrf.mxu0
    %v681 = vadd.f32 0.0, %v680
    %v682 = vpop.f32.mrf.mxu0
    %v683 = vadd.f32 0.0, %v682
    %684 = vdwg.mxu0
    %v685 = vrot.slane %v205, 3
    %v686 = vrot.slane %v206, 2
    %v687 = vsel %vm222, %v686, %v685
    %v688 = vrot.slane %v207, 1
    %v689 = vsel %vm225, %v688, %v687
    %v690 = vsel %vm228, %v208, %v689
    %v691 = vrot.slane %v209, 7
    %v692 = vsel %vm231, %v691, %v690
    %v693 = vrot.slane %v210, 6
    %v694 = vsel %vm234, %v693, %v692
    %v695 = vrot.slane %v211, 5
    %v696 = vsel %vm237, %v695, %v694
    %v697 = vrot.slane %v212, 4
    %v698 = vsel %vm240, %v697, %v696
    %v699 = vrot.slane %v213, 3
    %v700 = vrot.slane %v214, 2
    %v701 = vsel %vm222, %v700, %v699
    %v702 = vrot.slane %v215, 1
    %v703 = vsel %vm225, %v702, %v701
    %v704 = vsel %vm228, %v216, %v703
    %v705 = vrot.slane %v217, 7
    %v706 = vsel %vm231, %v705, %v704
    %v707 = vrot.slane %v218, 6
    %v708 = vsel %vm234, %v707, %v706
    %v709 = vrot.slane %v219, 5
    %v710 = vsel %vm237, %v709, %v708
    %v711 = vrot.slane %v220, 4
    %v712 = vsel %vm240, %v711, %v710
    %v713 = vpack.c.b16 %v712, %v698
    %v715 = vsel %vm281, %v713, 0
    %717 = vmatpush.bf16.msra.mxu0 0
    %718 = vmatpush.bf16.msra.mxu0 0
    %719 = vmatpush.bf16.msra.mxu0 0
    %720 = vmatpush.bf16.msra.mxu0 0
    %721 = vmatpush.bf16.msra.mxu0 %v276
    %722 = vmatpush.bf16.msra.mxu0 %v275
    %723 = vmatpush.bf16.msra.mxu0 %v274
    %724 = vmatpush.bf16.msra.mxu0 %v273
    %725 = vmatmul.bf16.gmra.mxu0 %v715
    %v726 = vpop.f32.mrf.mxu0
    %v727 = vadd.f32 %v681, %v726
    %v728 = vpop.f32.mrf.mxu0
    %v729 = vadd.f32 %v683, %v728
    %730 = vdwg.mxu0
    %v731 = vadd.f32 %v727, %v300
    %v732 = vadd.f32 %v729, %v300
    %v733 = vxor.u32 %v731, 2147483648
    %v734 = vxor.u32 %v732, 2147483648
    %v735 = vmul.f32 %v733, 1.442695
    %v736 = vpow.pop %v735
    %v737 = vmul.f32 %v734, 1.442695
    %v738 = vpow.pop %v737
    %v739 = vadd.f32 %v736, 1.0
    %v740 = vadd.f32 %v738, 1.0
    %v741 = vrcp.pop %v739
    %v742 = vmul.f32 %v739, %v741
    %v743 = vsub.f32 1.0, %v742
    %v744 = vmul.f32 %v741, %v743
    %v745 = vadd.f32 %v741, %v744
    %vm746 = vweird.f32 %v739
    %vm747 = vweird.f32 %v741
    %vm748 = vmor %vm746, %vm747
    %v749 = vsel %vm748, %v741, %v745
    %v750 = vand.u32 2147483647, %v739
    %vm751 = vcmp.eq.f32.partialorder %v750, 8.507059e+37
    %v752 = vand.u32 %v739, 2147483648
    %v753 = vor.u32 1.1754944e-38, %v752
    %v754 = vsel %vm751, %v753, %v749
    %v755 = vmul.f32 1.0, %v754
    %v756 = vrcp.pop %v740
    %v757 = vmul.f32 %v740, %v756
    %v758 = vsub.f32 1.0, %v757
    %v759 = vmul.f32 %v756, %v758
    %v760 = vadd.f32 %v756, %v759
    %vm761 = vweird.f32 %v740
    %vm762 = vweird.f32 %v756
    %vm763 = vmor %vm761, %vm762
    %v764 = vsel %vm763, %v756, %v760
    %v765 = vand.u32 2147483647, %v740
    %vm766 = vcmp.eq.f32.partialorder %v765, 8.507059e+37
    %v767 = vand.u32 %v740, 2147483648
    %v768 = vor.u32 1.1754944e-38, %v767
    %v769 = vsel %vm766, %v768, %v764
    %v770 = vmul.f32 1.0, %v769
    %v771 = vtanh.pop %v731
    %v772 = vtanh.pop %v732
    %v773 = vmul.f32 %v755, %v650
    %v774 = vmul.f32 %v770, %v651
    %777 = vrot.lane.b32.xlu0 %v771, 32
    %v778 = vpop.permute.xlu0 %777
    %779 = vrot.lane.b32.xlu0 %v772, 32
    %v780 = vpop.permute.xlu0 %779
    %v783 = vmul.f32 %v755, %v778
    %v784 = vmul.f32 %v770, %v780
    %787 = vrot.lane.b32.xlu0 %v783, 32
    %v788 = vpop.permute.xlu0 %787
    %789 = vrot.lane.b32.xlu0 %v784, 32
    %v790 = vpop.permute.xlu0 %789
    %v793 = vadd.f32 %v773, %v788
    %v794 = vadd.f32 %v774, %v790
    %v795 = vtanh.pop %v793
    %v796 = vtanh.pop %v794
    %799 = vrot.lane.b32.xlu0 %v795, 32
    %v800 = vpop.permute.xlu0 %799
    %801 = vrot.lane.b32.xlu0 %v796, 32
    %v802 = vpop.permute.xlu0 %801
    %v805 = vmul.f32 %v755, %v800
    %v806 = vmul.f32 %v770, %v802
    %v807 = vpack.c.bf16 %v806, %v805
    %809 = vrot.lane.b32.xlu0 %v807, 64
    %v810 = vpop.permute.xlu0 %809
    %v812 = vsel %vm139, %v810, 0
    %814 = vmatpush.bf16.msra.mxu0 0
    %815 = vmatpush.bf16.msra.mxu0 0
    %816 = vmatpush.bf16.msra.mxu0 0
    %817 = vmatpush.bf16.msra.mxu0 0
    %818 = vmatpush.bf16.msra.mxu0 0
    %819 = vmatpush.bf16.msra.mxu0 0
    %820 = vmatpush.bf16.msra.mxu0 %v136
    %821 = vmatpush.bf16.msra.mxu0 %v135
    %822 = vmatmul.bf16.gmra.mxu0 %v812
    %v823 = vpop.f32.mrf.mxu0
    %v824 = vadd.f32 0.0, %v823
    %v825 = vpop.f32.mrf.mxu0
    %v826 = vadd.f32 0.0, %v825
    %827 = vdwg.mxu0
    %v828 = vrot.slane %v205, 4
    %v829 = vrot.slane %v206, 3
    %v830 = vsel %vm222, %v829, %v828
    %v831 = vrot.slane %v207, 2
    %v832 = vsel %vm225, %v831, %v830
    %v833 = vrot.slane %v208, 1
    %v834 = vsel %vm228, %v833, %v832
    %v835 = vsel %vm231, %v209, %v834
    %v836 = vrot.slane %v210, 7
    %v837 = vsel %vm234, %v836, %v835
    %v838 = vrot.slane %v211, 6
    %v839 = vsel %vm237, %v838, %v837
    %v840 = vrot.slane %v212, 5
    %v841 = vsel %vm240, %v840, %v839
    %v842 = vrot.slane %v213, 4
    %v843 = vrot.slane %v214, 3
    %v844 = vsel %vm222, %v843, %v842
    %v845 = vrot.slane %v215, 2
    %v846 = vsel %vm225, %v845, %v844
    %v847 = vrot.slane %v216, 1
    %v848 = vsel %vm228, %v847, %v846
    %v849 = vsel %vm231, %v217, %v848
    %v850 = vrot.slane %v218, 7
    %v851 = vsel %vm234, %v850, %v849
    %v852 = vrot.slane %v219, 6
    %v853 = vsel %vm237, %v852, %v851
    %v854 = vrot.slane %v220, 5
    %v855 = vsel %vm240, %v854, %v853
    %v856 = vpack.c.b16 %v855, %v841
    %v858 = vsel %vm281, %v856, 0
    %860 = vmatpush.bf16.msra.mxu0 0
    %861 = vmatpush.bf16.msra.mxu0 0
    %862 = vmatpush.bf16.msra.mxu0 0
    %863 = vmatpush.bf16.msra.mxu0 0
    %864 = vmatpush.bf16.msra.mxu0 %v276
    %865 = vmatpush.bf16.msra.mxu0 %v275
    %866 = vmatpush.bf16.msra.mxu0 %v274
    %867 = vmatpush.bf16.msra.mxu0 %v273
    %868 = vmatmul.bf16.gmra.mxu0 %v858
    %v869 = vpop.f32.mrf.mxu0
    %v870 = vadd.f32 %v824, %v869
    %v871 = vpop.f32.mrf.mxu0
    %v872 = vadd.f32 %v826, %v871
    %873 = vdwg.mxu0
    %v874 = vadd.f32 %v870, %v300
    %v875 = vadd.f32 %v872, %v300
    %v876 = vxor.u32 %v874, 2147483648
    %v877 = vxor.u32 %v875, 2147483648
    %v878 = vmul.f32 %v876, 1.442695
    %v879 = vpow.pop %v878
    %v880 = vmul.f32 %v877, 1.442695
    %v881 = vpow.pop %v880
    %v882 = vadd.f32 %v879, 1.0
    %v883 = vadd.f32 %v881, 1.0
    %v884 = vrcp.pop %v882
    %v885 = vmul.f32 %v882, %v884
    %v886 = vsub.f32 1.0, %v885
    %v887 = vmul.f32 %v884, %v886
    %v888 = vadd.f32 %v884, %v887
    %vm889 = vweird.f32 %v882
    %vm890 = vweird.f32 %v884
    %vm891 = vmor %vm889, %vm890
    %v892 = vsel %vm891, %v884, %v888
    %v893 = vand.u32 2147483647, %v882
    %vm894 = vcmp.eq.f32.partialorder %v893, 8.507059e+37
    %v895 = vand.u32 %v882, 2147483648
    %v896 = vor.u32 1.1754944e-38, %v895
    %v897 = vsel %vm894, %v896, %v892
    %v898 = vmul.f32 1.0, %v897
    %v899 = vrcp.pop %v883
    %v900 = vmul.f32 %v883, %v899
    %v901 = vsub.f32 1.0, %v900
    %v902 = vmul.f32 %v899, %v901
    %v903 = vadd.f32 %v899, %v902
    %vm904 = vweird.f32 %v883
    %vm905 = vweird.f32 %v899
    %vm906 = vmor %vm904, %vm905
    %v907 = vsel %vm906, %v899, %v903
    %v908 = vand.u32 2147483647, %v883
    %vm909 = vcmp.eq.f32.partialorder %v908, 8.507059e+37
    %v910 = vand.u32 %v883, 2147483648
    %v911 = vor.u32 1.1754944e-38, %v910
    %v912 = vsel %vm909, %v911, %v907
    %v913 = vmul.f32 1.0, %v912
    %v914 = vtanh.pop %v874
    %v915 = vtanh.pop %v875
    %v916 = vmul.f32 %v898, %v793
    %v917 = vmul.f32 %v913, %v794
    %920 = vrot.lane.b32.xlu0 %v914, 32
    %v921 = vpop.permute.xlu0 %920
    %922 = vrot.lane.b32.xlu0 %v915, 32
    %v923 = vpop.permute.xlu0 %922
    %v926 = vmul.f32 %v898, %v921
    %v927 = vmul.f32 %v913, %v923
    %930 = vrot.lane.b32.xlu0 %v926, 32
    %v931 = vpop.permute.xlu0 %930
    %932 = vrot.lane.b32.xlu0 %v927, 32
    %v933 = vpop.permute.xlu0 %932
    %v936 = vadd.f32 %v916, %v931
    %v937 = vadd.f32 %v917, %v933
    %v938 = vtanh.pop %v936
    %v939 = vtanh.pop %v937
    %942 = vrot.lane.b32.xlu0 %v938, 32
    %v943 = vpop.permute.xlu0 %942
    %944 = vrot.lane.b32.xlu0 %v939, 32
    %v945 = vpop.permute.xlu0 %944
    %v948 = vmul.f32 %v898, %v943
    %v949 = vmul.f32 %v913, %v945
    %v950 = vpack.c.bf16 %v949, %v948
    %952 = vrot.lane.b32.xlu0 %v950, 64
    %v953 = vpop.permute.xlu0 %952
    %v955 = vsel %vm139, %v953, 0
    %957 = vmatpush.bf16.msra.mxu0 0
    %958 = vmatpush.bf16.msra.mxu0 0
    %959 = vmatpush.bf16.msra.mxu0 0
    %960 = vmatpush.bf16.msra.mxu0 0
    %961 = vmatpush.bf16.msra.mxu0 0
    %962 = vmatpush.bf16.msra.mxu0 0
    %963 = vmatpush.bf16.msra.mxu0 %v136
    %964 = vmatpush.bf16.msra.mxu0 %v135
    %965 = vmatmul.bf16.gmra.mxu0 %v955
    %v966 = vpop.f32.mrf.mxu0
    %v967 = vadd.f32 0.0, %v966
    %v968 = vpop.f32.mrf.mxu0
    %v969 = vadd.f32 0.0, %v968
    %970 = vdwg.mxu0
    %v971 = vrot.slane %v205, 5
    %v972 = vrot.slane %v206, 4
    %v973 = vsel %vm222, %v972, %v971
    %v974 = vrot.slane %v207, 3
    %v975 = vsel %vm225, %v974, %v973
    %v976 = vrot.slane %v208, 2
    %v977 = vsel %vm228, %v976, %v975
    %v978 = vrot.slane %v209, 1
    %v979 = vsel %vm231, %v978, %v977
    %v980 = vsel %vm234, %v210, %v979
    %v981 = vrot.slane %v211, 7
    %v982 = vsel %vm237, %v981, %v980
    %v983 = vrot.slane %v212, 6
    %v984 = vsel %vm240, %v983, %v982
    %v985 = vrot.slane %v213, 5
    %v986 = vrot.slane %v214, 4
    %v987 = vsel %vm222, %v986, %v985
    %v988 = vrot.slane %v215, 3
    %v989 = vsel %vm225, %v988, %v987
    %v990 = vrot.slane %v216, 2
    %v991 = vsel %vm228, %v990, %v989
    %v992 = vrot.slane %v217, 1
    %v993 = vsel %vm231, %v992, %v991
    %v994 = vsel %vm234, %v218, %v993
    %v995 = vrot.slane %v219, 7
    %v996 = vsel %vm237, %v995, %v994
    %v997 = vrot.slane %v220, 6
    %v998 = vsel %vm240, %v997, %v996
    %v999 = vpack.c.b16 %v998, %v984
    %v1001 = vsel %vm281, %v999, 0
    %1003 = vmatpush.bf16.msra.mxu0 0
    %1004 = vmatpush.bf16.msra.mxu0 0
    %1005 = vmatpush.bf16.msra.mxu0 0
    %1006 = vmatpush.bf16.msra.mxu0 0
    %1007 = vmatpush.bf16.msra.mxu0 %v276
    %1008 = vmatpush.bf16.msra.mxu0 %v275
    %1009 = vmatpush.bf16.msra.mxu0 %v274
    %1010 = vmatpush.bf16.msra.mxu0 %v273
    %1011 = vmatmul.bf16.gmra.mxu0 %v1001
    %v1012 = vpop.f32.mrf.mxu0
    %v1013 = vadd.f32 %v967, %v1012
    %v1014 = vpop.f32.mrf.mxu0
    %v1015 = vadd.f32 %v969, %v1014
    %1016 = vdwg.mxu0
    %v1017 = vadd.f32 %v1013, %v300
    %v1018 = vadd.f32 %v1015, %v300
    %v1019 = vxor.u32 %v1017, 2147483648
    %v1020 = vxor.u32 %v1018, 2147483648
    %v1021 = vmul.f32 %v1019, 1.442695
    %v1022 = vpow.pop %v1021
    %v1023 = vmul.f32 %v1020, 1.442695
    %v1024 = vpow.pop %v1023
    %v1025 = vadd.f32 %v1022, 1.0
    %v1026 = vadd.f32 %v1024, 1.0
    %v1027 = vrcp.pop %v1025
    %v1028 = vmul.f32 %v1025, %v1027
    %v1029 = vsub.f32 1.0, %v1028
    %v1030 = vmul.f32 %v1027, %v1029
    %v1031 = vadd.f32 %v1027, %v1030
    %vm1032 = vweird.f32 %v1025
    %vm1033 = vweird.f32 %v1027
    %vm1034 = vmor %vm1032, %vm1033
    %v1035 = vsel %vm1034, %v1027, %v1031
    %v1036 = vand.u32 2147483647, %v1025
    %vm1037 = vcmp.eq.f32.partialorder %v1036, 8.507059e+37
    %v1038 = vand.u32 %v1025, 2147483648
    %v1039 = vor.u32 1.1754944e-38, %v1038
    %v1040 = vsel %vm1037, %v1039, %v1035
    %v1041 = vmul.f32 1.0, %v1040
    %v1042 = vrcp.pop %v1026
    %v1043 = vmul.f32 %v1026, %v1042
    %v1044 = vsub.f32 1.0, %v1043
    %v1045 = vmul.f32 %v1042, %v1044
    %v1046 = vadd.f32 %v1042, %v1045
    %vm1047 = vweird.f32 %v1026
    %vm1048 = vweird.f32 %v1042
    %vm1049 = vmor %vm1047, %vm1048
    %v1050 = vsel %vm1049, %v1042, %v1046
    %v1051 = vand.u32 2147483647, %v1026
    %vm1052 = vcmp.eq.f32.partialorder %v1051, 8.507059e+37
    %v1053 = vand.u32 %v1026, 2147483648
    %v1054 = vor.u32 1.1754944e-38, %v1053
    %v1055 = vsel %vm1052, %v1054, %v1050
    %v1056 = vmul.f32 1.0, %v1055
    %v1057 = vtanh.pop %v1017
    %v1058 = vtanh.pop %v1018
    %v1059 = vmul.f32 %v1041, %v936
    %v1060 = vmul.f32 %v1056, %v937
    %1063 = vrot.lane.b32.xlu0 %v1057, 32
    %v1064 = vpop.permute.xlu0 %1063
    %1065 = vrot.lane.b32.xlu0 %v1058, 32
    %v1066 = vpop.permute.xlu0 %1065
    %v1069 = vmul.f32 %v1041, %v1064
    %v1070 = vmul.f32 %v1056, %v1066
    %1073 = vrot.lane.b32.xlu0 %v1069, 32
    %v1074 = vpop.permute.xlu0 %1073
    %1075 = vrot.lane.b32.xlu0 %v1070, 32
    %v1076 = vpop.permute.xlu0 %1075
    %v1079 = vadd.f32 %v1059, %v1074
    %v1080 = vadd.f32 %v1060, %v1076
    %v1081 = vtanh.pop %v1079
    %v1082 = vtanh.pop %v1080
    %1085 = vrot.lane.b32.xlu0 %v1081, 32
    %v1086 = vpop.permute.xlu0 %1085
    %1087 = vrot.lane.b32.xlu0 %v1082, 32
    %v1088 = vpop.permute.xlu0 %1087
    %v1091 = vmul.f32 %v1041, %v1086
    %v1092 = vmul.f32 %v1056, %v1088
    %v1093 = vpack.c.bf16 %v1092, %v1091
    %1095 = vrot.lane.b32.xlu0 %v1093, 64
    %v1096 = vpop.permute.xlu0 %1095
    %v1098 = vsel %vm139, %v1096, 0
    %1100 = vmatpush.bf16.msra.mxu0 0
    %1101 = vmatpush.bf16.msra.mxu0 0
    %1102 = vmatpush.bf16.msra.mxu0 0
    %1103 = vmatpush.bf16.msra.mxu0 0
    %1104 = vmatpush.bf16.msra.mxu0 0
    %1105 = vmatpush.bf16.msra.mxu0 0
    %1106 = vmatpush.bf16.msra.mxu0 %v136
    %1107 = vmatpush.bf16.msra.mxu0 %v135
    %1108 = vmatmul.bf16.gmra.mxu0 %v1098
    %v1109 = vpop.f32.mrf.mxu0
    %v1110 = vadd.f32 0.0, %v1109
    %v1111 = vpop.f32.mrf.mxu0
    %v1112 = vadd.f32 0.0, %v1111
    %1113 = vdwg.mxu0
    %v1114 = vrot.slane %v205, 6
    %v1115 = vrot.slane %v206, 5
    %v1116 = vsel %vm222, %v1115, %v1114
    %v1117 = vrot.slane %v207, 4
    %v1118 = vsel %vm225, %v1117, %v1116
    %v1119 = vrot.slane %v208, 3
    %v1120 = vsel %vm228, %v1119, %v1118
    %v1121 = vrot.slane %v209, 2
    %v1122 = vsel %vm231, %v1121, %v1120
    %v1123 = vrot.slane %v210, 1
    %v1124 = vsel %vm234, %v1123, %v1122
    %v1125 = vsel %vm237, %v211, %v1124
    %v1126 = vrot.slane %v212, 7
    %v1127 = vsel %vm240, %v1126, %v1125
    %v1128 = vrot.slane %v213, 6
    %v1129 = vrot.slane %v214, 5
    %v1130 = vsel %vm222, %v1129, %v1128
    %v1131 = vrot.slane %v215, 4
    %v1132 = vsel %vm225, %v1131, %v1130
    %v1133 = vrot.slane %v216, 3
    %v1134 = vsel %vm228, %v1133, %v1132
    %v1135 = vrot.slane %v217, 2
    %v1136 = vsel %vm231, %v1135, %v1134
    %v1137 = vrot.slane %v218, 1
    %v1138 = vsel %vm234, %v1137, %v1136
    %v1139 = vsel %vm237, %v219, %v1138
    %v1140 = vrot.slane %v220, 7
    %v1141 = vsel %vm240, %v1140, %v1139
    %v1142 = vpack.c.b16 %v1141, %v1127
    %v1144 = vsel %vm281, %v1142, 0
    %1146 = vmatpush.bf16.msra.mxu0 0
    %1147 = vmatpush.bf16.msra.mxu0 0
    %1148 = vmatpush.bf16.msra.mxu0 0
    %1149 = vmatpush.bf16.msra.mxu0 0
    %1150 = vmatpush.bf16.msra.mxu0 %v276
    %1151 = vmatpush.bf16.msra.mxu0 %v275
    %1152 = vmatpush.bf16.msra.mxu0 %v274
    %1153 = vmatpush.bf16.msra.mxu0 %v273
    %1154 = vmatmul.bf16.gmra.mxu0 %v1144
    %v1155 = vpop.f32.mrf.mxu0
    %v1156 = vadd.f32 %v1110, %v1155
    %v1157 = vpop.f32.mrf.mxu0
    %v1158 = vadd.f32 %v1112, %v1157
    %1159 = vdwg.mxu0
    %v1160 = vadd.f32 %v1156, %v300
    %v1161 = vadd.f32 %v1158, %v300
    %v1162 = vxor.u32 %v1160, 2147483648
    %v1163 = vxor.u32 %v1161, 2147483648
    %v1164 = vmul.f32 %v1162, 1.442695
    %v1165 = vpow.pop %v1164
    %v1166 = vmul.f32 %v1163, 1.442695
    %v1167 = vpow.pop %v1166
    %v1168 = vadd.f32 %v1165, 1.0
    %v1169 = vadd.f32 %v1167, 1.0
    %v1170 = vrcp.pop %v1168
    %v1171 = vmul.f32 %v1168, %v1170
    %v1172 = vsub.f32 1.0, %v1171
    %v1173 = vmul.f32 %v1170, %v1172
    %v1174 = vadd.f32 %v1170, %v1173
    %vm1175 = vweird.f32 %v1168
    %vm1176 = vweird.f32 %v1170
    %vm1177 = vmor %vm1175, %vm1176
    %v1178 = vsel %vm1177, %v1170, %v1174
    %v1179 = vand.u32 2147483647, %v1168
    %vm1180 = vcmp.eq.f32.partialorder %v1179, 8.507059e+37
    %v1181 = vand.u32 %v1168, 2147483648
    %v1182 = vor.u32 1.1754944e-38, %v1181
    %v1183 = vsel %vm1180, %v1182, %v1178
    %v1184 = vmul.f32 1.0, %v1183
    %v1185 = vrcp.pop %v1169
    %v1186 = vmul.f32 %v1169, %v1185
    %v1187 = vsub.f32 1.0, %v1186
    %v1188 = vmul.f32 %v1185, %v1187
    %v1189 = vadd.f32 %v1185, %v1188
    %vm1190 = vweird.f32 %v1169
    %vm1191 = vweird.f32 %v1185
    %vm1192 = vmor %vm1190, %vm1191
    %v1193 = vsel %vm1192, %v1185, %v1189
    %v1194 = vand.u32 2147483647, %v1169
    %vm1195 = vcmp.eq.f32.partialorder %v1194, 8.507059e+37
    %v1196 = vand.u32 %v1169, 2147483648
    %v1197 = vor.u32 1.1754944e-38, %v1196
    %v1198 = vsel %vm1195, %v1197, %v1193
    %v1199 = vmul.f32 1.0, %v1198
    %v1200 = vtanh.pop %v1160
    %v1201 = vtanh.pop %v1161
    %v1202 = vmul.f32 %v1184, %v1079
    %v1203 = vmul.f32 %v1199, %v1080
    %1206 = vrot.lane.b32.xlu0 %v1200, 32
    %v1207 = vpop.permute.xlu0 %1206
    %1208 = vrot.lane.b32.xlu0 %v1201, 32
    %v1209 = vpop.permute.xlu0 %1208
    %v1212 = vmul.f32 %v1184, %v1207
    %v1213 = vmul.f32 %v1199, %v1209
    %1216 = vrot.lane.b32.xlu0 %v1212, 32
    %v1217 = vpop.permute.xlu0 %1216
    %1218 = vrot.lane.b32.xlu0 %v1213, 32
    %v1219 = vpop.permute.xlu0 %1218
    %v1222 = vadd.f32 %v1202, %v1217
    %v1223 = vadd.f32 %v1203, %v1219
    %v1224 = vtanh.pop %v1222
    %v1225 = vtanh.pop %v1223
    %1228 = vrot.lane.b32.xlu0 %v1224, 32
    %v1229 = vpop.permute.xlu0 %1228
    %1230 = vrot.lane.b32.xlu0 %v1225, 32
    %v1231 = vpop.permute.xlu0 %1230
    %v1234 = vmul.f32 %v1184, %v1229
    %v1235 = vmul.f32 %v1199, %v1231
    %v1236 = vpack.c.bf16 %v1235, %v1234
    %1238 = vrot.lane.b32.xlu0 %v1236, 64
    %v1239 = vpop.permute.xlu0 %1238
    %v1241 = vsel %vm139, %v1239, 0
    %1243 = vmatpush.bf16.msra.mxu0 0
    %1244 = vmatpush.bf16.msra.mxu0 0
    %1245 = vmatpush.bf16.msra.mxu0 0
    %1246 = vmatpush.bf16.msra.mxu0 0
    %1247 = vmatpush.bf16.msra.mxu0 0
    %1248 = vmatpush.bf16.msra.mxu0 0
    %1249 = vmatpush.bf16.msra.mxu0 %v136
    %1250 = vmatpush.bf16.msra.mxu0 %v135
    %1251 = vmatmul.bf16.gmra.mxu0 %v1241
    %v1252 = vpop.f32.mrf.mxu0
    %v1253 = vadd.f32 0.0, %v1252
    %v1254 = vpop.f32.mrf.mxu0
    %v1255 = vadd.f32 0.0, %v1254
    %1256 = vdwg.mxu0
    %v1257 = vrot.slane %v205, 7
    %v1258 = vrot.slane %v206, 6
    %v1259 = vsel %vm222, %v1258, %v1257
    %v1260 = vrot.slane %v207, 5
    %v1261 = vsel %vm225, %v1260, %v1259
    %v1262 = vrot.slane %v208, 4
    %v1263 = vsel %vm228, %v1262, %v1261
    %v1264 = vrot.slane %v209, 3
    %v1265 = vsel %vm231, %v1264, %v1263
    %v1266 = vrot.slane %v210, 2
    %v1267 = vsel %vm234, %v1266, %v1265
    %v1268 = vrot.slane %v211, 1
    %v1269 = vsel %vm237, %v1268, %v1267
    %v1270 = vsel %vm240, %v212, %v1269
    %v1271 = vrot.slane %v213, 7
    %v1272 = vrot.slane %v214, 6
    %v1273 = vsel %vm222, %v1272, %v1271
    %v1274 = vrot.slane %v215, 5
    %v1275 = vsel %vm225, %v1274, %v1273
    %v1276 = vrot.slane %v216, 4
    %v1277 = vsel %vm228, %v1276, %v1275
    %v1278 = vrot.slane %v217, 3
    %v1279 = vsel %vm231, %v1278, %v1277
    %v1280 = vrot.slane %v218, 2
    %v1281 = vsel %vm234, %v1280, %v1279
    %v1282 = vrot.slane %v219, 1
    %v1283 = vsel %vm237, %v1282, %v1281
    %v1284 = vsel %vm240, %v220, %v1283
    %v1285 = vpack.c.b16 %v1284, %v1270
    %v1287 = vsel %vm281, %v1285, 0
    %1289 = vmatpush.bf16.msra.mxu0 0
    %1290 = vmatpush.bf16.msra.mxu0 0
    %1291 = vmatpush.bf16.msra.mxu0 0
    %1292 = vmatpush.bf16.msra.mxu0 0
    %1293 = vmatpush.bf16.msra.mxu0 %v276
    %1294 = vmatpush.bf16.msra.mxu0 %v275
    %1295 = vmatpush.bf16.msra.mxu0 %v274
    %1296 = vmatpush.bf16.msra.mxu0 %v273
    %1297 = vmatmul.bf16.gmra.mxu0 %v1287
    %v1298 = vpop.f32.mrf.mxu0
    %v1299 = vadd.f32 %v1253, %v1298
    %v1300 = vpop.f32.mrf.mxu0
    %v1301 = vadd.f32 %v1255, %v1300
    %1302 = vdwg.mxu0
    %v1303 = vadd.f32 %v1299, %v300
    %v1304 = vadd.f32 %v1301, %v300
    %v1305 = vxor.u32 %v1303, 2147483648
    %v1306 = vxor.u32 %v1304, 2147483648
    %v1307 = vmul.f32 %v1305, 1.442695
    %v1308 = vpow.pop %v1307
    %v1309 = vmul.f32 %v1306, 1.442695
    %v1310 = vpow.pop %v1309
    %v1311 = vadd.f32 %v1308, 1.0
    %v1312 = vadd.f32 %v1310, 1.0
    %v1313 = vrcp.pop %v1311
    %v1314 = vmul.f32 %v1311, %v1313
    %v1315 = vsub.f32 1.0, %v1314
    %v1316 = vmul.f32 %v1313, %v1315
    %v1317 = vadd.f32 %v1313, %v1316
    %vm1318 = vweird.f32 %v1311
    %vm1319 = vweird.f32 %v1313
    %vm1320 = vmor %vm1318, %vm1319
    %v1321 = vsel %vm1320, %v1313, %v1317
    %v1322 = vand.u32 2147483647, %v1311
    %vm1323 = vcmp.eq.f32.partialorder %v1322, 8.507059e+37
    %v1324 = vand.u32 %v1311, 2147483648
    %v1325 = vor.u32 1.1754944e-38, %v1324
    %v1326 = vsel %vm1323, %v1325, %v1321
    %v1327 = vmul.f32 1.0, %v1326
    %v1328 = vrcp.pop %v1312
    %v1329 = vmul.f32 %v1312, %v1328
    %v1330 = vsub.f32 1.0, %v1329
    %v1331 = vmul.f32 %v1328, %v1330
    %v1332 = vadd.f32 %v1328, %v1331
    %vm1333 = vweird.f32 %v1312
    %vm1334 = vweird.f32 %v1328
    %vm1335 = vmor %vm1333, %vm1334
    %v1336 = vsel %vm1335, %v1328, %v1332
    %v1337 = vand.u32 2147483647, %v1312
    %vm1338 = vcmp.eq.f32.partialorder %v1337, 8.507059e+37
    %v1339 = vand.u32 %v1312, 2147483648
    %v1340 = vor.u32 1.1754944e-38, %v1339
    %v1341 = vsel %vm1338, %v1340, %v1336
    %v1342 = vmul.f32 1.0, %v1341
    %v1343 = vtanh.pop %v1303
    %v1344 = vtanh.pop %v1304
    %v1345 = vmul.f32 %v1327, %v1222
    %v1346 = vmul.f32 %v1342, %v1223
    %1349 = vrot.lane.b32.xlu0 %v1343, 32
    %v1350 = vpop.permute.xlu0 %1349
    %1351 = vrot.lane.b32.xlu0 %v1344, 32
    %v1352 = vpop.permute.xlu0 %1351
    %v1355 = vmul.f32 %v1327, %v1350
    %v1356 = vmul.f32 %v1342, %v1352
    %1359 = vrot.lane.b32.xlu0 %v1355, 32
    %v1360 = vpop.permute.xlu0 %1359
    %1361 = vrot.lane.b32.xlu0 %v1356, 32
    %v1362 = vpop.permute.xlu0 %1361
    %v1365 = vadd.f32 %v1345, %v1360
    %v1366 = vadd.f32 %v1346, %v1362
    %v1367 = vtanh.pop %v1365
    %v1368 = vtanh.pop %v1366
    %1371 = vrot.lane.b32.xlu0 %v1367, 32
    %v1372 = vpop.permute.xlu0 %1371
    %1373 = vrot.lane.b32.xlu0 %v1368, 32
    %v1374 = vpop.permute.xlu0 %1373
    %v1377 = vmul.f32 %v1327, %v1372
    %v1378 = vmul.f32 %v1342, %v1374
    %v1379 = vpack.c.bf16 %v1378, %v1377
    %1381 = vrot.lane.b32.xlu0 %v1379, 64
    %v1382 = vpop.permute.xlu0 %1381
    %v1384 = vsel %vm139, %v1382, 0
    %1386 = vmatpush.bf16.msra.mxu0 0
    %1387 = vmatpush.bf16.msra.mxu0 0
    %1388 = vmatpush.bf16.msra.mxu0 0
    %1389 = vmatpush.bf16.msra.mxu0 0
    %1390 = vmatpush.bf16.msra.mxu0 0
    %1391 = vmatpush.bf16.msra.mxu0 0
    %1392 = vmatpush.bf16.msra.mxu0 %v136
    %1393 = vmatpush.bf16.msra.mxu0 %v135
    %1394 = vmatmul.bf16.gmra.mxu0 %v1384
    %v1395 = vpop.f32.mrf.mxu0
    %v1396 = vadd.f32 0.0, %v1395
    %v1397 = vpop.f32.mrf.mxu0
    %v1398 = vadd.f32 0.0, %v1397
    %1399 = vdwg.mxu0
    %v1416 = vunpack.c.l.b16 %v67
    %v1417 = vunpack.c.l.b16 %v70
    %v1418 = vunpack.c.l.b16 %v73
    %v1419 = vunpack.c.l.b16 %v76
    %v1420 = vunpack.c.l.b16 %v79
    %v1421 = vunpack.c.l.b16 %v82
    %v1422 = vunpack.c.l.b16 %v85
    %v1423 = vunpack.c.l.b16 %v88
    %v1424 = vunpack.c.l.b16 %v91
    %v1425 = vunpack.c.l.b16 %v94
    %v1426 = vunpack.c.l.b16 %v97
    %v1427 = vunpack.c.l.b16 %v100
    %v1428 = vunpack.c.l.b16 %v103
    %v1429 = vunpack.c.l.b16 %v106
    %v1430 = vunpack.c.l.b16 %v109
    %v1431 = vunpack.c.l.b16 %v112
    %v1432 = vpack.c.b16 %v1416, %v1416
    %v1433 = vpack.c.b16 %v1417, %v1417
    %v1434 = vpack.c.b16 %v1418, %v1418
    %v1435 = vpack.c.b16 %v1419, %v1419
    %v1436 = vpack.c.b16 %v1420, %v1420
    %v1437 = vpack.c.b16 %v1421, %v1421
    %v1438 = vpack.c.b16 %v1422, %v1422
    %v1439 = vpack.c.b16 %v1423, %v1423
    %v1440 = vpack.c.b16 %v1424, %v1424
    %v1441 = vpack.c.b16 %v1425, %v1425
    %v1442 = vpack.c.b16 %v1426, %v1426
    %v1443 = vpack.c.b16 %v1427, %v1427
    %v1444 = vpack.c.b16 %v1428, %v1428
    %v1445 = vpack.c.b16 %v1429, %v1429
    %v1446 = vpack.c.b16 %v1430, %v1430
    %v1447 = vpack.c.b16 %v1431, %v1431
    %v1448 = vunpack.c.l.b16 %v1432
    %v1449 = vunpack.c.l.b16 %v1433
    %v1450 = vunpack.c.l.b16 %v1434
    %v1451 = vunpack.c.l.b16 %v1435
    %v1452 = vunpack.c.l.b16 %v1436
    %v1453 = vunpack.c.l.b16 %v1437
    %v1454 = vunpack.c.l.b16 %v1438
    %v1455 = vunpack.c.l.b16 %v1439
    %v1456 = vunpack.c.l.b16 %v1440
    %v1457 = vunpack.c.l.b16 %v1441
    %v1458 = vunpack.c.l.b16 %v1442
    %v1459 = vunpack.c.l.b16 %v1443
    %v1460 = vunpack.c.l.b16 %v1444
    %v1461 = vunpack.c.l.b16 %v1445
    %v1462 = vunpack.c.l.b16 %v1446
    %v1463 = vunpack.c.l.b16 %v1447
    %v1464 = vrot.slane %v1449, 7
    %v1465 = vsel %vm222, %v1464, %v1448
    %v1466 = vrot.slane %v1450, 6
    %v1467 = vsel %vm225, %v1466, %v1465
    %v1468 = vrot.slane %v1451, 5
    %v1469 = vsel %vm228, %v1468, %v1467
    %v1470 = vrot.slane %v1452, 4
    %v1471 = vsel %vm231, %v1470, %v1469
    %v1472 = vrot.slane %v1453, 3
    %v1473 = vsel %vm234, %v1472, %v1471
    %v1474 = vrot.slane %v1454, 2
    %v1475 = vsel %vm237, %v1474, %v1473
    %v1476 = vrot.slane %v1455, 1
    %v1477 = vsel %vm240, %v1476, %v1475
    %v1478 = vrot.slane %v1457, 7
    %v1479 = vsel %vm222, %v1478, %v1456
    %v1480 = vrot.slane %v1458, 6
    %v1481 = vsel %vm225, %v1480, %v1479
    %v1482 = vrot.slane %v1459, 5
    %v1483 = vsel %vm228, %v1482, %v1481
    %v1484 = vrot.slane %v1460, 4
    %v1485 = vsel %vm231, %v1484, %v1483
    %v1486 = vrot.slane %v1461, 3
    %v1487 = vsel %vm234, %v1486, %v1485
    %v1488 = vrot.slane %v1462, 2
    %v1489 = vsel %vm237, %v1488, %v1487
    %v1490 = vrot.slane %v1463, 1
    %v1491 = vsel %vm240, %v1490, %v1489
    %v1492 = vpack.c.b16 %v1491, %v1477
    %v1494 = vsel %vm281, %v1492, 0
    %1496 = vmatpush.bf16.msra.mxu0 0
    %1497 = vmatpush.bf16.msra.mxu0 0
    %1498 = vmatpush.bf16.msra.mxu0 0
    %1499 = vmatpush.bf16.msra.mxu0 0
    %1500 = vmatpush.bf16.msra.mxu0 %v276
    %1501 = vmatpush.bf16.msra.mxu0 %v275
    %1502 = vmatpush.bf16.msra.mxu0 %v274
    %1503 = vmatpush.bf16.msra.mxu0 %v273
    %1504 = vmatmul.bf16.gmra.mxu0 %v1494
    %v1505 = vpop.f32.mrf.mxu0
    %v1506 = vadd.f32 %v1396, %v1505
    %v1507 = vpop.f32.mrf.mxu0
    %v1508 = vadd.f32 %v1398, %v1507
    %1509 = vdwg.mxu0
    %v1510 = vadd.f32 %v1506, %v300
    %v1511 = vadd.f32 %v1508, %v300
    %v1512 = vxor.u32 %v1510, 2147483648
    %v1513 = vxor.u32 %v1511, 2147483648
    %v1514 = vmul.f32 %v1512, 1.442695
    %v1515 = vpow.pop %v1514
    %v1516 = vmul.f32 %v1513, 1.442695
    %v1517 = vpow.pop %v1516
    %v1518 = vadd.f32 %v1515, 1.0
    %v1519 = vadd.f32 %v1517, 1.0
    %v1520 = vrcp.pop %v1518
    %v1521 = vmul.f32 %v1518, %v1520
    %v1522 = vsub.f32 1.0, %v1521
    %v1523 = vmul.f32 %v1520, %v1522
    %v1524 = vadd.f32 %v1520, %v1523
    %vm1525 = vweird.f32 %v1518
    %vm1526 = vweird.f32 %v1520
    %vm1527 = vmor %vm1525, %vm1526
    %v1528 = vsel %vm1527, %v1520, %v1524
    %v1529 = vand.u32 2147483647, %v1518
    %vm1530 = vcmp.eq.f32.partialorder %v1529, 8.507059e+37
    %v1531 = vand.u32 %v1518, 2147483648
    %v1532 = vor.u32 1.1754944e-38, %v1531
    %v1533 = vsel %vm1530, %v1532, %v1528
    %v1534 = vmul.f32 1.0, %v1533
    %v1535 = vrcp.pop %v1519
    %v1536 = vmul.f32 %v1519, %v1535
    %v1537 = vsub.f32 1.0, %v1536
    %v1538 = vmul.f32 %v1535, %v1537
    %v1539 = vadd.f32 %v1535, %v1538
    %vm1540 = vweird.f32 %v1519
    %vm1541 = vweird.f32 %v1535
    %vm1542 = vmor %vm1540, %vm1541
    %v1543 = vsel %vm1542, %v1535, %v1539
    %v1544 = vand.u32 2147483647, %v1519
    %vm1545 = vcmp.eq.f32.partialorder %v1544, 8.507059e+37
    %v1546 = vand.u32 %v1519, 2147483648
    %v1547 = vor.u32 1.1754944e-38, %v1546
    %v1548 = vsel %vm1545, %v1547, %v1543
    %v1549 = vmul.f32 1.0, %v1548
    %v1550 = vtanh.pop %v1510
    %v1551 = vtanh.pop %v1511
    %v1552 = vmul.f32 %v1534, %v1365
    %v1553 = vmul.f32 %v1549, %v1366
    %1556 = vrot.lane.b32.xlu0 %v1550, 32
    %v1557 = vpop.permute.xlu0 %1556
    %1558 = vrot.lane.b32.xlu0 %v1551, 32
    %v1559 = vpop.permute.xlu0 %1558
    %v1562 = vmul.f32 %v1534, %v1557
    %v1563 = vmul.f32 %v1549, %v1559
    %1566 = vrot.lane.b32.xlu0 %v1562, 32
    %v1567 = vpop.permute.xlu0 %1566
    %1568 = vrot.lane.b32.xlu0 %v1563, 32
    %v1569 = vpop.permute.xlu0 %1568
    %v1572 = vadd.f32 %v1552, %v1567
    %v1573 = vadd.f32 %v1553, %v1569
    %v1574 = vtanh.pop %v1572
    %v1575 = vtanh.pop %v1573
    %1578 = vrot.lane.b32.xlu0 %v1574, 32
    %v1579 = vpop.permute.xlu0 %1578
    %1580 = vrot.lane.b32.xlu0 %v1575, 32
    %v1581 = vpop.permute.xlu0 %1580
    %v1584 = vmul.f32 %v1534, %v1579
    %v1585 = vmul.f32 %v1549, %v1581
    %v1586 = vpack.c.bf16 %v1585, %v1584
    %1588 = vrot.lane.b32.xlu0 %v1586, 64
    %v1589 = vpop.permute.xlu0 %1588
    %v1591 = vsel %vm139, %v1589, 0
    %1593 = vmatpush.bf16.msra.mxu0 0
    %1594 = vmatpush.bf16.msra.mxu0 0
    %1595 = vmatpush.bf16.msra.mxu0 0
    %1596 = vmatpush.bf16.msra.mxu0 0
    %1597 = vmatpush.bf16.msra.mxu0 0
    %1598 = vmatpush.bf16.msra.mxu0 0
    %1599 = vmatpush.bf16.msra.mxu0 %v136
    %1600 = vmatpush.bf16.msra.mxu0 %v135
    %1601 = vmatmul.bf16.gmra.mxu0 %v1591
    %v1602 = vpop.f32.mrf.mxu0
    %v1603 = vadd.f32 0.0, %v1602
    %v1604 = vpop.f32.mrf.mxu0
    %v1605 = vadd.f32 0.0, %v1604
    %1606 = vdwg.mxu0
    %v1607 = vrot.slane %v1448, 1
    %v1608 = vsel %vm222, %v1449, %v1607
    %v1609 = vrot.slane %v1450, 7
    %v1610 = vsel %vm225, %v1609, %v1608
    %v1611 = vrot.slane %v1451, 6
    %v1612 = vsel %vm228, %v1611, %v1610
    %v1613 = vrot.slane %v1452, 5
    %v1614 = vsel %vm231, %v1613, %v1612
    %v1615 = vrot.slane %v1453, 4
    %v1616 = vsel %vm234, %v1615, %v1614
    %v1617 = vrot.slane %v1454, 3
    %v1618 = vsel %vm237, %v1617, %v1616
    %v1619 = vrot.slane %v1455, 2
    %v1620 = vsel %vm240, %v1619, %v1618
    %v1621 = vrot.slane %v1456, 1
    %v1622 = vsel %vm222, %v1457, %v1621
    %v1623 = vrot.slane %v1458, 7
    %v1624 = vsel %vm225, %v1623, %v1622
    %v1625 = vrot.slane %v1459, 6
    %v1626 = vsel %vm228, %v1625, %v1624
    %v1627 = vrot.slane %v1460, 5
    %v1628 = vsel %vm231, %v1627, %v1626
    %v1629 = vrot.slane %v1461, 4
    %v1630 = vsel %vm234, %v1629, %v1628
    %v1631 = vrot.slane %v1462, 3
    %v1632 = vsel %vm237, %v1631, %v1630
    %v1633 = vrot.slane %v1463, 2
    %v1634 = vsel %vm240, %v1633, %v1632
    %v1635 = vpack.c.b16 %v1634, %v1620
    %v1637 = vsel %vm281, %v1635, 0
    %1639 = vmatpush.bf16.msra.mxu0 0
    %1640 = vmatpush.bf16.msra.mxu0 0
    %1641 = vmatpush.bf16.msra.mxu0 0
    %1642 = vmatpush.bf16.msra.mxu0 0
    %1643 = vmatpush.bf16.msra.mxu0 %v276
    %1644 = vmatpush.bf16.msra.mxu0 %v275
    %1645 = vmatpush.bf16.msra.mxu0 %v274
    %1646 = vmatpush.bf16.msra.mxu0 %v273
    %1647 = vmatmul.bf16.gmra.mxu0 %v1637
    %v1648 = vpop.f32.mrf.mxu0
    %v1649 = vadd.f32 %v1603, %v1648
    %v1650 = vpop.f32.mrf.mxu0
    %v1651 = vadd.f32 %v1605, %v1650
    %1652 = vdwg.mxu0
    %v1653 = vadd.f32 %v1649, %v300
    %v1654 = vadd.f32 %v1651, %v300
    %v1655 = vxor.u32 %v1653, 2147483648
    %v1656 = vxor.u32 %v1654, 2147483648
    %v1657 = vmul.f32 %v1655, 1.442695
    %v1658 = vpow.pop %v1657
    %v1659 = vmul.f32 %v1656, 1.442695
    %v1660 = vpow.pop %v1659
    %v1661 = vadd.f32 %v1658, 1.0
    %v1662 = vadd.f32 %v1660, 1.0
    %v1663 = vrcp.pop %v1661
    %v1664 = vmul.f32 %v1661, %v1663
    %v1665 = vsub.f32 1.0, %v1664
    %v1666 = vmul.f32 %v1663, %v1665
    %v1667 = vadd.f32 %v1663, %v1666
    %vm1668 = vweird.f32 %v1661
    %vm1669 = vweird.f32 %v1663
    %vm1670 = vmor %vm1668, %vm1669
    %v1671 = vsel %vm1670, %v1663, %v1667
    %v1672 = vand.u32 2147483647, %v1661
    %vm1673 = vcmp.eq.f32.partialorder %v1672, 8.507059e+37
    %v1674 = vand.u32 %v1661, 2147483648
    %v1675 = vor.u32 1.1754944e-38, %v1674
    %v1676 = vsel %vm1673, %v1675, %v1671
    %v1677 = vmul.f32 1.0, %v1676
    %v1678 = vrcp.pop %v1662
    %v1679 = vmul.f32 %v1662, %v1678
    %v1680 = vsub.f32 1.0, %v1679
    %v1681 = vmul.f32 %v1678, %v1680
    %v1682 = vadd.f32 %v1678, %v1681
    %vm1683 = vweird.f32 %v1662
    %vm1684 = vweird.f32 %v1678
    %vm1685 = vmor %vm1683, %vm1684
    %v1686 = vsel %vm1685, %v1678, %v1682
    %v1687 = vand.u32 2147483647, %v1662
    %vm1688 = vcmp.eq.f32.partialorder %v1687, 8.507059e+37
    %v1689 = vand.u32 %v1662, 2147483648
    %v1690 = vor.u32 1.1754944e-38, %v1689
    %v1691 = vsel %vm1688, %v1690, %v1686
    %v1692 = vmul.f32 1.0, %v1691
    %v1693 = vtanh.pop %v1653
    %v1694 = vtanh.pop %v1654
    %v1695 = vmul.f32 %v1677, %v1572
    %v1696 = vmul.f32 %v1692, %v1573
    %1699 = vrot.lane.b32.xlu0 %v1693, 32
    %v1700 = vpop.permute.xlu0 %1699
    %1701 = vrot.lane.b32.xlu0 %v1694, 32
    %v1702 = vpop.permute.xlu0 %1701
    %v1705 = vmul.f32 %v1677, %v1700
    %v1706 = vmul.f32 %v1692, %v1702
    %1709 = vrot.lane.b32.xlu0 %v1705, 32
    %v1710 = vpop.permute.xlu0 %1709
    %1711 = vrot.lane.b32.xlu0 %v1706, 32
    %v1712 = vpop.permute.xlu0 %1711
    %v1715 = vadd.f32 %v1695, %v1710
    %v1716 = vadd.f32 %v1696, %v1712
    %v1717 = vtanh.pop %v1715
    %v1718 = vtanh.pop %v1716
    %1721 = vrot.lane.b32.xlu0 %v1717, 32
    %v1722 = vpop.permute.xlu0 %1721
    %1723 = vrot.lane.b32.xlu0 %v1718, 32
    %v1724 = vpop.permute.xlu0 %1723
    %v1727 = vmul.f32 %v1677, %v1722
    %v1728 = vmul.f32 %v1692, %v1724
    %v1729 = vpack.c.bf16 %v1728, %v1727
    %1731 = vrot.lane.b32.xlu0 %v1729, 64
    %v1732 = vpop.permute.xlu0 %1731
    %v1734 = vsel %vm139, %v1732, 0
    %1736 = vmatpush.bf16.msra.mxu0 0
    %1737 = vmatpush.bf16.msra.mxu0 0
    %1738 = vmatpush.bf16.msra.mxu0 0
    %1739 = vmatpush.bf16.msra.mxu0 0
    %1740 = vmatpush.bf16.msra.mxu0 0
    %1741 = vmatpush.bf16.msra.mxu0 0
    %1742 = vmatpush.bf16.msra.mxu0 %v136
    %1743 = vmatpush.bf16.msra.mxu0 %v135
    %1744 = vmatmul.bf16.gmra.mxu0 %v1734
    %v1745 = vpop.f32.mrf.mxu0
    %v1746 = vadd.f32 0.0, %v1745
    %v1747 = vpop.f32.mrf.mxu0
    %v1748 = vadd.f32 0.0, %v1747
    %1749 = vdwg.mxu0
    %v1750 = vrot.slane %v1448, 2
    %v1751 = vrot.slane %v1449, 1
    %v1752 = vsel %vm222, %v1751, %v1750
    %v1753 = vsel %vm225, %v1450, %v1752
    %v1754 = vrot.slane %v1451, 7
    %v1755 = vsel %vm228, %v1754, %v1753
    %v1756 = vrot.slane %v1452, 6
    %v1757 = vsel %vm231, %v1756, %v1755
    %v1758 = vrot.slane %v1453, 5
    %v1759 = vsel %vm234, %v1758, %v1757
    %v1760 = vrot.slane %v1454, 4
    %v1761 = vsel %vm237, %v1760, %v1759
    %v1762 = vrot.slane %v1455, 3
    %v1763 = vsel %vm240, %v1762, %v1761
    %v1764 = vrot.slane %v1456, 2
    %v1765 = vrot.slane %v1457, 1
    %v1766 = vsel %vm222, %v1765, %v1764
    %v1767 = vsel %vm225, %v1458, %v1766
    %v1768 = vrot.slane %v1459, 7
    %v1769 = vsel %vm228, %v1768, %v1767
    %v1770 = vrot.slane %v1460, 6
    %v1771 = vsel %vm231, %v1770, %v1769
    %v1772 = vrot.slane %v1461, 5
    %v1773 = vsel %vm234, %v1772, %v1771
    %v1774 = vrot.slane %v1462, 4
    %v1775 = vsel %vm237, %v1774, %v1773
    %v1776 = vrot.slane %v1463, 3
    %v1777 = vsel %vm240, %v1776, %v1775
    %v1778 = vpack.c.b16 %v1777, %v1763
    %v1780 = vsel %vm281, %v1778, 0
    %1782 = vmatpush.bf16.msra.mxu0 0
    %1783 = vmatpush.bf16.msra.mxu0 0
    %1784 = vmatpush.bf16.msra.mxu0 0
    %1785 = vmatpush.bf16.msra.mxu0 0
    %1786 = vmatpush.bf16.msra.mxu0 %v276
    %1787 = vmatpush.bf16.msra.mxu0 %v275
    %1788 = vmatpush.bf16.msra.mxu0 %v274
    %1789 = vmatpush.bf16.msra.mxu0 %v273
    %1790 = vmatmul.bf16.gmra.mxu0 %v1780
    %v1791 = vpop.f32.mrf.mxu0
    %v1792 = vadd.f32 %v1746, %v1791
    %v1793 = vpop.f32.mrf.mxu0
    %v1794 = vadd.f32 %v1748, %v1793
    %1795 = vdwg.mxu0
    %v1796 = vadd.f32 %v1792, %v300
    %v1797 = vadd.f32 %v1794, %v300
    %v1798 = vxor.u32 %v1796, 2147483648
    %v1799 = vxor.u32 %v1797, 2147483648
    %v1800 = vmul.f32 %v1798, 1.442695
    %v1801 = vpow.pop %v1800
    %v1802 = vmul.f32 %v1799, 1.442695
    %v1803 = vpow.pop %v1802
    %v1804 = vadd.f32 %v1801, 1.0
    %v1805 = vadd.f32 %v1803, 1.0
    %v1806 = vrcp.pop %v1804
    %v1807 = vmul.f32 %v1804, %v1806
    %v1808 = vsub.f32 1.0, %v1807
    %v1809 = vmul.f32 %v1806, %v1808
    %v1810 = vadd.f32 %v1806, %v1809
    %vm1811 = vweird.f32 %v1804
    %vm1812 = vweird.f32 %v1806
    %vm1813 = vmor %vm1811, %vm1812
    %v1814 = vsel %vm1813, %v1806, %v1810
    %v1815 = vand.u32 2147483647, %v1804
    %vm1816 = vcmp.eq.f32.partialorder %v1815, 8.507059e+37
    %v1817 = vand.u32 %v1804, 2147483648
    %v1818 = vor.u32 1.1754944e-38, %v1817
    %v1819 = vsel %vm1816, %v1818, %v1814
    %v1820 = vmul.f32 1.0, %v1819
    %v1821 = vrcp.pop %v1805
    %v1822 = vmul.f32 %v1805, %v1821
    %v1823 = vsub.f32 1.0, %v1822
    %v1824 = vmul.f32 %v1821, %v1823
    %v1825 = vadd.f32 %v1821, %v1824
    %vm1826 = vweird.f32 %v1805
    %vm1827 = vweird.f32 %v1821
    %vm1828 = vmor %vm1826, %vm1827
    %v1829 = vsel %vm1828, %v1821, %v1825
    %v1830 = vand.u32 2147483647, %v1805
    %vm1831 = vcmp.eq.f32.partialorder %v1830, 8.507059e+37
    %v1832 = vand.u32 %v1805, 2147483648
    %v1833 = vor.u32 1.1754944e-38, %v1832
    %v1834 = vsel %vm1831, %v1833, %v1829
    %v1835 = vmul.f32 1.0, %v1834
    %v1836 = vtanh.pop %v1796
    %v1837 = vtanh.pop %v1797
    %v1838 = vmul.f32 %v1820, %v1715
    %v1839 = vmul.f32 %v1835, %v1716
    %1842 = vrot.lane.b32.xlu0 %v1836, 32
    %v1843 = vpop.permute.xlu0 %1842
    %1844 = vrot.lane.b32.xlu0 %v1837, 32
    %v1845 = vpop.permute.xlu0 %1844
    %v1848 = vmul.f32 %v1820, %v1843
    %v1849 = vmul.f32 %v1835, %v1845
    %1852 = vrot.lane.b32.xlu0 %v1848, 32
    %v1853 = vpop.permute.xlu0 %1852
    %1854 = vrot.lane.b32.xlu0 %v1849, 32
    %v1855 = vpop.permute.xlu0 %1854
    %v1858 = vadd.f32 %v1838, %v1853
    %v1859 = vadd.f32 %v1839, %v1855
    %v1860 = vtanh.pop %v1858
    %v1861 = vtanh.pop %v1859
    %1864 = vrot.lane.b32.xlu0 %v1860, 32
    %v1865 = vpop.permute.xlu0 %1864
    %1866 = vrot.lane.b32.xlu0 %v1861, 32
    %v1867 = vpop.permute.xlu0 %1866
    %v1870 = vmul.f32 %v1820, %v1865
    %v1871 = vmul.f32 %v1835, %v1867
    %v1872 = vpack.c.bf16 %v1871, %v1870
    %1874 = vrot.lane.b32.xlu0 %v1872, 64
    %v1875 = vpop.permute.xlu0 %1874
    %v1877 = vsel %vm139, %v1875, 0
    %1879 = vmatpush.bf16.msra.mxu0 0
    %1880 = vmatpush.bf16.msra.mxu0 0
    %1881 = vmatpush.bf16.msra.mxu0 0
    %1882 = vmatpush.bf16.msra.mxu0 0
    %1883 = vmatpush.bf16.msra.mxu0 0
    %1884 = vmatpush.bf16.msra.mxu0 0
    %1885 = vmatpush.bf16.msra.mxu0 %v136
    %1886 = vmatpush.bf16.msra.mxu0 %v135
    %1887 = vmatmul.bf16.gmra.mxu0 %v1877
    %v1888 = vpop.f32.mrf.mxu0
    %v1889 = vadd.f32 0.0, %v1888
    %v1890 = vpop.f32.mrf.mxu0
    %v1891 = vadd.f32 0.0, %v1890
    %1892 = vdwg.mxu0
    %v1893 = vrot.slane %v1448, 3
    %v1894 = vrot.slane %v1449, 2
    %v1895 = vsel %vm222, %v1894, %v1893
    %v1896 = vrot.slane %v1450, 1
    %v1897 = vsel %vm225, %v1896, %v1895
    %v1898 = vsel %vm228, %v1451, %v1897
    %v1899 = vrot.slane %v1452, 7
    %v1900 = vsel %vm231, %v1899, %v1898
    %v1901 = vrot.slane %v1453, 6
    %v1902 = vsel %vm234, %v1901, %v1900
    %v1903 = vrot.slane %v1454, 5
    %v1904 = vsel %vm237, %v1903, %v1902
    %v1905 = vrot.slane %v1455, 4
    %v1906 = vsel %vm240, %v1905, %v1904
    %v1907 = vrot.slane %v1456, 3
    %v1908 = vrot.slane %v1457, 2
    %v1909 = vsel %vm222, %v1908, %v1907
    %v1910 = vrot.slane %v1458, 1
    %v1911 = vsel %vm225, %v1910, %v1909
    %v1912 = vsel %vm228, %v1459, %v1911
    %v1913 = vrot.slane %v1460, 7
    %v1914 = vsel %vm231, %v1913, %v1912
    %v1915 = vrot.slane %v1461, 6
    %v1916 = vsel %vm234, %v1915, %v1914
    %v1917 = vrot.slane %v1462, 5
    %v1918 = vsel %vm237, %v1917, %v1916
    %v1919 = vrot.slane %v1463, 4
    %v1920 = vsel %vm240, %v1919, %v1918
    %v1921 = vpack.c.b16 %v1920, %v1906
    %v1923 = vsel %vm281, %v1921, 0
    %1925 = vmatpush.bf16.msra.mxu0 0
    %1926 = vmatpush.bf16.msra.mxu0 0
    %1927 = vmatpush.bf16.msra.mxu0 0
    %1928 = vmatpush.bf16.msra.mxu0 0
    %1929 = vmatpush.bf16.msra.mxu0 %v276
    %1930 = vmatpush.bf16.msra.mxu0 %v275
    %1931 = vmatpush.bf16.msra.mxu0 %v274
    %1932 = vmatpush.bf16.msra.mxu0 %v273
    %1933 = vmatmul.bf16.gmra.mxu0 %v1923
    %v1934 = vpop.f32.mrf.mxu0
    %v1935 = vadd.f32 %v1889, %v1934
    %v1936 = vpop.f32.mrf.mxu0
    %v1937 = vadd.f32 %v1891, %v1936
    %1938 = vdwg.mxu0
    %v1939 = vadd.f32 %v1935, %v300
    %v1940 = vadd.f32 %v1937, %v300
    %v1941 = vxor.u32 %v1939, 2147483648
    %v1942 = vxor.u32 %v1940, 2147483648
    %v1943 = vmul.f32 %v1941, 1.442695
    %v1944 = vpow.pop %v1943
    %v1945 = vmul.f32 %v1942, 1.442695
    %v1946 = vpow.pop %v1945
    %v1947 = vadd.f32 %v1944, 1.0
    %v1948 = vadd.f32 %v1946, 1.0
    %v1949 = vrcp.pop %v1947
    %v1950 = vmul.f32 %v1947, %v1949
    %v1951 = vsub.f32 1.0, %v1950
    %v1952 = vmul.f32 %v1949, %v1951
    %v1953 = vadd.f32 %v1949, %v1952
    %vm1954 = vweird.f32 %v1947
    %vm1955 = vweird.f32 %v1949
    %vm1956 = vmor %vm1954, %vm1955
    %v1957 = vsel %vm1956, %v1949, %v1953
    %v1958 = vand.u32 2147483647, %v1947
    %vm1959 = vcmp.eq.f32.partialorder %v1958, 8.507059e+37
    %v1960 = vand.u32 %v1947, 2147483648
    %v1961 = vor.u32 1.1754944e-38, %v1960
    %v1962 = vsel %vm1959, %v1961, %v1957
    %v1963 = vmul.f32 1.0, %v1962
    %v1964 = vrcp.pop %v1948
    %v1965 = vmul.f32 %v1948, %v1964
    %v1966 = vsub.f32 1.0, %v1965
    %v1967 = vmul.f32 %v1964, %v1966
    %v1968 = vadd.f32 %v1964, %v1967
    %vm1969 = vweird.f32 %v1948
    %vm1970 = vweird.f32 %v1964
    %vm1971 = vmor %vm1969, %vm1970
    %v1972 = vsel %vm1971, %v1964, %v1968
    %v1973 = vand.u32 2147483647, %v1948
    %vm1974 = vcmp.eq.f32.partialorder %v1973, 8.507059e+37
    %v1975 = vand.u32 %v1948, 2147483648
    %v1976 = vor.u32 1.1754944e-38, %v1975
    %v1977 = vsel %vm1974, %v1976, %v1972
    %v1978 = vmul.f32 1.0, %v1977
    %v1979 = vtanh.pop %v1939
    %v1980 = vtanh.pop %v1940
    %v1981 = vmul.f32 %v1963, %v1858
    %v1982 = vmul.f32 %v1978, %v1859
    %1985 = vrot.lane.b32.xlu0 %v1979, 32
    %v1986 = vpop.permute.xlu0 %1985
    %1987 = vrot.lane.b32.xlu0 %v1980, 32
    %v1988 = vpop.permute.xlu0 %1987
    %v1991 = vmul.f32 %v1963, %v1986
    %v1992 = vmul.f32 %v1978, %v1988
    %1995 = vrot.lane.b32.xlu0 %v1991, 32
    %v1996 = vpop.permute.xlu0 %1995
    %1997 = vrot.lane.b32.xlu0 %v1992, 32
    %v1998 = vpop.permute.xlu0 %1997
    %v2001 = vadd.f32 %v1981, %v1996
    %v2002 = vadd.f32 %v1982, %v1998
    %v2003 = vtanh.pop %v2001
    %v2004 = vtanh.pop %v2002
    %2007 = vrot.lane.b32.xlu0 %v2003, 32
    %v2008 = vpop.permute.xlu0 %2007
    %2009 = vrot.lane.b32.xlu0 %v2004, 32
    %v2010 = vpop.permute.xlu0 %2009
    %v2013 = vmul.f32 %v1963, %v2008
    %v2014 = vmul.f32 %v1978, %v2010
    %v2015 = vpack.c.bf16 %v2014, %v2013
    %2017 = vrot.lane.b32.xlu0 %v2015, 64
    %v2018 = vpop.permute.xlu0 %2017
    %v2020 = vsel %vm139, %v2018, 0
    %2022 = vmatpush.bf16.msra.mxu0 0
    %2023 = vmatpush.bf16.msra.mxu0 0
    %2024 = vmatpush.bf16.msra.mxu0 0
    %2025 = vmatpush.bf16.msra.mxu0 0
    %2026 = vmatpush.bf16.msra.mxu0 0
    %2027 = vmatpush.bf16.msra.mxu0 0
    %2028 = vmatpush.bf16.msra.mxu0 %v136
    %2029 = vmatpush.bf16.msra.mxu0 %v135
    %2030 = vmatmul.bf16.gmra.mxu0 %v2020
    %v2031 = vpop.f32.mrf.mxu0
    %v2032 = vadd.f32 0.0, %v2031
    %v2033 = vpop.f32.mrf.mxu0
    %v2034 = vadd.f32 0.0, %v2033
    %2035 = vdwg.mxu0
    %v2036 = vrot.slane %v1448, 4
    %v2037 = vrot.slane %v1449, 3
    %v2038 = vsel %vm222, %v2037, %v2036
    %v2039 = vrot.slane %v1450, 2
    %v2040 = vsel %vm225, %v2039, %v2038
    %v2041 = vrot.slane %v1451, 1
    %v2042 = vsel %vm228, %v2041, %v2040
    %v2043 = vsel %vm231, %v1452, %v2042
    %v2044 = vrot.slane %v1453, 7
    %v2045 = vsel %vm234, %v2044, %v2043
    %v2046 = vrot.slane %v1454, 6
    %v2047 = vsel %vm237, %v2046, %v2045
    %v2048 = vrot.slane %v1455, 5
    %v2049 = vsel %vm240, %v2048, %v2047
    %v2050 = vrot.slane %v1456, 4
    %v2051 = vrot.slane %v1457, 3
    %v2052 = vsel %vm222, %v2051, %v2050
    %v2053 = vrot.slane %v1458, 2
    %v2054 = vsel %vm225, %v2053, %v2052
    %v2055 = vrot.slane %v1459, 1
    %v2056 = vsel %vm228, %v2055, %v2054
    %v2057 = vsel %vm231, %v1460, %v2056
    %v2058 = vrot.slane %v1461, 7
    %v2059 = vsel %vm234, %v2058, %v2057
    %v2060 = vrot.slane %v1462, 6
    %v2061 = vsel %vm237, %v2060, %v2059
    %v2062 = vrot.slane %v1463, 5
    %v2063 = vsel %vm240, %v2062, %v2061
    %v2064 = vpack.c.b16 %v2063, %v2049
    %v2066 = vsel %vm281, %v2064, 0
    %2068 = vmatpush.bf16.msra.mxu0 0
    %2069 = vmatpush.bf16.msra.mxu0 0
    %2070 = vmatpush.bf16.msra.mxu0 0
    %2071 = vmatpush.bf16.msra.mxu0 0
    %2072 = vmatpush.bf16.msra.mxu0 %v276
    %2073 = vmatpush.bf16.msra.mxu0 %v275
    %2074 = vmatpush.bf16.msra.mxu0 %v274
    %2075 = vmatpush.bf16.msra.mxu0 %v273
    %2076 = vmatmul.bf16.gmra.mxu0 %v2066
    %v2077 = vpop.f32.mrf.mxu0
    %v2078 = vadd.f32 %v2032, %v2077
    %v2079 = vpop.f32.mrf.mxu0
    %v2080 = vadd.f32 %v2034, %v2079
    %2081 = vdwg.mxu0
    %v2082 = vadd.f32 %v2078, %v300
    %v2083 = vadd.f32 %v2080, %v300
    %v2084 = vxor.u32 %v2082, 2147483648
    %v2085 = vxor.u32 %v2083, 2147483648
    %v2086 = vmul.f32 %v2084, 1.442695
    %v2087 = vpow.pop %v2086
    %v2088 = vmul.f32 %v2085, 1.442695
    %v2089 = vpow.pop %v2088
    %v2090 = vadd.f32 %v2087, 1.0
    %v2091 = vadd.f32 %v2089, 1.0
    %v2092 = vrcp.pop %v2090
    %v2093 = vmul.f32 %v2090, %v2092
    %v2094 = vsub.f32 1.0, %v2093
    %v2095 = vmul.f32 %v2092, %v2094
    %v2096 = vadd.f32 %v2092, %v2095
    %vm2097 = vweird.f32 %v2090
    %vm2098 = vweird.f32 %v2092
    %vm2099 = vmor %vm2097, %vm2098
    %v2100 = vsel %vm2099, %v2092, %v2096
    %v2101 = vand.u32 2147483647, %v2090
    %vm2102 = vcmp.eq.f32.partialorder %v2101, 8.507059e+37
    %v2103 = vand.u32 %v2090, 2147483648
    %v2104 = vor.u32 1.1754944e-38, %v2103
    %v2105 = vsel %vm2102, %v2104, %v2100
    %v2106 = vmul.f32 1.0, %v2105
    %v2107 = vrcp.pop %v2091
    %v2108 = vmul.f32 %v2091, %v2107
    %v2109 = vsub.f32 1.0, %v2108
    %v2110 = vmul.f32 %v2107, %v2109
    %v2111 = vadd.f32 %v2107, %v2110
    %vm2112 = vweird.f32 %v2091
    %vm2113 = vweird.f32 %v2107
    %vm2114 = vmor %vm2112, %vm2113
    %v2115 = vsel %vm2114, %v2107, %v2111
    %v2116 = vand.u32 2147483647, %v2091
    %vm2117 = vcmp.eq.f32.partialorder %v2116, 8.507059e+37
    %v2118 = vand.u32 %v2091, 2147483648
    %v2119 = vor.u32 1.1754944e-38, %v2118
    %v2120 = vsel %vm2117, %v2119, %v2115
    %v2121 = vmul.f32 1.0, %v2120
    %v2122 = vtanh.pop %v2082
    %v2123 = vtanh.pop %v2083
    %v2124 = vmul.f32 %v2106, %v2001
    %v2125 = vmul.f32 %v2121, %v2002
    %2128 = vrot.lane.b32.xlu0 %v2122, 32
    %v2129 = vpop.permute.xlu0 %2128
    %2130 = vrot.lane.b32.xlu0 %v2123, 32
    %v2131 = vpop.permute.xlu0 %2130
    %v2134 = vmul.f32 %v2106, %v2129
    %v2135 = vmul.f32 %v2121, %v2131
    %2138 = vrot.lane.b32.xlu0 %v2134, 32
    %v2139 = vpop.permute.xlu0 %2138
    %2140 = vrot.lane.b32.xlu0 %v2135, 32
    %v2141 = vpop.permute.xlu0 %2140
    %v2144 = vadd.f32 %v2124, %v2139
    %v2145 = vadd.f32 %v2125, %v2141
    %v2146 = vtanh.pop %v2144
    %v2147 = vtanh.pop %v2145
    %2150 = vrot.lane.b32.xlu0 %v2146, 32
    %v2151 = vpop.permute.xlu0 %2150
    %2152 = vrot.lane.b32.xlu0 %v2147, 32
    %v2153 = vpop.permute.xlu0 %2152
    %v2156 = vmul.f32 %v2106, %v2151
    %v2157 = vmul.f32 %v2121, %v2153
    %v2158 = vpack.c.bf16 %v2157, %v2156
    %2160 = vrot.lane.b32.xlu0 %v2158, 64
    %v2161 = vpop.permute.xlu0 %2160
    %v2163 = vsel %vm139, %v2161, 0
    %2165 = vmatpush.bf16.msra.mxu0 0
    %2166 = vmatpush.bf16.msra.mxu0 0
    %2167 = vmatpush.bf16.msra.mxu0 0
    %2168 = vmatpush.bf16.msra.mxu0 0
    %2169 = vmatpush.bf16.msra.mxu0 0
    %2170 = vmatpush.bf16.msra.mxu0 0
    %2171 = vmatpush.bf16.msra.mxu0 %v136
    %2172 = vmatpush.bf16.msra.mxu0 %v135
    %2173 = vmatmul.bf16.gmra.mxu0 %v2163
    %v2174 = vpop.f32.mrf.mxu0
    %v2175 = vadd.f32 0.0, %v2174
    %v2176 = vpop.f32.mrf.mxu0
    %v2177 = vadd.f32 0.0, %v2176
    %2178 = vdwg.mxu0
    %v2179 = vrot.slane %v1448, 5
    %v2180 = vrot.slane %v1449, 4
    %v2181 = vsel %vm222, %v2180, %v2179
    %v2182 = vrot.slane %v1450, 3
    %v2183 = vsel %vm225, %v2182, %v2181
    %v2184 = vrot.slane %v1451, 2
    %v2185 = vsel %vm228, %v2184, %v2183
    %v2186 = vrot.slane %v1452, 1
    %v2187 = vsel %vm231, %v2186, %v2185
    %v2188 = vsel %vm234, %v1453, %v2187
    %v2189 = vrot.slane %v1454, 7
    %v2190 = vsel %vm237, %v2189, %v2188
    %v2191 = vrot.slane %v1455, 6
    %v2192 = vsel %vm240, %v2191, %v2190
    %v2193 = vrot.slane %v1456, 5
    %v2194 = vrot.slane %v1457, 4
    %v2195 = vsel %vm222, %v2194, %v2193
    %v2196 = vrot.slane %v1458, 3
    %v2197 = vsel %vm225, %v2196, %v2195
    %v2198 = vrot.slane %v1459, 2
    %v2199 = vsel %vm228, %v2198, %v2197
    %v2200 = vrot.slane %v1460, 1
    %v2201 = vsel %vm231, %v2200, %v2199
    %v2202 = vsel %vm234, %v1461, %v2201
    %v2203 = vrot.slane %v1462, 7
    %v2204 = vsel %vm237, %v2203, %v2202
    %v2205 = vrot.slane %v1463, 6
    %v2206 = vsel %vm240, %v2205, %v2204
    %v2207 = vpack.c.b16 %v2206, %v2192
    %v2209 = vsel %vm281, %v2207, 0
    %2211 = vmatpush.bf16.msra.mxu0 0
    %2212 = vmatpush.bf16.msra.mxu0 0
    %2213 = vmatpush.bf16.msra.mxu0 0
    %2214 = vmatpush.bf16.msra.mxu0 0
    %2215 = vmatpush.bf16.msra.mxu0 %v276
    %2216 = vmatpush.bf16.msra.mxu0 %v275
    %2217 = vmatpush.bf16.msra.mxu0 %v274
    %2218 = vmatpush.bf16.msra.mxu0 %v273
    %2219 = vmatmul.bf16.gmra.mxu0 %v2209
    %v2220 = vpop.f32.mrf.mxu0
    %v2221 = vadd.f32 %v2175, %v2220
    %v2222 = vpop.f32.mrf.mxu0
    %v2223 = vadd.f32 %v2177, %v2222
    %2224 = vdwg.mxu0
    %v2225 = vadd.f32 %v2221, %v300
    %v2226 = vadd.f32 %v2223, %v300
    %v2227 = vxor.u32 %v2225, 2147483648
    %v2228 = vxor.u32 %v2226, 2147483648
    %v2229 = vmul.f32 %v2227, 1.442695
    %v2230 = vpow.pop %v2229
    %v2231 = vmul.f32 %v2228, 1.442695
    %v2232 = vpow.pop %v2231
    %v2233 = vadd.f32 %v2230, 1.0
    %v2234 = vadd.f32 %v2232, 1.0
    %v2235 = vrcp.pop %v2233
    %v2236 = vmul.f32 %v2233, %v2235
    %v2237 = vsub.f32 1.0, %v2236
    %v2238 = vmul.f32 %v2235, %v2237
    %v2239 = vadd.f32 %v2235, %v2238
    %vm2240 = vweird.f32 %v2233
    %vm2241 = vweird.f32 %v2235
    %vm2242 = vmor %vm2240, %vm2241
    %v2243 = vsel %vm2242, %v2235, %v2239
    %v2244 = vand.u32 2147483647, %v2233
    %vm2245 = vcmp.eq.f32.partialorder %v2244, 8.507059e+37
    %v2246 = vand.u32 %v2233, 2147483648
    %v2247 = vor.u32 1.1754944e-38, %v2246
    %v2248 = vsel %vm2245, %v2247, %v2243
    %v2249 = vmul.f32 1.0, %v2248
    %v2250 = vrcp.pop %v2234
    %v2251 = vmul.f32 %v2234, %v2250
    %v2252 = vsub.f32 1.0, %v2251
    %v2253 = vmul.f32 %v2250, %v2252
    %v2254 = vadd.f32 %v2250, %v2253
    %vm2255 = vweird.f32 %v2234
    %vm2256 = vweird.f32 %v2250
    %vm2257 = vmor %vm2255, %vm2256
    %v2258 = vsel %vm2257, %v2250, %v2254
    %v2259 = vand.u32 2147483647, %v2234
    %vm2260 = vcmp.eq.f32.partialorder %v2259, 8.507059e+37
    %v2261 = vand.u32 %v2234, 2147483648
    %v2262 = vor.u32 1.1754944e-38, %v2261
    %v2263 = vsel %vm2260, %v2262, %v2258
    %v2264 = vmul.f32 1.0, %v2263
    %v2265 = vtanh.pop %v2225
    %v2266 = vtanh.pop %v2226
    %v2267 = vmul.f32 %v2249, %v2144
    %v2268 = vmul.f32 %v2264, %v2145
    %2271 = vrot.lane.b32.xlu0 %v2265, 32
    %v2272 = vpop.permute.xlu0 %2271
    %2273 = vrot.lane.b32.xlu0 %v2266, 32
    %v2274 = vpop.permute.xlu0 %2273
    %v2277 = vmul.f32 %v2249, %v2272
    %v2278 = vmul.f32 %v2264, %v2274
    %2281 = vrot.lane.b32.xlu0 %v2277, 32
    %v2282 = vpop.permute.xlu0 %2281
    %2283 = vrot.lane.b32.xlu0 %v2278, 32
    %v2284 = vpop.permute.xlu0 %2283
    %v2287 = vadd.f32 %v2267, %v2282
    %v2288 = vadd.f32 %v2268, %v2284
    %v2289 = vtanh.pop %v2287
    %v2290 = vtanh.pop %v2288
    %2293 = vrot.lane.b32.xlu0 %v2289, 32
    %v2294 = vpop.permute.xlu0 %2293
    %2295 = vrot.lane.b32.xlu0 %v2290, 32
    %v2296 = vpop.permute.xlu0 %2295
    %v2299 = vmul.f32 %v2249, %v2294
    %v2300 = vmul.f32 %v2264, %v2296
    %v2301 = vpack.c.bf16 %v2300, %v2299
    %2303 = vrot.lane.b32.xlu0 %v2301, 64
    %v2304 = vpop.permute.xlu0 %2303
    %v2306 = vsel %vm139, %v2304, 0
    %2308 = vmatpush.bf16.msra.mxu0 0
    %2309 = vmatpush.bf16.msra.mxu0 0
    %2310 = vmatpush.bf16.msra.mxu0 0
    %2311 = vmatpush.bf16.msra.mxu0 0
    %2312 = vmatpush.bf16.msra.mxu0 0
    %2313 = vmatpush.bf16.msra.mxu0 0
    %2314 = vmatpush.bf16.msra.mxu0 %v136
    %2315 = vmatpush.bf16.msra.mxu0 %v135
    %2316 = vmatmul.bf16.gmra.mxu0 %v2306
    %v2317 = vpop.f32.mrf.mxu0
    %v2318 = vadd.f32 0.0, %v2317
    %v2319 = vpop.f32.mrf.mxu0
    %v2320 = vadd.f32 0.0, %v2319
    %2321 = vdwg.mxu0
    %v2322 = vrot.slane %v1448, 6
    %v2323 = vrot.slane %v1449, 5
    %v2324 = vsel %vm222, %v2323, %v2322
    %v2325 = vrot.slane %v1450, 4
    %v2326 = vsel %vm225, %v2325, %v2324
    %v2327 = vrot.slane %v1451, 3
    %v2328 = vsel %vm228, %v2327, %v2326
    %v2329 = vrot.slane %v1452, 2
    %v2330 = vsel %vm231, %v2329, %v2328
    %v2331 = vrot.slane %v1453, 1
    %v2332 = vsel %vm234, %v2331, %v2330
    %v2333 = vsel %vm237, %v1454, %v2332
    %v2334 = vrot.slane %v1455, 7
    %v2335 = vsel %vm240, %v2334, %v2333
    %v2336 = vrot.slane %v1456, 6
    %v2337 = vrot.slane %v1457, 5
    %v2338 = vsel %vm222, %v2337, %v2336
    %v2339 = vrot.slane %v1458, 4
    %v2340 = vsel %vm225, %v2339, %v2338
    %v2341 = vrot.slane %v1459, 3
    %v2342 = vsel %vm228, %v2341, %v2340
    %v2343 = vrot.slane %v1460, 2
    %v2344 = vsel %vm231, %v2343, %v2342
    %v2345 = vrot.slane %v1461, 1
    %v2346 = vsel %vm234, %v2345, %v2344
    %v2347 = vsel %vm237, %v1462, %v2346
    %v2348 = vrot.slane %v1463, 7
    %v2349 = vsel %vm240, %v2348, %v2347
    %v2350 = vpack.c.b16 %v2349, %v2335
    %v2352 = vsel %vm281, %v2350, 0
    %2354 = vmatpush.bf16.msra.mxu0 0
    %2355 = vmatpush.bf16.msra.mxu0 0
    %2356 = vmatpush.bf16.msra.mxu0 0
    %2357 = vmatpush.bf16.msra.mxu0 0
    %2358 = vmatpush.bf16.msra.mxu0 %v276
    %2359 = vmatpush.bf16.msra.mxu0 %v275
    %2360 = vmatpush.bf16.msra.mxu0 %v274
    %2361 = vmatpush.bf16.msra.mxu0 %v273
    %2362 = vmatmul.bf16.gmra.mxu0 %v2352
    %v2363 = vpop.f32.mrf.mxu0
    %v2364 = vadd.f32 %v2318, %v2363
    %v2365 = vpop.f32.mrf.mxu0
    %v2366 = vadd.f32 %v2320, %v2365
    %2367 = vdwg.mxu0
    %v2368 = vadd.f32 %v2364, %v300
    %v2369 = vadd.f32 %v2366, %v300
    %v2370 = vxor.u32 %v2368, 2147483648
    %v2371 = vxor.u32 %v2369, 2147483648
    %v2372 = vmul.f32 %v2370, 1.442695
    %v2373 = vpow.pop %v2372
    %v2374 = vmul.f32 %v2371, 1.442695
    %v2375 = vpow.pop %v2374
    %v2376 = vadd.f32 %v2373, 1.0
    %v2377 = vadd.f32 %v2375, 1.0
    %v2378 = vrcp.pop %v2376
    %v2379 = vmul.f32 %v2376, %v2378
    %v2380 = vsub.f32 1.0, %v2379
    %v2381 = vmul.f32 %v2378, %v2380
    %v2382 = vadd.f32 %v2378, %v2381
    %vm2383 = vweird.f32 %v2376
    %vm2384 = vweird.f32 %v2378
    %vm2385 = vmor %vm2383, %vm2384
    %v2386 = vsel %vm2385, %v2378, %v2382
    %v2387 = vand.u32 2147483647, %v2376
    %vm2388 = vcmp.eq.f32.partialorder %v2387, 8.507059e+37
    %v2389 = vand.u32 %v2376, 2147483648
    %v2390 = vor.u32 1.1754944e-38, %v2389
    %v2391 = vsel %vm2388, %v2390, %v2386
    %v2392 = vmul.f32 1.0, %v2391
    %v2393 = vrcp.pop %v2377
    %v2394 = vmul.f32 %v2377, %v2393
    %v2395 = vsub.f32 1.0, %v2394
    %v2396 = vmul.f32 %v2393, %v2395
    %v2397 = vadd.f32 %v2393, %v2396
    %vm2398 = vweird.f32 %v2377
    %vm2399 = vweird.f32 %v2393
    %vm2400 = vmor %vm2398, %vm2399
    %v2401 = vsel %vm2400, %v2393, %v2397
    %v2402 = vand.u32 2147483647, %v2377
    %vm2403 = vcmp.eq.f32.partialorder %v2402, 8.507059e+37
    %v2404 = vand.u32 %v2377, 2147483648
    %v2405 = vor.u32 1.1754944e-38, %v2404
    %v2406 = vsel %vm2403, %v2405, %v2401
    %v2407 = vmul.f32 1.0, %v2406
    %v2408 = vtanh.pop %v2368
    %v2409 = vtanh.pop %v2369
    %v2410 = vmul.f32 %v2392, %v2287
    %v2411 = vmul.f32 %v2407, %v2288
    %2414 = vrot.lane.b32.xlu0 %v2408, 32
    %v2415 = vpop.permute.xlu0 %2414
    %2416 = vrot.lane.b32.xlu0 %v2409, 32
    %v2417 = vpop.permute.xlu0 %2416
    %v2420 = vmul.f32 %v2392, %v2415
    %v2421 = vmul.f32 %v2407, %v2417
    %2424 = vrot.lane.b32.xlu0 %v2420, 32
    %v2425 = vpop.permute.xlu0 %2424
    %2426 = vrot.lane.b32.xlu0 %v2421, 32
    %v2427 = vpop.permute.xlu0 %2426
    %v2430 = vadd.f32 %v2410, %v2425
    %v2431 = vadd.f32 %v2411, %v2427
    %v2432 = vtanh.pop %v2430
    %v2433 = vtanh.pop %v2431
    %2436 = vrot.lane.b32.xlu0 %v2432, 32
    %v2437 = vpop.permute.xlu0 %2436
    %2438 = vrot.lane.b32.xlu0 %v2433, 32
    %v2439 = vpop.permute.xlu0 %2438
    %v2442 = vmul.f32 %v2392, %v2437
    %v2443 = vmul.f32 %v2407, %v2439
    %v2444 = vpack.c.bf16 %v2443, %v2442
    %2446 = vrot.lane.b32.xlu0 %v2444, 64
    %v2447 = vpop.permute.xlu0 %2446
    %v2449 = vsel %vm139, %v2447, 0
    %2451 = vmatpush.bf16.msra.mxu0 0
    %2452 = vmatpush.bf16.msra.mxu0 0
    %2453 = vmatpush.bf16.msra.mxu0 0
    %2454 = vmatpush.bf16.msra.mxu0 0
    %2455 = vmatpush.bf16.msra.mxu0 0
    %2456 = vmatpush.bf16.msra.mxu0 0
    %2457 = vmatpush.bf16.msra.mxu0 %v136
    %2458 = vmatpush.bf16.msra.mxu0 %v135
    %2459 = vmatmul.bf16.gmra.mxu0 %v2449
    %v2460 = vpop.f32.mrf.mxu0
    %v2461 = vadd.f32 0.0, %v2460
    %v2462 = vpop.f32.mrf.mxu0
    %v2463 = vadd.f32 0.0, %v2462
    %2464 = vdwg.mxu0
    %v2465 = vrot.slane %v1448, 7
    %v2466 = vrot.slane %v1449, 6
    %v2467 = vsel %vm222, %v2466, %v2465
    %v2468 = vrot.slane %v1450, 5
    %v2469 = vsel %vm225, %v2468, %v2467
    %v2470 = vrot.slane %v1451, 4
    %v2471 = vsel %vm228, %v2470, %v2469
    %v2472 = vrot.slane %v1452, 3
    %v2473 = vsel %vm231, %v2472, %v2471
    %v2474 = vrot.slane %v1453, 2
    %v2475 = vsel %vm234, %v2474, %v2473
    %v2476 = vrot.slane %v1454, 1
    %v2477 = vsel %vm237, %v2476, %v2475
    %v2478 = vsel %vm240, %v1455, %v2477
    %v2479 = vrot.slane %v1456, 7
    %v2480 = vrot.slane %v1457, 6
    %v2481 = vsel %vm222, %v2480, %v2479
    %v2482 = vrot.slane %v1458, 5
    %v2483 = vsel %vm225, %v2482, %v2481
    %v2484 = vrot.slane %v1459, 4
    %v2485 = vsel %vm228, %v2484, %v2483
    %v2486 = vrot.slane %v1460, 3
    %v2487 = vsel %vm231, %v2486, %v2485
    %v2488 = vrot.slane %v1461, 2
    %v2489 = vsel %vm234, %v2488, %v2487
    %v2490 = vrot.slane %v1462, 1
    %v2491 = vsel %vm237, %v2490, %v2489
    %v2492 = vsel %vm240, %v1463, %v2491
    %v2493 = vpack.c.b16 %v2492, %v2478
    %v2495 = vsel %vm281, %v2493, 0
    %2497 = vmatpush.bf16.msra.mxu0 0
    %2498 = vmatpush.bf16.msra.mxu0 0
    %2499 = vmatpush.bf16.msra.mxu0 0
    %2500 = vmatpush.bf16.msra.mxu0 0
    %2501 = vmatpush.bf16.msra.mxu0 %v276
    %2502 = vmatpush.bf16.msra.mxu0 %v275
    %2503 = vmatpush.bf16.msra.mxu0 %v274
    %2504 = vmatpush.bf16.msra.mxu0 %v273
    %2505 = vmatmul.bf16.gmra.mxu0 %v2495
    %v2506 = vpop.f32.mrf.mxu0
    %v2507 = vadd.f32 %v2461, %v2506
    %v2508 = vpop.f32.mrf.mxu0
    %v2509 = vadd.f32 %v2463, %v2508
    %2510 = vdwg.mxu0
    %v2511 = vadd.f32 %v2507, %v300
    %v2512 = vadd.f32 %v2509, %v300
    %v2513 = vxor.u32 %v2511, 2147483648
    %v2514 = vxor.u32 %v2512, 2147483648
    %v2515 = vmul.f32 %v2513, 1.442695
    %v2516 = vpow.pop %v2515
    %v2517 = vmul.f32 %v2514, 1.442695
    %v2518 = vpow.pop %v2517
    %v2519 = vadd.f32 %v2516, 1.0
    %v2520 = vadd.f32 %v2518, 1.0
    %v2521 = vrcp.pop %v2519
    %v2522 = vmul.f32 %v2519, %v2521
    %v2523 = vsub.f32 1.0, %v2522
    %v2524 = vmul.f32 %v2521, %v2523
    %v2525 = vadd.f32 %v2521, %v2524
    %vm2526 = vweird.f32 %v2519
    %vm2527 = vweird.f32 %v2521
    %vm2528 = vmor %vm2526, %vm2527
    %v2529 = vsel %vm2528, %v2521, %v2525
    %v2530 = vand.u32 2147483647, %v2519
    %vm2531 = vcmp.eq.f32.partialorder %v2530, 8.507059e+37
    %v2532 = vand.u32 %v2519, 2147483648
    %v2533 = vor.u32 1.1754944e-38, %v2532
    %v2534 = vsel %vm2531, %v2533, %v2529
    %v2535 = vmul.f32 1.0, %v2534
    %v2536 = vrcp.pop %v2520
    %v2537 = vmul.f32 %v2520, %v2536
    %v2538 = vsub.f32 1.0, %v2537
    %v2539 = vmul.f32 %v2536, %v2538
    %v2540 = vadd.f32 %v2536, %v2539
    %vm2541 = vweird.f32 %v2520
    %vm2542 = vweird.f32 %v2536
    %vm2543 = vmor %vm2541, %vm2542
    %v2544 = vsel %vm2543, %v2536, %v2540
    %v2545 = vand.u32 2147483647, %v2520
    %vm2546 = vcmp.eq.f32.partialorder %v2545, 8.507059e+37
    %v2547 = vand.u32 %v2520, 2147483648
    %v2548 = vor.u32 1.1754944e-38, %v2547
    %v2549 = vsel %vm2546, %v2548, %v2544
    %v2550 = vmul.f32 1.0, %v2549
    %v2551 = vtanh.pop %v2511
    %v2552 = vtanh.pop %v2512
    %v2553 = vmul.f32 %v2535, %v2430
    %v2554 = vmul.f32 %v2550, %v2431
    %2557 = vrot.lane.b32.xlu0 %v2551, 32
    %v2558 = vpop.permute.xlu0 %2557
    %2559 = vrot.lane.b32.xlu0 %v2552, 32
    %v2560 = vpop.permute.xlu0 %2559
    %v2563 = vmul.f32 %v2535, %v2558
    %v2564 = vmul.f32 %v2550, %v2560
    %2567 = vrot.lane.b32.xlu0 %v2563, 32
    %v2568 = vpop.permute.xlu0 %2567
    %2569 = vrot.lane.b32.xlu0 %v2564, 32
    %v2570 = vpop.permute.xlu0 %2569
    %v2573 = vadd.f32 %v2553, %v2568
    %v2574 = vadd.f32 %v2554, %v2570
    %v2575 = vtanh.pop %v2573
    %v2576 = vtanh.pop %v2574
    %2579 = vrot.lane.b32.xlu0 %v2575, 32
    %v2580 = vpop.permute.xlu0 %2579
    %2581 = vrot.lane.b32.xlu0 %v2576, 32
    %v2582 = vpop.permute.xlu0 %2581
    %v2585 = vmul.f32 %v2535, %v2580
    %v2586 = vmul.f32 %v2550, %v2582
    %v2587 = vpack.c.bf16 %v2586, %v2585
    %2589 = vrot.lane.b32.xlu0 %v2587, 64
    %v2590 = vpop.permute.xlu0 %2589
    %v2592 = vsel %vm139, %v2590, 0
    %2594 = vmatpush.bf16.msra.mxu0 0
    %2595 = vmatpush.bf16.msra.mxu0 0
    %2596 = vmatpush.bf16.msra.mxu0 0
    %2597 = vmatpush.bf16.msra.mxu0 0
    %2598 = vmatpush.bf16.msra.mxu0 0
    %2599 = vmatpush.bf16.msra.mxu0 0
    %2600 = vmatpush.bf16.msra.mxu0 %v136
    %2601 = vmatpush.bf16.msra.mxu0 %v135
    %2602 = vmatmul.bf16.gmra.mxu0 %v2592
    %v2603 = vpop.f32.mrf.mxu0
    %v2604 = vadd.f32 0.0, %v2603
    %v2605 = vpop.f32.mrf.mxu0
    %v2606 = vadd.f32 0.0, %v2605
    %2607 = vdwg.mxu0
    %v2624 = vunpack.c.l.b16 %v68
    %v2625 = vunpack.c.l.b16 %v71
    %v2626 = vunpack.c.l.b16 %v74
    %v2627 = vunpack.c.l.b16 %v77
    %v2628 = vunpack.c.l.b16 %v80
    %v2629 = vunpack.c.l.b16 %v83
    %v2630 = vunpack.c.l.b16 %v86
    %v2631 = vunpack.c.l.b16 %v89
    %v2632 = vunpack.c.l.b16 %v92
    %v2633 = vunpack.c.l.b16 %v95
    %v2634 = vunpack.c.l.b16 %v98
    %v2635 = vunpack.c.l.b16 %v101
    %v2636 = vunpack.c.l.b16 %v104
    %v2637 = vunpack.c.l.b16 %v107
    %v2638 = vunpack.c.l.b16 %v110
    %v2639 = vunpack.c.l.b16 %v113
    %v2640 = vpack.c.b16 %v2624, %v2624
    %v2641 = vpack.c.b16 %v2625, %v2625
    %v2642 = vpack.c.b16 %v2626, %v2626
    %v2643 = vpack.c.b16 %v2627, %v2627
    %v2644 = vpack.c.b16 %v2628, %v2628
    %v2645 = vpack.c.b16 %v2629, %v2629
    %v2646 = vpack.c.b16 %v2630, %v2630
    %v2647 = vpack.c.b16 %v2631, %v2631
    %v2648 = vpack.c.b16 %v2632, %v2632
    %v2649 = vpack.c.b16 %v2633, %v2633
    %v2650 = vpack.c.b16 %v2634, %v2634
    %v2651 = vpack.c.b16 %v2635, %v2635
    %v2652 = vpack.c.b16 %v2636, %v2636
    %v2653 = vpack.c.b16 %v2637, %v2637
    %v2654 = vpack.c.b16 %v2638, %v2638
    %v2655 = vpack.c.b16 %v2639, %v2639
    %v2656 = vunpack.c.l.b16 %v2640
    %v2657 = vunpack.c.l.b16 %v2641
    %v2658 = vunpack.c.l.b16 %v2642
    %v2659 = vunpack.c.l.b16 %v2643
    %v2660 = vunpack.c.l.b16 %v2644
    %v2661 = vunpack.c.l.b16 %v2645
    %v2662 = vunpack.c.l.b16 %v2646
    %v2663 = vunpack.c.l.b16 %v2647
    %v2664 = vunpack.c.l.b16 %v2648
    %v2665 = vunpack.c.l.b16 %v2649
    %v2666 = vunpack.c.l.b16 %v2650
    %v2667 = vunpack.c.l.b16 %v2651
    %v2668 = vunpack.c.l.b16 %v2652
    %v2669 = vunpack.c.l.b16 %v2653
    %v2670 = vunpack.c.l.b16 %v2654
    %v2671 = vunpack.c.l.b16 %v2655
    %v2672 = vrot.slane %v2657, 7
    %v2673 = vsel %vm222, %v2672, %v2656
    %v2674 = vrot.slane %v2658, 6
    %v2675 = vsel %vm225, %v2674, %v2673
    %v2676 = vrot.slane %v2659, 5
    %v2677 = vsel %vm228, %v2676, %v2675
    %v2678 = vrot.slane %v2660, 4
    %v2679 = vsel %vm231, %v2678, %v2677
    %v2680 = vrot.slane %v2661, 3
    %v2681 = vsel %vm234, %v2680, %v2679
    %v2682 = vrot.slane %v2662, 2
    %v2683 = vsel %vm237, %v2682, %v2681
    %v2684 = vrot.slane %v2663, 1
    %v2685 = vsel %vm240, %v2684, %v2683
    %v2686 = vrot.slane %v2665, 7
    %v2687 = vsel %vm222, %v2686, %v2664
    %v2688 = vrot.slane %v2666, 6
    %v2689 = vsel %vm225, %v2688, %v2687
    %v2690 = vrot.slane %v2667, 5
    %v2691 = vsel %vm228, %v2690, %v2689
    %v2692 = vrot.slane %v2668, 4
    %v2693 = vsel %vm231, %v2692, %v2691
    %v2694 = vrot.slane %v2669, 3
    %v2695 = vsel %vm234, %v2694, %v2693
    %v2696 = vrot.slane %v2670, 2
    %v2697 = vsel %vm237, %v2696, %v2695
    %v2698 = vrot.slane %v2671, 1
    %v2699 = vsel %vm240, %v2698, %v2697
    %v2700 = vpack.c.b16 %v2699, %v2685
    %v2702 = vsel %vm281, %v2700, 0
    %2704 = vmatpush.bf16.msra.mxu0 0
    %2705 = vmatpush.bf16.msra.mxu0 0
    %2706 = vmatpush.bf16.msra.mxu0 0
    %2707 = vmatpush.bf16.msra.mxu0 0
    %2708 = vmatpush.bf16.msra.mxu0 %v276
    %2709 = vmatpush.bf16.msra.mxu0 %v275
    %2710 = vmatpush.bf16.msra.mxu0 %v274
    %2711 = vmatpush.bf16.msra.mxu0 %v273
    %2712 = vmatmul.bf16.gmra.mxu0 %v2702
    %v2713 = vpop.f32.mrf.mxu0
    %v2714 = vadd.f32 %v2604, %v2713
    %v2715 = vpop.f32.mrf.mxu0
    %v2716 = vadd.f32 %v2606, %v2715
    %2717 = vdwg.mxu0
    %v2718 = vadd.f32 %v2714, %v300
    %v2719 = vadd.f32 %v2716, %v300
    %v2720 = vxor.u32 %v2718, 2147483648
    %v2721 = vxor.u32 %v2719, 2147483648
    %v2722 = vmul.f32 %v2720, 1.442695
    %v2723 = vpow.pop %v2722
    %v2724 = vmul.f32 %v2721, 1.442695
    %v2725 = vpow.pop %v2724
    %v2726 = vadd.f32 %v2723, 1.0
    %v2727 = vadd.f32 %v2725, 1.0
    %v2728 = vrcp.pop %v2726
    %v2729 = vmul.f32 %v2726, %v2728
    %v2730 = vsub.f32 1.0, %v2729
    %v2731 = vmul.f32 %v2728, %v2730
    %v2732 = vadd.f32 %v2728, %v2731
    %vm2733 = vweird.f32 %v2726
    %vm2734 = vweird.f32 %v2728
    %vm2735 = vmor %vm2733, %vm2734
    %v2736 = vsel %vm2735, %v2728, %v2732
    %v2737 = vand.u32 2147483647, %v2726
    %vm2738 = vcmp.eq.f32.partialorder %v2737, 8.507059e+37
    %v2739 = vand.u32 %v2726, 2147483648
    %v2740 = vor.u32 1.1754944e-38, %v2739
    %v2741 = vsel %vm2738, %v2740, %v2736
    %v2742 = vmul.f32 1.0, %v2741
    %v2743 = vrcp.pop %v2727
    %v2744 = vmul.f32 %v2727, %v2743
    %v2745 = vsub.f32 1.0, %v2744
    %v2746 = vmul.f32 %v2743, %v2745
    %v2747 = vadd.f32 %v2743, %v2746
    %vm2748 = vweird.f32 %v2727
    %vm2749 = vweird.f32 %v2743
    %vm2750 = vmor %vm2748, %vm2749
    %v2751 = vsel %vm2750, %v2743, %v2747
    %v2752 = vand.u32 2147483647, %v2727
    %vm2753 = vcmp.eq.f32.partialorder %v2752, 8.507059e+37
    %v2754 = vand.u32 %v2727, 2147483648
    %v2755 = vor.u32 1.1754944e-38, %v2754
    %v2756 = vsel %vm2753, %v2755, %v2751
    %v2757 = vmul.f32 1.0, %v2756
    %v2758 = vtanh.pop %v2718
    %v2759 = vtanh.pop %v2719
    %v2760 = vmul.f32 %v2742, %v2573
    %v2761 = vmul.f32 %v2757, %v2574
    %2764 = vrot.lane.b32.xlu0 %v2758, 32
    %v2765 = vpop.permute.xlu0 %2764
    %2766 = vrot.lane.b32.xlu0 %v2759, 32
    %v2767 = vpop.permute.xlu0 %2766
    %v2770 = vmul.f32 %v2742, %v2765
    %v2771 = vmul.f32 %v2757, %v2767
    %2774 = vrot.lane.b32.xlu0 %v2770, 32
    %v2775 = vpop.permute.xlu0 %2774
    %2776 = vrot.lane.b32.xlu0 %v2771, 32
    %v2777 = vpop.permute.xlu0 %2776
    %v2780 = vadd.f32 %v2760, %v2775
    %v2781 = vadd.f32 %v2761, %v2777
    %v2782 = vtanh.pop %v2780
    %v2783 = vtanh.pop %v2781
    %2786 = vrot.lane.b32.xlu0 %v2782, 32
    %v2787 = vpop.permute.xlu0 %2786
    %2788 = vrot.lane.b32.xlu0 %v2783, 32
    %v2789 = vpop.permute.xlu0 %2788
    %v2792 = vmul.f32 %v2742, %v2787
    %v2793 = vmul.f32 %v2757, %v2789
    %v2794 = vpack.c.bf16 %v2793, %v2792
    %2796 = vrot.lane.b32.xlu0 %v2794, 64
    %v2797 = vpop.permute.xlu0 %2796
    %v2799 = vsel %vm139, %v2797, 0
    %2801 = vmatpush.bf16.msra.mxu0 0
    %2802 = vmatpush.bf16.msra.mxu0 0
    %2803 = vmatpush.bf16.msra.mxu0 0
    %2804 = vmatpush.bf16.msra.mxu0 0
    %2805 = vmatpush.bf16.msra.mxu0 0
    %2806 = vmatpush.bf16.msra.mxu0 0
    %2807 = vmatpush.bf16.msra.mxu0 %v136
    %2808 = vmatpush.bf16.msra.mxu0 %v135
    %2809 = vmatmul.bf16.gmra.mxu0 %v2799
    %v2810 = vpop.f32.mrf.mxu0
    %v2811 = vadd.f32 0.0, %v2810
    %v2812 = vpop.f32.mrf.mxu0
    %v2813 = vadd.f32 0.0, %v2812
    %2814 = vdwg.mxu0
    %v2815 = vrot.slane %v2656, 1
    %v2816 = vsel %vm222, %v2657, %v2815
    %v2817 = vrot.slane %v2658, 7
    %v2818 = vsel %vm225, %v2817, %v2816
    %v2819 = vrot.slane %v2659, 6
    %v2820 = vsel %vm228, %v2819, %v2818
    %v2821 = vrot.slane %v2660, 5
    %v2822 = vsel %vm231, %v2821, %v2820
    %v2823 = vrot.slane %v2661, 4
    %v2824 = vsel %vm234, %v2823, %v2822
    %v2825 = vrot.slane %v2662, 3
    %v2826 = vsel %vm237, %v2825, %v2824
    %v2827 = vrot.slane %v2663, 2
    %v2828 = vsel %vm240, %v2827, %v2826
    %v2829 = vrot.slane %v2664, 1
    %v2830 = vsel %vm222, %v2665, %v2829
    %v2831 = vrot.slane %v2666, 7
    %v2832 = vsel %vm225, %v2831, %v2830
    %v2833 = vrot.slane %v2667, 6
    %v2834 = vsel %vm228, %v2833, %v2832
    %v2835 = vrot.slane %v2668, 5
    %v2836 = vsel %vm231, %v2835, %v2834
    %v2837 = vrot.slane %v2669, 4
    %v2838 = vsel %vm234, %v2837, %v2836
    %v2839 = vrot.slane %v2670, 3
    %v2840 = vsel %vm237, %v2839, %v2838
    %v2841 = vrot.slane %v2671, 2
    %v2842 = vsel %vm240, %v2841, %v2840
    %v2843 = vpack.c.b16 %v2842, %v2828
    %v2845 = vsel %vm281, %v2843, 0
    %2847 = vmatpush.bf16.msra.mxu0 0
    %2848 = vmatpush.bf16.msra.mxu0 0
    %2849 = vmatpush.bf16.msra.mxu0 0
    %2850 = vmatpush.bf16.msra.mxu0 0
    %2851 = vmatpush.bf16.msra.mxu0 %v276
    %2852 = vmatpush.bf16.msra.mxu0 %v275
    %2853 = vmatpush.bf16.msra.mxu0 %v274
    %2854 = vmatpush.bf16.msra.mxu0 %v273
    %2855 = vmatmul.bf16.gmra.mxu0 %v2845
    %v2856 = vpop.f32.mrf.mxu0
    %v2857 = vadd.f32 %v2811, %v2856
    %v2858 = vpop.f32.mrf.mxu0
    %v2859 = vadd.f32 %v2813, %v2858
    %2860 = vdwg.mxu0
    %v2861 = vadd.f32 %v2857, %v300
    %v2862 = vadd.f32 %v2859, %v300
    %v2863 = vxor.u32 %v2861, 2147483648
    %v2864 = vxor.u32 %v2862, 2147483648
    %v2865 = vmul.f32 %v2863, 1.442695
    %v2866 = vpow.pop %v2865
    %v2867 = vmul.f32 %v2864, 1.442695
    %v2868 = vpow.pop %v2867
    %v2869 = vadd.f32 %v2866, 1.0
    %v2870 = vadd.f32 %v2868, 1.0
    %v2871 = vrcp.pop %v2869
    %v2872 = vmul.f32 %v2869, %v2871
    %v2873 = vsub.f32 1.0, %v2872
    %v2874 = vmul.f32 %v2871, %v2873
    %v2875 = vadd.f32 %v2871, %v2874
    %vm2876 = vweird.f32 %v2869
    %vm2877 = vweird.f32 %v2871
    %vm2878 = vmor %vm2876, %vm2877
    %v2879 = vsel %vm2878, %v2871, %v2875
    %v2880 = vand.u32 2147483647, %v2869
    %vm2881 = vcmp.eq.f32.partialorder %v2880, 8.507059e+37
    %v2882 = vand.u32 %v2869, 2147483648
    %v2883 = vor.u32 1.1754944e-38, %v2882
    %v2884 = vsel %vm2881, %v2883, %v2879
    %v2885 = vmul.f32 1.0, %v2884
    %v2886 = vrcp.pop %v2870
    %v2887 = vmul.f32 %v2870, %v2886
    %v2888 = vsub.f32 1.0, %v2887
    %v2889 = vmul.f32 %v2886, %v2888
    %v2890 = vadd.f32 %v2886, %v2889
    %vm2891 = vweird.f32 %v2870
    %vm2892 = vweird.f32 %v2886
    %vm2893 = vmor %vm2891, %vm2892
    %v2894 = vsel %vm2893, %v2886, %v2890
    %v2895 = vand.u32 2147483647, %v2870
    %vm2896 = vcmp.eq.f32.partialorder %v2895, 8.507059e+37
    %v2897 = vand.u32 %v2870, 2147483648
    %v2898 = vor.u32 1.1754944e-38, %v2897
    %v2899 = vsel %vm2896, %v2898, %v2894
    %v2900 = vmul.f32 1.0, %v2899
    %v2901 = vtanh.pop %v2861
    %v2902 = vtanh.pop %v2862
    %v2903 = vmul.f32 %v2885, %v2780
    %v2904 = vmul.f32 %v2900, %v2781
    %2907 = vrot.lane.b32.xlu0 %v2901, 32
    %v2908 = vpop.permute.xlu0 %2907
    %2909 = vrot.lane.b32.xlu0 %v2902, 32
    %v2910 = vpop.permute.xlu0 %2909
    %v2913 = vmul.f32 %v2885, %v2908
    %v2914 = vmul.f32 %v2900, %v2910
    %2917 = vrot.lane.b32.xlu0 %v2913, 32
    %v2918 = vpop.permute.xlu0 %2917
    %2919 = vrot.lane.b32.xlu0 %v2914, 32
    %v2920 = vpop.permute.xlu0 %2919
    %v2923 = vadd.f32 %v2903, %v2918
    %v2924 = vadd.f32 %v2904, %v2920
    %v2925 = vtanh.pop %v2923
    %v2926 = vtanh.pop %v2924
    %2929 = vrot.lane.b32.xlu0 %v2925, 32
    %v2930 = vpop.permute.xlu0 %2929
    %2931 = vrot.lane.b32.xlu0 %v2926, 32
    %v2932 = vpop.permute.xlu0 %2931
    %v2935 = vmul.f32 %v2885, %v2930
    %v2936 = vmul.f32 %v2900, %v2932
    %v2937 = vpack.c.bf16 %v2936, %v2935
    %2939 = vrot.lane.b32.xlu0 %v2937, 64
    %v2940 = vpop.permute.xlu0 %2939
    %v2942 = vsel %vm139, %v2940, 0
    %2944 = vmatpush.bf16.msra.mxu0 0
    %2945 = vmatpush.bf16.msra.mxu0 0
    %2946 = vmatpush.bf16.msra.mxu0 0
    %2947 = vmatpush.bf16.msra.mxu0 0
    %2948 = vmatpush.bf16.msra.mxu0 0
    %2949 = vmatpush.bf16.msra.mxu0 0
    %2950 = vmatpush.bf16.msra.mxu0 %v136
    %2951 = vmatpush.bf16.msra.mxu0 %v135
    %2952 = vmatmul.bf16.gmra.mxu0 %v2942
    %v2953 = vpop.f32.mrf.mxu0
    %v2954 = vadd.f32 0.0, %v2953
    %v2955 = vpop.f32.mrf.mxu0
    %v2956 = vadd.f32 0.0, %v2955
    %2957 = vdwg.mxu0
    %v2958 = vrot.slane %v2656, 2
    %v2959 = vrot.slane %v2657, 1
    %v2960 = vsel %vm222, %v2959, %v2958
    %v2961 = vsel %vm225, %v2658, %v2960
    %v2962 = vrot.slane %v2659, 7
    %v2963 = vsel %vm228, %v2962, %v2961
    %v2964 = vrot.slane %v2660, 6
    %v2965 = vsel %vm231, %v2964, %v2963
    %v2966 = vrot.slane %v2661, 5
    %v2967 = vsel %vm234, %v2966, %v2965
    %v2968 = vrot.slane %v2662, 4
    %v2969 = vsel %vm237, %v2968, %v2967
    %v2970 = vrot.slane %v2663, 3
    %v2971 = vsel %vm240, %v2970, %v2969
    %v2972 = vrot.slane %v2664, 2
    %v2973 = vrot.slane %v2665, 1
    %v2974 = vsel %vm222, %v2973, %v2972
    %v2975 = vsel %vm225, %v2666, %v2974
    %v2976 = vrot.slane %v2667, 7
    %v2977 = vsel %vm228, %v2976, %v2975
    %v2978 = vrot.slane %v2668, 6
    %v2979 = vsel %vm231, %v2978, %v2977
    %v2980 = vrot.slane %v2669, 5
    %v2981 = vsel %vm234, %v2980, %v2979
    %v2982 = vrot.slane %v2670, 4
    %v2983 = vsel %vm237, %v2982, %v2981
    %v2984 = vrot.slane %v2671, 3
    %v2985 = vsel %vm240, %v2984, %v2983
    %v2986 = vpack.c.b16 %v2985, %v2971
    %v2988 = vsel %vm281, %v2986, 0
    %2990 = vmatpush.bf16.msra.mxu0 0
    %2991 = vmatpush.bf16.msra.mxu0 0
    %2992 = vmatpush.bf16.msra.mxu0 0
    %2993 = vmatpush.bf16.msra.mxu0 0
    %2994 = vmatpush.bf16.msra.mxu0 %v276
    %2995 = vmatpush.bf16.msra.mxu0 %v275
    %2996 = vmatpush.bf16.msra.mxu0 %v274
    %2997 = vmatpush.bf16.msra.mxu0 %v273
    %2998 = vmatmul.bf16.gmra.mxu0 %v2988
    %v2999 = vpop.f32.mrf.mxu0
    %v3000 = vadd.f32 %v2954, %v2999
    %v3001 = vpop.f32.mrf.mxu0
    %v3002 = vadd.f32 %v2956, %v3001
    %3003 = vdwg.mxu0
    %v3004 = vadd.f32 %v3000, %v300
    %v3005 = vadd.f32 %v3002, %v300
    %v3006 = vxor.u32 %v3004, 2147483648
    %v3007 = vxor.u32 %v3005, 2147483648
    %v3008 = vmul.f32 %v3006, 1.442695
    %v3009 = vpow.pop %v3008
    %v3010 = vmul.f32 %v3007, 1.442695
    %v3011 = vpow.pop %v3010
    %v3012 = vadd.f32 %v3009, 1.0
    %v3013 = vadd.f32 %v3011, 1.0
    %v3014 = vrcp.pop %v3012
    %v3015 = vmul.f32 %v3012, %v3014
    %v3016 = vsub.f32 1.0, %v3015
    %v3017 = vmul.f32 %v3014, %v3016
    %v3018 = vadd.f32 %v3014, %v3017
    %vm3019 = vweird.f32 %v3012
    %vm3020 = vweird.f32 %v3014
    %vm3021 = vmor %vm3019, %vm3020
    %v3022 = vsel %vm3021, %v3014, %v3018
    %v3023 = vand.u32 2147483647, %v3012
    %vm3024 = vcmp.eq.f32.partialorder %v3023, 8.507059e+37
    %v3025 = vand.u32 %v3012, 2147483648
    %v3026 = vor.u32 1.1754944e-38, %v3025
    %v3027 = vsel %vm3024, %v3026, %v3022
    %v3028 = vmul.f32 1.0, %v3027
    %v3029 = vrcp.pop %v3013
    %v3030 = vmul.f32 %v3013, %v3029
    %v3031 = vsub.f32 1.0, %v3030
    %v3032 = vmul.f32 %v3029, %v3031
    %v3033 = vadd.f32 %v3029, %v3032
    %vm3034 = vweird.f32 %v3013
    %vm3035 = vweird.f32 %v3029
    %vm3036 = vmor %vm3034, %vm3035
    %v3037 = vsel %vm3036, %v3029, %v3033
    %v3038 = vand.u32 2147483647, %v3013
    %vm3039 = vcmp.eq.f32.partialorder %v3038, 8.507059e+37
    %v3040 = vand.u32 %v3013, 2147483648
    %v3041 = vor.u32 1.1754944e-38, %v3040
    %v3042 = vsel %vm3039, %v3041, %v3037
    %v3043 = vmul.f32 1.0, %v3042
    %v3044 = vtanh.pop %v3004
    %v3045 = vtanh.pop %v3005
    %v3046 = vmul.f32 %v3028, %v2923
    %v3047 = vmul.f32 %v3043, %v2924
    %3050 = vrot.lane.b32.xlu0 %v3044, 32
    %v3051 = vpop.permute.xlu0 %3050
    %3052 = vrot.lane.b32.xlu0 %v3045, 32
    %v3053 = vpop.permute.xlu0 %3052
    %v3056 = vmul.f32 %v3028, %v3051
    %v3057 = vmul.f32 %v3043, %v3053
    %3060 = vrot.lane.b32.xlu0 %v3056, 32
    %v3061 = vpop.permute.xlu0 %3060
    %3062 = vrot.lane.b32.xlu0 %v3057, 32
    %v3063 = vpop.permute.xlu0 %3062
    %v3066 = vadd.f32 %v3046, %v3061
    %v3067 = vadd.f32 %v3047, %v3063
    %v3068 = vtanh.pop %v3066
    %v3069 = vtanh.pop %v3067
    %3072 = vrot.lane.b32.xlu0 %v3068, 32
    %v3073 = vpop.permute.xlu0 %3072
    %3074 = vrot.lane.b32.xlu0 %v3069, 32
    %v3075 = vpop.permute.xlu0 %3074
    %v3078 = vmul.f32 %v3028, %v3073
    %v3079 = vmul.f32 %v3043, %v3075
    %v3080 = vpack.c.bf16 %v3079, %v3078
    %3082 = vrot.lane.b32.xlu0 %v3080, 64
    %v3083 = vpop.permute.xlu0 %3082
    %v3085 = vsel %vm139, %v3083, 0
    %3087 = vmatpush.bf16.msra.mxu0 0
    %3088 = vmatpush.bf16.msra.mxu0 0
    %3089 = vmatpush.bf16.msra.mxu0 0
    %3090 = vmatpush.bf16.msra.mxu0 0
    %3091 = vmatpush.bf16.msra.mxu0 0
    %3092 = vmatpush.bf16.msra.mxu0 0
    %3093 = vmatpush.bf16.msra.mxu0 %v136
    %3094 = vmatpush.bf16.msra.mxu0 %v135
    %3095 = vmatmul.bf16.gmra.mxu0 %v3085
    %v3096 = vpop.f32.mrf.mxu0
    %v3097 = vadd.f32 0.0, %v3096
    %v3098 = vpop.f32.mrf.mxu0
    %v3099 = vadd.f32 0.0, %v3098
    %3100 = vdwg.mxu0
    %v3101 = vrot.slane %v2656, 3
    %v3102 = vrot.slane %v2657, 2
    %v3103 = vsel %vm222, %v3102, %v3101
    %v3104 = vrot.slane %v2658, 1
    %v3105 = vsel %vm225, %v3104, %v3103
    %v3106 = vsel %vm228, %v2659, %v3105
    %v3107 = vrot.slane %v2660, 7
    %v3108 = vsel %vm231, %v3107, %v3106
    %v3109 = vrot.slane %v2661, 6
    %v3110 = vsel %vm234, %v3109, %v3108
    %v3111 = vrot.slane %v2662, 5
    %v3112 = vsel %vm237, %v3111, %v3110
    %v3113 = vrot.slane %v2663, 4
    %v3114 = vsel %vm240, %v3113, %v3112
    %v3115 = vrot.slane %v2664, 3
    %v3116 = vrot.slane %v2665, 2
    %v3117 = vsel %vm222, %v3116, %v3115
    %v3118 = vrot.slane %v2666, 1
    %v3119 = vsel %vm225, %v3118, %v3117
    %v3120 = vsel %vm228, %v2667, %v3119
    %v3121 = vrot.slane %v2668, 7
    %v3122 = vsel %vm231, %v3121, %v3120
    %v3123 = vrot.slane %v2669, 6
    %v3124 = vsel %vm234, %v3123, %v3122
    %v3125 = vrot.slane %v2670, 5
    %v3126 = vsel %vm237, %v3125, %v3124
    %v3127 = vrot.slane %v2671, 4
    %v3128 = vsel %vm240, %v3127, %v3126
    %v3129 = vpack.c.b16 %v3128, %v3114
    %v3131 = vsel %vm281, %v3129, 0
    %3133 = vmatpush.bf16.msra.mxu0 0
    %3134 = vmatpush.bf16.msra.mxu0 0
    %3135 = vmatpush.bf16.msra.mxu0 0
    %3136 = vmatpush.bf16.msra.mxu0 0
    %3137 = vmatpush.bf16.msra.mxu0 %v276
    %3138 = vmatpush.bf16.msra.mxu0 %v275
    %3139 = vmatpush.bf16.msra.mxu0 %v274
    %3140 = vmatpush.bf16.msra.mxu0 %v273
    %3141 = vmatmul.bf16.gmra.mxu0 %v3131
    %v3142 = vpop.f32.mrf.mxu0
    %v3143 = vadd.f32 %v3097, %v3142
    %v3144 = vpop.f32.mrf.mxu0
    %v3145 = vadd.f32 %v3099, %v3144
    %3146 = vdwg.mxu0
    %v3147 = vadd.f32 %v3143, %v300
    %v3148 = vadd.f32 %v3145, %v300
    %v3149 = vxor.u32 %v3147, 2147483648
    %v3150 = vxor.u32 %v3148, 2147483648
    %v3151 = vmul.f32 %v3149, 1.442695
    %v3152 = vpow.pop %v3151
    %v3153 = vmul.f32 %v3150, 1.442695
    %v3154 = vpow.pop %v3153
    %v3155 = vadd.f32 %v3152, 1.0
    %v3156 = vadd.f32 %v3154, 1.0
    %v3157 = vrcp.pop %v3155
    %v3158 = vmul.f32 %v3155, %v3157
    %v3159 = vsub.f32 1.0, %v3158
    %v3160 = vmul.f32 %v3157, %v3159
    %v3161 = vadd.f32 %v3157, %v3160
    %vm3162 = vweird.f32 %v3155
    %vm3163 = vweird.f32 %v3157
    %vm3164 = vmor %vm3162, %vm3163
    %v3165 = vsel %vm3164, %v3157, %v3161
    %v3166 = vand.u32 2147483647, %v3155
    %vm3167 = vcmp.eq.f32.partialorder %v3166, 8.507059e+37
    %v3168 = vand.u32 %v3155, 2147483648
    %v3169 = vor.u32 1.1754944e-38, %v3168
    %v3170 = vsel %vm3167, %v3169, %v3165
    %v3171 = vmul.f32 1.0, %v3170
    %v3172 = vrcp.pop %v3156
    %v3173 = vmul.f32 %v3156, %v3172
    %v3174 = vsub.f32 1.0, %v3173
    %v3175 = vmul.f32 %v3172, %v3174
    %v3176 = vadd.f32 %v3172, %v3175
    %vm3177 = vweird.f32 %v3156
    %vm3178 = vweird.f32 %v3172
    %vm3179 = vmor %vm3177, %vm3178
    %v3180 = vsel %vm3179, %v3172, %v3176
    %v3181 = vand.u32 2147483647, %v3156
    %vm3182 = vcmp.eq.f32.partialorder %v3181, 8.507059e+37
    %v3183 = vand.u32 %v3156, 2147483648
    %v3184 = vor.u32 1.1754944e-38, %v3183
    %v3185 = vsel %vm3182, %v3184, %v3180
    %v3186 = vmul.f32 1.0, %v3185
    %v3187 = vtanh.pop %v3147
    %v3188 = vtanh.pop %v3148
    %v3189 = vmul.f32 %v3171, %v3066
    %v3190 = vmul.f32 %v3186, %v3067
    %3193 = vrot.lane.b32.xlu0 %v3187, 32
    %v3194 = vpop.permute.xlu0 %3193
    %3195 = vrot.lane.b32.xlu0 %v3188, 32
    %v3196 = vpop.permute.xlu0 %3195
    %v3199 = vmul.f32 %v3171, %v3194
    %v3200 = vmul.f32 %v3186, %v3196
    %3203 = vrot.lane.b32.xlu0 %v3199, 32
    %v3204 = vpop.permute.xlu0 %3203
    %3205 = vrot.lane.b32.xlu0 %v3200, 32
    %v3206 = vpop.permute.xlu0 %3205
    %v3209 = vadd.f32 %v3189, %v3204
    %v3210 = vadd.f32 %v3190, %v3206
    %v3211 = vtanh.pop %v3209
    %v3212 = vtanh.pop %v3210
    %3215 = vrot.lane.b32.xlu0 %v3211, 32
    %v3216 = vpop.permute.xlu0 %3215
    %3217 = vrot.lane.b32.xlu0 %v3212, 32
    %v3218 = vpop.permute.xlu0 %3217
    %v3221 = vmul.f32 %v3171, %v3216
    %v3222 = vmul.f32 %v3186, %v3218
    %v3223 = vpack.c.bf16 %v3222, %v3221
    %3225 = vrot.lane.b32.xlu0 %v3223, 64
    %v3226 = vpop.permute.xlu0 %3225
    %v3228 = vsel %vm139, %v3226, 0
    %3230 = vmatpush.bf16.msra.mxu0 0
    %3231 = vmatpush.bf16.msra.mxu0 0
    %3232 = vmatpush.bf16.msra.mxu0 0
    %3233 = vmatpush.bf16.msra.mxu0 0
    %3234 = vmatpush.bf16.msra.mxu0 0
    %3235 = vmatpush.bf16.msra.mxu0 0
    %3236 = vmatpush.bf16.msra.mxu0 %v136
    %3237 = vmatpush.bf16.msra.mxu0 %v135
    %3238 = vmatmul.bf16.gmra.mxu0 %v3228
    %v3239 = vpop.f32.mrf.mxu0
    %v3240 = vadd.f32 0.0, %v3239
    %v3241 = vpop.f32.mrf.mxu0
    %v3242 = vadd.f32 0.0, %v3241
    %3243 = vdwg.mxu0
    %v3244 = vrot.slane %v2656, 4
    %v3245 = vrot.slane %v2657, 3
    %v3246 = vsel %vm222, %v3245, %v3244
    %v3247 = vrot.slane %v2658, 2
    %v3248 = vsel %vm225, %v3247, %v3246
    %v3249 = vrot.slane %v2659, 1
    %v3250 = vsel %vm228, %v3249, %v3248
    %v3251 = vsel %vm231, %v2660, %v3250
    %v3252 = vrot.slane %v2661, 7
    %v3253 = vsel %vm234, %v3252, %v3251
    %v3254 = vrot.slane %v2662, 6
    %v3255 = vsel %vm237, %v3254, %v3253
    %v3256 = vrot.slane %v2663, 5
    %v3257 = vsel %vm240, %v3256, %v3255
    %v3258 = vrot.slane %v2664, 4
    %v3259 = vrot.slane %v2665, 3
    %v3260 = vsel %vm222, %v3259, %v3258
    %v3261 = vrot.slane %v2666, 2
    %v3262 = vsel %vm225, %v3261, %v3260
    %v3263 = vrot.slane %v2667, 1
    %v3264 = vsel %vm228, %v3263, %v3262
    %v3265 = vsel %vm231, %v2668, %v3264
    %v3266 = vrot.slane %v2669, 7
    %v3267 = vsel %vm234, %v3266, %v3265
    %v3268 = vrot.slane %v2670, 6
    %v3269 = vsel %vm237, %v3268, %v3267
    %v3270 = vrot.slane %v2671, 5
    %v3271 = vsel %vm240, %v3270, %v3269
    %v3272 = vpack.c.b16 %v3271, %v3257
    %v3274 = vsel %vm281, %v3272, 0
    %3276 = vmatpush.bf16.msra.mxu0 0
    %3277 = vmatpush.bf16.msra.mxu0 0
    %3278 = vmatpush.bf16.msra.mxu0 0
    %3279 = vmatpush.bf16.msra.mxu0 0
    %3280 = vmatpush.bf16.msra.mxu0 %v276
    %3281 = vmatpush.bf16.msra.mxu0 %v275
    %3282 = vmatpush.bf16.msra.mxu0 %v274
    %3283 = vmatpush.bf16.msra.mxu0 %v273
    %3284 = vmatmul.bf16.gmra.mxu0 %v3274
    %v3285 = vpop.f32.mrf.mxu0
    %v3286 = vadd.f32 %v3240, %v3285
    %v3287 = vpop.f32.mrf.mxu0
    %v3288 = vadd.f32 %v3242, %v3287
    %3289 = vdwg.mxu0
    %v3290 = vadd.f32 %v3286, %v300
    %v3291 = vadd.f32 %v3288, %v300
    %v3292 = vxor.u32 %v3290, 2147483648
    %v3293 = vxor.u32 %v3291, 2147483648
    %v3294 = vmul.f32 %v3292, 1.442695
    %v3295 = vpow.pop %v3294
    %v3296 = vmul.f32 %v3293, 1.442695
    %v3297 = vpow.pop %v3296
    %v3298 = vadd.f32 %v3295, 1.0
    %v3299 = vadd.f32 %v3297, 1.0
    %v3300 = vrcp.pop %v3298
    %v3301 = vmul.f32 %v3298, %v3300
    %v3302 = vsub.f32 1.0, %v3301
    %v3303 = vmul.f32 %v3300, %v3302
    %v3304 = vadd.f32 %v3300, %v3303
    %vm3305 = vweird.f32 %v3298
    %vm3306 = vweird.f32 %v3300
    %vm3307 = vmor %vm3305, %vm3306
    %v3308 = vsel %vm3307, %v3300, %v3304
    %v3309 = vand.u32 2147483647, %v3298
    %vm3310 = vcmp.eq.f32.partialorder %v3309, 8.507059e+37
    %v3311 = vand.u32 %v3298, 2147483648
    %v3312 = vor.u32 1.1754944e-38, %v3311
    %v3313 = vsel %vm3310, %v3312, %v3308
    %v3314 = vmul.f32 1.0, %v3313
    %v3315 = vrcp.pop %v3299
    %v3316 = vmul.f32 %v3299, %v3315
    %v3317 = vsub.f32 1.0, %v3316
    %v3318 = vmul.f32 %v3315, %v3317
    %v3319 = vadd.f32 %v3315, %v3318
    %vm3320 = vweird.f32 %v3299
    %vm3321 = vweird.f32 %v3315
    %vm3322 = vmor %vm3320, %vm3321
    %v3323 = vsel %vm3322, %v3315, %v3319
    %v3324 = vand.u32 2147483647, %v3299
    %vm3325 = vcmp.eq.f32.partialorder %v3324, 8.507059e+37
    %v3326 = vand.u32 %v3299, 2147483648
    %v3327 = vor.u32 1.1754944e-38, %v3326
    %v3328 = vsel %vm3325, %v3327, %v3323
    %v3329 = vmul.f32 1.0, %v3328
    %v3330 = vtanh.pop %v3290
    %v3331 = vtanh.pop %v3291
    %v3332 = vmul.f32 %v3314, %v3209
    %v3333 = vmul.f32 %v3329, %v3210
    %3336 = vrot.lane.b32.xlu0 %v3330, 32
    %v3337 = vpop.permute.xlu0 %3336
    %3338 = vrot.lane.b32.xlu0 %v3331, 32
    %v3339 = vpop.permute.xlu0 %3338
    %v3342 = vmul.f32 %v3314, %v3337
    %v3343 = vmul.f32 %v3329, %v3339
    %3346 = vrot.lane.b32.xlu0 %v3342, 32
    %v3347 = vpop.permute.xlu0 %3346
    %3348 = vrot.lane.b32.xlu0 %v3343, 32
    %v3349 = vpop.permute.xlu0 %3348
    %v3352 = vadd.f32 %v3332, %v3347
    %v3353 = vadd.f32 %v3333, %v3349
    %v3354 = vtanh.pop %v3352
    %v3355 = vtanh.pop %v3353
    %3358 = vrot.lane.b32.xlu0 %v3354, 32
    %v3359 = vpop.permute.xlu0 %3358
    %3360 = vrot.lane.b32.xlu0 %v3355, 32
    %v3361 = vpop.permute.xlu0 %3360
    %v3364 = vmul.f32 %v3314, %v3359
    %v3365 = vmul.f32 %v3329, %v3361
    %v3366 = vpack.c.bf16 %v3365, %v3364
    %3368 = vrot.lane.b32.xlu0 %v3366, 64
    %v3369 = vpop.permute.xlu0 %3368
    %v3371 = vsel %vm139, %v3369, 0
    %3373 = vmatpush.bf16.msra.mxu0 0
    %3374 = vmatpush.bf16.msra.mxu0 0
    %3375 = vmatpush.bf16.msra.mxu0 0
    %3376 = vmatpush.bf16.msra.mxu0 0
    %3377 = vmatpush.bf16.msra.mxu0 0
    %3378 = vmatpush.bf16.msra.mxu0 0
    %3379 = vmatpush.bf16.msra.mxu0 %v136
    %3380 = vmatpush.bf16.msra.mxu0 %v135
    %3381 = vmatmul.bf16.gmra.mxu0 %v3371
    %v3382 = vpop.f32.mrf.mxu0
    %v3383 = vadd.f32 0.0, %v3382
    %v3384 = vpop.f32.mrf.mxu0
    %v3385 = vadd.f32 0.0, %v3384
    %3386 = vdwg.mxu0
    %v3387 = vrot.slane %v2656, 5
    %v3388 = vrot.slane %v2657, 4
    %v3389 = vsel %vm222, %v3388, %v3387
    %v3390 = vrot.slane %v2658, 3
    %v3391 = vsel %vm225, %v3390, %v3389
    %v3392 = vrot.slane %v2659, 2
    %v3393 = vsel %vm228, %v3392, %v3391
    %v3394 = vrot.slane %v2660, 1
    %v3395 = vsel %vm231, %v3394, %v3393
    %v3396 = vsel %vm234, %v2661, %v3395
    %v3397 = vrot.slane %v2662, 7
    %v3398 = vsel %vm237, %v3397, %v3396
    %v3399 = vrot.slane %v2663, 6
    %v3400 = vsel %vm240, %v3399, %v3398
    %v3401 = vrot.slane %v2664, 5
    %v3402 = vrot.slane %v2665, 4
    %v3403 = vsel %vm222, %v3402, %v3401
    %v3404 = vrot.slane %v2666, 3
    %v3405 = vsel %vm225, %v3404, %v3403
    %v3406 = vrot.slane %v2667, 2
    %v3407 = vsel %vm228, %v3406, %v3405
    %v3408 = vrot.slane %v2668, 1
    %v3409 = vsel %vm231, %v3408, %v3407
    %v3410 = vsel %vm234, %v2669, %v3409
    %v3411 = vrot.slane %v2670, 7
    %v3412 = vsel %vm237, %v3411, %v3410
    %v3413 = vrot.slane %v2671, 6
    %v3414 = vsel %vm240, %v3413, %v3412
    %v3415 = vpack.c.b16 %v3414, %v3400
    %v3417 = vsel %vm281, %v3415, 0
    %3419 = vmatpush.bf16.msra.mxu0 0
    %3420 = vmatpush.bf16.msra.mxu0 0
    %3421 = vmatpush.bf16.msra.mxu0 0
    %3422 = vmatpush.bf16.msra.mxu0 0
    %3423 = vmatpush.bf16.msra.mxu0 %v276
    %3424 = vmatpush.bf16.msra.mxu0 %v275
    %3425 = vmatpush.bf16.msra.mxu0 %v274
    %3426 = vmatpush.bf16.msra.mxu0 %v273
    %3427 = vmatmul.bf16.gmra.mxu0 %v3417
    %v3428 = vpop.f32.mrf.mxu0
    %v3429 = vadd.f32 %v3383, %v3428
    %v3430 = vpop.f32.mrf.mxu0
    %v3431 = vadd.f32 %v3385, %v3430
    %3432 = vdwg.mxu0
    %v3433 = vadd.f32 %v3429, %v300
    %v3434 = vadd.f32 %v3431, %v300
    %v3435 = vxor.u32 %v3433, 2147483648
    %v3436 = vxor.u32 %v3434, 2147483648
    %v3437 = vmul.f32 %v3435, 1.442695
    %v3438 = vpow.pop %v3437
    %v3439 = vmul.f32 %v3436, 1.442695
    %v3440 = vpow.pop %v3439
    %v3441 = vadd.f32 %v3438, 1.0
    %v3442 = vadd.f32 %v3440, 1.0
    %v3443 = vrcp.pop %v3441
    %v3444 = vmul.f32 %v3441, %v3443
    %v3445 = vsub.f32 1.0, %v3444
    %v3446 = vmul.f32 %v3443, %v3445
    %v3447 = vadd.f32 %v3443, %v3446
    %vm3448 = vweird.f32 %v3441
    %vm3449 = vweird.f32 %v3443
    %vm3450 = vmor %vm3448, %vm3449
    %v3451 = vsel %vm3450, %v3443, %v3447
    %v3452 = vand.u32 2147483647, %v3441
    %vm3453 = vcmp.eq.f32.partialorder %v3452, 8.507059e+37
    %v3454 = vand.u32 %v3441, 2147483648
    %v3455 = vor.u32 1.1754944e-38, %v3454
    %v3456 = vsel %vm3453, %v3455, %v3451
    %v3457 = vmul.f32 1.0, %v3456
    %v3458 = vrcp.pop %v3442
    %v3459 = vmul.f32 %v3442, %v3458
    %v3460 = vsub.f32 1.0, %v3459
    %v3461 = vmul.f32 %v3458, %v3460
    %v3462 = vadd.f32 %v3458, %v3461
    %vm3463 = vweird.f32 %v3442
    %vm3464 = vweird.f32 %v3458
    %vm3465 = vmor %vm3463, %vm3464
    %v3466 = vsel %vm3465, %v3458, %v3462
    %v3467 = vand.u32 2147483647, %v3442
    %vm3468 = vcmp.eq.f32.partialorder %v3467, 8.507059e+37
    %v3469 = vand.u32 %v3442, 2147483648
    %v3470 = vor.u32 1.1754944e-38, %v3469
    %v3471 = vsel %vm3468, %v3470, %v3466
    %v3472 = vmul.f32 1.0, %v3471
    %v3473 = vtanh.pop %v3433
    %v3474 = vtanh.pop %v3434
    %v3475 = vmul.f32 %v3457, %v3352
    %v3476 = vmul.f32 %v3472, %v3353
    %3479 = vrot.lane.b32.xlu0 %v3473, 32
    %v3480 = vpop.permute.xlu0 %3479
    %3481 = vrot.lane.b32.xlu0 %v3474, 32
    %v3482 = vpop.permute.xlu0 %3481
    %v3485 = vmul.f32 %v3457, %v3480
    %v3486 = vmul.f32 %v3472, %v3482
    %3489 = vrot.lane.b32.xlu0 %v3485, 32
    %v3490 = vpop.permute.xlu0 %3489
    %3491 = vrot.lane.b32.xlu0 %v3486, 32
    %v3492 = vpop.permute.xlu0 %3491
    %v3495 = vadd.f32 %v3475, %v3490
    %v3496 = vadd.f32 %v3476, %v3492
    %v3497 = vtanh.pop %v3495
    %v3498 = vtanh.pop %v3496
    %3501 = vrot.lane.b32.xlu0 %v3497, 32
    %v3502 = vpop.permute.xlu0 %3501
    %3503 = vrot.lane.b32.xlu0 %v3498, 32
    %v3504 = vpop.permute.xlu0 %3503
    %v3507 = vmul.f32 %v3457, %v3502
    %v3508 = vmul.f32 %v3472, %v3504
    %v3509 = vpack.c.bf16 %v3508, %v3507
    %3511 = vrot.lane.b32.xlu0 %v3509, 64
    %v3512 = vpop.permute.xlu0 %3511
    %v3514 = vsel %vm139, %v3512, 0
    %3516 = vmatpush.bf16.msra.mxu0 0
    %3517 = vmatpush.bf16.msra.mxu0 0
    %3518 = vmatpush.bf16.msra.mxu0 0
    %3519 = vmatpush.bf16.msra.mxu0 0
    %3520 = vmatpush.bf16.msra.mxu0 0
    %3521 = vmatpush.bf16.msra.mxu0 0
    %3522 = vmatpush.bf16.msra.mxu0 %v136
    %3523 = vmatpush.bf16.msra.mxu0 %v135
    %3524 = vmatmul.bf16.gmra.mxu0 %v3514
    %v3525 = vpop.f32.mrf.mxu0
    %v3526 = vadd.f32 0.0, %v3525
    %v3527 = vpop.f32.mrf.mxu0
    %v3528 = vadd.f32 0.0, %v3527
    %3529 = vdwg.mxu0
    %v3530 = vrot.slane %v2656, 6
    %v3531 = vrot.slane %v2657, 5
    %v3532 = vsel %vm222, %v3531, %v3530
    %v3533 = vrot.slane %v2658, 4
    %v3534 = vsel %vm225, %v3533, %v3532
    %v3535 = vrot.slane %v2659, 3
    %v3536 = vsel %vm228, %v3535, %v3534
    %v3537 = vrot.slane %v2660, 2
    %v3538 = vsel %vm231, %v3537, %v3536
    %v3539 = vrot.slane %v2661, 1
    %v3540 = vsel %vm234, %v3539, %v3538
    %v3541 = vsel %vm237, %v2662, %v3540
    %v3542 = vrot.slane %v2663, 7
    %v3543 = vsel %vm240, %v3542, %v3541
    %v3544 = vrot.slane %v2664, 6
    %v3545 = vrot.slane %v2665, 5
    %v3546 = vsel %vm222, %v3545, %v3544
    %v3547 = vrot.slane %v2666, 4
    %v3548 = vsel %vm225, %v3547, %v3546
    %v3549 = vrot.slane %v2667, 3
    %v3550 = vsel %vm228, %v3549, %v3548
    %v3551 = vrot.slane %v2668, 2
    %v3552 = vsel %vm231, %v3551, %v3550
    %v3553 = vrot.slane %v2669, 1
    %v3554 = vsel %vm234, %v3553, %v3552
    %v3555 = vsel %vm237, %v2670, %v3554
    %v3556 = vrot.slane %v2671, 7
    %v3557 = vsel %vm240, %v3556, %v3555
    %v3558 = vpack.c.b16 %v3557, %v3543
    %v3560 = vsel %vm281, %v3558, 0
    %3562 = vmatpush.bf16.msra.mxu0 0
    %3563 = vmatpush.bf16.msra.mxu0 0
    %3564 = vmatpush.bf16.msra.mxu0 0
    %3565 = vmatpush.bf16.msra.mxu0 0
    %3566 = vmatpush.bf16.msra.mxu0 %v276
    %3567 = vmatpush.bf16.msra.mxu0 %v275
    %3568 = vmatpush.bf16.msra.mxu0 %v274
    %3569 = vmatpush.bf16.msra.mxu0 %v273
    %3570 = vmatmul.bf16.gmra.mxu0 %v3560
    %v3571 = vpop.f32.mrf.mxu0
    %v3572 = vadd.f32 %v3526, %v3571
    %v3573 = vpop.f32.mrf.mxu0
    %v3574 = vadd.f32 %v3528, %v3573
    %3575 = vdwg.mxu0
    %v3576 = vadd.f32 %v3572, %v300
    %v3577 = vadd.f32 %v3574, %v300
    %v3578 = vxor.u32 %v3576, 2147483648
    %v3579 = vxor.u32 %v3577, 2147483648
    %v3580 = vmul.f32 %v3578, 1.442695
    %v3581 = vpow.pop %v3580
    %v3582 = vmul.f32 %v3579, 1.442695
    %v3583 = vpow.pop %v3582
    %v3584 = vadd.f32 %v3581, 1.0
    %v3585 = vadd.f32 %v3583, 1.0
    %v3586 = vrcp.pop %v3584
    %v3587 = vmul.f32 %v3584, %v3586
    %v3588 = vsub.f32 1.0, %v3587
    %v3589 = vmul.f32 %v3586, %v3588
    %v3590 = vadd.f32 %v3586, %v3589
    %vm3591 = vweird.f32 %v3584
    %vm3592 = vweird.f32 %v3586
    %vm3593 = vmor %vm3591, %vm3592
    %v3594 = vsel %vm3593, %v3586, %v3590
    %v3595 = vand.u32 2147483647, %v3584
    %vm3596 = vcmp.eq.f32.partialorder %v3595, 8.507059e+37
    %v3597 = vand.u32 %v3584, 2147483648
    %v3598 = vor.u32 1.1754944e-38, %v3597
    %v3599 = vsel %vm3596, %v3598, %v3594
    %v3600 = vmul.f32 1.0, %v3599
    %v3601 = vrcp.pop %v3585
    %v3602 = vmul.f32 %v3585, %v3601
    %v3603 = vsub.f32 1.0, %v3602
    %v3604 = vmul.f32 %v3601, %v3603
    %v3605 = vadd.f32 %v3601, %v3604
    %vm3606 = vweird.f32 %v3585
    %vm3607 = vweird.f32 %v3601
    %vm3608 = vmor %vm3606, %vm3607
    %v3609 = vsel %vm3608, %v3601, %v3605
    %v3610 = vand.u32 2147483647, %v3585
    %vm3611 = vcmp.eq.f32.partialorder %v3610, 8.507059e+37
    %v3612 = vand.u32 %v3585, 2147483648
    %v3613 = vor.u32 1.1754944e-38, %v3612
    %v3614 = vsel %vm3611, %v3613, %v3609
    %v3615 = vmul.f32 1.0, %v3614
    %v3616 = vtanh.pop %v3576
    %v3617 = vtanh.pop %v3577
    %v3618 = vmul.f32 %v3600, %v3495
    %v3619 = vmul.f32 %v3615, %v3496
    %3622 = vrot.lane.b32.xlu0 %v3616, 32
    %v3623 = vpop.permute.xlu0 %3622
    %3624 = vrot.lane.b32.xlu0 %v3617, 32
    %v3625 = vpop.permute.xlu0 %3624
    %v3628 = vmul.f32 %v3600, %v3623
    %v3629 = vmul.f32 %v3615, %v3625
    %3632 = vrot.lane.b32.xlu0 %v3628, 32
    %v3633 = vpop.permute.xlu0 %3632
    %3634 = vrot.lane.b32.xlu0 %v3629, 32
    %v3635 = vpop.permute.xlu0 %3634
    %v3638 = vadd.f32 %v3618, %v3633
    %v3639 = vadd.f32 %v3619, %v3635
    %v3640 = vtanh.pop %v3638
    %v3641 = vtanh.pop %v3639
    %3644 = vrot.lane.b32.xlu0 %v3640, 32
    %v3645 = vpop.permute.xlu0 %3644
    %3646 = vrot.lane.b32.xlu0 %v3641, 32
    %v3647 = vpop.permute.xlu0 %3646
    %v3650 = vmul.f32 %v3600, %v3645
    %v3651 = vmul.f32 %v3615, %v3647
    %v3652 = vpack.c.bf16 %v3651, %v3650
    %3654 = vrot.lane.b32.xlu0 %v3652, 64
    %v3655 = vpop.permute.xlu0 %3654
    %v3657 = vsel %vm139, %v3655, 0
    %3659 = vmatpush.bf16.msra.mxu0 0
    %3660 = vmatpush.bf16.msra.mxu0 0
    %3661 = vmatpush.bf16.msra.mxu0 0
    %3662 = vmatpush.bf16.msra.mxu0 0
    %3663 = vmatpush.bf16.msra.mxu0 0
    %3664 = vmatpush.bf16.msra.mxu0 0
    %3665 = vmatpush.bf16.msra.mxu0 %v136
    %3666 = vmatpush.bf16.msra.mxu0 %v135
    %3667 = vmatmul.bf16.gmra.mxu0 %v3657
    %v3668 = vpop.f32.mrf.mxu0
    %v3669 = vadd.f32 0.0, %v3668
    %v3670 = vpop.f32.mrf.mxu0
    %v3671 = vadd.f32 0.0, %v3670
    %3672 = vdwg.mxu0
    %v3673 = vrot.slane %v2656, 7
    %v3674 = vrot.slane %v2657, 6
    %v3675 = vsel %vm222, %v3674, %v3673
    %v3676 = vrot.slane %v2658, 5
    %v3677 = vsel %vm225, %v3676, %v3675
    %v3678 = vrot.slane %v2659, 4
    %v3679 = vsel %vm228, %v3678, %v3677
    %v3680 = vrot.slane %v2660, 3
    %v3681 = vsel %vm231, %v3680, %v3679
    %v3682 = vrot.slane %v2661, 2
    %v3683 = vsel %vm234, %v3682, %v3681
    %v3684 = vrot.slane %v2662, 1
    %v3685 = vsel %vm237, %v3684, %v3683
    %v3686 = vsel %vm240, %v2663, %v3685
    %v3687 = vrot.slane %v2664, 7
    %v3688 = vrot.slane %v2665, 6
    %v3689 = vsel %vm222, %v3688, %v3687
    %v3690 = vrot.slane %v2666, 5
    %v3691 = vsel %vm225, %v3690, %v3689
    %v3692 = vrot.slane %v2667, 4
    %v3693 = vsel %vm228, %v3692, %v3691
    %v3694 = vrot.slane %v2668, 3
    %v3695 = vsel %vm231, %v3694, %v3693
    %v3696 = vrot.slane %v2669, 2
    %v3697 = vsel %vm234, %v3696, %v3695
    %v3698 = vrot.slane %v2670, 1
    %v3699 = vsel %vm237, %v3698, %v3697
    %v3700 = vsel %vm240, %v2671, %v3699
    %v3701 = vpack.c.b16 %v3700, %v3686
    %v3703 = vsel %vm281, %v3701, 0
    %3705 = vmatpush.bf16.msra.mxu0 0
    %3706 = vmatpush.bf16.msra.mxu0 0
    %3707 = vmatpush.bf16.msra.mxu0 0
    %3708 = vmatpush.bf16.msra.mxu0 0
    %3709 = vmatpush.bf16.msra.mxu0 %v276
    %3710 = vmatpush.bf16.msra.mxu0 %v275
    %3711 = vmatpush.bf16.msra.mxu0 %v274
    %3712 = vmatpush.bf16.msra.mxu0 %v273
    %3713 = vmatmul.bf16.gmra.mxu0 %v3703
    %v3714 = vpop.f32.mrf.mxu0
    %v3715 = vadd.f32 %v3669, %v3714
    %v3716 = vpop.f32.mrf.mxu0
    %v3717 = vadd.f32 %v3671, %v3716
    %3718 = vdwg.mxu0
    %v3719 = vadd.f32 %v3715, %v300
    %v3720 = vadd.f32 %v3717, %v300
    %v3721 = vxor.u32 %v3719, 2147483648
    %v3722 = vxor.u32 %v3720, 2147483648
    %v3723 = vmul.f32 %v3721, 1.442695
    %v3724 = vpow.pop %v3723
    %v3725 = vmul.f32 %v3722, 1.442695
    %v3726 = vpow.pop %v3725
    %v3727 = vadd.f32 %v3724, 1.0
    %v3728 = vadd.f32 %v3726, 1.0
    %v3729 = vrcp.pop %v3727
    %v3730 = vmul.f32 %v3727, %v3729
    %v3731 = vsub.f32 1.0, %v3730
    %v3732 = vmul.f32 %v3729, %v3731
    %v3733 = vadd.f32 %v3729, %v3732
    %vm3734 = vweird.f32 %v3727
    %vm3735 = vweird.f32 %v3729
    %vm3736 = vmor %vm3734, %vm3735
    %v3737 = vsel %vm3736, %v3729, %v3733
    %v3738 = vand.u32 2147483647, %v3727
    %vm3739 = vcmp.eq.f32.partialorder %v3738, 8.507059e+37
    %v3740 = vand.u32 %v3727, 2147483648
    %v3741 = vor.u32 1.1754944e-38, %v3740
    %v3742 = vsel %vm3739, %v3741, %v3737
    %v3743 = vmul.f32 1.0, %v3742
    %v3744 = vrcp.pop %v3728
    %v3745 = vmul.f32 %v3728, %v3744
    %v3746 = vsub.f32 1.0, %v3745
    %v3747 = vmul.f32 %v3744, %v3746
    %v3748 = vadd.f32 %v3744, %v3747
    %vm3749 = vweird.f32 %v3728
    %vm3750 = vweird.f32 %v3744
    %vm3751 = vmor %vm3749, %vm3750
    %v3752 = vsel %vm3751, %v3744, %v3748
    %v3753 = vand.u32 2147483647, %v3728
    %vm3754 = vcmp.eq.f32.partialorder %v3753, 8.507059e+37
    %v3755 = vand.u32 %v3728, 2147483648
    %v3756 = vor.u32 1.1754944e-38, %v3755
    %v3757 = vsel %vm3754, %v3756, %v3752
    %v3758 = vmul.f32 1.0, %v3757
    %v3759 = vtanh.pop %v3719
    %v3760 = vtanh.pop %v3720
    %v3761 = vmul.f32 %v3743, %v3638
    %v3762 = vmul.f32 %v3758, %v3639
    %3765 = vrot.lane.b32.xlu0 %v3759, 32
    %v3766 = vpop.permute.xlu0 %3765
    %3767 = vrot.lane.b32.xlu0 %v3760, 32
    %v3768 = vpop.permute.xlu0 %3767
    %v3771 = vmul.f32 %v3743, %v3766
    %v3772 = vmul.f32 %v3758, %v3768
    %3775 = vrot.lane.b32.xlu0 %v3771, 32
    %v3776 = vpop.permute.xlu0 %3775
    %3777 = vrot.lane.b32.xlu0 %v3772, 32
    %v3778 = vpop.permute.xlu0 %3777
    %v3781 = vadd.f32 %v3761, %v3776
    %v3782 = vadd.f32 %v3762, %v3778
    %v3783 = vtanh.pop %v3781
    %v3784 = vtanh.pop %v3782
    %3787 = vrot.lane.b32.xlu0 %v3783, 32
    %v3788 = vpop.permute.xlu0 %3787
    %3789 = vrot.lane.b32.xlu0 %v3784, 32
    %v3790 = vpop.permute.xlu0 %3789
    %v3793 = vmul.f32 %v3743, %v3788
    %v3794 = vmul.f32 %v3758, %v3790
    %3797 = vrot.lane.b32.xlu0 %v3793, 64
    %v3798 = vpop.permute.xlu0 %3797
    %3799 = vrot.lane.b32.xlu0 %v3794, 64
    %v3800 = vpop.permute.xlu0 %3799
    %3803 = vst.msk [vmem:[#allocation8] sm:$0xff] %vm139, %v3798
    %3804 = vst.msk [vmem:[#allocation8 + $0x8] sm:$0xff] %vm139, %v3800
    // Predicated region
    $region30: #{tpu_custom_call.1} parent=1 // pred_check
      _
    $region31: #{tpu_custom_call.1} parent=1 // pred_check_branch
      %3806 = sbr.rel (0) target = $region33
    $region32: #{tpu_custom_call.1} parent=1 // pred_region
      %3808 = vsyncadd [#allocation4], 0
      %s3809 = sshll.u32 [#allocation8], 4
      %s3810 = int_to_ptr.vmem [resolvable:$true] %s3809
      %s3811 = sshll.u32 %s4, 4
      %s3812 = int_to_ptr.hbm [resolvable:$true] %s3811
      %3817 = dma.vmem_to_hbm [thread:$0]  %s3810, 256, %s3812, [#allocation4], 128, 128, 8
    $region33: #{tpu_custom_call.1} parent=1 // pred_fallthru
      _
    // Predicated region
    $region34: #{tpu_custom_call.1} parent=1 // pred_check
      _
    $region35: #{tpu_custom_call.1} parent=1 // pred_check_branch
      %3819 = sbr.rel (0) target = $region37
    $region36: #{tpu_custom_call.1} parent=1 // pred_region
      %3821 = dma.done [#allocation4], 256
    $region37: #{tpu_custom_call.1} parent=1 // pred_fallthru
      _
    %3822 = vsyncpa [#allocation3], 1
    %3823 = vsyncpa [#allocation6], 1
    %3824 = vsyncpa [#allocation4], 1

// kernel: tpu_custom_call.1
$region0: #{tpu_custom_call.1}
  #allocation0 [shape = 'u32[]', space=smem, size = 0x4, offset = 0x4, fixed_abs, tag = 'smem constant byte address 0x4 - core index']
  #allocation1 [shape = 'u32[72,128]{1,0:T(1,128)}', space=vmem, size = 0x9000, scoped, tag = 'internal scratch']
  %s0 = inlined_call_operand.hbm [shape: bf16[16,24,64], index: 0, kind: input, shape index: {}]
  %s1 = inlined_call_operand.hbm [shape: bf16[64,128], index: 1, kind: input, shape index: {}]
  %s2 = inlined_call_operand.hbm [shape: bf16[32,128], index: 2, kind: input, shape index: {}]
  %s3 = inlined_call_operand.vmem [shape: f32[1,128], index: 3, kind: input, shape index: {}]
  %s4 = inlined_call_operand.hbm [shape: f32[16,32], index: 4, kind: output, shape index: {}]
  %s5 = sld [smem:[#allocation0]]
  $region38: #{tpu_custom_call.1} parent=0
    _
  %s7 = ssub.s32 1, %s5
  %s8 = scalar_select 0, %s7, %s5
  $region1: #{tpu_custom_call.1} parent=0
    #allocation2 [shape = 'u8[98304]{0}', space=vmem, size = 0x18000, scoped, tag = 'input window, operand 0, single buffered']
    #allocation3 [shape = 's32[1]{0}', space=sflag, size = 0x4, scoped, tag = 'scoped memory for tpu_custom_call.1']
    #allocation4 [shape = 's32[1]{0}', space=sflag, size = 0x4, scoped, tag = 'scoped memory for tpu_custom_call.1']
    #allocation5 [shape = 'u8[16384]{0}', space=vmem, size = 0x4000, scoped, tag = 'input window, operand 1, single buffered']
    #allocation6 [shape = 's32[1]{0}', space=sflag, size = 0x4, scoped, tag = 'scoped memory for tpu_custom_call.1']
    #allocation7 [shape = 'u8[8192]{0}', space=vmem, size = 0x2000, scoped, tag = 'input window, operand 2, single buffered']
    #allocation8 [shape = 'u8[8192]{0}', space=vmem, size = 0x2000, scoped, tag = 'output window, operand 0, single buffered']
    %9 = vsyncpa [#allocation3], 0
    %10 = vsyncpa [#allocation6], 0
    %11 = vsyncpa [#allocation4], 0
    // Predicated region
    $region2: #{tpu_custom_call.1} parent=1 // pred_check
      _
    $region3: #{tpu_custom_call.1} parent=1 // pred_check_branch
      %13 = sbr.rel (0) target = $region5
    $region4: #{tpu_custom_call.1} parent=1 // pred_region
      %15 = vsyncadd [#allocation3], 0
      %s16 = sshll.u32 %s0, 4
      %s17 = int_to_ptr.hbm [resolvable:$true] %s16
      %s18 = sshll.u32 [#allocation2], 4
      %s19 = int_to_ptr.vmem [resolvable:$true] %s18
      %24 = dma.hbm_to_vmem [thread:$0]  %s17, 3072, %s19, [#allocation3], 64, 64, 4
    $region5: #{tpu_custom_call.1} parent=1 // pred_fallthru
      _
    // Predicated region
    $region6: #{tpu_custom_call.1} parent=1 // pred_check
      _
    $region7: #{tpu_custom_call.1} parent=1 // pred_check_branch
      %26 = sbr.rel (0) target = $region9
    $region8: #{tpu_custom_call.1} parent=1 // pred_region
      %28 = vsyncadd [#allocation6], 0
      %s29 = sshll.u32 %s1, 4
      %s30 = int_to_ptr.hbm [resolvable:$true] %s29
      %s31 = sshll.u32 [#allocation5], 4
      %s32 = int_to_ptr.vmem [resolvable:$true] %s31
      %37 = dma.hbm_to_vmem [thread:$0]  %s30, 512, %s32, [#allocation6], 64, 64, 4
    $region9: #{tpu_custom_call.1} parent=1 // pred_fallthru
      _
    // Predicated region
    $region10: #{tpu_custom_call.1} parent=1 // pred_check
      _
    $region11: #{tpu_custom_call.1} parent=1 // pred_check_branch
      %39 = sbr.rel (0) target = $region13
    $region12: #{tpu_custom_call.1} parent=1 // pred_region
      %41 = vsyncadd [#allocation6], 0
      %s42 = sshll.u32 %s2, 4
      %s43 = int_to_ptr.hbm [resolvable:$true] %s42
      %s44 = sshll.u32 [#allocation7], 4
      %s45 = int_to_ptr.vmem [resolvable:$true] %s44
      %50 = dma.hbm_to_vmem [thread:$0]  %s43, 256, %s45, [#allocation6], 64, 64, 4
    $region13: #{tpu_custom_call.1} parent=1 // pred_fallthru
      _
    // Predicated region
    $region14: #{tpu_custom_call.1} parent=1 // pred_check
      _
    $region15: #{tpu_custom_call.1} parent=1 // pred_check_branch
      %52 = sbr.rel (0) target = $region17
    $region16: #{tpu_custom_call.1} parent=1 // pred_region
      _
    $region17: #{tpu_custom_call.1} parent=1 // pred_fallthru
      _
    // Predicated region
    $region18: #{tpu_custom_call.1} parent=1 // pred_check
      _
    $region19: #{tpu_custom_call.1} parent=1 // pred_check_branch
      %54 = sbr.rel (0) target = $region21
    $region20: #{tpu_custom_call.1} parent=1 // pred_region
      %56 = dma.done [#allocation3], 3072
    $region21: #{tpu_custom_call.1} parent=1 // pred_fallthru
      _
    // Predicated region
    $region22: #{tpu_custom_call.1} parent=1 // pred_check
      _
    $region23: #{tpu_custom_call.1} parent=1 // pred_check_branch
      %58 = sbr.rel (0) target = $region25
    $region24: #{tpu_custom_call.1} parent=1 // pred_region
      %60 = dma.done [#allocation6], 512
    $region25: #{tpu_custom_call.1} parent=1 // pred_fallthru
      _
    // Predicated region
    $region26: #{tpu_custom_call.1} parent=1 // pred_check
      _
    $region27: #{tpu_custom_call.1} parent=1 // pred_check_branch
      %62 = sbr.rel (0) target = $region29
    $region28: #{tpu_custom_call.1} parent=1 // pred_region
      %64 = dma.done [#allocation6], 256
    $region29: #{tpu_custom_call.1} parent=1 // pred_fallthru
      _
    %v66 = vld [vmem:[#allocation2] sm:$0xf]
    %v67 = vld [vmem:[#allocation2 + $0x4] sm:$0xf]
    %v68 = vld [vmem:[#allocation2 + $0x8] sm:$0xf]
    %v69 = vld [vmem:[#allocation2 + $0xc] sm:$0xf]
    %v70 = vld [vmem:[#allocation2 + $0x10] sm:$0xf]
    %v71 = vld [vmem:[#allocation2 + $0x14] sm:$0xf]
    %v72 = vld [vmem:[#allocation2 + $0x18] sm:$0xf]
    %v73 = vld [vmem:[#allocation2 + $0x1c] sm:$0xf]
    %v74 = vld [vmem:[#allocation2 + $0x20] sm:$0xf]
    %v75 = vld [vmem:[#allocation2 + $0x24] sm:$0xf]
    %v76 = vld [vmem:[#allocation2 + $0x28] sm:$0xf]
    %v77 = vld [vmem:[#allocation2 + $0x2c] sm:$0xf]
    %v78 = vld [vmem:[#allocation2 + $0x30] sm:$0xf]
    %v79 = vld [vmem:[#allocation2 + $0x34] sm:$0xf]
    %v80 = vld [vmem:[#allocation2 + $0x38] sm:$0xf]
    %v81 = vld [vmem:[#allocation2 + $0x3c] sm:$0xf]
    %v82 = vld [vmem:[#allocation2 + $0x40] sm:$0xf]
    %v83 = vld [vmem:[#allocation2 + $0x44] sm:$0xf]
    %v84 = vld [vmem:[#allocation2 + $0x48] sm:$0xf]
    %v85 = vld [vmem:[#allocation2 + $0x4c] sm:$0xf]
    %v86 = vld [vmem:[#allocation2 + $0x50] sm:$0xf]
    %v87 = vld [vmem:[#allocation2 + $0x54] sm:$0xf]
    %v88 = vld [vmem:[#allocation2 + $0x58] sm:$0xf]
    %v89 = vld [vmem:[#allocation2 + $0x5c] sm:$0xf]
    %v90 = vld [vmem:[#allocation2 + $0x60] sm:$0xf]
    %v91 = vld [vmem:[#allocation2 + $0x64] sm:$0xf]
    %v92 = vld [vmem:[#allocation2 + $0x68] sm:$0xf]
    %v93 = vld [vmem:[#allocation2 + $0x6c] sm:$0xf]
    %v94 = vld [vmem:[#allocation2 + $0x70] sm:$0xf]
    %v95 = vld [vmem:[#allocation2 + $0x74] sm:$0xf]
    %v96 = vld [vmem:[#allocation2 + $0x78] sm:$0xf]
    %v97 = vld [vmem:[#allocation2 + $0x7c] sm:$0xf]
    %v98 = vld [vmem:[#allocation2 + $0x80] sm:$0xf]
    %v99 = vld [vmem:[#allocation2 + $0x84] sm:$0xf]
    %v100 = vld [vmem:[#allocation2 + $0x88] sm:$0xf]
    %v101 = vld [vmem:[#allocation2 + $0x8c] sm:$0xf]
    %v102 = vld [vmem:[#allocation2 + $0x90] sm:$0xf]
    %v103 = vld [vmem:[#allocation2 + $0x94] sm:$0xf]
    %v104 = vld [vmem:[#allocation2 + $0x98] sm:$0xf]
    %v105 = vld [vmem:[#allocation2 + $0x9c] sm:$0xf]
    %v106 = vld [vmem:[#allocation2 + $0xa0] sm:$0xf]
    %v107 = vld [vmem:[#allocation2 + $0xa4] sm:$0xf]
    %v108 = vld [vmem:[#allocation2 + $0xa8] sm:$0xf]
    %v109 = vld [vmem:[#allocation2 + $0xac] sm:$0xf]
    %v110 = vld [vmem:[#allocation2 + $0xb0] sm:$0xf]
    %v111 = vld [vmem:[#allocation2 + $0xb4] sm:$0xf]
    %v112 = vld [vmem:[#allocation2 + $0xb8] sm:$0xf]
    %v113 = vld [vmem:[#allocation2 + $0xbc] sm:$0xf]
    %v114 = vld [vmem:[#allocation5] sm:$0xf]
    %v115 = vld [vmem:[#allocation5 + $0x4] sm:$0xf]
    %v116 = vld [vmem:[#allocation5 + $0x8] sm:$0xf]
    %v117 = vld [vmem:[#allocation5 + $0xc] sm:$0xf]
    %v118 = vld [vmem:[#allocation5 + $0x10] sm:$0xf]
    %v119 = vld [vmem:[#allocation5 + $0x14] sm:$0xf]
    %v120 = vld [vmem:[#allocation5 + $0x18] sm:$0xf]
    %v121 = vld [vmem:[#allocation5 + $0x1c] sm:$0xf]
    %v122 = vld [vmem:[#allocation7] sm:$0xf]
    %v123 = vld [vmem:[#allocation7 + $0x4] sm:$0xf]
    %v124 = vld [vmem:[#allocation7 + $0x8] sm:$0xf]
    %v125 = vld [vmem:[#allocation7 + $0xc] sm:$0xf]
    %v126 = vld [vmem:[%s3] sm:$0x1]
    %v131 = vunpack.c.l.b16 %v122
    %v132 = vunpack.c.l.b16 %v123
    %v133 = vunpack.c.l.b16 %v124
    %v134 = vunpack.c.l.b16 %v125
    %v135 = vpack.c.b16 %v132, %v131
    %v136 = vpack.c.b16 %v134, %v133
    %vm139 = vcmask 261120
    %v141 = vsel %vm139, 0, 0
    %143 = vmatpush.bf16.msra.mxu0 0
    %144 = vmatpush.bf16.msra.mxu0 0
    %145 = vmatpush.bf16.msra.mxu0 0
    %146 = vmatpush.bf16.msra.mxu0 0
    %147 = vmatpush.bf16.msra.mxu0 0
    %148 = vmatpush.bf16.msra.mxu0 0
    %149 = vmatpush.bf16.msra.mxu0 %v136
    %150 = vmatpush.bf16.msra.mxu0 %v135
    %151 = vmatmul.bf16.gmra.mxu0 %v141
    %v152 = vpop.f32.mrf.mxu0
    %v153 = vadd.f32 0.0, %v152
    %v154 = vpop.f32.mrf.mxu0
    %v155 = vadd.f32 0.0, %v154
    %156 = vdwg.mxu0
    %v173 = vunpack.c.l.b16 %v66
    %v174 = vunpack.c.l.b16 %v69
    %v175 = vunpack.c.l.b16 %v72
    %v176 = vunpack.c.l.b16 %v75
    %v177 = vunpack.c.l.b16 %v78
    %v178 = vunpack.c.l.b16 %v81
    %v179 = vunpack.c.l.b16 %v84
    %v180 = vunpack.c.l.b16 %v87
    %v181 = vunpack.c.l.b16 %v90
    %v182 = vunpack.c.l.b16 %v93
    %v183 = vunpack.c.l.b16 %v96
    %v184 = vunpack.c.l.b16 %v99
    %v185 = vunpack.c.l.b16 %v102
    %v186 = vunpack.c.l.b16 %v105
    %v187 = vunpack.c.l.b16 %v108
    %v188 = vunpack.c.l.b16 %v111
    %v189 = vpack.c.b16 %v173, %v173
    %v190 = vpack.c.b16 %v174, %v174
    %v191 = vpack.c.b16 %v175, %v175
    %v192 = vpack.c.b16 %v176, %v176
    %v193 = vpack.c.b16 %v177, %v177
    %v194 = vpack.c.b16 %v178, %v178
    %v195 = vpack.c.b16 %v179, %v179
    %v196 = vpack.c.b16 %v180, %v180
    %v197 = vpack.c.b16 %v181, %v181
    %v198 = vpack.c.b16 %v182, %v182
    %v199 = vpack.c.b16 %v183, %v183
    %v200 = vpack.c.b16 %v184, %v184
    %v201 = vpack.c.b16 %v185, %v185
    %v202 = vpack.c.b16 %v186, %v186
    %v203 = vpack.c.b16 %v187, %v187
    %v204 = vpack.c.b16 %v188, %v188
    %v205 = vunpack.c.l.b16 %v189
    %v206 = vunpack.c.l.b16 %v190
    %v207 = vunpack.c.l.b16 %v191
    %v208 = vunpack.c.l.b16 %v192
    %v209 = vunpack.c.l.b16 %v193
    %v210 = vunpack.c.l.b16 %v194
    %v211 = vunpack.c.l.b16 %v195
    %v212 = vunpack.c.l.b16 %v196
    %v213 = vunpack.c.l.b16 %v197
    %v214 = vunpack.c.l.b16 %v198
    %v215 = vunpack.c.l.b16 %v199
    %v216 = vunpack.c.l.b16 %v200
    %v217 = vunpack.c.l.b16 %v201
    %v218 = vunpack.c.l.b16 %v202
    %v219 = vunpack.c.l.b16 %v203
    %v220 = vunpack.c.l.b16 %v204
    %v221 = vrot.slane %v206, 7
    %vm222 = vcmask 1041409
    %v223 = vsel %vm222, %v221, %v205
    %v224 = vrot.slane %v207, 6
    %vm225 = vcmask 1042434
    %v226 = vsel %vm225, %v224, %v223
    %v227 = vrot.slane %v208, 5
    %vm228 = vcmask 1043459
    %v229 = vsel %vm228, %v227, %v226
    %v230 = vrot.slane %v209, 4
    %vm231 = vcmask 1044484
    %v232 = vsel %vm231, %v230, %v229
    %v233 = vrot.slane %v210, 3
    %vm234 = vcmask 1045509
    %v235 = vsel %vm234, %v233, %v232
    %v236 = vrot.slane %v211, 2
    %vm237 = vcmask 1046534
    %v238 = vsel %vm237, %v236, %v235
    %v239 = vrot.slane %v212, 1
    %vm240 = vcmask 1047559
    %v241 = vsel %vm240, %v239, %v238
    %v242 = vrot.slane %v214, 7
    %v243 = vsel %vm222, %v242, %v213
    %v244 = vrot.slane %v215, 6
    %v245 = vsel %vm225, %v244, %v243
    %v246 = vrot.slane %v216, 5
    %v247 = vsel %vm228, %v246, %v245
    %v248 = vrot.slane %v217, 4
    %v249 = vsel %vm231, %v248, %v247
    %v250 = vrot.slane %v218, 3
    %v251 = vsel %vm234, %v250, %v249
    %v252 = vrot.slane %v219, 2
    %v253 = vsel %vm237, %v252, %v251
    %v254 = vrot.slane %v220, 1
    %v255 = vsel %vm240, %v254, %v253
    %v256 = vpack.c.b16 %v255, %v241
    %v265 = vunpack.c.l.b16 %v114
    %v266 = vunpack.c.l.b16 %v115
    %v267 = vunpack.c.l.b16 %v116
    %v268 = vunpack.c.l.b16 %v117
    %v269 = vunpack.c.l.b16 %v118
    %v270 = vunpack.c.l.b16 %v119
    %v271 = vunpack.c.l.b16 %v120
    %v272 = vunpack.c.l.b16 %v121
    %v273 = vpack.c.b16 %v266, %v265
    %v274 = vpack.c.b16 %v268, %v267
    %v275 = vpack.c.b16 %v270, %v269
    %v276 = vpack.c.b16 %v272, %v271
    %vm281 = vcmask 523264
    %v283 = vsel %vm281, %v256, 0
    %285 = vmatpush.bf16.msra.mxu0 0
    %286 = vmatpush.bf16.msra.mxu0 0
    %287 = vmatpush.bf16.msra.mxu0 0
    %288 = vmatpush.bf16.msra.mxu0 0
    %289 = vmatpush.bf16.msra.mxu0 %v276
    %290 = vmatpush.bf16.msra.mxu0 %v275
    %291 = vmatpush.bf16.msra.mxu0 %v274
    %292 = vmatpush.bf16.msra.mxu0 %v273
    %293 = vmatmul.bf16.gmra.mxu0 %v283
    %v294 = vpop.f32.mrf.mxu0
    %v295 = vadd.f32 %v153, %v294
    %v296 = vpop.f32.mrf.mxu0
    %v297 = vadd.f32 %v155, %v296
    %298 = vdwg.mxu0
    %v300 = vperm.slane %v126, 0
    %v302 = vadd.f32 %v295, %v300
    %v303 = vadd.f32 %v297, %v300
    %v304 = vxor.u32 %v302, 2147483648
    %v305 = vxor.u32 %v303, 2147483648
    %v306 = vmul.f32 %v304, 1.442695
    %v307 = vpow.pop %v306
    %v308 = vmul.f32 %v305, 1.442695
    %v309 = vpow.pop %v308
    %v310 = vadd.f32 %v307, 1.0
    %v311 = vadd.f32 %v309, 1.0
    %v312 = vrcp.pop %v310
    %v313 = vmul.f32 %v310, %v312
    %v314 = vsub.f32 1.0, %v313
    %v315 = vmul.f32 %v312, %v314
    %v316 = vadd.f32 %v312, %v315
    %vm317 = vweird.f32 %v310
    %vm318 = vweird.f32 %v312
    %vm319 = vmor %vm317, %vm318
    %v320 = vsel %vm319, %v312, %v316
    %v321 = vand.u32 2147483647, %v310
    %vm322 = vcmp.eq.f32.partialorder %v321, 8.507059e+37
    %v323 = vand.u32 %v310, 2147483648
    %v324 = vor.u32 1.1754944e-38, %v323
    %v325 = vsel %vm322, %v324, %v320
    %v326 = vmul.f32 1.0, %v325
    %v327 = vrcp.pop %v311
    %v328 = vmul.f32 %v311, %v327
    %v329 = vsub.f32 1.0, %v328
    %v330 = vmul.f32 %v327, %v329
    %v331 = vadd.f32 %v327, %v330
    %vm332 = vweird.f32 %v311
    %vm333 = vweird.f32 %v327
    %vm334 = vmor %vm332, %vm333
    %v335 = vsel %vm334, %v327, %v331
    %v336 = vand.u32 2147483647, %v311
    %vm337 = vcmp.eq.f32.partialorder %v336, 8.507059e+37
    %v338 = vand.u32 %v311, 2147483648
    %v339 = vor.u32 1.1754944e-38, %v338
    %v340 = vsel %vm337, %v339, %v335
    %v341 = vmul.f32 1.0, %v340
    %v342 = vtanh.pop %v302
    %v343 = vtanh.pop %v303
    %v344 = vmul.f32 %v326, 0.0
    %v345 = vmul.f32 %v341, 0.0
    %348 = vrot.lane.b32.xlu0 %v342, 32
    %v349 = vpop.permute.xlu0 %348
    %350 = vrot.lane.b32.xlu0 %v343, 32
    %v351 = vpop.permute.xlu0 %350
    %v354 = vmul.f32 %v326, %v349
    %v355 = vmul.f32 %v341, %v351
    %358 = vrot.lane.b32.xlu0 %v354, 32
    %v359 = vpop.permute.xlu0 %358
    %360 = vrot.lane.b32.xlu0 %v355, 32
    %v361 = vpop.permute.xlu0 %360
    %v364 = vadd.f32 %v344, %v359
    %v365 = vadd.f32 %v345, %v361
    %v366 = vtanh.pop %v364
    %v367 = vtanh.pop %v365
    %370 = vrot.lane.b32.xlu0 %v366, 32
    %v371 = vpop.permute.xlu0 %370
    %372 = vrot.lane.b32.xlu0 %v367, 32
    %v373 = vpop.permute.xlu0 %372
    %v376 = vmul.f32 %v326, %v371
    %v377 = vmul.f32 %v341, %v373
    %v378 = vpack.c.bf16 %v377, %v376
    %380 = vrot.lane.b32.xlu0 %v378, 64
    %v381 = vpop.permute.xlu0 %380
    %v383 = vsel %vm139, %v381, 0
    %385 = vmatpush.bf16.msra.mxu0 0
    %386 = vmatpush.bf16.msra.mxu0 0
    %387 = vmatpush.bf16.msra.mxu0 0
    %388 = vmatpush.bf16.msra.mxu0 0
    %389 = vmatpush.bf16.msra.mxu0 0
    %390 = vmatpush.bf16.msra.mxu0 0
    %391 = vmatpush.bf16.msra.mxu0 %v136
    %392 = vmatpush.bf16.msra.mxu0 %v135
    %393 = vmatmul.bf16.gmra.mxu0 %v383
    %v394 = vpop.f32.mrf.mxu0
    %v395 = vadd.f32 0.0, %v394
    %v396 = vpop.f32.mrf.mxu0
    %v397 = vadd.f32 0.0, %v396
    %398 = vdwg.mxu0
    %v399 = vrot.slane %v205, 1
    %v400 = vsel %vm222, %v206, %v399
    %v401 = vrot.slane %v207, 7
    %v402 = vsel %vm225, %v401, %v400
    %v403 = vrot.slane %v208, 6
    %v404 = vsel %vm228, %v403, %v402
    %v405 = vrot.slane %v209, 5
    %v406 = vsel %vm231, %v405, %v404
    %v407 = vrot.slane %v210, 4
    %v408 = vsel %vm234, %v407, %v406
    %v409 = vrot.slane %v211, 3
    %v410 = vsel %vm237, %v409, %v408
    %v411 = vrot.slane %v212, 2
    %v412 = vsel %vm240, %v411, %v410
    %v413 = vrot.slane %v213, 1
    %v414 = vsel %vm222, %v214, %v413
    %v415 = vrot.slane %v215, 7
    %v416 = vsel %vm225, %v415, %v414
    %v417 = vrot.slane %v216, 6
    %v418 = vsel %vm228, %v417, %v416
    %v419 = vrot.slane %v217, 5
    %v420 = vsel %vm231, %v419, %v418
    %v421 = vrot.slane %v218, 4
    %v422 = vsel %vm234, %v421, %v420
    %v423 = vrot.slane %v219, 3
    %v424 = vsel %vm237, %v423, %v422
    %v425 = vrot.slane %v220, 2
    %v426 = vsel %vm240, %v425, %v424
    %v427 = vpack.c.b16 %v426, %v412
    %v429 = vsel %vm281, %v427, 0
    %431 = vmatpush.bf16.msra.mxu0 0
    %432 = vmatpush.bf16.msra.mxu0 0
    %433 = vmatpush.bf16.msra.mxu0 0
    %434 = vmatpush.bf16.msra.mxu0 0
    %435 = vmatpush.bf16.msra.mxu0 %v276
    %436 = vmatpush.bf16.msra.mxu0 %v275
    %437 = vmatpush.bf16.msra.mxu0 %v274
    %438 = vmatpush.bf16.msra.mxu0 %v273
    %439 = vmatmul.bf16.gmra.mxu0 %v429
    %v440 = vpop.f32.mrf.mxu0
    %v441 = vadd.f32 %v395, %v440
    %v442 = vpop.f32.mrf.mxu0
    %v443 = vadd.f32 %v397, %v442
    %444 = vdwg.mxu0
    %v445 = vadd.f32 %v441, %v300
    %v446 = vadd.f32 %v443, %v300
    %v447 = vxor.u32 %v445, 2147483648
    %v448 = vxor.u32 %v446, 2147483648
    %v449 = vmul.f32 %v447, 1.442695
    %v450 = vpow.pop %v449
    %v451 = vmul.f32 %v448, 1.442695
    %v452 = vpow.pop %v451
    %v453 = vadd.f32 %v450, 1.0
    %v454 = vadd.f32 %v452, 1.0
    %v455 = vrcp.pop %v453
    %v456 = vmul.f32 %v453, %v455
    %v457 = vsub.f32 1.0, %v456
    %v458 = vmul.f32 %v455, %v457
    %v459 = vadd.f32 %v455, %v458
    %vm460 = vweird.f32 %v453
    %vm461 = vweird.f32 %v455
    %vm462 = vmor %vm460, %vm461
    %v463 = vsel %vm462, %v455, %v459
    %v464 = vand.u32 2147483647, %v453
    %vm465 = vcmp.eq.f32.partialorder %v464, 8.507059e+37
    %v466 = vand.u32 %v453, 2147483648
    %v467 = vor.u32 1.1754944e-38, %v466
    %v468 = vsel %vm465, %v467, %v463
    %v469 = vmul.f32 1.0, %v468
    %v470 = vrcp.pop %v454
    %v471 = vmul.f32 %v454, %v470
    %v472 = vsub.f32 1.0, %v471
    %v473 = vmul.f32 %v470, %v472
    %v474 = vadd.f32 %v470, %v473
    %vm475 = vweird.f32 %v454
    %vm476 = vweird.f32 %v470
    %vm477 = vmor %vm475, %vm476
    %v478 = vsel %vm477, %v470, %v474
    %v479 = vand.u32 2147483647, %v454
    %vm480 = vcmp.eq.f32.partialorder %v479, 8.507059e+37
    %v481 = vand.u32 %v454, 2147483648
    %v482 = vor.u32 1.1754944e-38, %v481
    %v483 = vsel %vm480, %v482, %v478
    %v484 = vmul.f32 1.0, %v483
    %v485 = vtanh.pop %v445
    %v486 = vtanh.pop %v446
    %v487 = vmul.f32 %v469, %v364
    %v488 = vmul.f32 %v484, %v365
    %491 = vrot.lane.b32.xlu0 %v485, 32
    %v492 = vpop.permute.xlu0 %491
    %493 = vrot.lane.b32.xlu0 %v486, 32
    %v494 = vpop.permute.xlu0 %493
    %v497 = vmul.f32 %v469, %v492
    %v498 = vmul.f32 %v484, %v494
    %501 = vrot.lane.b32.xlu0 %v497, 32
    %v502 = vpop.permute.xlu0 %501
    %503 = vrot.lane.b32.xlu0 %v498, 32
    %v504 = vpop.permute.xlu0 %503
    %v507 = vadd.f32 %v487, %v502
    %v508 = vadd.f32 %v488, %v504
    %v509 = vtanh.pop %v507
    %v510 = vtanh.pop %v508
    %513 = vrot.lane.b32.xlu0 %v509, 32
    %v514 = vpop.permute.xlu0 %513
    %515 = vrot.lane.b32.xlu0 %v510, 32
    %v516 = vpop.permute.xlu0 %515
    %v519 = vmul.f32 %v469, %v514
    %v520 = vmul.f32 %v484, %v516
    %v521 = vpack.c.bf16 %v520, %v519
    %523 = vrot.lane.b32.xlu0 %v521, 64
    %v524 = vpop.permute.xlu0 %523
    %v526 = vsel %vm139, %v524, 0
    %528 = vmatpush.bf16.msra.mxu0 0
    %529 = vmatpush.bf16.msra.mxu0 0
    %530 = vmatpush.bf16.msra.mxu0 0
    %531 = vmatpush.bf16.msra.mxu0 0
    %532 = vmatpush.bf16.msra.mxu0 0
    %533 = vmatpush.bf16.msra.mxu0 0
    %534 = vmatpush.bf16.msra.mxu0 %v136
    %535 = vmatpush.bf16.msra.mxu0 %v135
    %536 = vmatmul.bf16.gmra.mxu0 %v526
    %v537 = vpop.f32.mrf.mxu0
    %v538 = vadd.f32 0.0, %v537
    %v539 = vpop.f32.mrf.mxu0
    %v540 = vadd.f32 0.0, %v539
    %541 = vdwg.mxu0
    %v542 = vrot.slane %v205, 2
    %v543 = vrot.slane %v206, 1
    %v544 = vsel %vm222, %v543, %v542
    %v545 = vsel %vm225, %v207, %v544
    %v546 = vrot.slane %v208, 7
    %v547 = vsel %vm228, %v546, %v545
    %v548 = vrot.slane %v209, 6
    %v549 = vsel %vm231, %v548, %v547
    %v550 = vrot.slane %v210, 5
    %v551 = vsel %vm234, %v550, %v549
    %v552 = vrot.slane %v211, 4
    %v553 = vsel %vm237, %v552, %v551
    %v554 = vrot.slane %v212, 3
    %v555 = vsel %vm240, %v554, %v553
    %v556 = vrot.slane %v213, 2
    %v557 = vrot.slane %v214, 1
    %v558 = vsel %vm222, %v557, %v556
    %v559 = vsel %vm225, %v215, %v558
    %v560 = vrot.slane %v216, 7
    %v561 = vsel %vm228, %v560, %v559
    %v562 = vrot.slane %v217, 6
    %v563 = vsel %vm231, %v562, %v561
    %v564 = vrot.slane %v218, 5
    %v565 = vsel %vm234, %v564, %v563
    %v566 = vrot.slane %v219, 4
    %v567 = vsel %vm237, %v566, %v565
    %v568 = vrot.slane %v220, 3
    %v569 = vsel %vm240, %v568, %v567
    %v570 = vpack.c.b16 %v569, %v555
    %v572 = vsel %vm281, %v570, 0
    %574 = vmatpush.bf16.msra.mxu0 0
    %575 = vmatpush.bf16.msra.mxu0 0
    %576 = vmatpush.bf16.msra.mxu0 0
    %577 = vmatpush.bf16.msra.mxu0 0
    %578 = vmatpush.bf16.msra.mxu0 %v276
    %579 = vmatpush.bf16.msra.mxu0 %v275
    %580 = vmatpush.bf16.msra.mxu0 %v274
    %581 = vmatpush.bf16.msra.mxu0 %v273
    %582 = vmatmul.bf16.gmra.mxu0 %v572
    %v583 = vpop.f32.mrf.mxu0
    %v584 = vadd.f32 %v538, %v583
    %v585 = vpop.f32.mrf.mxu0
    %v586 = vadd.f32 %v540, %v585
    %587 = vdwg.mxu0
    %v588 = vadd.f32 %v584, %v300
    %v589 = vadd.f32 %v586, %v300
    %v590 = vxor.u32 %v588, 2147483648
    %v591 = vxor.u32 %v589, 2147483648
    %v592 = vmul.f32 %v590, 1.442695
    %v593 = vpow.pop %v592
    %v594 = vmul.f32 %v591, 1.442695
    %v595 = vpow.pop %v594
    %v596 = vadd.f32 %v593, 1.0
    %v597 = vadd.f32 %v595, 1.0
    %v598 = vrcp.pop %v596
    %v599 = vmul.f32 %v596, %v598
    %v600 = vsub.f32 1.0, %v599
    %v601 = vmul.f32 %v598, %v600
    %v602 = vadd.f32 %v598, %v601
    %vm603 = vweird.f32 %v596
    %vm604 = vweird.f32 %v598
    %vm605 = vmor %vm603, %vm604
    %v606 = vsel %vm605, %v598, %v602
    %v607 = vand.u32 2147483647, %v596
    %vm608 = vcmp.eq.f32.partialorder %v607, 8.507059e+37
    %v609 = vand.u32 %v596, 2147483648
    %v610 = vor.u32 1.1754944e-38, %v609
    %v611 = vsel %vm608, %v610, %v606
    %v612 = vmul.f32 1.0, %v611
    %v613 = vrcp.pop %v597
    %v614 = vmul.f32 %v597, %v613
    %v615 = vsub.f32 1.0, %v614
    %v616 = vmul.f32 %v613, %v615
    %v617 = vadd.f32 %v613, %v616
    %vm618 = vweird.f32 %v597
    %vm619 = vweird.f32 %v613
    %vm620 = vmor %vm618, %vm619
    %v621 = vsel %vm620, %v613, %v617
    %v622 = vand.u32 2147483647, %v597
    %vm623 = vcmp.eq.f32.partialorder %v622, 8.507059e+37
    %v624 = vand.u32 %v597, 2147483648
    %v625 = vor.u32 1.1754944e-38, %v624
    %v626 = vsel %vm623, %v625, %v621
    %v627 = vmul.f32 1.0, %v626
    %v628 = vtanh.pop %v588
    %v629 = vtanh.pop %v589
    %v630 = vmul.f32 %v612, %v507
    %v631 = vmul.f32 %v627, %v508
    %634 = vrot.lane.b32.xlu0 %v628, 32
    %v635 = vpop.permute.xlu0 %634
    %636 = vrot.lane.b32.xlu0 %v629, 32
    %v637 = vpop.permute.xlu0 %636
    %v640 = vmul.f32 %v612, %v635
    %v641 = vmul.f32 %v627, %v637
    %644 = vrot.lane.b32.xlu0 %v640, 32
    %v645 = vpop.permute.xlu0 %644
    %646 = vrot.lane.b32.xlu0 %v641, 32
    %v647 = vpop.permute.xlu0 %646
    %v650 = vadd.f32 %v630, %v645
    %v651 = vadd.f32 %v631, %v647
    %v652 = vtanh.pop %v650
    %v653 = vtanh.pop %v651
    %656 = vrot.lane.b32.xlu0 %v652, 32
    %v657 = vpop.permute.xlu0 %656
    %658 = vrot.lane.b32.xlu0 %v653, 32
    %v659 = vpop.permute.xlu0 %658
    %v662 = vmul.f32 %v612, %v657
    %v663 = vmul.f32 %v627, %v659
    %v664 = vpack.c.bf16 %v663, %v662
    %666 = vrot.lane.b32.xlu0 %v664, 64
    %v667 = vpop.permute.xlu0 %666
    %v669 = vsel %vm139, %v667, 0
    %671 = vmatpush.bf16.msra.mxu0 0
    %672 = vmatpush.bf16.msra.mxu0 0
    %673 = vmatpush.bf16.msra.mxu0 0
    %674 = vmatpush.bf16.msra.mxu0 0
    %675 = vmatpush.bf16.msra.mxu0 0
    %676 = vmatpush.bf16.msra.mxu0 0
    %677 = vmatpush.bf16.msra.mxu0 %v136
    %678 = vmatpush.bf16.msra.mxu0 %v135
    %679 = vmatmul.bf16.gmra.mxu0 %v669
    %v680 = vpop.f32.mrf.mxu0
    %v681 = vadd.f32 0.0, %v680
    %v682 = vpop.f32.mrf.mxu0
    %v683 = vadd.f32 0.0, %v682
    %684 = vdwg.mxu0
    %v685 = vrot.slane %v205, 3
    %v686 = vrot.slane %v206, 2
    %v687 = vsel %vm222, %v686, %v685
    %v688 = vrot.slane %v207, 1
    %v689 = vsel %vm225, %v688, %v687
    %v690 = vsel %vm228, %v208, %v689
    %v691 = vrot.slane %v209, 7
    %v692 = vsel %vm231, %v691, %v690
    %v693 = vrot.slane %v210, 6
    %v694 = vsel %vm234, %v693, %v692
    %v695 = vrot.slane %v211, 5
    %v696 = vsel %vm237, %v695, %v694
    %v697 = vrot.slane %v212, 4
    %v698 = vsel %vm240, %v697, %v696
    %v699 = vrot.slane %v213, 3
    %v700 = vrot.slane %v214, 2
    %v701 = vsel %vm222, %v700, %v699
    %v702 = vrot.slane %v215, 1
    %v703 = vsel %vm225, %v702, %v701
    %v704 = vsel %vm228, %v216, %v703
    %v705 = vrot.slane %v217, 7
    %v706 = vsel %vm231, %v705, %v704
    %v707 = vrot.slane %v218, 6
    %v708 = vsel %vm234, %v707, %v706
    %v709 = vrot.slane %v219, 5
    %v710 = vsel %vm237, %v709, %v708
    %v711 = vrot.slane %v220, 4
    %v712 = vsel %vm240, %v711, %v710
    %v713 = vpack.c.b16 %v712, %v698
    %v715 = vsel %vm281, %v713, 0
    %717 = vmatpush.bf16.msra.mxu0 0
    %718 = vmatpush.bf16.msra.mxu0 0
    %719 = vmatpush.bf16.msra.mxu0 0
    %720 = vmatpush.bf16.msra.mxu0 0
    %721 = vmatpush.bf16.msra.mxu0 %v276
    %722 = vmatpush.bf16.msra.mxu0 %v275
    %723 = vmatpush.bf16.msra.mxu0 %v274
    %724 = vmatpush.bf16.msra.mxu0 %v273
    %725 = vmatmul.bf16.gmra.mxu0 %v715
    %v726 = vpop.f32.mrf.mxu0
    %v727 = vadd.f32 %v681, %v726
    %v728 = vpop.f32.mrf.mxu0
    %v729 = vadd.f32 %v683, %v728
    %730 = vdwg.mxu0
    %v731 = vadd.f32 %v727, %v300
    %v732 = vadd.f32 %v729, %v300
    %v733 = vxor.u32 %v731, 2147483648
    %v734 = vxor.u32 %v732, 2147483648
    %v735 = vmul.f32 %v733, 1.442695
    %v736 = vpow.pop %v735
    %v737 = vmul.f32 %v734, 1.442695
    %v738 = vpow.pop %v737
    %v739 = vadd.f32 %v736, 1.0
    %v740 = vadd.f32 %v738, 1.0
    %v741 = vrcp.pop %v739
    %v742 = vmul.f32 %v739, %v741
    %v743 = vsub.f32 1.0, %v742
    %v744 = vmul.f32 %v741, %v743
    %v745 = vadd.f32 %v741, %v744
    %vm746 = vweird.f32 %v739
    %vm747 = vweird.f32 %v741
    %vm748 = vmor %vm746, %vm747
    %v749 = vsel %vm748, %v741, %v745
    %v750 = vand.u32 2147483647, %v739
    %vm751 = vcmp.eq.f32.partialorder %v750, 8.507059e+37
    %v752 = vand.u32 %v739, 2147483648
    %v753 = vor.u32 1.1754944e-38, %v752
    %v754 = vsel %vm751, %v753, %v749
    %v755 = vmul.f32 1.0, %v754
    %v756 = vrcp.pop %v740
    %v757 = vmul.f32 %v740, %v756
    %v758 = vsub.f32 1.0, %v757
    %v759 = vmul.f32 %v756, %v758
    %v760 = vadd.f32 %v756, %v759
    %vm761 = vweird.f32 %v740
    %vm762 = vweird.f32 %v756
    %vm763 = vmor %vm761, %vm762
    %v764 = vsel %vm763, %v756, %v760
    %v765 = vand.u32 2147483647, %v740
    %vm766 = vcmp.eq.f32.partialorder %v765, 8.507059e+37
    %v767 = vand.u32 %v740, 2147483648
    %v768 = vor.u32 1.1754944e-38, %v767
    %v769 = vsel %vm766, %v768, %v764
    %v770 = vmul.f32 1.0, %v769
    %v771 = vtanh.pop %v731
    %v772 = vtanh.pop %v732
    %v773 = vmul.f32 %v755, %v650
    %v774 = vmul.f32 %v770, %v651
    %777 = vrot.lane.b32.xlu0 %v771, 32
    %v778 = vpop.permute.xlu0 %777
    %779 = vrot.lane.b32.xlu0 %v772, 32
    %v780 = vpop.permute.xlu0 %779
    %v783 = vmul.f32 %v755, %v778
    %v784 = vmul.f32 %v770, %v780
    %787 = vrot.lane.b32.xlu0 %v783, 32
    %v788 = vpop.permute.xlu0 %787
    %789 = vrot.lane.b32.xlu0 %v784, 32
    %v790 = vpop.permute.xlu0 %789
    %v793 = vadd.f32 %v773, %v788
    %v794 = vadd.f32 %v774, %v790
    %v795 = vtanh.pop %v793
    %v796 = vtanh.pop %v794
    %799 = vrot.lane.b32.xlu0 %v795, 32
    %v800 = vpop.permute.xlu0 %799
    %801 = vrot.lane.b32.xlu0 %v796, 32
    %v802 = vpop.permute.xlu0 %801
    %v805 = vmul.f32 %v755, %v800
    %v806 = vmul.f32 %v770, %v802
    %v807 = vpack.c.bf16 %v806, %v805
    %809 = vrot.lane.b32.xlu0 %v807, 64
    %v810 = vpop.permute.xlu0 %809
    %v812 = vsel %vm139, %v810, 0
    %814 = vmatpush.bf16.msra.mxu0 0
    %815 = vmatpush.bf16.msra.mxu0 0
    %816 = vmatpush.bf16.msra.mxu0 0
    %817 = vmatpush.bf16.msra.mxu0 0
    %818 = vmatpush.bf16.msra.mxu0 0
    %819 = vmatpush.bf16.msra.mxu0 0
    %820 = vmatpush.bf16.msra.mxu0 %v136
    %821 = vmatpush.bf16.msra.mxu0 %v135
    %822 = vmatmul.bf16.gmra.mxu0 %v812
    %v823 = vpop.f32.mrf.mxu0
    %v824 = vadd.f32 0.0, %v823
    %v825 = vpop.f32.mrf.mxu0
    %v826 = vadd.f32 0.0, %v825
    %827 = vdwg.mxu0
    %v828 = vrot.slane %v205, 4
    %v829 = vrot.slane %v206, 3
    %v830 = vsel %vm222, %v829, %v828
    %v831 = vrot.slane %v207, 2
    %v832 = vsel %vm225, %v831, %v830
    %v833 = vrot.slane %v208, 1
    %v834 = vsel %vm228, %v833, %v832
    %v835 = vsel %vm231, %v209, %v834
    %v836 = vrot.slane %v210, 7
    %v837 = vsel %vm234, %v836, %v835
    %v838 = vrot.slane %v211, 6
    %v839 = vsel %vm237, %v838, %v837
    %v840 = vrot.slane %v212, 5
    %v841 = vsel %vm240, %v840, %v839
    %v842 = vrot.slane %v213, 4
    %v843 = vrot.slane %v214, 3
    %v844 = vsel %vm222, %v843, %v842
    %v845 = vrot.slane %v215, 2
    %v846 = vsel %vm225, %v845, %v844
    %v847 = vrot.slane %v216, 1
    %v848 = vsel %vm228, %v847, %v846
    %v849 = vsel %vm231, %v217, %v848
    %v850 = vrot.slane %v218, 7
    %v851 = vsel %vm234, %v850, %v849
    %v852 = vrot.slane %v219, 6
    %v853 = vsel %vm237, %v852, %v851
    %v854 = vrot.slane %v220, 5
    %v855 = vsel %vm240, %v854, %v853
    %v856 = vpack.c.b16 %v855, %v841
    %v858 = vsel %vm281, %v856, 0
    %860 = vmatpush.bf16.msra.mxu0 0
    %861 = vmatpush.bf16.msra.mxu0 0
    %862 = vmatpush.bf16.msra.mxu0 0
    %863 = vmatpush.bf16.msra.mxu0 0
    %864 = vmatpush.bf16.msra.mxu0 %v276
    %865 = vmatpush.bf16.msra.mxu0 %v275
    %866 = vmatpush.bf16.msra.mxu0 %v274
    %867 = vmatpush.bf16.msra.mxu0 %v273
    %868 = vmatmul.bf16.gmra.mxu0 %v858
    %v869 = vpop.f32.mrf.mxu0
    %v870 = vadd.f32 %v824, %v869
    %v871 = vpop.f32.mrf.mxu0
    %v872 = vadd.f32 %v826, %v871
    %873 = vdwg.mxu0
    %v874 = vadd.f32 %v870, %v300
    %v875 = vadd.f32 %v872, %v300
    %v876 = vxor.u32 %v874, 2147483648
    %v877 = vxor.u32 %v875, 2147483648
    %v878 = vmul.f32 %v876, 1.442695
    %v879 = vpow.pop %v878
    %v880 = vmul.f32 %v877, 1.442695
    %v881 = vpow.pop %v880
    %v882 = vadd.f32 %v879, 1.0
    %v883 = vadd.f32 %v881, 1.0
    %v884 = vrcp.pop %v882
    %v885 = vmul.f32 %v882, %v884
    %v886 = vsub.f32 1.0, %v885
    %v887 = vmul.f32 %v884, %v886
    %v888 = vadd.f32 %v884, %v887
    %vm889 = vweird.f32 %v882
    %vm890 = vweird.f32 %v884
    %vm891 = vmor %vm889, %vm890
    %v892 = vsel %vm891, %v884, %v888
    %v893 = vand.u32 2147483647, %v882
    %vm894 = vcmp.eq.f32.partialorder %v893, 8.507059e+37
    %v895 = vand.u32 %v882, 2147483648
    %v896 = vor.u32 1.1754944e-38, %v895
    %v897 = vsel %vm894, %v896, %v892
    %v898 = vmul.f32 1.0, %v897
    %v899 = vrcp.pop %v883
    %v900 = vmul.f32 %v883, %v899
    %v901 = vsub.f32 1.0, %v900
    %v902 = vmul.f32 %v899, %v901
    %v903 = vadd.f32 %v899, %v902
    %vm904 = vweird.f32 %v883
    %vm905 = vweird.f32 %v899
    %vm906 = vmor %vm904, %vm905
    %v907 = vsel %vm906, %v899, %v903
    %v908 = vand.u32 2147483647, %v883
    %vm909 = vcmp.eq.f32.partialorder %v908, 8.507059e+37
    %v910 = vand.u32 %v883, 2147483648
    %v911 = vor.u32 1.1754944e-38, %v910
    %v912 = vsel %vm909, %v911, %v907
    %v913 = vmul.f32 1.0, %v912
    %v914 = vtanh.pop %v874
    %v915 = vtanh.pop %v875
    %v916 = vmul.f32 %v898, %v793
    %v917 = vmul.f32 %v913, %v794
    %920 = vrot.lane.b32.xlu0 %v914, 32
    %v921 = vpop.permute.xlu0 %920
    %922 = vrot.lane.b32.xlu0 %v915, 32
    %v923 = vpop.permute.xlu0 %922
    %v926 = vmul.f32 %v898, %v921
    %v927 = vmul.f32 %v913, %v923
    %930 = vrot.lane.b32.xlu0 %v926, 32
    %v931 = vpop.permute.xlu0 %930
    %932 = vrot.lane.b32.xlu0 %v927, 32
    %v933 = vpop.permute.xlu0 %932
    %v936 = vadd.f32 %v916, %v931
    %v937 = vadd.f32 %v917, %v933
    %v938 = vtanh.pop %v936
    %v939 = vtanh.pop %v937
    %942 = vrot.lane.b32.xlu0 %v938, 32
    %v943 = vpop.permute.xlu0 %942
    %944 = vrot.lane.b32.xlu0 %v939, 32
    %v945 = vpop.permute.xlu0 %944
    %v948 = vmul.f32 %v898, %v943
    %v949 = vmul.f32 %v913, %v945
    %v950 = vpack.c.bf16 %v949, %v948
    %952 = vrot.lane.b32.xlu0 %v950, 64
    %v953 = vpop.permute.xlu0 %952
    %v955 = vsel %vm139, %v953, 0
    %957 = vmatpush.bf16.msra.mxu0 0
    %958 = vmatpush.bf16.msra.mxu0 0
    %959 = vmatpush.bf16.msra.mxu0 0
    %960 = vmatpush.bf16.msra.mxu0 0
    %961 = vmatpush.bf16.msra.mxu0 0
    %962 = vmatpush.bf16.msra.mxu0 0
    %963 = vmatpush.bf16.msra.mxu0 %v136
    %964 = vmatpush.bf16.msra.mxu0 %v135
    %965 = vmatmul.bf16.gmra.mxu0 %v955
    %v966 = vpop.f32.mrf.mxu0
    %v967 = vadd.f32 0.0, %v966
    %v968 = vpop.f32.mrf.mxu0
    %v969 = vadd.f32 0.0, %v968
    %970 = vdwg.mxu0
    %v971 = vrot.slane %v205, 5
    %v972 = vrot.slane %v206, 4
    %v973 = vsel %vm222, %v972, %v971
    %v974 = vrot.slane %v207, 3
    %v975 = vsel %vm225, %v974, %v973
    %v976 = vrot.slane %v208, 2
    %v977 = vsel %vm228, %v976, %v975
    %v978 = vrot.slane %v209, 1
    %v979 = vsel %vm231, %v978, %v977
    %v980 = vsel %vm234, %v210, %v979
    %v981 = vrot.slane %v211, 7
    %v982 = vsel %vm237, %v981, %v980
    %v983 = vrot.slane %v212, 6
    %v984 = vsel %vm240, %v983, %v982
    %v985 = vrot.slane %v213, 5
    %v986 = vrot.slane %v214, 4
    %v987 = vsel %vm222, %v986, %v985
    %v988 = vrot.slane %v215, 3
    %v989 = vsel %vm225, %v988, %v987
    %v990 = vrot.slane %v216, 2
    %v991 = vsel %vm228, %v990, %v989
    %v992 = vrot.slane %v217, 1
    %v993 = vsel %vm231, %v992, %v991
    %v994 = vsel %vm234, %v218, %v993
    %v995 = vrot.slane %v219, 7
    %v996 = vsel %vm237, %v995, %v994
    %v997 = vrot.slane %v220, 6
    %v998 = vsel %vm240, %v997, %v996
    %v999 = vpack.c.b16 %v998, %v984
    %v1001 = vsel %vm281, %v999, 0
    %1003 = vmatpush.bf16.msra.mxu0 0
    %1004 = vmatpush.bf16.msra.mxu0 0
    %1005 = vmatpush.bf16.msra.mxu0 0
    %1006 = vmatpush.bf16.msra.mxu0 0
    %1007 = vmatpush.bf16.msra.mxu0 %v276
    %1008 = vmatpush.bf16.msra.mxu0 %v275
    %1009 = vmatpush.bf16.msra.mxu0 %v274
    %1010 = vmatpush.bf16.msra.mxu0 %v273
    %1011 = vmatmul.bf16.gmra.mxu0 %v1001
    %v1012 = vpop.f32.mrf.mxu0
    %v1013 = vadd.f32 %v967, %v1012
    %v1014 = vpop.f32.mrf.mxu0
    %v1015 = vadd.f32 %v969, %v1014
    %1016 = vdwg.mxu0
    %v1017 = vadd.f32 %v1013, %v300
    %v1018 = vadd.f32 %v1015, %v300
    %v1019 = vxor.u32 %v1017, 2147483648
    %v1020 = vxor.u32 %v1018, 2147483648
    %v1021 = vmul.f32 %v1019, 1.442695
    %v1022 = vpow.pop %v1021
    %v1023 = vmul.f32 %v1020, 1.442695
    %v1024 = vpow.pop %v1023
    %v1025 = vadd.f32 %v1022, 1.0
    %v1026 = vadd.f32 %v1024, 1.0
    %v1027 = vrcp.pop %v1025
    %v1028 = vmul.f32 %v1025, %v1027
    %v1029 = vsub.f32 1.0, %v1028
    %v1030 = vmul.f32 %v1027, %v1029
    %v1031 = vadd.f32 %v1027, %v1030
    %vm1032 = vweird.f32 %v1025
    %vm1033 = vweird.f32 %v1027
    %vm1034 = vmor %vm1032, %vm1033
    %v1035 = vsel %vm1034, %v1027, %v1031
    %v1036 = vand.u32 2147483647, %v1025
    %vm1037 = vcmp.eq.f32.partialorder %v1036, 8.507059e+37
    %v1038 = vand.u32 %v1025, 2147483648
    %v1039 = vor.u32 1.1754944e-38, %v1038
    %v1040 = vsel %vm1037, %v1039, %v1035
    %v1041 = vmul.f32 1.0, %v1040
    %v1042 = vrcp.pop %v1026
    %v1043 = vmul.f32 %v1026, %v1042
    %v1044 = vsub.f32 1.0, %v1043
    %v1045 = vmul.f32 %v1042, %v1044
    %v1046 = vadd.f32 %v1042, %v1045
    %vm1047 = vweird.f32 %v1026
    %vm1048 = vweird.f32 %v1042
    %vm1049 = vmor %vm1047, %vm1048
    %v1050 = vsel %vm1049, %v1042, %v1046
    %v1051 = vand.u32 2147483647, %v1026
    %vm1052 = vcmp.eq.f32.partialorder %v1051, 8.507059e+37
    %v1053 = vand.u32 %v1026, 2147483648
    %v1054 = vor.u32 1.1754944e-38, %v1053
    %v1055 = vsel %vm1052, %v1054, %v1050
    %v1056 = vmul.f32 1.0, %v1055
    %v1057 = vtanh.pop %v1017
    %v1058 = vtanh.pop %v1018
    %v1059 = vmul.f32 %v1041, %v936
    %v1060 = vmul.f32 %v1056, %v937
    %1063 = vrot.lane.b32.xlu0 %v1057, 32
    %v1064 = vpop.permute.xlu0 %1063
    %1065 = vrot.lane.b32.xlu0 %v1058, 32
    %v1066 = vpop.permute.xlu0 %1065
    %v1069 = vmul.f32 %v1041, %v1064
    %v1070 = vmul.f32 %v1056, %v1066
    %1073 = vrot.lane.b32.xlu0 %v1069, 32
    %v1074 = vpop.permute.xlu0 %1073
    %1075 = vrot.lane.b32.xlu0 %v1070, 32
    %v1076 = vpop.permute.xlu0 %1075
    %v1079 = vadd.f32 %v1059, %v1074
    %v1080 = vadd.f32 %v1060, %v1076
    %v1081 = vtanh.pop %v1079
    %v1082 = vtanh.pop %v1080
    %1085 = vrot.lane.b32.xlu0 %v1081, 32
    %v1086 = vpop.permute.xlu0 %1085
    %1087 = vrot.lane.b32.xlu0 %v1082, 32
    %v1088 = vpop.permute.xlu0 %1087
    %v1091 = vmul.f32 %v1041, %v1086
    %v1092 = vmul.f32 %v1056, %v1088
    %v1093 = vpack.c.bf16 %v1092, %v1091
    %1095 = vrot.lane.b32.xlu0 %v1093, 64
    %v1096 = vpop.permute.xlu0 %1095
    %v1098 = vsel %vm139, %v1096, 0
    %1100 = vmatpush.bf16.msra.mxu0 0
    %1101 = vmatpush.bf16.msra.mxu0 0
    %1102 = vmatpush.bf16.msra.mxu0 0
    %1103 = vmatpush.bf16.msra.mxu0 0
    %1104 = vmatpush.bf16.msra.mxu0 0
    %1105 = vmatpush.bf16.msra.mxu0 0
    %1106 = vmatpush.bf16.msra.mxu0 %v136
    %1107 = vmatpush.bf16.msra.mxu0 %v135
    %1108 = vmatmul.bf16.gmra.mxu0 %v1098
    %v1109 = vpop.f32.mrf.mxu0
    %v1110 = vadd.f32 0.0, %v1109
    %v1111 = vpop.f32.mrf.mxu0
    %v1112 = vadd.f32 0.0, %v1111
    %1113 = vdwg.mxu0
    %v1114 = vrot.slane %v205, 6
    %v1115 = vrot.slane %v206, 5
    %v1116 = vsel %vm222, %v1115, %v1114
    %v1117 = vrot.slane %v207, 4
    %v1118 = vsel %vm225, %v1117, %v1116
    %v1119 = vrot.slane %v208, 3
    %v1120 = vsel %vm228, %v1119, %v1118
    %v1121 = vrot.slane %v209, 2
    %v1122 = vsel %vm231, %v1121, %v1120
    %v1123 = vrot.slane %v210, 1
    %v1124 = vsel %vm234, %v1123, %v1122
    %v1125 = vsel %vm237, %v211, %v1124
    %v1126 = vrot.slane %v212, 7
    %v1127 = vsel %vm240, %v1126, %v1125
    %v1128 = vrot.slane %v213, 6
    %v1129 = vrot.slane %v214, 5
    %v1130 = vsel %vm222, %v1129, %v1128
    %v1131 = vrot.slane %v215, 4
    %v1132 = vsel %vm225, %v1131, %v1130
    %v1133 = vrot.slane %v216, 3
    %v1134 = vsel %vm228, %v1133, %v1132
    %v1135 = vrot.slane %v217, 2
    %v1136 = vsel %vm231, %v1135, %v1134
    %v1137 = vrot.slane %v218, 1
    %v1138 = vsel %vm234, %v1137, %v1136
    %v1139 = vsel %vm237, %v219, %v1138
    %v1140 = vrot.slane %v220, 7
    %v1141 = vsel %vm240, %v1140, %v1139
    %v1142 = vpack.c.b16 %v1141, %v1127
    %v1144 = vsel %vm281, %v1142, 0
    %1146 = vmatpush.bf16.msra.mxu0 0
    %1147 = vmatpush.bf16.msra.mxu0 0
    %1148 = vmatpush.bf16.msra.mxu0 0
    %1149 = vmatpush.bf16.msra.mxu0 0
    %1150 = vmatpush.bf16.msra.mxu0 %v276
    %1151 = vmatpush.bf16.msra.mxu0 %v275
    %1152 = vmatpush.bf16.msra.mxu0 %v274
    %1153 = vmatpush.bf16.msra.mxu0 %v273
    %1154 = vmatmul.bf16.gmra.mxu0 %v1144
    %v1155 = vpop.f32.mrf.mxu0
    %v1156 = vadd.f32 %v1110, %v1155
    %v1157 = vpop.f32.mrf.mxu0
    %v1158 = vadd.f32 %v1112, %v1157
    %1159 = vdwg.mxu0
    %v1160 = vadd.f32 %v1156, %v300
    %v1161 = vadd.f32 %v1158, %v300
    %v1162 = vxor.u32 %v1160, 2147483648
    %v1163 = vxor.u32 %v1161, 2147483648
    %v1164 = vmul.f32 %v1162, 1.442695
    %v1165 = vpow.pop %v1164
    %v1166 = vmul.f32 %v1163, 1.442695
    %v1167 = vpow.pop %v1166
    %v1168 = vadd.f32 %v1165, 1.0
    %v1169 = vadd.f32 %v1167, 1.0
    %v1170 = vrcp.pop %v1168
    %v1171 = vmul.f32 %v1168, %v1170
    %v1172 = vsub.f32 1.0, %v1171
    %v1173 = vmul.f32 %v1170, %v1172
    %v1174 = vadd.f32 %v1170, %v1173
    %vm1175 = vweird.f32 %v1168
    %vm1176 = vweird.f32 %v1170
    %vm1177 = vmor %vm1175, %vm1176
    %v1178 = vsel %vm1177, %v1170, %v1174
    %v1179 = vand.u32 2147483647, %v1168
    %vm1180 = vcmp.eq.f32.partialorder %v1179, 8.507059e+37
    %v1181 = vand.u32 %v1168, 2147483648
    %v1182 = vor.u32 1.1754944e-38, %v1181
    %v1183 = vsel %vm1180, %v1182, %v1178
    %v1184 = vmul.f32 1.0, %v1183
    %v1185 = vrcp.pop %v1169
    %v1186 = vmul.f32 %v1169, %v1185
    %v1187 = vsub.f32 1.0, %v1186
    %v1188 = vmul.f32 %v1185, %v1187
    %v1189 = vadd.f32 %v1185, %v1188
    %vm1190 = vweird.f32 %v1169
    %vm1191 = vweird.f32 %v1185
    %vm1192 = vmor %vm1190, %vm1191
    %v1193 = vsel %vm1192, %v1185, %v1189
    %v1194 = vand.u32 2147483647, %v1169
    %vm1195 = vcmp.eq.f32.partialorder %v1194, 8.507059e+37
    %v1196 = vand.u32 %v1169, 2147483648
    %v1197 = vor.u32 1.1754944e-38, %v1196
    %v1198 = vsel %vm1195, %v1197, %v1193
    %v1199 = vmul.f32 1.0, %v1198
    %v1200 = vtanh.pop %v1160
    %v1201 = vtanh.pop %v1161
    %v1202 = vmul.f32 %v1184, %v1079
    %v1203 = vmul.f32 %v1199, %v1080
    %1206 = vrot.lane.b32.xlu0 %v1200, 32
    %v1207 = vpop.permute.xlu0 %1206
    %1208 = vrot.lane.b32.xlu0 %v1201, 32
    %v1209 = vpop.permute.xlu0 %1208
    %v1212 = vmul.f32 %v1184, %v1207
    %v1213 = vmul.f32 %v1199, %v1209
    %1216 = vrot.lane.b32.xlu0 %v1212, 32
    %v1217 = vpop.permute.xlu0 %1216
    %1218 = vrot.lane.b32.xlu0 %v1213, 32
    %v1219 = vpop.permute.xlu0 %1218
    %v1222 = vadd.f32 %v1202, %v1217
    %v1223 = vadd.f32 %v1203, %v1219
    %v1224 = vtanh.pop %v1222
    %v1225 = vtanh.pop %v1223
    %1228 = vrot.lane.b32.xlu0 %v1224, 32
    %v1229 = vpop.permute.xlu0 %1228
    %1230 = vrot.lane.b32.xlu0 %v1225, 32
    %v1231 = vpop.permute.xlu0 %1230
    %v1234 = vmul.f32 %v1184, %v1229
    %v1235 = vmul.f32 %v1199, %v1231
    %v1236 = vpack.c.bf16 %v1235, %v1234
    %1238 = vrot.lane.b32.xlu0 %v1236, 64
    %v1239 = vpop.permute.xlu0 %1238
    %v1241 = vsel %vm139, %v1239, 0
    %1243 = vmatpush.bf16.msra.mxu0 0
    %1244 = vmatpush.bf16.msra.mxu0 0
    %1245 = vmatpush.bf16.msra.mxu0 0
    %1246 = vmatpush.bf16.msra.mxu0 0
    %1247 = vmatpush.bf16.msra.mxu0 0
    %1248 = vmatpush.bf16.msra.mxu0 0
    %1249 = vmatpush.bf16.msra.mxu0 %v136
    %1250 = vmatpush.bf16.msra.mxu0 %v135
    %1251 = vmatmul.bf16.gmra.mxu0 %v1241
    %v1252 = vpop.f32.mrf.mxu0
    %v1253 = vadd.f32 0.0, %v1252
    %v1254 = vpop.f32.mrf.mxu0
    %v1255 = vadd.f32 0.0, %v1254
    %1256 = vdwg.mxu0
    %v1257 = vrot.slane %v205, 7
    %v1258 = vrot.slane %v206, 6
    %v1259 = vsel %vm222, %v1258, %v1257
    %v1260 = vrot.slane %v207, 5
    %v1261 = vsel %vm225, %v1260, %v1259
    %v1262 = vrot.slane %v208, 4
    %v1263 = vsel %vm228, %v1262, %v1261
    %v1264 = vrot.slane %v209, 3
    %v1265 = vsel %vm231, %v1264, %v1263
    %v1266 = vrot.slane %v210, 2
    %v1267 = vsel %vm234, %v1266, %v1265
    %v1268 = vrot.slane %v211, 1
    %v1269 = vsel %vm237, %v1268, %v1267
    %v1270 = vsel %vm240, %v212, %v1269
    %v1271 = vrot.slane %v213, 7
    %v1272 = vrot.slane %v214, 6
    %v1273 = vsel %vm222, %v1272, %v1271
    %v1274 = vrot.slane %v215, 5
    %v1275 = vsel %vm225, %v1274, %v1273
    %v1276 = vrot.slane %v216, 4
    %v1277 = vsel %vm228, %v1276, %v1275
    %v1278 = vrot.slane %v217, 3
    %v1279 = vsel %vm231, %v1278, %v1277
    %v1280 = vrot.slane %v218, 2
    %v1281 = vsel %vm234, %v1280, %v1279
    %v1282 = vrot.slane %v219, 1
    %v1283 = vsel %vm237, %v1282, %v1281
    %v1284 = vsel %vm240, %v220, %v1283
    %v1285 = vpack.c.b16 %v1284, %v1270
    %v1287 = vsel %vm281, %v1285, 0
    %1289 = vmatpush.bf16.msra.mxu0 0
    %1290 = vmatpush.bf16.msra.mxu0 0
    %1291 = vmatpush.bf16.msra.mxu0 0
    %1292 = vmatpush.bf16.msra.mxu0 0
    %1293 = vmatpush.bf16.msra.mxu0 %v276
    %1294 = vmatpush.bf16.msra.mxu0 %v275
    %1295 = vmatpush.bf16.msra.mxu0 %v274
    %1296 = vmatpush.bf16.msra.mxu0 %v273
    %1297 = vmatmul.bf16.gmra.mxu0 %v1287
    %v1298 = vpop.f32.mrf.mxu0
    %v1299 = vadd.f32 %v1253, %v1298
    %v1300 = vpop.f32.mrf.mxu0
    %v1301 = vadd.f32 %v1255, %v1300
    %1302 = vdwg.mxu0
    %v1303 = vadd.f32 %v1299, %v300
    %v1304 = vadd.f32 %v1301, %v300
    %v1305 = vxor.u32 %v1303, 2147483648
    %v1306 = vxor.u32 %v1304, 2147483648
    %v1307 = vmul.f32 %v1305, 1.442695
    %v1308 = vpow.pop %v1307
    %v1309 = vmul.f32 %v1306, 1.442695
    %v1310 = vpow.pop %v1309
    %v1311 = vadd.f32 %v1308, 1.0
    %v1312 = vadd.f32 %v1310, 1.0
    %v1313 = vrcp.pop %v1311
    %v1314 = vmul.f32 %v1311, %v1313
    %v1315 = vsub.f32 1.0, %v1314
    %v1316 = vmul.f32 %v1313, %v1315
    %v1317 = vadd.f32 %v1313, %v1316
    %vm1318 = vweird.f32 %v1311
    %vm1319 = vweird.f32 %v1313
    %vm1320 = vmor %vm1318, %vm1319
    %v1321 = vsel %vm1320, %v1313, %v1317
    %v1322 = vand.u32 2147483647, %v1311
    %vm1323 = vcmp.eq.f32.partialorder %v1322, 8.507059e+37
    %v1324 = vand.u32 %v1311, 2147483648
    %v1325 = vor.u32 1.1754944e-38, %v1324
    %v1326 = vsel %vm1323, %v1325, %v1321
    %v1327 = vmul.f32 1.0, %v1326
    %v1328 = vrcp.pop %v1312
    %v1329 = vmul.f32 %v1312, %v1328
    %v1330 = vsub.f32 1.0, %v1329
    %v1331 = vmul.f32 %v1328, %v1330
    %v1332 = vadd.f32 %v1328, %v1331
    %vm1333 = vweird.f32 %v1312
    %vm1334 = vweird.f32 %v1328
    %vm1335 = vmor %vm1333, %vm1334
    %v1336 = vsel %vm1335, %v1328, %v1332
    %v1337 = vand.u32 2147483647, %v1312
    %vm1338 = vcmp.eq.f32.partialorder %v1337, 8.507059e+37
    %v1339 = vand.u32 %v1312, 2147483648
    %v1340 = vor.u32 1.1754944e-38, %v1339
    %v1341 = vsel %vm1338, %v1340, %v1336
    %v1342 = vmul.f32 1.0, %v1341
    %v1343 = vtanh.pop %v1303
    %v1344 = vtanh.pop %v1304
    %v1345 = vmul.f32 %v1327, %v1222
    %v1346 = vmul.f32 %v1342, %v1223
    %1349 = vrot.lane.b32.xlu0 %v1343, 32
    %v1350 = vpop.permute.xlu0 %1349
    %1351 = vrot.lane.b32.xlu0 %v1344, 32
    %v1352 = vpop.permute.xlu0 %1351
    %v1355 = vmul.f32 %v1327, %v1350
    %v1356 = vmul.f32 %v1342, %v1352
    %1359 = vrot.lane.b32.xlu0 %v1355, 32
    %v1360 = vpop.permute.xlu0 %1359
    %1361 = vrot.lane.b32.xlu0 %v1356, 32
    %v1362 = vpop.permute.xlu0 %1361
    %v1365 = vadd.f32 %v1345, %v1360
    %v1366 = vadd.f32 %v1346, %v1362
    %v1367 = vtanh.pop %v1365
    %v1368 = vtanh.pop %v1366
    %1371 = vrot.lane.b32.xlu0 %v1367, 32
    %v1372 = vpop.permute.xlu0 %1371
    %1373 = vrot.lane.b32.xlu0 %v1368, 32
    %v1374 = vpop.permute.xlu0 %1373
    %v1377 = vmul.f32 %v1327, %v1372
    %v1378 = vmul.f32 %v1342, %v1374
    %v1379 = vpack.c.bf16 %v1378, %v1377
    %1381 = vrot.lane.b32.xlu0 %v1379, 64
    %v1382 = vpop.permute.xlu0 %1381
    %v1384 = vsel %vm139, %v1382, 0
    %1386 = vmatpush.bf16.msra.mxu0 0
    %1387 = vmatpush.bf16.msra.mxu0 0
    %1388 = vmatpush.bf16.msra.mxu0 0
    %1389 = vmatpush.bf16.msra.mxu0 0
    %1390 = vmatpush.bf16.msra.mxu0 0
    %1391 = vmatpush.bf16.msra.mxu0 0
    %1392 = vmatpush.bf16.msra.mxu0 %v136
    %1393 = vmatpush.bf16.msra.mxu0 %v135
    %1394 = vmatmul.bf16.gmra.mxu0 %v1384
    %v1395 = vpop.f32.mrf.mxu0
    %v1396 = vadd.f32 0.0, %v1395
    %v1397 = vpop.f32.mrf.mxu0
    %v1398 = vadd.f32 0.0, %v1397
    %1399 = vdwg.mxu0
    %v1416 = vunpack.c.l.b16 %v67
    %v1417 = vunpack.c.l.b16 %v70
    %v1418 = vunpack.c.l.b16 %v73
    %v1419 = vunpack.c.l.b16 %v76
    %v1420 = vunpack.c.l.b16 %v79
    %v1421 = vunpack.c.l.b16 %v82
    %v1422 = vunpack.c.l.b16 %v85
    %v1423 = vunpack.c.l.b16 %v88
    %v1424 = vunpack.c.l.b16 %v91
    %v1425 = vunpack.c.l.b16 %v94
    %v1426 = vunpack.c.l.b16 %v97
    %v1427 = vunpack.c.l.b16 %v100
    %v1428 = vunpack.c.l.b16 %v103
    %v1429 = vunpack.c.l.b16 %v106
    %v1430 = vunpack.c.l.b16 %v109
    %v1431 = vunpack.c.l.b16 %v112
    %v1432 = vpack.c.b16 %v1416, %v1416
    %v1433 = vpack.c.b16 %v1417, %v1417
    %v1434 = vpack.c.b16 %v1418, %v1418
    %v1435 = vpack.c.b16 %v1419, %v1419
    %v1436 = vpack.c.b16 %v1420, %v1420
    %v1437 = vpack.c.b16 %v1421, %v1421
    %v1438 = vpack.c.b16 %v1422, %v1422
    %v1439 = vpack.c.b16 %v1423, %v1423
    %v1440 = vpack.c.b16 %v1424, %v1424
    %v1441 = vpack.c.b16 %v1425, %v1425
    %v1442 = vpack.c.b16 %v1426, %v1426
    %v1443 = vpack.c.b16 %v1427, %v1427
    %v1444 = vpack.c.b16 %v1428, %v1428
    %v1445 = vpack.c.b16 %v1429, %v1429
    %v1446 = vpack.c.b16 %v1430, %v1430
    %v1447 = vpack.c.b16 %v1431, %v1431
    %v1448 = vunpack.c.l.b16 %v1432
    %v1449 = vunpack.c.l.b16 %v1433
    %v1450 = vunpack.c.l.b16 %v1434
    %v1451 = vunpack.c.l.b16 %v1435
    %v1452 = vunpack.c.l.b16 %v1436
    %v1453 = vunpack.c.l.b16 %v1437
    %v1454 = vunpack.c.l.b16 %v1438
    %v1455 = vunpack.c.l.b16 %v1439
    %v1456 = vunpack.c.l.b16 %v1440
    %v1457 = vunpack.c.l.b16 %v1441
    %v1458 = vunpack.c.l.b16 %v1442
    %v1459 = vunpack.c.l.b16 %v1443
    %v1460 = vunpack.c.l.b16 %v1444
    %v1461 = vunpack.c.l.b16 %v1445
    %v1462 = vunpack.c.l.b16 %v1446
    %v1463 = vunpack.c.l.b16 %v1447
    %v1464 = vrot.slane %v1449, 7
    %v1465 = vsel %vm222, %v1464, %v1448
    %v1466 = vrot.slane %v1450, 6
    %v1467 = vsel %vm225, %v1466, %v1465
    %v1468 = vrot.slane %v1451, 5
    %v1469 = vsel %vm228, %v1468, %v1467
    %v1470 = vrot.slane %v1452, 4
    %v1471 = vsel %vm231, %v1470, %v1469
    %v1472 = vrot.slane %v1453, 3
    %v1473 = vsel %vm234, %v1472, %v1471
    %v1474 = vrot.slane %v1454, 2
    %v1475 = vsel %vm237, %v1474, %v1473
    %v1476 = vrot.slane %v1455, 1
    %v1477 = vsel %vm240, %v1476, %v1475
    %v1478 = vrot.slane %v1457, 7
    %v1479 = vsel %vm222, %v1478, %v1456
    %v1480 = vrot.slane %v1458, 6
    %v1481 = vsel %vm225, %v1480, %v1479
    %v1482 = vrot.slane %v1459, 5
    %v1483 = vsel %vm228, %v1482, %v1481
    %v1484 = vrot.slane %v1460, 4
    %v1485 = vsel %vm231, %v1484, %v1483
    %v1486 = vrot.slane %v1461, 3
    %v1487 = vsel %vm234, %v1486, %v1485
    %v1488 = vrot.slane %v1462, 2
    %v1489 = vsel %vm237, %v1488, %v1487
    %v1490 = vrot.slane %v1463, 1
    %v1491 = vsel %vm240, %v1490, %v1489
    %v1492 = vpack.c.b16 %v1491, %v1477
    %v1494 = vsel %vm281, %v1492, 0
    %1496 = vmatpush.bf16.msra.mxu0 0
    %1497 = vmatpush.bf16.msra.mxu0 0
    %1498 = vmatpush.bf16.msra.mxu0 0
    %1499 = vmatpush.bf16.msra.mxu0 0
    %1500 = vmatpush.bf16.msra.mxu0 %v276
    %1501 = vmatpush.bf16.msra.mxu0 %v275
    %1502 = vmatpush.bf16.msra.mxu0 %v274
    %1503 = vmatpush.bf16.msra.mxu0 %v273
    %1504 = vmatmul.bf16.gmra.mxu0 %v1494
    %v1505 = vpop.f32.mrf.mxu0
    %v1506 = vadd.f32 %v1396, %v1505
    %v1507 = vpop.f32.mrf.mxu0
    %v1508 = vadd.f32 %v1398, %v1507
    %1509 = vdwg.mxu0
    %v1510 = vadd.f32 %v1506, %v300
    %v1511 = vadd.f32 %v1508, %v300
    %v1512 = vxor.u32 %v1510, 2147483648
    %v1513 = vxor.u32 %v1511, 2147483648
    %v1514 = vmul.f32 %v1512, 1.442695
    %v1515 = vpow.pop %v1514
    %v1516 = vmul.f32 %v1513, 1.442695
    %v1517 = vpow.pop %v1516
    %v1518 = vadd.f32 %v1515, 1.0
    %v1519 = vadd.f32 %v1517, 1.0
    %v1520 = vrcp.pop %v1518
    %v1521 = vmul.f32 %v1518, %v1520
    %v1522 = vsub.f32 1.0, %v1521
    %v1523 = vmul.f32 %v1520, %v1522
    %v1524 = vadd.f32 %v1520, %v1523
    %vm1525 = vweird.f32 %v1518
    %vm1526 = vweird.f32 %v1520
    %vm1527 = vmor %vm1525, %vm1526
    %v1528 = vsel %vm1527, %v1520, %v1524
    %v1529 = vand.u32 2147483647, %v1518
    %vm1530 = vcmp.eq.f32.partialorder %v1529, 8.507059e+37
    %v1531 = vand.u32 %v1518, 2147483648
    %v1532 = vor.u32 1.1754944e-38, %v1531
    %v1533 = vsel %vm1530, %v1532, %v1528
    %v1534 = vmul.f32 1.0, %v1533
    %v1535 = vrcp.pop %v1519
    %v1536 = vmul.f32 %v1519, %v1535
    %v1537 = vsub.f32 1.0, %v1536
    %v1538 = vmul.f32 %v1535, %v1537
    %v1539 = vadd.f32 %v1535, %v1538
    %vm1540 = vweird.f32 %v1519
    %vm1541 = vweird.f32 %v1535
    %vm1542 = vmor %vm1540, %vm1541
    %v1543 = vsel %vm1542, %v1535, %v1539
    %v1544 = vand.u32 2147483647, %v1519
    %vm1545 = vcmp.eq.f32.partialorder %v1544, 8.507059e+37
    %v1546 = vand.u32 %v1519, 2147483648
    %v1547 = vor.u32 1.1754944e-38, %v1546
    %v1548 = vsel %vm1545, %v1547, %v1543
    %v1549 = vmul.f32 1.0, %v1548
    %v1550 = vtanh.pop %v1510
    %v1551 = vtanh.pop %v1511
    %v1552 = vmul.f32 %v1534, %v1365
    %v1553 = vmul.f32 %v1549, %v1366
    %1556 = vrot.lane.b32.xlu0 %v1550, 32
    %v1557 = vpop.permute.xlu0 %1556
    %1558 = vrot.lane.b32.xlu0 %v1551, 32
    %v1559 = vpop.permute.xlu0 %1558
    %v1562 = vmul.f32 %v1534, %v1557
    %v1563 = vmul.f32 %v1549, %v1559
    %1566 = vrot.lane.b32.xlu0 %v1562, 32
    %v1567 = vpop.permute.xlu0 %1566
    %1568 = vrot.lane.b32.xlu0 %v1563, 32
    %v1569 = vpop.permute.xlu0 %1568
    %v1572 = vadd.f32 %v1552, %v1567
    %v1573 = vadd.f32 %v1553, %v1569
    %v1574 = vtanh.pop %v1572
    %v1575 = vtanh.pop %v1573
    %1578 = vrot.lane.b32.xlu0 %v1574, 32
    %v1579 = vpop.permute.xlu0 %1578
    %1580 = vrot.lane.b32.xlu0 %v1575, 32
    %v1581 = vpop.permute.xlu0 %1580
    %v1584 = vmul.f32 %v1534, %v1579
    %v1585 = vmul.f32 %v1549, %v1581
    %v1586 = vpack.c.bf16 %v1585, %v1584
    %1588 = vrot.lane.b32.xlu0 %v1586, 64
    %v1589 = vpop.permute.xlu0 %1588
    %v1591 = vsel %vm139, %v1589, 0
    %1593 = vmatpush.bf16.msra.mxu0 0
    %1594 = vmatpush.bf16.msra.mxu0 0
    %1595 = vmatpush.bf16.msra.mxu0 0
    %1596 = vmatpush.bf16.msra.mxu0 0
    %1597 = vmatpush.bf16.msra.mxu0 0
    %1598 = vmatpush.bf16.msra.mxu0 0
    %1599 = vmatpush.bf16.msra.mxu0 %v136
    %1600 = vmatpush.bf16.msra.mxu0 %v135
    %1601 = vmatmul.bf16.gmra.mxu0 %v1591
    %v1602 = vpop.f32.mrf.mxu0
    %v1603 = vadd.f32 0.0, %v1602
    %v1604 = vpop.f32.mrf.mxu0
    %v1605 = vadd.f32 0.0, %v1604
    %1606 = vdwg.mxu0
    %v1607 = vrot.slane %v1448, 1
    %v1608 = vsel %vm222, %v1449, %v1607
    %v1609 = vrot.slane %v1450, 7
    %v1610 = vsel %vm225, %v1609, %v1608
    %v1611 = vrot.slane %v1451, 6
    %v1612 = vsel %vm228, %v1611, %v1610
    %v1613 = vrot.slane %v1452, 5
    %v1614 = vsel %vm231, %v1613, %v1612
    %v1615 = vrot.slane %v1453, 4
    %v1616 = vsel %vm234, %v1615, %v1614
    %v1617 = vrot.slane %v1454, 3
    %v1618 = vsel %vm237, %v1617, %v1616
    %v1619 = vrot.slane %v1455, 2
    %v1620 = vsel %vm240, %v1619, %v1618
    %v1621 = vrot.slane %v1456, 1
    %v1622 = vsel %vm222, %v1457, %v1621
    %v1623 = vrot.slane %v1458, 7
    %v1624 = vsel %vm225, %v1623, %v1622
    %v1625 = vrot.slane %v1459, 6
    %v1626 = vsel %vm228, %v1625, %v1624
    %v1627 = vrot.slane %v1460, 5
    %v1628 = vsel %vm231, %v1627, %v1626
    %v1629 = vrot.slane %v1461, 4
    %v1630 = vsel %vm234, %v1629, %v1628
    %v1631 = vrot.slane %v1462, 3
    %v1632 = vsel %vm237, %v1631, %v1630
    %v1633 = vrot.slane %v1463, 2
    %v1634 = vsel %vm240, %v1633, %v1632
    %v1635 = vpack.c.b16 %v1634, %v1620
    %v1637 = vsel %vm281, %v1635, 0
    %1639 = vmatpush.bf16.msra.mxu0 0
    %1640 = vmatpush.bf16.msra.mxu0 0
    %1641 = vmatpush.bf16.msra.mxu0 0
    %1642 = vmatpush.bf16.msra.mxu0 0
    %1643 = vmatpush.bf16.msra.mxu0 %v276
    %1644 = vmatpush.bf16.msra.mxu0 %v275
    %1645 = vmatpush.bf16.msra.mxu0 %v274
    %1646 = vmatpush.bf16.msra.mxu0 %v273
    %1647 = vmatmul.bf16.gmra.mxu0 %v1637
    %v1648 = vpop.f32.mrf.mxu0
    %v1649 = vadd.f32 %v1603, %v1648
    %v1650 = vpop.f32.mrf.mxu0
    %v1651 = vadd.f32 %v1605, %v1650
    %1652 = vdwg.mxu0
    %v1653 = vadd.f32 %v1649, %v300
    %v1654 = vadd.f32 %v1651, %v300
    %v1655 = vxor.u32 %v1653, 2147483648
    %v1656 = vxor.u32 %v1654, 2147483648
    %v1657 = vmul.f32 %v1655, 1.442695
    %v1658 = vpow.pop %v1657
    %v1659 = vmul.f32 %v1656, 1.442695
    %v1660 = vpow.pop %v1659
    %v1661 = vadd.f32 %v1658, 1.0
    %v1662 = vadd.f32 %v1660, 1.0
    %v1663 = vrcp.pop %v1661
    %v1664 = vmul.f32 %v1661, %v1663
    %v1665 = vsub.f32 1.0, %v1664
    %v1666 = vmul.f32 %v1663, %v1665
    %v1667 = vadd.f32 %v1663, %v1666
    %vm1668 = vweird.f32 %v1661
    %vm1669 = vweird.f32 %v1663
    %vm1670 = vmor %vm1668, %vm1669
    %v1671 = vsel %vm1670, %v1663, %v1667
    %v1672 = vand.u32 2147483647, %v1661
    %vm1673 = vcmp.eq.f32.partialorder %v1672, 8.507059e+37
    %v1674 = vand.u32 %v1661, 2147483648
    %v1675 = vor.u32 1.1754944e-38, %v1674
    %v1676 = vsel %vm1673, %v1675, %v1671
    %v1677 = vmul.f32 1.0, %v1676
    %v1678 = vrcp.pop %v1662
    %v1679 = vmul.f32 %v1662, %v1678
    %v1680 = vsub.f32 1.0, %v1679
    %v1681 = vmul.f32 %v1678, %v1680
    %v1682 = vadd.f32 %v1678, %v1681
    %vm1683 = vweird.f32 %v1662
    %vm1684 = vweird.f32 %v1678
    %vm1685 = vmor %vm1683, %vm1684
    %v1686 = vsel %vm1685, %v1678, %v1682
    %v1687 = vand.u32 2147483647, %v1662
    %vm1688 = vcmp.eq.f32.partialorder %v1687, 8.507059e+37
    %v1689 = vand.u32 %v1662, 2147483648
    %v1690 = vor.u32 1.1754944e-38, %v1689
    %v1691 = vsel %vm1688, %v1690, %v1686
    %v1692 = vmul.f32 1.0, %v1691
    %v1693 = vtanh.pop %v1653
    %v1694 = vtanh.pop %v1654
    %v1695 = vmul.f32 %v1677, %v1572
    %v1696 = vmul.f32 %v1692, %v1573
    %1699 = vrot.lane.b32.xlu0 %v1693, 32
    %v1700 = vpop.permute.xlu0 %1699
    %1701 = vrot.lane.b32.xlu0 %v1694, 32
    %v1702 = vpop.permute.xlu0 %1701
    %v1705 = vmul.f32 %v1677, %v1700
    %v1706 = vmul.f32 %v1692, %v1702
    %1709 = vrot.lane.b32.xlu0 %v1705, 32
    %v1710 = vpop.permute.xlu0 %1709
    %1711 = vrot.lane.b32.xlu0 %v1706, 32
    %v1712 = vpop.permute.xlu0 %1711
    %v1715 = vadd.f32 %v1695, %v1710
    %v1716 = vadd.f32 %v1696, %v1712
    %v1717 = vtanh.pop %v1715
    %v1718 = vtanh.pop %v1716
    %1721 = vrot.lane.b32.xlu0 %v1717, 32
    %v1722 = vpop.permute.xlu0 %1721
    %1723 = vrot.lane.b32.xlu0 %v1718, 32
    %v1724 = vpop.permute.xlu0 %1723
    %v1727 = vmul.f32 %v1677, %v1722
    %v1728 = vmul.f32 %v1692, %v1724
    %v1729 = vpack.c.bf16 %v1728, %v1727
    %1731 = vrot.lane.b32.xlu0 %v1729, 64
    %v1732 = vpop.permute.xlu0 %1731
    %v1734 = vsel %vm139, %v1732, 0
    %1736 = vmatpush.bf16.msra.mxu0 0
    %1737 = vmatpush.bf16.msra.mxu0 0
    %1738 = vmatpush.bf16.msra.mxu0 0
    %1739 = vmatpush.bf16.msra.mxu0 0
    %1740 = vmatpush.bf16.msra.mxu0 0
    %1741 = vmatpush.bf16.msra.mxu0 0
    %1742 = vmatpush.bf16.msra.mxu0 %v136
    %1743 = vmatpush.bf16.msra.mxu0 %v135
    %1744 = vmatmul.bf16.gmra.mxu0 %v1734
    %v1745 = vpop.f32.mrf.mxu0
    %v1746 = vadd.f32 0.0, %v1745
    %v1747 = vpop.f32.mrf.mxu0
    %v1748 = vadd.f32 0.0, %v1747
    %1749 = vdwg.mxu0
    %v1750 = vrot.slane %v1448, 2
    %v1751 = vrot.slane %v1449, 1
    %v1752 = vsel %vm222, %v1751, %v1750
    %v1753 = vsel %vm225, %v1450, %v1752
    %v1754 = vrot.slane %v1451, 7
    %v1755 = vsel %vm228, %v1754, %v1753
    %v1756 = vrot.slane %v1452, 6
    %v1757 = vsel %vm231, %v1756, %v1755
    %v1758 = vrot.slane %v1453, 5
    %v1759 = vsel %vm234, %v1758, %v1757
    %v1760 = vrot.slane %v1454, 4
    %v1761 = vsel %vm237, %v1760, %v1759
    %v1762 = vrot.slane %v1455, 3
    %v1763 = vsel %vm240, %v1762, %v1761
    %v1764 = vrot.slane %v1456, 2
    %v1765 = vrot.slane %v1457, 1
    %v1766 = vsel %vm222, %v1765, %v1764
    %v1767 = vsel %vm225, %v1458, %v1766
    %v1768 = vrot.slane %v1459, 7
    %v1769 = vsel %vm228, %v1768, %v1767
    %v1770 = vrot.slane %v1460, 6
    %v1771 = vsel %vm231, %v1770, %v1769
    %v1772 = vrot.slane %v1461, 5
    %v1773 = vsel %vm234, %v1772, %v1771
    %v1774 = vrot.slane %v1462, 4
    %v1775 = vsel %vm237, %v1774, %v1773
    %v1776 = vrot.slane %v1463, 3
    %v1777 = vsel %vm240, %v1776, %v1775
    %v1778 = vpack.c.b16 %v1777, %v1763
    %v1780 = vsel %vm281, %v1778, 0
    %1782 = vmatpush.bf16.msra.mxu0 0
    %1783 = vmatpush.bf16.msra.mxu0 0
    %1784 = vmatpush.bf16.msra.mxu0 0
    %1785 = vmatpush.bf16.msra.mxu0 0
    %1786 = vmatpush.bf16.msra.mxu0 %v276
    %1787 = vmatpush.bf16.msra.mxu0 %v275
    %1788 = vmatpush.bf16.msra.mxu0 %v274
    %1789 = vmatpush.bf16.msra.mxu0 %v273
    %1790 = vmatmul.bf16.gmra.mxu0 %v1780
    %v1791 = vpop.f32.mrf.mxu0
    %v1792 = vadd.f32 %v1746, %v1791
    %v1793 = vpop.f32.mrf.mxu0
    %v1794 = vadd.f32 %v1748, %v1793
    %1795 = vdwg.mxu0
    %v1796 = vadd.f32 %v1792, %v300
    %v1797 = vadd.f32 %v1794, %v300
    %v1798 = vxor.u32 %v1796, 2147483648
    %v1799 = vxor.u32 %v1797, 2147483648
    %v1800 = vmul.f32 %v1798, 1.442695
    %v1801 = vpow.pop %v1800
    %v1802 = vmul.f32 %v1799, 1.442695
    %v1803 = vpow.pop %v1802
    %v1804 = vadd.f32 %v1801, 1.0
    %v1805 = vadd.f32 %v1803, 1.0
    %v1806 = vrcp.pop %v1804
    %v1807 = vmul.f32 %v1804, %v1806
    %v1808 = vsub.f32 1.0, %v1807
    %v1809 = vmul.f32 %v1806, %v1808
    %v1810 = vadd.f32 %v1806, %v1809
    %vm1811 = vweird.f32 %v1804
    %vm1812 = vweird.f32 %v1806
    %vm1813 = vmor %vm1811, %vm1812
    %v1814 = vsel %vm1813, %v1806, %v1810
    %v1815 = vand.u32 2147483647, %v1804
    %vm1816 = vcmp.eq.f32.partialorder %v1815, 8.507059e+37
    %v1817 = vand.u32 %v1804, 2147483648
    %v1818 = vor.u32 1.1754944e-38, %v1817
    %v1819 = vsel %vm1816, %v1818, %v1814
    %v1820 = vmul.f32 1.0, %v1819
    %v1821 = vrcp.pop %v1805
    %v1822 = vmul.f32 %v1805, %v1821
    %v1823 = vsub.f32 1.0, %v1822
    %v1824 = vmul.f32 %v1821, %v1823
    %v1825 = vadd.f32 %v1821, %v1824
    %vm1826 = vweird.f32 %v1805
    %vm1827 = vweird.f32 %v1821
    %vm1828 = vmor %vm1826, %vm1827
    %v1829 = vsel %vm1828, %v1821, %v1825
    %v1830 = vand.u32 2147483647, %v1805
    %vm1831 = vcmp.eq.f32.partialorder %v1830, 8.507059e+37
    %v1832 = vand.u32 %v1805, 2147483648
    %v1833 = vor.u32 1.1754944e-38, %v1832
    %v1834 = vsel %vm1831, %v1833, %v1829
    %v1835 = vmul.f32 1.0, %v1834
    %v1836 = vtanh.pop %v1796
    %v1837 = vtanh.pop %v1797
    %v1838 = vmul.f32 %v1820, %v1715
    %v1839 = vmul.f32 %v1835, %v1716
    %1842 = vrot.lane.b32.xlu0 %v1836, 32
    %v1843 = vpop.permute.xlu0 %1842
    %1844 = vrot.lane.b32.xlu0 %v1837, 32
    %v1845 = vpop.permute.xlu0 %1844
    %v1848 = vmul.f32 %v1820, %v1843
    %v1849 = vmul.f32 %v1835, %v1845
    %1852 = vrot.lane.b32.xlu0 %v1848, 32
    %v1853 = vpop.permute.xlu0 %1852
    %1854 = vrot.lane.b32.xlu0 %v1849, 32
    %v1855 = vpop.permute.xlu0 %1854
    %v1858 = vadd.f32 %v1838, %v1853
    %v1859 = vadd.f32 %v1839, %v1855
    %v1860 = vtanh.pop %v1858
    %v1861 = vtanh.pop %v1859
    %1864 = vrot.lane.b32.xlu0 %v1860, 32
    %v1865 = vpop.permute.xlu0 %1864
    %1866 = vrot.lane.b32.xlu0 %v1861, 32
    %v1867 = vpop.permute.xlu0 %1866
    %v1870 = vmul.f32 %v1820, %v1865
    %v1871 = vmul.f32 %v1835, %v1867
    %v1872 = vpack.c.bf16 %v1871, %v1870
    %1874 = vrot.lane.b32.xlu0 %v1872, 64
    %v1875 = vpop.permute.xlu0 %1874
    %v1877 = vsel %vm139, %v1875, 0
    %1879 = vmatpush.bf16.msra.mxu0 0
    %1880 = vmatpush.bf16.msra.mxu0 0
    %1881 = vmatpush.bf16.msra.mxu0 0
    %1882 = vmatpush.bf16.msra.mxu0 0
    %1883 = vmatpush.bf16.msra.mxu0 0
    %1884 = vmatpush.bf16.msra.mxu0 0
    %1885 = vmatpush.bf16.msra.mxu0 %v136
    %1886 = vmatpush.bf16.msra.mxu0 %v135
    %1887 = vmatmul.bf16.gmra.mxu0 %v1877
    %v1888 = vpop.f32.mrf.mxu0
    %v1889 = vadd.f32 0.0, %v1888
    %v1890 = vpop.f32.mrf.mxu0
    %v1891 = vadd.f32 0.0, %v1890
    %1892 = vdwg.mxu0
    %v1893 = vrot.slane %v1448, 3
    %v1894 = vrot.slane %v1449, 2
    %v1895 = vsel %vm222, %v1894, %v1893
    %v1896 = vrot.slane %v1450, 1
    %v1897 = vsel %vm225, %v1896, %v1895
    %v1898 = vsel %vm228, %v1451, %v1897
    %v1899 = vrot.slane %v1452, 7
    %v1900 = vsel %vm231, %v1899, %v1898
    %v1901 = vrot.slane %v1453, 6
    %v1902 = vsel %vm234, %v1901, %v1900
    %v1903 = vrot.slane %v1454, 5
    %v1904 = vsel %vm237, %v1903, %v1902
    %v1905 = vrot.slane %v1455, 4
    %v1906 = vsel %vm240, %v1905, %v1904
    %v1907 = vrot.slane %v1456, 3
    %v1908 = vrot.slane %v1457, 2
    %v1909 = vsel %vm222, %v1908, %v1907
    %v1910 = vrot.slane %v1458, 1
    %v1911 = vsel %vm225, %v1910, %v1909
    %v1912 = vsel %vm228, %v1459, %v1911
    %v1913 = vrot.slane %v1460, 7
    %v1914 = vsel %vm231, %v1913, %v1912
    %v1915 = vrot.slane %v1461, 6
    %v1916 = vsel %vm234, %v1915, %v1914
    %v1917 = vrot.slane %v1462, 5
    %v1918 = vsel %vm237, %v1917, %v1916
    %v1919 = vrot.slane %v1463, 4
    %v1920 = vsel %vm240, %v1919, %v1918
    %v1921 = vpack.c.b16 %v1920, %v1906
    %v1923 = vsel %vm281, %v1921, 0
    %1925 = vmatpush.bf16.msra.mxu0 0
    %1926 = vmatpush.bf16.msra.mxu0 0
    %1927 = vmatpush.bf16.msra.mxu0 0
    %1928 = vmatpush.bf16.msra.mxu0 0
    %1929 = vmatpush.bf16.msra.mxu0 %v276
    %1930 = vmatpush.bf16.msra.mxu0 %v275
    %1931 = vmatpush.bf16.msra.mxu0 %v274
    %1932 = vmatpush.bf16.msra.mxu0 %v273
    %1933 = vmatmul.bf16.gmra.mxu0 %v1923
    %v1934 = vpop.f32.mrf.mxu0
    %v1935 = vadd.f32 %v1889, %v1934
    %v1936 = vpop.f32.mrf.mxu0
    %v1937 = vadd.f32 %v1891, %v1936
    %1938 = vdwg.mxu0
    %v1939 = vadd.f32 %v1935, %v300
    %v1940 = vadd.f32 %v1937, %v300
    %v1941 = vxor.u32 %v1939, 2147483648
    %v1942 = vxor.u32 %v1940, 2147483648
    %v1943 = vmul.f32 %v1941, 1.442695
    %v1944 = vpow.pop %v1943
    %v1945 = vmul.f32 %v1942, 1.442695
    %v1946 = vpow.pop %v1945
    %v1947 = vadd.f32 %v1944, 1.0
    %v1948 = vadd.f32 %v1946, 1.0
    %v1949 = vrcp.pop %v1947
    %v1950 = vmul.f32 %v1947, %v1949
    %v1951 = vsub.f32 1.0, %v1950
    %v1952 = vmul.f32 %v1949, %v1951
    %v1953 = vadd.f32 %v1949, %v1952
    %vm1954 = vweird.f32 %v1947
    %vm1955 = vweird.f32 %v1949
    %vm1956 = vmor %vm1954, %vm1955
    %v1957 = vsel %vm1956, %v1949, %v1953
    %v1958 = vand.u32 2147483647, %v1947
    %vm1959 = vcmp.eq.f32.partialorder %v1958, 8.507059e+37
    %v1960 = vand.u32 %v1947, 2147483648
    %v1961 = vor.u32 1.1754944e-38, %v1960
    %v1962 = vsel %vm1959, %v1961, %v1957
    %v1963 = vmul.f32 1.0, %v1962
    %v1964 = vrcp.pop %v1948
    %v1965 = vmul.f32 %v1948, %v1964
    %v1966 = vsub.f32 1.0, %v1965
    %v1967 = vmul.f32 %v1964, %v1966
    %v1968 = vadd.f32 %v1964, %v1967
    %vm1969 = vweird.f32 %v1948
    %vm1970 = vweird.f32 %v1964
    %vm1971 = vmor %vm1969, %vm1970
    %v1972 = vsel %vm1971, %v1964, %v1968
    %v1973 = vand.u32 2147483647, %v1948
    %vm1974 = vcmp.eq.f32.partialorder %v1973, 8.507059e+37
    %v1975 = vand.u32 %v1948, 2147483648
    %v1976 = vor.u32 1.1754944e-38, %v1975
    %v1977 = vsel %vm1974, %v1976, %v1972
    %v1978 = vmul.f32 1.0, %v1977
    %v1979 = vtanh.pop %v1939
    %v1980 = vtanh.pop %v1940
    %v1981 = vmul.f32 %v1963, %v1858
    %v1982 = vmul.f32 %v1978, %v1859
    %1985 = vrot.lane.b32.xlu0 %v1979, 32
    %v1986 = vpop.permute.xlu0 %1985
    %1987 = vrot.lane.b32.xlu0 %v1980, 32
    %v1988 = vpop.permute.xlu0 %1987
    %v1991 = vmul.f32 %v1963, %v1986
    %v1992 = vmul.f32 %v1978, %v1988
    %1995 = vrot.lane.b32.xlu0 %v1991, 32
    %v1996 = vpop.permute.xlu0 %1995
    %1997 = vrot.lane.b32.xlu0 %v1992, 32
    %v1998 = vpop.permute.xlu0 %1997
    %v2001 = vadd.f32 %v1981, %v1996
    %v2002 = vadd.f32 %v1982, %v1998
    %v2003 = vtanh.pop %v2001
    %v2004 = vtanh.pop %v2002
    %2007 = vrot.lane.b32.xlu0 %v2003, 32
    %v2008 = vpop.permute.xlu0 %2007
    %2009 = vrot.lane.b32.xlu0 %v2004, 32
    %v2010 = vpop.permute.xlu0 %2009
    %v2013 = vmul.f32 %v1963, %v2008
    %v2014 = vmul.f32 %v1978, %v2010
    %v2015 = vpack.c.bf16 %v2014, %v2013
    %2017 = vrot.lane.b32.xlu0 %v2015, 64
    %v2018 = vpop.permute.xlu0 %2017
    %v2020 = vsel %vm139, %v2018, 0
    %2022 = vmatpush.bf16.msra.mxu0 0
    %2023 = vmatpush.bf16.msra.mxu0 0
    %2024 = vmatpush.bf16.msra.mxu0 0
    %2025 = vmatpush.bf16.msra.mxu0 0
    %2026 = vmatpush.bf16.msra.mxu0 0
    %2027 = vmatpush.bf16.msra.mxu0 0
    %2028 = vmatpush.bf16.msra.mxu0 %v136
    %2029 = vmatpush.bf16.msra.mxu0 %v135
    %2030 = vmatmul.bf16.gmra.mxu0 %v2020
    %v2031 = vpop.f32.mrf.mxu0
    %v2032 = vadd.f32 0.0, %v2031
    %v2033 = vpop.f32.mrf.mxu0
    %v2034 = vadd.f32 0.0, %v2033
    %2035 = vdwg.mxu0
    %v2036 = vrot.slane %v1448, 4
    %v2037 = vrot.slane %v1449, 3
    %v2038 = vsel %vm222, %v2037, %v2036
    %v2039 = vrot.slane %v1450, 2
    %v2040 = vsel %vm225, %v2039, %v2038
    %v2041 = vrot.slane %v1451, 1
    %v2042 = vsel %vm228, %v2041, %v2040
    %v2043 = vsel %vm231, %v1452, %v2042
    %v2044 = vrot.slane %v1453, 7
    %v2045 = vsel %vm234, %v2044, %v2043
    %v2046 = vrot.slane %v1454, 6
    %v2047 = vsel %vm237, %v2046, %v2045
    %v2048 = vrot.slane %v1455, 5
    %v2049 = vsel %vm240, %v2048, %v2047
    %v2050 = vrot.slane %v1456, 4
    %v2051 = vrot.slane %v1457, 3
    %v2052 = vsel %vm222, %v2051, %v2050
    %v2053 = vrot.slane %v1458, 2
    %v2054 = vsel %vm225, %v2053, %v2052
    %v2055 = vrot.slane %v1459, 1
    %v2056 = vsel %vm228, %v2055, %v2054
    %v2057 = vsel %vm231, %v1460, %v2056
    %v2058 = vrot.slane %v1461, 7
    %v2059 = vsel %vm234, %v2058, %v2057
    %v2060 = vrot.slane %v1462, 6
    %v2061 = vsel %vm237, %v2060, %v2059
    %v2062 = vrot.slane %v1463, 5
    %v2063 = vsel %vm240, %v2062, %v2061
    %v2064 = vpack.c.b16 %v2063, %v2049
    %v2066 = vsel %vm281, %v2064, 0
    %2068 = vmatpush.bf16.msra.mxu0 0
    %2069 = vmatpush.bf16.msra.mxu0 0
    %2070 = vmatpush.bf16.msra.mxu0 0
    %2071 = vmatpush.bf16.msra.mxu0 0
    %2072 = vmatpush.bf16.msra.mxu0 %v276
    %2073 = vmatpush.bf16.msra.mxu0 %v275
    %2074 = vmatpush.bf16.msra.mxu0 %v274
    %2075 = vmatpush.bf16.msra.mxu0 %v273
    %2076 = vmatmul.bf16.gmra.mxu0 %v2066
    %v2077 = vpop.f32.mrf.mxu0
    %v2078 = vadd.f32 %v2032, %v2077
    %v2079 = vpop.f32.mrf.mxu0
    %v2080 = vadd.f32 %v2034, %v2079
    %2081 = vdwg.mxu0
    %v2082 = vadd.f32 %v2078, %v300
    %v2083 = vadd.f32 %v2080, %v300
    %v2084 = vxor.u32 %v2082, 2147483648
    %v2085 = vxor.u32 %v2083, 2147483648
    %v2086 = vmul.f32 %v2084, 1.442695
    %v2087 = vpow.pop %v2086
    %v2088 = vmul.f32 %v2085, 1.442695
    %v2089 = vpow.pop %v2088
    %v2090 = vadd.f32 %v2087, 1.0
    %v2091 = vadd.f32 %v2089, 1.0
    %v2092 = vrcp.pop %v2090
    %v2093 = vmul.f32 %v2090, %v2092
    %v2094 = vsub.f32 1.0, %v2093
    %v2095 = vmul.f32 %v2092, %v2094
    %v2096 = vadd.f32 %v2092, %v2095
    %vm2097 = vweird.f32 %v2090
    %vm2098 = vweird.f32 %v2092
    %vm2099 = vmor %vm2097, %vm2098
    %v2100 = vsel %vm2099, %v2092, %v2096
    %v2101 = vand.u32 2147483647, %v2090
    %vm2102 = vcmp.eq.f32.partialorder %v2101, 8.507059e+37
    %v2103 = vand.u32 %v2090, 2147483648
    %v2104 = vor.u32 1.1754944e-38, %v2103
    %v2105 = vsel %vm2102, %v2104, %v2100
    %v2106 = vmul.f32 1.0, %v2105
    %v2107 = vrcp.pop %v2091
    %v2108 = vmul.f32 %v2091, %v2107
    %v2109 = vsub.f32 1.0, %v2108
    %v2110 = vmul.f32 %v2107, %v2109
    %v2111 = vadd.f32 %v2107, %v2110
    %vm2112 = vweird.f32 %v2091
    %vm2113 = vweird.f32 %v2107
    %vm2114 = vmor %vm2112, %vm2113
    %v2115 = vsel %vm2114, %v2107, %v2111
    %v2116 = vand.u32 2147483647, %v2091
    %vm2117 = vcmp.eq.f32.partialorder %v2116, 8.507059e+37
    %v2118 = vand.u32 %v2091, 2147483648
    %v2119 = vor.u32 1.1754944e-38, %v2118
    %v2120 = vsel %vm2117, %v2119, %v2115
    %v2121 = vmul.f32 1.0, %v2120
    %v2122 = vtanh.pop %v2082
    %v2123 = vtanh.pop %v2083
    %v2124 = vmul.f32 %v2106, %v2001
    %v2125 = vmul.f32 %v2121, %v2002
    %2128 = vrot.lane.b32.xlu0 %v2122, 32
    %v2129 = vpop.permute.xlu0 %2128
    %2130 = vrot.lane.b32.xlu0 %v2123, 32
    %v2131 = vpop.permute.xlu0 %2130
    %v2134 = vmul.f32 %v2106, %v2129
    %v2135 = vmul.f32 %v2121, %v2131
    %2138 = vrot.lane.b32.xlu0 %v2134, 32
    %v2139 = vpop.permute.xlu0 %2138
    %2140 = vrot.lane.b32.xlu0 %v2135, 32
    %v2141 = vpop.permute.xlu0 %2140
    %v2144 = vadd.f32 %v2124, %v2139
    %v2145 = vadd.f32 %v2125, %v2141
    %v2146 = vtanh.pop %v2144
    %v2147 = vtanh.pop %v2145
    %2150 = vrot.lane.b32.xlu0 %v2146, 32
    %v2151 = vpop.permute.xlu0 %2150
    %2152 = vrot.lane.b32.xlu0 %v2147, 32
    %v2153 = vpop.permute.xlu0 %2152
    %v2156 = vmul.f32 %v2106, %v2151
    %v2157 = vmul.f32 %v2121, %v2153
    %v2158 = vpack.c.bf16 %v2157, %v2156
    %2160 = vrot.lane.b32.xlu0 %v2158, 64
    %v2161 = vpop.permute.xlu0 %2160
    %v2163 = vsel %vm139, %v2161, 0
    %2165 = vmatpush.bf16.msra.mxu0 0
    %2166 = vmatpush.bf16.msra.mxu0 0
    %2167 = vmatpush.bf16.msra.mxu0 0
    %2168 = vmatpush.bf16.msra.mxu0 0
    %2169 = vmatpush.bf16.msra.mxu0 0
    %2170 = vmatpush.bf16.msra.mxu0 0
    %2171 = vmatpush.bf16.msra.mxu0 %v136
    %2172 = vmatpush.bf16.msra.mxu0 %v135
    %2173 = vmatmul.bf16.gmra.mxu0 %v2163
    %v2174 = vpop.f32.mrf.mxu0
    %v2175 = vadd.f32 0.0, %v2174
    %v2176 = vpop.f32.mrf.mxu0
    %v2177 = vadd.f32 0.0, %v2176
    %2178 = vdwg.mxu0
    %v2179 = vrot.slane %v1448, 5
    %v2180 = vrot.slane %v1449, 4
    %v2181 = vsel %vm222, %v2180, %v2179
    %v2182 = vrot.slane %v1450, 3
    %v2183 = vsel %vm225, %v2182, %v2181
    %v2184 = vrot.slane %v1451, 2
    %v2185 = vsel %vm228, %v2184, %v2183
    %v2186 = vrot.slane %v1452, 1
    %v2187 = vsel %vm231, %v2186, %v2185
    %v2188 = vsel %vm234, %v1453, %v2187
    %v2189 = vrot.slane %v1454, 7
    %v2190 = vsel %vm237, %v2189, %v2188
    %v2191 = vrot.slane %v1455, 6
    %v2192 = vsel %vm240, %v2191, %v2190
    %v2193 = vrot.slane %v1456, 5
    %v2194 = vrot.slane %v1457, 4
    %v2195 = vsel %vm222, %v2194, %v2193
    %v2196 = vrot.slane %v1458, 3
    %v2197 = vsel %vm225, %v2196, %v2195
    %v2198 = vrot.slane %v1459, 2
    %v2199 = vsel %vm228, %v2198, %v2197
    %v2200 = vrot.slane %v1460, 1
    %v2201 = vsel %vm231, %v2200, %v2199
    %v2202 = vsel %vm234, %v1461, %v2201
    %v2203 = vrot.slane %v1462, 7
    %v2204 = vsel %vm237, %v2203, %v2202
    %v2205 = vrot.slane %v1463, 6
    %v2206 = vsel %vm240, %v2205, %v2204
    %v2207 = vpack.c.b16 %v2206, %v2192
    %v2209 = vsel %vm281, %v2207, 0
    %2211 = vmatpush.bf16.msra.mxu0 0
    %2212 = vmatpush.bf16.msra.mxu0 0
    %2213 = vmatpush.bf16.msra.mxu0 0
    %2214 = vmatpush.bf16.msra.mxu0 0
    %2215 = vmatpush.bf16.msra.mxu0 %v276
    %2216 = vmatpush.bf16.msra.mxu0 %v275
    %2217 = vmatpush.bf16.msra.mxu0 %v274
    %2218 = vmatpush.bf16.msra.mxu0 %v273
    %2219 = vmatmul.bf16.gmra.mxu0 %v2209
    %v2220 = vpop.f32.mrf.mxu0
    %v2221 = vadd.f32 %v2175, %v2220
    %v2222 = vpop.f32.mrf.mxu0
    %v2223 = vadd.f32 %v2177, %v2222
    %2224 = vdwg.mxu0
    %v2225 = vadd.f32 %v2221, %v300
    %v2226 = vadd.f32 %v2223, %v300
    %v2227 = vxor.u32 %v2225, 2147483648
    %v2228 = vxor.u32 %v2226, 2147483648
    %v2229 = vmul.f32 %v2227, 1.442695
    %v2230 = vpow.pop %v2229
    %v2231 = vmul.f32 %v2228, 1.442695
    %v2232 = vpow.pop %v2231
    %v2233 = vadd.f32 %v2230, 1.0
    %v2234 = vadd.f32 %v2232, 1.0
    %v2235 = vrcp.pop %v2233
    %v2236 = vmul.f32 %v2233, %v2235
    %v2237 = vsub.f32 1.0, %v2236
    %v2238 = vmul.f32 %v2235, %v2237
    %v2239 = vadd.f32 %v2235, %v2238
    %vm2240 = vweird.f32 %v2233
    %vm2241 = vweird.f32 %v2235
    %vm2242 = vmor %vm2240, %vm2241
    %v2243 = vsel %vm2242, %v2235, %v2239
    %v2244 = vand.u32 2147483647, %v2233
    %vm2245 = vcmp.eq.f32.partialorder %v2244, 8.507059e+37
    %v2246 = vand.u32 %v2233, 2147483648
    %v2247 = vor.u32 1.1754944e-38, %v2246
    %v2248 = vsel %vm2245, %v2247, %v2243
    %v2249 = vmul.f32 1.0, %v2248
    %v2250 = vrcp.pop %v2234
    %v2251 = vmul.f32 %v2234, %v2250
    %v2252 = vsub.f32 1.0, %v2251
    %v2253 = vmul.f32 %v2250, %v2252
    %v2254 = vadd.f32 %v2250, %v2253
    %vm2255 = vweird.f32 %v2234
    %vm2256 = vweird.f32 %v2250
    %vm2257 = vmor %vm2255, %vm2256
    %v2258 = vsel %vm2257, %v2250, %v2254
    %v2259 = vand.u32 2147483647, %v2234
    %vm2260 = vcmp.eq.f32.partialorder %v2259, 8.507059e+37
    %v2261 = vand.u32 %v2234, 2147483648
    %v2262 = vor.u32 1.1754944e-38, %v2261
    %v2263 = vsel %vm2260, %v2262, %v2258
    %v2264 = vmul.f32 1.0, %v2263
    %v2265 = vtanh.pop %v2225
    %v2266 = vtanh.pop %v2226
    %v2267 = vmul.f32 %v2249, %v2144
    %v2268 = vmul.f32 %v2264, %v2145
    %2271 = vrot.lane.b32.xlu0 %v2265, 32
    %v2272 = vpop.permute.xlu0 %2271
    %2273 = vrot.lane.b32.xlu0 %v2266, 32
    %v2274 = vpop.permute.xlu0 %2273
    %v2277 = vmul.f32 %v2249, %v2272
    %v2278 = vmul.f32 %v2264, %v2274
    %2281 = vrot.lane.b32.xlu0 %v2277, 32
    %v2282 = vpop.permute.xlu0 %2281
    %2283 = vrot.lane.b32.xlu0 %v2278, 32
    %v2284 = vpop.permute.xlu0 %2283
    %v2287 = vadd.f32 %v2267, %v2282
    %v2288 = vadd.f32 %v2268, %v2284
    %v2289 = vtanh.pop %v2287
    %v2290 = vtanh.pop %v2288
    %2293 = vrot.lane.b32.xlu0 %v2289, 32
    %v2294 = vpop.permute.xlu0 %2293
    %2295 = vrot.lane.b32.xlu0 %v2290, 32
    %v2296 = vpop.permute.xlu0 %2295
    %v2299 = vmul.f32 %v2249, %v2294
    %v2300 = vmul.f32 %v2264, %v2296
    %v2301 = vpack.c.bf16 %v2300, %v2299
    %2303 = vrot.lane.b32.xlu0 %v2301, 64
    %v2304 = vpop.permute.xlu0 %2303
    %v2306 = vsel %vm139, %v2304, 0
    %2308 = vmatpush.bf16.msra.mxu0 0
    %2309 = vmatpush.bf16.msra.mxu0 0
    %2310 = vmatpush.bf16.msra.mxu0 0
    %2311 = vmatpush.bf16.msra.mxu0 0
    %2312 = vmatpush.bf16.msra.mxu0 0
    %2313 = vmatpush.bf16.msra.mxu0 0
    %2314 = vmatpush.bf16.msra.mxu0 %v136
    %2315 = vmatpush.bf16.msra.mxu0 %v135
    %2316 = vmatmul.bf16.gmra.mxu0 %v2306
    %v2317 = vpop.f32.mrf.mxu0
    %v2318 = vadd.f32 0.0, %v2317
    %v2319 = vpop.f32.mrf.mxu0
    %v2320 = vadd.f32 0.0, %v2319
    %2321 = vdwg.mxu0
    %v2322 = vrot.slane %v1448, 6
    %v2323 = vrot.slane %v1449, 5
    %v2324 = vsel %vm222, %v2323, %v2322
    %v2325 = vrot.slane %v1450, 4
    %v2326 = vsel %vm225, %v2325, %v2324
    %v2327 = vrot.slane %v1451, 3
    %v2328 = vsel %vm228, %v2327, %v2326
    %v2329 = vrot.slane %v1452, 2
    %v2330 = vsel %vm231, %v2329, %v2328
    %v2331 = vrot.slane %v1453, 1
    %v2332 = vsel %vm234, %v2331, %v2330
    %v2333 = vsel %vm237, %v1454, %v2332
    %v2334 = vrot.slane %v1455, 7
    %v2335 = vsel %vm240, %v2334, %v2333
    %v2336 = vrot.slane %v1456, 6
    %v2337 = vrot.slane %v1457, 5
    %v2338 = vsel %vm222, %v2337, %v2336
    %v2339 = vrot.slane %v1458, 4
    %v2340 = vsel %vm225, %v2339, %v2338
    %v2341 = vrot.slane %v1459, 3
    %v2342 = vsel %vm228, %v2341, %v2340
    %v2343 = vrot.slane %v1460, 2
    %v2344 = vsel %vm231, %v2343, %v2342
    %v2345 = vrot.slane %v1461, 1
    %v2346 = vsel %vm234, %v2345, %v2344
    %v2347 = vsel %vm237, %v1462, %v2346
    %v2348 = vrot.slane %v1463, 7
    %v2349 = vsel %vm240, %v2348, %v2347
    %v2350 = vpack.c.b16 %v2349, %v2335
    %v2352 = vsel %vm281, %v2350, 0
    %2354 = vmatpush.bf16.msra.mxu0 0
    %2355 = vmatpush.bf16.msra.mxu0 0
    %2356 = vmatpush.bf16.msra.mxu0 0
    %2357 = vmatpush.bf16.msra.mxu0 0
    %2358 = vmatpush.bf16.msra.mxu0 %v276
    %2359 = vmatpush.bf16.msra.mxu0 %v275
    %2360 = vmatpush.bf16.msra.mxu0 %v274
    %2361 = vmatpush.bf16.msra.mxu0 %v273
    %2362 = vmatmul.bf16.gmra.mxu0 %v2352
    %v2363 = vpop.f32.mrf.mxu0
    %v2364 = vadd.f32 %v2318, %v2363
    %v2365 = vpop.f32.mrf.mxu0
    %v2366 = vadd.f32 %v2320, %v2365
    %2367 = vdwg.mxu0
    %v2368 = vadd.f32 %v2364, %v300
    %v2369 = vadd.f32 %v2366, %v300
    %v2370 = vxor.u32 %v2368, 2147483648
    %v2371 = vxor.u32 %v2369, 2147483648
    %v2372 = vmul.f32 %v2370, 1.442695
    %v2373 = vpow.pop %v2372
    %v2374 = vmul.f32 %v2371, 1.442695
    %v2375 = vpow.pop %v2374
    %v2376 = vadd.f32 %v2373, 1.0
    %v2377 = vadd.f32 %v2375, 1.0
    %v2378 = vrcp.pop %v2376
    %v2379 = vmul.f32 %v2376, %v2378
    %v2380 = vsub.f32 1.0, %v2379
    %v2381 = vmul.f32 %v2378, %v2380
    %v2382 = vadd.f32 %v2378, %v2381
    %vm2383 = vweird.f32 %v2376
    %vm2384 = vweird.f32 %v2378
    %vm2385 = vmor %vm2383, %vm2384
    %v2386 = vsel %vm2385, %v2378, %v2382
    %v2387 = vand.u32 2147483647, %v2376
    %vm2388 = vcmp.eq.f32.partialorder %v2387, 8.507059e+37
    %v2389 = vand.u32 %v2376, 2147483648
    %v2390 = vor.u32 1.1754944e-38, %v2389
    %v2391 = vsel %vm2388, %v2390, %v2386
    %v2392 = vmul.f32 1.0, %v2391
    %v2393 = vrcp.pop %v2377
    %v2394 = vmul.f32 %v2377, %v2393
    %v2395 = vsub.f32 1.0, %v2394
    %v2396 = vmul.f32 %v2393, %v2395
    %v2397 = vadd.f32 %v2393, %v2396
    %vm2398 = vweird.f32 %v2377
    %vm2399 = vweird.f32 %v2393
    %vm2400 = vmor %vm2398, %vm2399
    %v2401 = vsel %vm2400, %v2393, %v2397
    %v2402 = vand.u32 2147483647, %v2377
    %vm2403 = vcmp.eq.f32.partialorder %v2402, 8.507059e+37
    %v2404 = vand.u32 %v2377, 2147483648
    %v2405 = vor.u32 1.1754944e-38, %v2404
    %v2406 = vsel %vm2403, %v2405, %v2401
    %v2407 = vmul.f32 1.0, %v2406
    %v2408 = vtanh.pop %v2368
    %v2409 = vtanh.pop %v2369
    %v2410 = vmul.f32 %v2392, %v2287
    %v2411 = vmul.f32 %v2407, %v2288
    %2414 = vrot.lane.b32.xlu0 %v2408, 32
    %v2415 = vpop.permute.xlu0 %2414
    %2416 = vrot.lane.b32.xlu0 %v2409, 32
    %v2417 = vpop.permute.xlu0 %2416
    %v2420 = vmul.f32 %v2392, %v2415
    %v2421 = vmul.f32 %v2407, %v2417
    %2424 = vrot.lane.b32.xlu0 %v2420, 32
    %v2425 = vpop.permute.xlu0 %2424
    %2426 = vrot.lane.b32.xlu0 %v2421, 32
    %v2427 = vpop.permute.xlu0 %2426
    %v2430 = vadd.f32 %v2410, %v2425
    %v2431 = vadd.f32 %v2411, %v2427
    %v2432 = vtanh.pop %v2430
    %v2433 = vtanh.pop %v2431
    %2436 = vrot.lane.b32.xlu0 %v2432, 32
    %v2437 = vpop.permute.xlu0 %2436
    %2438 = vrot.lane.b32.xlu0 %v2433, 32
    %v2439 = vpop.permute.xlu0 %2438
    %v2442 = vmul.f32 %v2392, %v2437
    %v2443 = vmul.f32 %v2407, %v2439
    %v2444 = vpack.c.bf16 %v2443, %v2442
    %2446 = vrot.lane.b32.xlu0 %v2444, 64
    %v2447 = vpop.permute.xlu0 %2446
    %v2449 = vsel %vm139, %v2447, 0
    %2451 = vmatpush.bf16.msra.mxu0 0
    %2452 = vmatpush.bf16.msra.mxu0 0
    %2453 = vmatpush.bf16.msra.mxu0 0
    %2454 = vmatpush.bf16.msra.mxu0 0
    %2455 = vmatpush.bf16.msra.mxu0 0
    %2456 = vmatpush.bf16.msra.mxu0 0
    %2457 = vmatpush.bf16.msra.mxu0 %v136
    %2458 = vmatpush.bf16.msra.mxu0 %v135
    %2459 = vmatmul.bf16.gmra.mxu0 %v2449
    %v2460 = vpop.f32.mrf.mxu0
    %v2461 = vadd.f32 0.0, %v2460
    %v2462 = vpop.f32.mrf.mxu0
    %v2463 = vadd.f32 0.0, %v2462
    %2464 = vdwg.mxu0
    %v2465 = vrot.slane %v1448, 7
    %v2466 = vrot.slane %v1449, 6
    %v2467 = vsel %vm222, %v2466, %v2465
    %v2468 = vrot.slane %v1450, 5
    %v2469 = vsel %vm225, %v2468, %v2467
    %v2470 = vrot.slane %v1451, 4
    %v2471 = vsel %vm228, %v2470, %v2469
    %v2472 = vrot.slane %v1452, 3
    %v2473 = vsel %vm231, %v2472, %v2471
    %v2474 = vrot.slane %v1453, 2
    %v2475 = vsel %vm234, %v2474, %v2473
    %v2476 = vrot.slane %v1454, 1
    %v2477 = vsel %vm237, %v2476, %v2475
    %v2478 = vsel %vm240, %v1455, %v2477
    %v2479 = vrot.slane %v1456, 7
    %v2480 = vrot.slane %v1457, 6
    %v2481 = vsel %vm222, %v2480, %v2479
    %v2482 = vrot.slane %v1458, 5
    %v2483 = vsel %vm225, %v2482, %v2481
    %v2484 = vrot.slane %v1459, 4
    %v2485 = vsel %vm228, %v2484, %v2483
    %v2486 = vrot.slane %v1460, 3
    %v2487 = vsel %vm231, %v2486, %v2485
    %v2488 = vrot.slane %v1461, 2
    %v2489 = vsel %vm234, %v2488, %v2487
    %v2490 = vrot.slane %v1462, 1
    %v2491 = vsel %vm237, %v2490, %v2489
    %v2492 = vsel %vm240, %v1463, %v2491
    %v2493 = vpack.c.b16 %v2492, %v2478
    %v2495 = vsel %vm281, %v2493, 0
    %2497 = vmatpush.bf16.msra.mxu0 0
    %2498 = vmatpush.bf16.msra.mxu0 0
    %2499 = vmatpush.bf16.msra.mxu0 0
    %2500 = vmatpush.bf16.msra.mxu0 0
    %2501 = vmatpush.bf16.msra.mxu0 %v276
    %2502 = vmatpush.bf16.msra.mxu0 %v275
    %2503 = vmatpush.bf16.msra.mxu0 %v274
    %2504 = vmatpush.bf16.msra.mxu0 %v273
    %2505 = vmatmul.bf16.gmra.mxu0 %v2495
    %v2506 = vpop.f32.mrf.mxu0
    %v2507 = vadd.f32 %v2461, %v2506
    %v2508 = vpop.f32.mrf.mxu0
    %v2509 = vadd.f32 %v2463, %v2508
    %2510 = vdwg.mxu0
    %v2511 = vadd.f32 %v2507, %v300
    %v2512 = vadd.f32 %v2509, %v300
    %v2513 = vxor.u32 %v2511, 2147483648
    %v2514 = vxor.u32 %v2512, 2147483648
    %v2515 = vmul.f32 %v2513, 1.442695
    %v2516 = vpow.pop %v2515
    %v2517 = vmul.f32 %v2514, 1.442695
    %v2518 = vpow.pop %v2517
    %v2519 = vadd.f32 %v2516, 1.0
    %v2520 = vadd.f32 %v2518, 1.0
    %v2521 = vrcp.pop %v2519
    %v2522 = vmul.f32 %v2519, %v2521
    %v2523 = vsub.f32 1.0, %v2522
    %v2524 = vmul.f32 %v2521, %v2523
    %v2525 = vadd.f32 %v2521, %v2524
    %vm2526 = vweird.f32 %v2519
    %vm2527 = vweird.f32 %v2521
    %vm2528 = vmor %vm2526, %vm2527
    %v2529 = vsel %vm2528, %v2521, %v2525
    %v2530 = vand.u32 2147483647, %v2519
    %vm2531 = vcmp.eq.f32.partialorder %v2530, 8.507059e+37
    %v2532 = vand.u32 %v2519, 2147483648
    %v2533 = vor.u32 1.1754944e-38, %v2532
    %v2534 = vsel %vm2531, %v2533, %v2529
    %v2535 = vmul.f32 1.0, %v2534
    %v2536 = vrcp.pop %v2520
    %v2537 = vmul.f32 %v2520, %v2536
    %v2538 = vsub.f32 1.0, %v2537
    %v2539 = vmul.f32 %v2536, %v2538
    %v2540 = vadd.f32 %v2536, %v2539
    %vm2541 = vweird.f32 %v2520
    %vm2542 = vweird.f32 %v2536
    %vm2543 = vmor %vm2541, %vm2542
    %v2544 = vsel %vm2543, %v2536, %v2540
    %v2545 = vand.u32 2147483647, %v2520
    %vm2546 = vcmp.eq.f32.partialorder %v2545, 8.507059e+37
    %v2547 = vand.u32 %v2520, 2147483648
    %v2548 = vor.u32 1.1754944e-38, %v2547
    %v2549 = vsel %vm2546, %v2548, %v2544
    %v2550 = vmul.f32 1.0, %v2549
    %v2551 = vtanh.pop %v2511
    %v2552 = vtanh.pop %v2512
    %v2553 = vmul.f32 %v2535, %v2430
    %v2554 = vmul.f32 %v2550, %v2431
    %2557 = vrot.lane.b32.xlu0 %v2551, 32
    %v2558 = vpop.permute.xlu0 %2557
    %2559 = vrot.lane.b32.xlu0 %v2552, 32
    %v2560 = vpop.permute.xlu0 %2559
    %v2563 = vmul.f32 %v2535, %v2558
    %v2564 = vmul.f32 %v2550, %v2560
    %2567 = vrot.lane.b32.xlu0 %v2563, 32
    %v2568 = vpop.permute.xlu0 %2567
    %2569 = vrot.lane.b32.xlu0 %v2564, 32
    %v2570 = vpop.permute.xlu0 %2569
    %v2573 = vadd.f32 %v2553, %v2568
    %v2574 = vadd.f32 %v2554, %v2570
    %v2575 = vtanh.pop %v2573
    %v2576 = vtanh.pop %v2574
    %2579 = vrot.lane.b32.xlu0 %v2575, 32
    %v2580 = vpop.permute.xlu0 %2579
    %2581 = vrot.lane.b32.xlu0 %v2576, 32
    %v2582 = vpop.permute.xlu0 %2581
    %v2585 = vmul.f32 %v2535, %v2580
    %v2586 = vmul.f32 %v2550, %v2582
    %v2587 = vpack.c.bf16 %v2586, %v2585
    %2589 = vrot.lane.b32.xlu0 %v2587, 64
    %v2590 = vpop.permute.xlu0 %2589
    %v2592 = vsel %vm139, %v2590, 0
    %2594 = vmatpush.bf16.msra.mxu0 0
    %2595 = vmatpush.bf16.msra.mxu0 0
    %2596 = vmatpush.bf16.msra.mxu0 0
    %2597 = vmatpush.bf16.msra.mxu0 0
    %2598 = vmatpush.bf16.msra.mxu0 0
    %2599 = vmatpush.bf16.msra.mxu0 0
    %2600 = vmatpush.bf16.msra.mxu0 %v136
    %2601 = vmatpush.bf16.msra.mxu0 %v135
    %2602 = vmatmul.bf16.gmra.mxu0 %v2592
    %v2603 = vpop.f32.mrf.mxu0
    %v2604 = vadd.f32 0.0, %v2603
    %v2605 = vpop.f32.mrf.mxu0
    %v2606 = vadd.f32 0.0, %v2605
    %2607 = vdwg.mxu0
    %v2624 = vunpack.c.l.b16 %v68
    %v2625 = vunpack.c.l.b16 %v71
    %v2626 = vunpack.c.l.b16 %v74
    %v2627 = vunpack.c.l.b16 %v77
    %v2628 = vunpack.c.l.b16 %v80
    %v2629 = vunpack.c.l.b16 %v83
    %v2630 = vunpack.c.l.b16 %v86
    %v2631 = vunpack.c.l.b16 %v89
    %v2632 = vunpack.c.l.b16 %v92
    %v2633 = vunpack.c.l.b16 %v95
    %v2634 = vunpack.c.l.b16 %v98
    %v2635 = vunpack.c.l.b16 %v101
    %v2636 = vunpack.c.l.b16 %v104
    %v2637 = vunpack.c.l.b16 %v107
    %v2638 = vunpack.c.l.b16 %v110
    %v2639 = vunpack.c.l.b16 %v113
    %v2640 = vpack.c.b16 %v2624, %v2624
    %v2641 = vpack.c.b16 %v2625, %v2625
    %v2642 = vpack.c.b16 %v2626, %v2626
    %v2643 = vpack.c.b16 %v2627, %v2627
    %v2644 = vpack.c.b16 %v2628, %v2628
    %v2645 = vpack.c.b16 %v2629, %v2629
    %v2646 = vpack.c.b16 %v2630, %v2630
    %v2647 = vpack.c.b16 %v2631, %v2631
    %v2648 = vpack.c.b16 %v2632, %v2632
    %v2649 = vpack.c.b16 %v2633, %v2633
    %v2650 = vpack.c.b16 %v2634, %v2634
    %v2651 = vpack.c.b16 %v2635, %v2635
    %v2652 = vpack.c.b16 %v2636, %v2636
    %v2653 = vpack.c.b16 %v2637, %v2637
    %v2654 = vpack.c.b16 %v2638, %v2638
    %v2655 = vpack.c.b16 %v2639, %v2639
    %v2656 = vunpack.c.l.b16 %v2640
    %v2657 = vunpack.c.l.b16 %v2641
    %v2658 = vunpack.c.l.b16 %v2642
    %v2659 = vunpack.c.l.b16 %v2643
    %v2660 = vunpack.c.l.b16 %v2644
    %v2661 = vunpack.c.l.b16 %v2645
    %v2662 = vunpack.c.l.b16 %v2646
    %v2663 = vunpack.c.l.b16 %v2647
    %v2664 = vunpack.c.l.b16 %v2648
    %v2665 = vunpack.c.l.b16 %v2649
    %v2666 = vunpack.c.l.b16 %v2650
    %v2667 = vunpack.c.l.b16 %v2651
    %v2668 = vunpack.c.l.b16 %v2652
    %v2669 = vunpack.c.l.b16 %v2653
    %v2670 = vunpack.c.l.b16 %v2654
    %v2671 = vunpack.c.l.b16 %v2655
    %v2672 = vrot.slane %v2657, 7
    %v2673 = vsel %vm222, %v2672, %v2656
    %v2674 = vrot.slane %v2658, 6
    %v2675 = vsel %vm225, %v2674, %v2673
    %v2676 = vrot.slane %v2659, 5
    %v2677 = vsel %vm228, %v2676, %v2675
    %v2678 = vrot.slane %v2660, 4
    %v2679 = vsel %vm231, %v2678, %v2677
    %v2680 = vrot.slane %v2661, 3
    %v2681 = vsel %vm234, %v2680, %v2679
    %v2682 = vrot.slane %v2662, 2
    %v2683 = vsel %vm237, %v2682, %v2681
    %v2684 = vrot.slane %v2663, 1
    %v2685 = vsel %vm240, %v2684, %v2683
    %v2686 = vrot.slane %v2665, 7
    %v2687 = vsel %vm222, %v2686, %v2664
    %v2688 = vrot.slane %v2666, 6
    %v2689 = vsel %vm225, %v2688, %v2687
    %v2690 = vrot.slane %v2667, 5
    %v2691 = vsel %vm228, %v2690, %v2689
    %v2692 = vrot.slane %v2668, 4
    %v2693 = vsel %vm231, %v2692, %v2691
    %v2694 = vrot.slane %v2669, 3
    %v2695 = vsel %vm234, %v2694, %v2693
    %v2696 = vrot.slane %v2670, 2
    %v2697 = vsel %vm237, %v2696, %v2695
    %v2698 = vrot.slane %v2671, 1
    %v2699 = vsel %vm240, %v2698, %v2697
    %v2700 = vpack.c.b16 %v2699, %v2685
    %v2702 = vsel %vm281, %v2700, 0
    %2704 = vmatpush.bf16.msra.mxu0 0
    %2705 = vmatpush.bf16.msra.mxu0 0
    %2706 = vmatpush.bf16.msra.mxu0 0
    %2707 = vmatpush.bf16.msra.mxu0 0
    %2708 = vmatpush.bf16.msra.mxu0 %v276
    %2709 = vmatpush.bf16.msra.mxu0 %v275
    %2710 = vmatpush.bf16.msra.mxu0 %v274
    %2711 = vmatpush.bf16.msra.mxu0 %v273
    %2712 = vmatmul.bf16.gmra.mxu0 %v2702
    %v2713 = vpop.f32.mrf.mxu0
    %v2714 = vadd.f32 %v2604, %v2713
    %v2715 = vpop.f32.mrf.mxu0
    %v2716 = vadd.f32 %v2606, %v2715
    %2717 = vdwg.mxu0
    %v2718 = vadd.f32 %v2714, %v300
    %v2719 = vadd.f32 %v2716, %v300
    %v2720 = vxor.u32 %v2718, 2147483648
    %v2721 = vxor.u32 %v2719, 2147483648
    %v2722 = vmul.f32 %v2720, 1.442695
    %v2723 = vpow.pop %v2722
    %v2724 = vmul.f32 %v2721, 1.442695
    %v2725 = vpow.pop %v2724
    %v2726 = vadd.f32 %v2723, 1.0
    %v2727 = vadd.f32 %v2725, 1.0
    %v2728 = vrcp.pop %v2726
    %v2729 = vmul.f32 %v2726, %v2728
    %v2730 = vsub.f32 1.0, %v2729
    %v2731 = vmul.f32 %v2728, %v2730
    %v2732 = vadd.f32 %v2728, %v2731
    %vm2733 = vweird.f32 %v2726
    %vm2734 = vweird.f32 %v2728
    %vm2735 = vmor %vm2733, %vm2734
    %v2736 = vsel %vm2735, %v2728, %v2732
    %v2737 = vand.u32 2147483647, %v2726
    %vm2738 = vcmp.eq.f32.partialorder %v2737, 8.507059e+37
    %v2739 = vand.u32 %v2726, 2147483648
    %v2740 = vor.u32 1.1754944e-38, %v2739
    %v2741 = vsel %vm2738, %v2740, %v2736
    %v2742 = vmul.f32 1.0, %v2741
    %v2743 = vrcp.pop %v2727
    %v2744 = vmul.f32 %v2727, %v2743
    %v2745 = vsub.f32 1.0, %v2744
    %v2746 = vmul.f32 %v2743, %v2745
    %v2747 = vadd.f32 %v2743, %v2746
    %vm2748 = vweird.f32 %v2727
    %vm2749 = vweird.f32 %v2743
    %vm2750 = vmor %vm2748, %vm2749
    %v2751 = vsel %vm2750, %v2743, %v2747
    %v2752 = vand.u32 2147483647, %v2727
    %vm2753 = vcmp.eq.f32.partialorder %v2752, 8.507059e+37
    %v2754 = vand.u32 %v2727, 2147483648
    %v2755 = vor.u32 1.1754944e-38, %v2754
    %v2756 = vsel %vm2753, %v2755, %v2751
    %v2757 = vmul.f32 1.0, %v2756
    %v2758 = vtanh.pop %v2718
    %v2759 = vtanh.pop %v2719
    %v2760 = vmul.f32 %v2742, %v2573
    %v2761 = vmul.f32 %v2757, %v2574
    %2764 = vrot.lane.b32.xlu0 %v2758, 32
    %v2765 = vpop.permute.xlu0 %2764
    %2766 = vrot.lane.b32.xlu0 %v2759, 32
    %v2767 = vpop.permute.xlu0 %2766
    %v2770 = vmul.f32 %v2742, %v2765
    %v2771 = vmul.f32 %v2757, %v2767
    %2774 = vrot.lane.b32.xlu0 %v2770, 32
    %v2775 = vpop.permute.xlu0 %2774
    %2776 = vrot.lane.b32.xlu0 %v2771, 32
    %v2777 = vpop.permute.xlu0 %2776
    %v2780 = vadd.f32 %v2760, %v2775
    %v2781 = vadd.f32 %v2761, %v2777
    %v2782 = vtanh.pop %v2780
    %v2783 = vtanh.pop %v2781
    %2786 = vrot.lane.b32.xlu0 %v2782, 32
    %v2787 = vpop.permute.xlu0 %2786
    %2788 = vrot.lane.b32.xlu0 %v2783, 32
    %v2789 = vpop.permute.xlu0 %2788
    %v2792 = vmul.f32 %v2742, %v2787
    %v2793 = vmul.f32 %v2757, %v2789
    %v2794 = vpack.c.bf16 %v2793, %v2792
    %2796 = vrot.lane.b32.xlu0 %v2794, 64
    %v2797 = vpop.permute.xlu0 %2796
    %v2799 = vsel %vm139, %v2797, 0
    %2801 = vmatpush.bf16.msra.mxu0 0
    %2802 = vmatpush.bf16.msra.mxu0 0
    %2803 = vmatpush.bf16.msra.mxu0 0
    %2804 = vmatpush.bf16.msra.mxu0 0
    %2805 = vmatpush.bf16.msra.mxu0 0
    %2806 = vmatpush.bf16.msra.mxu0 0
    %2807 = vmatpush.bf16.msra.mxu0 %v136
    %2808 = vmatpush.bf16.msra.mxu0 %v135
    %2809 = vmatmul.bf16.gmra.mxu0 %v2799
    %v2810 = vpop.f32.mrf.mxu0
    %v2811 = vadd.f32 0.0, %v2810
    %v2812 = vpop.f32.mrf.mxu0
    %v2813 = vadd.f32 0.0, %v2812
    %2814 = vdwg.mxu0
    %v2815 = vrot.slane %v2656, 1
    %v2816 = vsel %vm222, %v2657, %v2815
    %v2817 = vrot.slane %v2658, 7
    %v2818 = vsel %vm225, %v2817, %v2816
    %v2819 = vrot.slane %v2659, 6
    %v2820 = vsel %vm228, %v2819, %v2818
    %v2821 = vrot.slane %v2660, 5
    %v2822 = vsel %vm231, %v2821, %v2820
    %v2823 = vrot.slane %v2661, 4
    %v2824 = vsel %vm234, %v2823, %v2822
    %v2825 = vrot.slane %v2662, 3
    %v2826 = vsel %vm237, %v2825, %v2824
    %v2827 = vrot.slane %v2663, 2
    %v2828 = vsel %vm240, %v2827, %v2826
    %v2829 = vrot.slane %v2664, 1
    %v2830 = vsel %vm222, %v2665, %v2829
    %v2831 = vrot.slane %v2666, 7
    %v2832 = vsel %vm225, %v2831, %v2830
    %v2833 = vrot.slane %v2667, 6
    %v2834 = vsel %vm228, %v2833, %v2832
    %v2835 = vrot.slane %v2668, 5
    %v2836 = vsel %vm231, %v2835, %v2834
    %v2837 = vrot.slane %v2669, 4
    %v2838 = vsel %vm234, %v2837, %v2836
    %v2839 = vrot.slane %v2670, 3
    %v2840 = vsel %vm237, %v2839, %v2838
    %v2841 = vrot.slane %v2671, 2
    %v2842 = vsel %vm240, %v2841, %v2840
    %v2843 = vpack.c.b16 %v2842, %v2828
    %v2845 = vsel %vm281, %v2843, 0
    %2847 = vmatpush.bf16.msra.mxu0 0
    %2848 = vmatpush.bf16.msra.mxu0 0
    %2849 = vmatpush.bf16.msra.mxu0 0
    %2850 = vmatpush.bf16.msra.mxu0 0
    %2851 = vmatpush.bf16.msra.mxu0 %v276
    %2852 = vmatpush.bf16.msra.mxu0 %v275
    %2853 = vmatpush.bf16.msra.mxu0 %v274
    %2854 = vmatpush.bf16.msra.mxu0 %v273
    %2855 = vmatmul.bf16.gmra.mxu0 %v2845
    %v2856 = vpop.f32.mrf.mxu0
    %v2857 = vadd.f32 %v2811, %v2856
    %v2858 = vpop.f32.mrf.mxu0
    %v2859 = vadd.f32 %v2813, %v2858
    %2860 = vdwg.mxu0
    %v2861 = vadd.f32 %v2857, %v300
    %v2862 = vadd.f32 %v2859, %v300
    %v2863 = vxor.u32 %v2861, 2147483648
    %v2864 = vxor.u32 %v2862, 2147483648
    %v2865 = vmul.f32 %v2863, 1.442695
    %v2866 = vpow.pop %v2865
    %v2867 = vmul.f32 %v2864, 1.442695
    %v2868 = vpow.pop %v2867
    %v2869 = vadd.f32 %v2866, 1.0
    %v2870 = vadd.f32 %v2868, 1.0
    %v2871 = vrcp.pop %v2869
    %v2872 = vmul.f32 %v2869, %v2871
    %v2873 = vsub.f32 1.0, %v2872
    %v2874 = vmul.f32 %v2871, %v2873
    %v2875 = vadd.f32 %v2871, %v2874
    %vm2876 = vweird.f32 %v2869
    %vm2877 = vweird.f32 %v2871
    %vm2878 = vmor %vm2876, %vm2877
    %v2879 = vsel %vm2878, %v2871, %v2875
    %v2880 = vand.u32 2147483647, %v2869
    %vm2881 = vcmp.eq.f32.partialorder %v2880, 8.507059e+37
    %v2882 = vand.u32 %v2869, 2147483648
    %v2883 = vor.u32 1.1754944e-38, %v2882
    %v2884 = vsel %vm2881, %v2883, %v2879
    %v2885 = vmul.f32 1.0, %v2884
    %v2886 = vrcp.pop %v2870
    %v2887 = vmul.f32 %v2870, %v2886
    %v2888 = vsub.f32 1.0, %v2887
    %v2889 = vmul.f32 %v2886, %v2888
    %v2890 = vadd.f32 %v2886, %v2889
    %vm2891 = vweird.f32 %v2870
    %vm2892 = vweird.f32 %v2886
    %vm2893 = vmor %vm2891, %vm2892
    %v2894 = vsel %vm2893, %v2886, %v2890
    %v2895 = vand.u32 2147483647, %v2870
    %vm2896 = vcmp.eq.f32.partialorder %v2895, 8.507059e+37
    %v2897 = vand.u32 %v2870, 2147483648
    %v2898 = vor.u32 1.1754944e-38, %v2897
    %v2899 = vsel %vm2896, %v2898, %v2894
    %v2900 = vmul.f32 1.0, %v2899
    %v2901 = vtanh.pop %v2861
    %v2902 = vtanh.pop %v2862
    %v2903 = vmul.f32 %v2885, %v2780
    %v2904 = vmul.f32 %v2900, %v2781
    %2907 = vrot.lane.b32.xlu0 %v2901, 32
    %v2908 = vpop.permute.xlu0 %2907
    %2909 = vrot.lane.b32.xlu0 %v2902, 32
    %v2910 = vpop.permute.xlu0 %2909
    %v2913 = vmul.f32 %v2885, %v2908
    %v2914 = vmul.f32 %v2900, %v2910
    %2917 = vrot.lane.b32.xlu0 %v2913, 32
    %v2918 = vpop.permute.xlu0 %2917
    %2919 = vrot.lane.b32.xlu0 %v2914, 32
    %v2920 = vpop.permute.xlu0 %2919
    %v2923 = vadd.f32 %v2903, %v2918
    %v2924 = vadd.f32 %v2904, %v2920
    %v2925 = vtanh.pop %v2923
    %v2926 = vtanh.pop %v2924
    %2929 = vrot.lane.b32.xlu0 %v2925, 32
    %v2930 = vpop.permute.xlu0 %2929
    %2931 = vrot.lane.b32.xlu0 %v2926, 32
    %v2932 = vpop.permute.xlu0 %2931
    %v2935 = vmul.f32 %v2885, %v2930
    %v2936 = vmul.f32 %v2900, %v2932
    %v2937 = vpack.c.bf16 %v2936, %v2935
    %2939 = vrot.lane.b32.xlu0 %v2937, 64
    %v2940 = vpop.permute.xlu0 %2939
    %v2942 = vsel %vm139, %v2940, 0
    %2944 = vmatpush.bf16.msra.mxu0 0
    %2945 = vmatpush.bf16.msra.mxu0 0
    %2946 = vmatpush.bf16.msra.mxu0 0
    %2947 = vmatpush.bf16.msra.mxu0 0
    %2948 = vmatpush.bf16.msra.mxu0 0
    %2949 = vmatpush.bf16.msra.mxu0 0
    %2950 = vmatpush.bf16.msra.mxu0 %v136
    %2951 = vmatpush.bf16.msra.mxu0 %v135
    %2952 = vmatmul.bf16.gmra.mxu0 %v2942
    %v2953 = vpop.f32.mrf.mxu0
    %v2954 = vadd.f32 0.0, %v2953
    %v2955 = vpop.f32.mrf.mxu0
    %v2956 = vadd.f32 0.0, %v2955
    %2957 = vdwg.mxu0
    %v2958 = vrot.slane %v2656, 2
    %v2959 = vrot.slane %v2657, 1
    %v2960 = vsel %vm222, %v2959, %v2958
    %v2961 = vsel %vm225, %v2658, %v2960
    %v2962 = vrot.slane %v2659, 7
    %v2963 = vsel %vm228, %v2962, %v2961
    %v2964 = vrot.slane %v2660, 6
    %v2965 = vsel %vm231, %v2964, %v2963
    %v2966 = vrot.slane %v2661, 5
    %v2967 = vsel %vm234, %v2966, %v2965
    %v2968 = vrot.slane %v2662, 4
    %v2969 = vsel %vm237, %v2968, %v2967
    %v2970 = vrot.slane %v2663, 3
    %v2971 = vsel %vm240, %v2970, %v2969
    %v2972 = vrot.slane %v2664, 2
    %v2973 = vrot.slane %v2665, 1
    %v2974 = vsel %vm222, %v2973, %v2972
    %v2975 = vsel %vm225, %v2666, %v2974
    %v2976 = vrot.slane %v2667, 7
    %v2977 = vsel %vm228, %v2976, %v2975
    %v2978 = vrot.slane %v2668, 6
    %v2979 = vsel %vm231, %v2978, %v2977
    %v2980 = vrot.slane %v2669, 5
    %v2981 = vsel %vm234, %v2980, %v2979
    %v2982 = vrot.slane %v2670, 4
    %v2983 = vsel %vm237, %v2982, %v2981
    %v2984 = vrot.slane %v2671, 3
    %v2985 = vsel %vm240, %v2984, %v2983
    %v2986 = vpack.c.b16 %v2985, %v2971
    %v2988 = vsel %vm281, %v2986, 0
    %2990 = vmatpush.bf16.msra.mxu0 0
    %2991 = vmatpush.bf16.msra.mxu0 0
    %2992 = vmatpush.bf16.msra.mxu0 0
    %2993 = vmatpush.bf16.msra.mxu0 0
    %2994 = vmatpush.bf16.msra.mxu0 %v276
    %2995 = vmatpush.bf16.msra.mxu0 %v275
    %2996 = vmatpush.bf16.msra.mxu0 %v274
    %2997 = vmatpush.bf16.msra.mxu0 %v273
    %2998 = vmatmul.bf16.gmra.mxu0 %v2988
    %v2999 = vpop.f32.mrf.mxu0
    %v3000 = vadd.f32 %v2954, %v2999
    %v3001 = vpop.f32.mrf.mxu0
    %v3002 = vadd.f32 %v2956, %v3001
    %3003 = vdwg.mxu0
    %v3004 = vadd.f32 %v3000, %v300
    %v3005 = vadd.f32 %v3002, %v300
    %v3006 = vxor.u32 %v3004, 2147483648
    %v3007 = vxor.u32 %v3005, 2147483648
    %v3008 = vmul.f32 %v3006, 1.442695
    %v3009 = vpow.pop %v3008
    %v3010 = vmul.f32 %v3007, 1.442695
    %v3011 = vpow.pop %v3010
    %v3012 = vadd.f32 %v3009, 1.0
    %v3013 = vadd.f32 %v3011, 1.0
    %v3014 = vrcp.pop %v3012
    %v3015 = vmul.f32 %v3012, %v3014
    %v3016 = vsub.f32 1.0, %v3015
    %v3017 = vmul.f32 %v3014, %v3016
    %v3018 = vadd.f32 %v3014, %v3017
    %vm3019 = vweird.f32 %v3012
    %vm3020 = vweird.f32 %v3014
    %vm3021 = vmor %vm3019, %vm3020
    %v3022 = vsel %vm3021, %v3014, %v3018
    %v3023 = vand.u32 2147483647, %v3012
    %vm3024 = vcmp.eq.f32.partialorder %v3023, 8.507059e+37
    %v3025 = vand.u32 %v3012, 2147483648
    %v3026 = vor.u32 1.1754944e-38, %v3025
    %v3027 = vsel %vm3024, %v3026, %v3022
    %v3028 = vmul.f32 1.0, %v3027
    %v3029 = vrcp.pop %v3013
    %v3030 = vmul.f32 %v3013, %v3029
    %v3031 = vsub.f32 1.0, %v3030
    %v3032 = vmul.f32 %v3029, %v3031
    %v3033 = vadd.f32 %v3029, %v3032
    %vm3034 = vweird.f32 %v3013
    %vm3035 = vweird.f32 %v3029
    %vm3036 = vmor %vm3034, %vm3035
    %v3037 = vsel %vm3036, %v3029, %v3033
    %v3038 = vand.u32 2147483647, %v3013
    %vm3039 = vcmp.eq.f32.partialorder %v3038, 8.507059e+37
    %v3040 = vand.u32 %v3013, 2147483648
    %v3041 = vor.u32 1.1754944e-38, %v3040
    %v3042 = vsel %vm3039, %v3041, %v3037
    %v3043 = vmul.f32 1.0, %v3042
    %v3044 = vtanh.pop %v3004
    %v3045 = vtanh.pop %v3005
    %v3046 = vmul.f32 %v3028, %v2923
    %v3047 = vmul.f32 %v3043, %v2924
    %3050 = vrot.lane.b32.xlu0 %v3044, 32
    %v3051 = vpop.permute.xlu0 %3050
    %3052 = vrot.lane.b32.xlu0 %v3045, 32
    %v3053 = vpop.permute.xlu0 %3052
    %v3056 = vmul.f32 %v3028, %v3051
    %v3057 = vmul.f32 %v3043, %v3053
    %3060 = vrot.lane.b32.xlu0 %v3056, 32
    %v3061 = vpop.permute.xlu0 %3060
    %3062 = vrot.lane.b32.xlu0 %v3057, 32
    %v3063 = vpop.permute.xlu0 %3062
    %v3066 = vadd.f32 %v3046, %v3061
    %v3067 = vadd.f32 %v3047, %v3063
    %v3068 = vtanh.pop %v3066
    %v3069 = vtanh.pop %v3067
    %3072 = vrot.lane.b32.xlu0 %v3068, 32
    %v3073 = vpop.permute.xlu0 %3072
    %3074 = vrot.lane.b32.xlu0 %v3069, 32
    %v3075 = vpop.permute.xlu0 %3074
    %v3078 = vmul.f32 %v3028, %v3073
    %v3079 = vmul.f32 %v3043, %v3075
    %v3080 = vpack.c.bf16 %v3079, %v3078
    %3082 = vrot.lane.b32.xlu0 %v3080, 64
    %v3083 = vpop.permute.xlu0 %3082
    %v3085 = vsel %vm139, %v3083, 0
    %3087 = vmatpush.bf16.msra.mxu0 0
    %3088 = vmatpush.bf16.msra.mxu0 0
    %3089 = vmatpush.bf16.msra.mxu0 0
    %3090 = vmatpush.bf16.msra.mxu0 0
    %3091 = vmatpush.bf16.msra.mxu0 0
    %3092 = vmatpush.bf16.msra.mxu0 0
    %3093 = vmatpush.bf16.msra.mxu0 %v136
    %3094 = vmatpush.bf16.msra.mxu0 %v135
    %3095 = vmatmul.bf16.gmra.mxu0 %v3085
    %v3096 = vpop.f32.mrf.mxu0
    %v3097 = vadd.f32 0.0, %v3096
    %v3098 = vpop.f32.mrf.mxu0
    %v3099 = vadd.f32 0.0, %v3098
    %3100 = vdwg.mxu0
    %v3101 = vrot.slane %v2656, 3
    %v3102 = vrot.slane %v2657, 2
    %v3103 = vsel %vm222, %v3102, %v3101
    %v3104 = vrot.slane %v2658, 1
    %v3105 = vsel %vm225, %v3104, %v3103
    %v3106 = vsel %vm228, %v2659, %v3105
    %v3107 = vrot.slane %v2660, 7
    %v3108 = vsel %vm231, %v3107, %v3106
    %v3109 = vrot.slane %v2661, 6
    %v3110 = vsel %vm234, %v3109, %v3108
    %v3111 = vrot.slane %v2662, 5
    %v3112 = vsel %vm237, %v3111, %v3110
    %v3113 = vrot.slane %v2663, 4
    %v3114 = vsel %vm240, %v3113, %v3112
    %v3115 = vrot.slane %v2664, 3
    %v3116 = vrot.slane %v2665, 2
    %v3117 = vsel %vm222, %v3116, %v3115
    %v3118 = vrot.slane %v2666, 1
    %v3119 = vsel %vm225, %v3118, %v3117
    %v3120 = vsel %vm228, %v2667, %v3119
    %v3121 = vrot.slane %v2668, 7
    %v3122 = vsel %vm231, %v3121, %v3120
    %v3123 = vrot.slane %v2669, 6
    %v3124 = vsel %vm234, %v3123, %v3122
    %v3125 = vrot.slane %v2670, 5
    %v3126 = vsel %vm237, %v3125, %v3124
    %v3127 = vrot.slane %v2671, 4
    %v3128 = vsel %vm240, %v3127, %v3126
    %v3129 = vpack.c.b16 %v3128, %v3114
    %v3131 = vsel %vm281, %v3129, 0
    %3133 = vmatpush.bf16.msra.mxu0 0
    %3134 = vmatpush.bf16.msra.mxu0 0
    %3135 = vmatpush.bf16.msra.mxu0 0
    %3136 = vmatpush.bf16.msra.mxu0 0
    %3137 = vmatpush.bf16.msra.mxu0 %v276
    %3138 = vmatpush.bf16.msra.mxu0 %v275
    %3139 = vmatpush.bf16.msra.mxu0 %v274
    %3140 = vmatpush.bf16.msra.mxu0 %v273
    %3141 = vmatmul.bf16.gmra.mxu0 %v3131
    %v3142 = vpop.f32.mrf.mxu0
    %v3143 = vadd.f32 %v3097, %v3142
    %v3144 = vpop.f32.mrf.mxu0
    %v3145 = vadd.f32 %v3099, %v3144
    %3146 = vdwg.mxu0
    %v3147 = vadd.f32 %v3143, %v300
    %v3148 = vadd.f32 %v3145, %v300
    %v3149 = vxor.u32 %v3147, 2147483648
    %v3150 = vxor.u32 %v3148, 2147483648
    %v3151 = vmul.f32 %v3149, 1.442695
    %v3152 = vpow.pop %v3151
    %v3153 = vmul.f32 %v3150, 1.442695
    %v3154 = vpow.pop %v3153
    %v3155 = vadd.f32 %v3152, 1.0
    %v3156 = vadd.f32 %v3154, 1.0
    %v3157 = vrcp.pop %v3155
    %v3158 = vmul.f32 %v3155, %v3157
    %v3159 = vsub.f32 1.0, %v3158
    %v3160 = vmul.f32 %v3157, %v3159
    %v3161 = vadd.f32 %v3157, %v3160
    %vm3162 = vweird.f32 %v3155
    %vm3163 = vweird.f32 %v3157
    %vm3164 = vmor %vm3162, %vm3163
    %v3165 = vsel %vm3164, %v3157, %v3161
    %v3166 = vand.u32 2147483647, %v3155
    %vm3167 = vcmp.eq.f32.partialorder %v3166, 8.507059e+37
    %v3168 = vand.u32 %v3155, 2147483648
    %v3169 = vor.u32 1.1754944e-38, %v3168
    %v3170 = vsel %vm3167, %v3169, %v3165
    %v3171 = vmul.f32 1.0, %v3170
    %v3172 = vrcp.pop %v3156
    %v3173 = vmul.f32 %v3156, %v3172
    %v3174 = vsub.f32 1.0, %v3173
    %v3175 = vmul.f32 %v3172, %v3174
    %v3176 = vadd.f32 %v3172, %v3175
    %vm3177 = vweird.f32 %v3156
    %vm3178 = vweird.f32 %v3172
    %vm3179 = vmor %vm3177, %vm3178
    %v3180 = vsel %vm3179, %v3172, %v3176
    %v3181 = vand.u32 2147483647, %v3156
    %vm3182 = vcmp.eq.f32.partialorder %v3181, 8.507059e+37
    %v3183 = vand.u32 %v3156, 2147483648
    %v3184 = vor.u32 1.1754944e-38, %v3183
    %v3185 = vsel %vm3182, %v3184, %v3180
    %v3186 = vmul.f32 1.0, %v3185
    %v3187 = vtanh.pop %v3147
    %v3188 = vtanh.pop %v3148
    %v3189 = vmul.f32 %v3171, %v3066
    %v3190 = vmul.f32 %v3186, %v3067
    %3193 = vrot.lane.b32.xlu0 %v3187, 32
    %v3194 = vpop.permute.xlu0 %3193
    %3195 = vrot.lane.b32.xlu0 %v3188, 32
    %v3196 = vpop.permute.xlu0 %3195
    %v3199 = vmul.f32 %v3171, %v3194
    %v3200 = vmul.f32 %v3186, %v3196
    %3203 = vrot.lane.b32.xlu0 %v3199, 32
    %v3204 = vpop.permute.xlu0 %3203
    %3205 = vrot.lane.b32.xlu0 %v3200, 32
    %v3206 = vpop.permute.xlu0 %3205
    %v3209 = vadd.f32 %v3189, %v3204
    %v3210 = vadd.f32 %v3190, %v3206
    %v3211 = vtanh.pop %v3209
    %v3212 = vtanh.pop %v3210
    %3215 = vrot.lane.b32.xlu0 %v3211, 32
    %v3216 = vpop.permute.xlu0 %3215
    %3217 = vrot.lane.b32.xlu0 %v3212, 32
    %v3218 = vpop.permute.xlu0 %3217
    %v3221 = vmul.f32 %v3171, %v3216
    %v3222 = vmul.f32 %v3186, %v3218
    %v3223 = vpack.c.bf16 %v3222, %v3221
    %3225 = vrot.lane.b32.xlu0 %v3223, 64
    %v3226 = vpop.permute.xlu0 %3225
    %v3228 = vsel %vm139, %v3226, 0
    %3230 = vmatpush.bf16.msra.mxu0 0
    %3231 = vmatpush.bf16.msra.mxu0 0
    %3232 = vmatpush.bf16.msra.mxu0 0
    %3233 = vmatpush.bf16.msra.mxu0 0
    %3234 = vmatpush.bf16.msra.mxu0 0
    %3235 = vmatpush.bf16.msra.mxu0 0
    %3236 = vmatpush.bf16.msra.mxu0 %v136
    %3237 = vmatpush.bf16.msra.mxu0 %v135
    %3238 = vmatmul.bf16.gmra.mxu0 %v3228
    %v3239 = vpop.f32.mrf.mxu0
    %v3240 = vadd.f32 0.0, %v3239
    %v3241 = vpop.f32.mrf.mxu0
    %v3242 = vadd.f32 0.0, %v3241
    %3243 = vdwg.mxu0
    %v3244 = vrot.slane %v2656, 4
    %v3245 = vrot.slane %v2657, 3
    %v3246 = vsel %vm222, %v3245, %v3244
    %v3247 = vrot.slane %v2658, 2
    %v3248 = vsel %vm225, %v3247, %v3246
    %v3249 = vrot.slane %v2659, 1
    %v3250 = vsel %vm228, %v3249, %v3248
    %v3251 = vsel %vm231, %v2660, %v3250
    %v3252 = vrot.slane %v2661, 7
    %v3253 = vsel %vm234, %v3252, %v3251
    %v3254 = vrot.slane %v2662, 6
    %v3255 = vsel %vm237, %v3254, %v3253
    %v3256 = vrot.slane %v2663, 5
    %v3257 = vsel %vm240, %v3256, %v3255
    %v3258 = vrot.slane %v2664, 4
    %v3259 = vrot.slane %v2665, 3
    %v3260 = vsel %vm222, %v3259, %v3258
    %v3261 = vrot.slane %v2666, 2
    %v3262 = vsel %vm225, %v3261, %v3260
    %v3263 = vrot.slane %v2667, 1
    %v3264 = vsel %vm228, %v3263, %v3262
    %v3265 = vsel %vm231, %v2668, %v3264
    %v3266 = vrot.slane %v2669, 7
    %v3267 = vsel %vm234, %v3266, %v3265
    %v3268 = vrot.slane %v2670, 6
    %v3269 = vsel %vm237, %v3268, %v3267
    %v3270 = vrot.slane %v2671, 5
    %v3271 = vsel %vm240, %v3270, %v3269
    %v3272 = vpack.c.b16 %v3271, %v3257
    %v3274 = vsel %vm281, %v3272, 0
    %3276 = vmatpush.bf16.msra.mxu0 0
    %3277 = vmatpush.bf16.msra.mxu0 0
    %3278 = vmatpush.bf16.msra.mxu0 0
    %3279 = vmatpush.bf16.msra.mxu0 0
    %3280 = vmatpush.bf16.msra.mxu0 %v276
    %3281 = vmatpush.bf16.msra.mxu0 %v275
    %3282 = vmatpush.bf16.msra.mxu0 %v274
    %3283 = vmatpush.bf16.msra.mxu0 %v273
    %3284 = vmatmul.bf16.gmra.mxu0 %v3274
    %v3285 = vpop.f32.mrf.mxu0
    %v3286 = vadd.f32 %v3240, %v3285
    %v3287 = vpop.f32.mrf.mxu0
    %v3288 = vadd.f32 %v3242, %v3287
    %3289 = vdwg.mxu0
    %v3290 = vadd.f32 %v3286, %v300
    %v3291 = vadd.f32 %v3288, %v300
    %v3292 = vxor.u32 %v3290, 2147483648
    %v3293 = vxor.u32 %v3291, 2147483648
    %v3294 = vmul.f32 %v3292, 1.442695
    %v3295 = vpow.pop %v3294
    %v3296 = vmul.f32 %v3293, 1.442695
    %v3297 = vpow.pop %v3296
    %v3298 = vadd.f32 %v3295, 1.0
    %v3299 = vadd.f32 %v3297, 1.0
    %v3300 = vrcp.pop %v3298
    %v3301 = vmul.f32 %v3298, %v3300
    %v3302 = vsub.f32 1.0, %v3301
    %v3303 = vmul.f32 %v3300, %v3302
    %v3304 = vadd.f32 %v3300, %v3303
    %vm3305 = vweird.f32 %v3298
    %vm3306 = vweird.f32 %v3300
    %vm3307 = vmor %vm3305, %vm3306
    %v3308 = vsel %vm3307, %v3300, %v3304
    %v3309 = vand.u32 2147483647, %v3298
    %vm3310 = vcmp.eq.f32.partialorder %v3309, 8.507059e+37
    %v3311 = vand.u32 %v3298, 2147483648
    %v3312 = vor.u32 1.1754944e-38, %v3311
    %v3313 = vsel %vm3310, %v3312, %v3308
    %v3314 = vmul.f32 1.0, %v3313
    %v3315 = vrcp.pop %v3299
    %v3316 = vmul.f32 %v3299, %v3315
    %v3317 = vsub.f32 1.0, %v3316
    %v3318 = vmul.f32 %v3315, %v3317
    %v3319 = vadd.f32 %v3315, %v3318
    %vm3320 = vweird.f32 %v3299
    %vm3321 = vweird.f32 %v3315
    %vm3322 = vmor %vm3320, %vm3321
    %v3323 = vsel %vm3322, %v3315, %v3319
    %v3324 = vand.u32 2147483647, %v3299
    %vm3325 = vcmp.eq.f32.partialorder %v3324, 8.507059e+37
    %v3326 = vand.u32 %v3299, 2147483648
    %v3327 = vor.u32 1.1754944e-38, %v3326
    %v3328 = vsel %vm3325, %v3327, %v3323
    %v3329 = vmul.f32 1.0, %v3328
    %v3330 = vtanh.pop %v3290
    %v3331 = vtanh.pop %v3291
    %v3332 = vmul.f32 %v3314, %v3209
    %v3333 = vmul.f32 %v3329, %v3210
    %3336 = vrot.lane.b32.xlu0 %v3330, 32
    %v3337 = vpop.permute.xlu0 %3336
    %3338 = vrot.lane.b32.xlu0 %v3331, 32
    %v3339 = vpop.permute.xlu0 %3338
    %v3342 = vmul.f32 %v3314, %v3337
    %v3343 = vmul.f32 %v3329, %v3339
    %3346 = vrot.lane.b32.xlu0 %v3342, 32
    %v3347 = vpop.permute.xlu0 %3346
    %3348 = vrot.lane.b32.xlu0 %v3343, 32
    %v3349 = vpop.permute.xlu0 %3348
    %v3352 = vadd.f32 %v3332, %v3347
    %v3353 = vadd.f32 %v3333, %v3349
    %v3354 = vtanh.pop %v3352
    %v3355 = vtanh.pop %v3353
    %3358 = vrot.lane.b32.xlu0 %v3354, 32
    %v3359 = vpop.permute.xlu0 %3358
    %3360 = vrot.lane.b32.xlu0 %v3355, 32
    %v3361 = vpop.permute.xlu0 %3360
    %v3364 = vmul.f32 %v3314, %v3359
    %v3365 = vmul.f32 %v3329, %v3361
    %v3366 = vpack.c.bf16 %v3365, %v3364
    %3368 = vrot.lane.b32.xlu0 %v3366, 64
    %v3369 = vpop.permute.xlu0 %3368
    %v3371 = vsel %vm139, %v3369, 0
    %3373 = vmatpush.bf16.msra.mxu0 0
    %3374 = vmatpush.bf16.msra.mxu0 0
    %3375 = vmatpush.bf16.msra.mxu0 0
    %3376 = vmatpush.bf16.msra.mxu0 0
    %3377 = vmatpush.bf16.msra.mxu0 0
    %3378 = vmatpush.bf16.msra.mxu0 0
    %3379 = vmatpush.bf16.msra.mxu0 %v136
    %3380 = vmatpush.bf16.msra.mxu0 %v135
    %3381 = vmatmul.bf16.gmra.mxu0 %v3371
    %v3382 = vpop.f32.mrf.mxu0
    %v3383 = vadd.f32 0.0, %v3382
    %v3384 = vpop.f32.mrf.mxu0
    %v3385 = vadd.f32 0.0, %v3384
    %3386 = vdwg.mxu0
    %v3387 = vrot.slane %v2656, 5
    %v3388 = vrot.slane %v2657, 4
    %v3389 = vsel %vm222, %v3388, %v3387
    %v3390 = vrot.slane %v2658, 3
    %v3391 = vsel %vm225, %v3390, %v3389
    %v3392 = vrot.slane %v2659, 2
    %v3393 = vsel %vm228, %v3392, %v3391
    %v3394 = vrot.slane %v2660, 1
    %v3395 = vsel %vm231, %v3394, %v3393
    %v3396 = vsel %vm234, %v2661, %v3395
    %v3397 = vrot.slane %v2662, 7
    %v3398 = vsel %vm237, %v3397, %v3396
    %v3399 = vrot.slane %v2663, 6
    %v3400 = vsel %vm240, %v3399, %v3398
    %v3401 = vrot.slane %v2664, 5
    %v3402 = vrot.slane %v2665, 4
    %v3403 = vsel %vm222, %v3402, %v3401
    %v3404 = vrot.slane %v2666, 3
    %v3405 = vsel %vm225, %v3404, %v3403
    %v3406 = vrot.slane %v2667, 2
    %v3407 = vsel %vm228, %v3406, %v3405
    %v3408 = vrot.slane %v2668, 1
    %v3409 = vsel %vm231, %v3408, %v3407
    %v3410 = vsel %vm234, %v2669, %v3409
    %v3411 = vrot.slane %v2670, 7
    %v3412 = vsel %vm237, %v3411, %v3410
    %v3413 = vrot.slane %v2671, 6
    %v3414 = vsel %vm240, %v3413, %v3412
    %v3415 = vpack.c.b16 %v3414, %v3400
    %v3417 = vsel %vm281, %v3415, 0
    %3419 = vmatpush.bf16.msra.mxu0 0
    %3420 = vmatpush.bf16.msra.mxu0 0
    %3421 = vmatpush.bf16.msra.mxu0 0
    %3422 = vmatpush.bf16.msra.mxu0 0
    %3423 = vmatpush.bf16.msra.mxu0 %v276
    %3424 = vmatpush.bf16.msra.mxu0 %v275
    %3425 = vmatpush.bf16.msra.mxu0 %v274
    %3426 = vmatpush.bf16.msra.mxu0 %v273
    %3427 = vmatmul.bf16.gmra.mxu0 %v3417
    %v3428 = vpop.f32.mrf.mxu0
    %v3429 = vadd.f32 %v3383, %v3428
    %v3430 = vpop.f32.mrf.mxu0
    %v3431 = vadd.f32 %v3385, %v3430
    %3432 = vdwg.mxu0
    %v3433 = vadd.f32 %v3429, %v300
    %v3434 = vadd.f32 %v3431, %v300
    %v3435 = vxor.u32 %v3433, 2147483648
    %v3436 = vxor.u32 %v3434, 2147483648
    %v3437 = vmul.f32 %v3435, 1.442695
    %v3438 = vpow.pop %v3437
    %v3439 = vmul.f32 %v3436, 1.442695
    %v3440 = vpow.pop %v3439
    %v3441 = vadd.f32 %v3438, 1.0
    %v3442 = vadd.f32 %v3440, 1.0
    %v3443 = vrcp.pop %v3441
    %v3444 = vmul.f32 %v3441, %v3443
    %v3445 = vsub.f32 1.0, %v3444
    %v3446 = vmul.f32 %v3443, %v3445
    %v3447 = vadd.f32 %v3443, %v3446
    %vm3448 = vweird.f32 %v3441
    %vm3449 = vweird.f32 %v3443
    %vm3450 = vmor %vm3448, %vm3449
    %v3451 = vsel %vm3450, %v3443, %v3447
    %v3452 = vand.u32 2147483647, %v3441
    %vm3453 = vcmp.eq.f32.partialorder %v3452, 8.507059e+37
    %v3454 = vand.u32 %v3441, 2147483648
    %v3455 = vor.u32 1.1754944e-38, %v3454
    %v3456 = vsel %vm3453, %v3455, %v3451
    %v3457 = vmul.f32 1.0, %v3456
    %v3458 = vrcp.pop %v3442
    %v3459 = vmul.f32 %v3442, %v3458
    %v3460 = vsub.f32 1.0, %v3459
    %v3461 = vmul.f32 %v3458, %v3460
    %v3462 = vadd.f32 %v3458, %v3461
    %vm3463 = vweird.f32 %v3442
    %vm3464 = vweird.f32 %v3458
    %vm3465 = vmor %vm3463, %vm3464
    %v3466 = vsel %vm3465, %v3458, %v3462
    %v3467 = vand.u32 2147483647, %v3442
    %vm3468 = vcmp.eq.f32.partialorder %v3467, 8.507059e+37
    %v3469 = vand.u32 %v3442, 2147483648
    %v3470 = vor.u32 1.1754944e-38, %v3469
    %v3471 = vsel %vm3468, %v3470, %v3466
    %v3472 = vmul.f32 1.0, %v3471
    %v3473 = vtanh.pop %v3433
    %v3474 = vtanh.pop %v3434
    %v3475 = vmul.f32 %v3457, %v3352
    %v3476 = vmul.f32 %v3472, %v3353
    %3479 = vrot.lane.b32.xlu0 %v3473, 32
    %v3480 = vpop.permute.xlu0 %3479
    %3481 = vrot.lane.b32.xlu0 %v3474, 32
    %v3482 = vpop.permute.xlu0 %3481
    %v3485 = vmul.f32 %v3457, %v3480
    %v3486 = vmul.f32 %v3472, %v3482
    %3489 = vrot.lane.b32.xlu0 %v3485, 32
    %v3490 = vpop.permute.xlu0 %3489
    %3491 = vrot.lane.b32.xlu0 %v3486, 32
    %v3492 = vpop.permute.xlu0 %3491
    %v3495 = vadd.f32 %v3475, %v3490
    %v3496 = vadd.f32 %v3476, %v3492
    %v3497 = vtanh.pop %v3495
    %v3498 = vtanh.pop %v3496
    %3501 = vrot.lane.b32.xlu0 %v3497, 32
    %v3502 = vpop.permute.xlu0 %3501
    %3503 = vrot.lane.b32.xlu0 %v3498, 32
    %v3504 = vpop.permute.xlu0 %3503
    %v3507 = vmul.f32 %v3457, %v3502
    %v3508 = vmul.f32 %v3472, %v3504
    %v3509 = vpack.c.bf16 %v3508, %v3507
    %3511 = vrot.lane.b32.xlu0 %v3509, 64
    %v3512 = vpop.permute.xlu0 %3511
    %v3514 = vsel %vm139, %v3512, 0
    %3516 = vmatpush.bf16.msra.mxu0 0
    %3517 = vmatpush.bf16.msra.mxu0 0
    %3518 = vmatpush.bf16.msra.mxu0 0
    %3519 = vmatpush.bf16.msra.mxu0 0
    %3520 = vmatpush.bf16.msra.mxu0 0
    %3521 = vmatpush.bf16.msra.mxu0 0
    %3522 = vmatpush.bf16.msra.mxu0 %v136
    %3523 = vmatpush.bf16.msra.mxu0 %v135
    %3524 = vmatmul.bf16.gmra.mxu0 %v3514
    %v3525 = vpop.f32.mrf.mxu0
    %v3526 = vadd.f32 0.0, %v3525
    %v3527 = vpop.f32.mrf.mxu0
    %v3528 = vadd.f32 0.0, %v3527
    %3529 = vdwg.mxu0
    %v3530 = vrot.slane %v2656, 6
    %v3531 = vrot.slane %v2657, 5
    %v3532 = vsel %vm222, %v3531, %v3530
    %v3533 = vrot.slane %v2658, 4
    %v3534 = vsel %vm225, %v3533, %v3532
    %v3535 = vrot.slane %v2659, 3
    %v3536 = vsel %vm228, %v3535, %v3534
    %v3537 = vrot.slane %v2660, 2
    %v3538 = vsel %vm231, %v3537, %v3536
    %v3539 = vrot.slane %v2661, 1
    %v3540 = vsel %vm234, %v3539, %v3538
    %v3541 = vsel %vm237, %v2662, %v3540
    %v3542 = vrot.slane %v2663, 7
    %v3543 = vsel %vm240, %v3542, %v3541
    %v3544 = vrot.slane %v2664, 6
    %v3545 = vrot.slane %v2665, 5
    %v3546 = vsel %vm222, %v3545, %v3544
    %v3547 = vrot.slane %v2666, 4
    %v3548 = vsel %vm225, %v3547, %v3546
    %v3549 = vrot.slane %v2667, 3
    %v3550 = vsel %vm228, %v3549, %v3548
    %v3551 = vrot.slane %v2668, 2
    %v3552 = vsel %vm231, %v3551, %v3550
    %v3553 = vrot.slane %v2669, 1
    %v3554 = vsel %vm234, %v3553, %v3552
    %v3555 = vsel %vm237, %v2670, %v3554
    %v3556 = vrot.slane %v2671, 7
    %v3557 = vsel %vm240, %v3556, %v3555
    %v3558 = vpack.c.b16 %v3557, %v3543
    %v3560 = vsel %vm281, %v3558, 0
    %3562 = vmatpush.bf16.msra.mxu0 0
    %3563 = vmatpush.bf16.msra.mxu0 0
    %3564 = vmatpush.bf16.msra.mxu0 0
    %3565 = vmatpush.bf16.msra.mxu0 0
    %3566 = vmatpush.bf16.msra.mxu0 %v276
    %3567 = vmatpush.bf16.msra.mxu0 %v275
    %3568 = vmatpush.bf16.msra.mxu0 %v274
    %3569 = vmatpush.bf16.msra.mxu0 %v273
    %3570 = vmatmul.bf16.gmra.mxu0 %v3560
    %v3571 = vpop.f32.mrf.mxu0
    %v3572 = vadd.f32 %v3526, %v3571
    %v3573 = vpop.f32.mrf.mxu0
    %v3574 = vadd.f32 %v3528, %v3573
    %3575 = vdwg.mxu0
    %v3576 = vadd.f32 %v3572, %v300
    %v3577 = vadd.f32 %v3574, %v300
    %v3578 = vxor.u32 %v3576, 2147483648
    %v3579 = vxor.u32 %v3577, 2147483648
    %v3580 = vmul.f32 %v3578, 1.442695
    %v3581 = vpow.pop %v3580
    %v3582 = vmul.f32 %v3579, 1.442695
    %v3583 = vpow.pop %v3582
    %v3584 = vadd.f32 %v3581, 1.0
    %v3585 = vadd.f32 %v3583, 1.0
    %v3586 = vrcp.pop %v3584
    %v3587 = vmul.f32 %v3584, %v3586
    %v3588 = vsub.f32 1.0, %v3587
    %v3589 = vmul.f32 %v3586, %v3588
    %v3590 = vadd.f32 %v3586, %v3589
    %vm3591 = vweird.f32 %v3584
    %vm3592 = vweird.f32 %v3586
    %vm3593 = vmor %vm3591, %vm3592
    %v3594 = vsel %vm3593, %v3586, %v3590
    %v3595 = vand.u32 2147483647, %v3584
    %vm3596 = vcmp.eq.f32.partialorder %v3595, 8.507059e+37
    %v3597 = vand.u32 %v3584, 2147483648
    %v3598 = vor.u32 1.1754944e-38, %v3597
    %v3599 = vsel %vm3596, %v3598, %v3594
    %v3600 = vmul.f32 1.0, %v3599
    %v3601 = vrcp.pop %v3585
    %v3602 = vmul.f32 %v3585, %v3601
    %v3603 = vsub.f32 1.0, %v3602
    %v3604 = vmul.f32 %v3601, %v3603
    %v3605 = vadd.f32 %v3601, %v3604
    %vm3606 = vweird.f32 %v3585
    %vm3607 = vweird.f32 %v3601
    %vm3608 = vmor %vm3606, %vm3607
    %v3609 = vsel %vm3608, %v3601, %v3605
    %v3610 = vand.u32 2147483647, %v3585
    %vm3611 = vcmp.eq.f32.partialorder %v3610, 8.507059e+37
    %v3612 = vand.u32 %v3585, 2147483648
    %v3613 = vor.u32 1.1754944e-38, %v3612
    %v3614 = vsel %vm3611, %v3613, %v3609
    %v3615 = vmul.f32 1.0, %v3614
    %v3616 = vtanh.pop %v3576
    %v3617 = vtanh.pop %v3577
    %v3618 = vmul.f32 %v3600, %v3495
    %v3619 = vmul.f32 %v3615, %v3496
    %3622 = vrot.lane.b32.xlu0 %v3616, 32
    %v3623 = vpop.permute.xlu0 %3622
    %3624 = vrot.lane.b32.xlu0 %v3617, 32
    %v3625 = vpop.permute.xlu0 %3624
    %v3628 = vmul.f32 %v3600, %v3623
    %v3629 = vmul.f32 %v3615, %v3625
    %3632 = vrot.lane.b32.xlu0 %v3628, 32
    %v3633 = vpop.permute.xlu0 %3632
    %3634 = vrot.lane.b32.xlu0 %v3629, 32
    %v3635 = vpop.permute.xlu0 %3634
    %v3638 = vadd.f32 %v3618, %v3633
    %v3639 = vadd.f32 %v3619, %v3635
    %v3640 = vtanh.pop %v3638
    %v3641 = vtanh.pop %v3639
    %3644 = vrot.lane.b32.xlu0 %v3640, 32
    %v3645 = vpop.permute.xlu0 %3644
    %3646 = vrot.lane.b32.xlu0 %v3641, 32
    %v3647 = vpop.permute.xlu0 %3646
    %v3650 = vmul.f32 %v3600, %v3645
    %v3651 = vmul.f32 %v3615, %v3647
    %v3652 = vpack.c.bf16 %v3651, %v3650
    %3654 = vrot.lane.b32.xlu0 %v3652, 64
    %v3655 = vpop.permute.xlu0 %3654
    %v3657 = vsel %vm139, %v3655, 0
    %3659 = vmatpush.bf16.msra.mxu0 0
    %3660 = vmatpush.bf16.msra.mxu0 0
    %3661 = vmatpush.bf16.msra.mxu0 0
    %3662 = vmatpush.bf16.msra.mxu0 0
    %3663 = vmatpush.bf16.msra.mxu0 0
    %3664 = vmatpush.bf16.msra.mxu0 0
    %3665 = vmatpush.bf16.msra.mxu0 %v136
    %3666 = vmatpush.bf16.msra.mxu0 %v135
    %3667 = vmatmul.bf16.gmra.mxu0 %v3657
    %v3668 = vpop.f32.mrf.mxu0
    %v3669 = vadd.f32 0.0, %v3668
    %v3670 = vpop.f32.mrf.mxu0
    %v3671 = vadd.f32 0.0, %v3670
    %3672 = vdwg.mxu0
    %v3673 = vrot.slane %v2656, 7
    %v3674 = vrot.slane %v2657, 6
    %v3675 = vsel %vm222, %v3674, %v3673
    %v3676 = vrot.slane %v2658, 5
    %v3677 = vsel %vm225, %v3676, %v3675
    %v3678 = vrot.slane %v2659, 4
    %v3679 = vsel %vm228, %v3678, %v3677
    %v3680 = vrot.slane %v2660, 3
    %v3681 = vsel %vm231, %v3680, %v3679
    %v3682 = vrot.slane %v2661, 2
    %v3683 = vsel %vm234, %v3682, %v3681
    %v3684 = vrot.slane %v2662, 1
    %v3685 = vsel %vm237, %v3684, %v3683
    %v3686 = vsel %vm240, %v2663, %v3685
    %v3687 = vrot.slane %v2664, 7
    %v3688 = vrot.slane %v2665, 6
    %v3689 = vsel %vm222, %v3688, %v3687
    %v3690 = vrot.slane %v2666, 5
    %v3691 = vsel %vm225, %v3690, %v3689
    %v3692 = vrot.slane %v2667, 4
    %v3693 = vsel %vm228, %v3692, %v3691
    %v3694 = vrot.slane %v2668, 3
    %v3695 = vsel %vm231, %v3694, %v3693
    %v3696 = vrot.slane %v2669, 2
    %v3697 = vsel %vm234, %v3696, %v3695
    %v3698 = vrot.slane %v2670, 1
    %v3699 = vsel %vm237, %v3698, %v3697
    %v3700 = vsel %vm240, %v2671, %v3699
    %v3701 = vpack.c.b16 %v3700, %v3686
    %v3703 = vsel %vm281, %v3701, 0
    %3705 = vmatpush.bf16.msra.mxu0 0
    %3706 = vmatpush.bf16.msra.mxu0 0
    %3707 = vmatpush.bf16.msra.mxu0 0
    %3708 = vmatpush.bf16.msra.mxu0 0
    %3709 = vmatpush.bf16.msra.mxu0 %v276
    %3710 = vmatpush.bf16.msra.mxu0 %v275
    %3711 = vmatpush.bf16.msra.mxu0 %v274
    %3712 = vmatpush.bf16.msra.mxu0 %v273
    %3713 = vmatmul.bf16.gmra.mxu0 %v3703
    %v3714 = vpop.f32.mrf.mxu0
    %v3715 = vadd.f32 %v3669, %v3714
    %v3716 = vpop.f32.mrf.mxu0
    %v3717 = vadd.f32 %v3671, %v3716
    %3718 = vdwg.mxu0
    %v3719 = vadd.f32 %v3715, %v300
    %v3720 = vadd.f32 %v3717, %v300
    %v3721 = vxor.u32 %v3719, 2147483648
    %v3722 = vxor.u32 %v3720, 2147483648
    %v3723 = vmul.f32 %v3721, 1.442695
    %v3724 = vpow.pop %v3723
    %v3725 = vmul.f32 %v3722, 1.442695
    %v3726 = vpow.pop %v3725
    %v3727 = vadd.f32 %v3724, 1.0
    %v3728 = vadd.f32 %v3726, 1.0
    %v3729 = vrcp.pop %v3727
    %v3730 = vmul.f32 %v3727, %v3729
    %v3731 = vsub.f32 1.0, %v3730
    %v3732 = vmul.f32 %v3729, %v3731
    %v3733 = vadd.f32 %v3729, %v3732
    %vm3734 = vweird.f32 %v3727
    %vm3735 = vweird.f32 %v3729
    %vm3736 = vmor %vm3734, %vm3735
    %v3737 = vsel %vm3736, %v3729, %v3733
    %v3738 = vand.u32 2147483647, %v3727
    %vm3739 = vcmp.eq.f32.partialorder %v3738, 8.507059e+37
    %v3740 = vand.u32 %v3727, 2147483648
    %v3741 = vor.u32 1.1754944e-38, %v3740
    %v3742 = vsel %vm3739, %v3741, %v3737
    %v3743 = vmul.f32 1.0, %v3742
    %v3744 = vrcp.pop %v3728
    %v3745 = vmul.f32 %v3728, %v3744
    %v3746 = vsub.f32 1.0, %v3745
    %v3747 = vmul.f32 %v3744, %v3746
    %v3748 = vadd.f32 %v3744, %v3747
    %vm3749 = vweird.f32 %v3728
    %vm3750 = vweird.f32 %v3744
    %vm3751 = vmor %vm3749, %vm3750
    %v3752 = vsel %vm3751, %v3744, %v3748
    %v3753 = vand.u32 2147483647, %v3728
    %vm3754 = vcmp.eq.f32.partialorder %v3753, 8.507059e+37
    %v3755 = vand.u32 %v3728, 2147483648
    %v3756 = vor.u32 1.1754944e-38, %v3755
    %v3757 = vsel %vm3754, %v3756, %v3752
    %v3758 = vmul.f32 1.0, %v3757
    %v3759 = vtanh.pop %v3719
    %v3760 = vtanh.pop %v3720
    %v3761 = vmul.f32 %v3743, %v3638
    %v3762 = vmul.f32 %v3758, %v3639
    %3765 = vrot.lane.b32.xlu0 %v3759, 32
    %v3766 = vpop.permute.xlu0 %3765
    %3767 = vrot.lane.b32.xlu0 %v3760, 32
    %v3768 = vpop.permute.xlu0 %3767
    %v3771 = vmul.f32 %v3743, %v3766
    %v3772 = vmul.f32 %v3758, %v3768
    %3775 = vrot.lane.b32.xlu0 %v3771, 32
    %v3776 = vpop.permute.xlu0 %3775
    %3777 = vrot.lane.b32.xlu0 %v3772, 32
    %v3778 = vpop.permute.xlu0 %3777
    %v3781 = vadd.f32 %v3761, %v3776
    %v3782 = vadd.f32 %v3762, %v3778
    %v3783 = vtanh.pop %v3781
    %v3784 = vtanh.pop %v3782
    %3787 = vrot.lane.b32.xlu0 %v3783, 32
    %v3788 = vpop.permute.xlu0 %3787
    %3789 = vrot.lane.b32.xlu0 %v3784, 32
    %v3790 = vpop.permute.xlu0 %3789
    %v3793 = vmul.f32 %v3743, %v3788
    %v3794 = vmul.f32 %v3758, %v3790
    %3797 = vrot.lane.b32.xlu0 %v3793, 64
    %v3798 = vpop.permute.xlu0 %3797
    %3799 = vrot.lane.b32.xlu0 %v3794, 64
    %v3800 = vpop.permute.xlu0 %3799
    %3803 = vst.msk [vmem:[#allocation8] sm:$0xff] %vm139, %v3798
    %3804 = vst.msk [vmem:[#allocation8 + $0x8] sm:$0xff] %vm139, %v3800
    // Predicated region
    $region30: #{tpu_custom_call.1} parent=1 // pred_check
      _
    $region31: #{tpu_custom_call.1} parent=1 // pred_check_branch
      %3806 = sbr.rel (0) target = $region33
    $region32: #{tpu_custom_call.1} parent=1 // pred_region
      %3808 = vsyncadd [#allocation4], 0
      %s3809 = sshll.u32 [#allocation8], 4
      %s3810 = int_to_ptr.vmem [resolvable:$true] %s3809
      %s3811 = sshll.u32 %s4, 4
      %s3812 = int_to_ptr.hbm [resolvable:$true] %s3811
      %3817 = dma.vmem_to_hbm [thread:$0]  %s3810, 256, %s3812, [#allocation4], 128, 128, 8
    $region33: #{tpu_custom_call.1} parent=1 // pred_fallthru
      _
    // Predicated region
    $region34: #{tpu_custom_call.1} parent=1 // pred_check
      _
    $region35: #{tpu_custom_call.1} parent=1 // pred_check_branch
      %3819 = sbr.rel (0) target = $region37
    $region36: #{tpu_custom_call.1} parent=1 // pred_region
      %3821 = dma.done [#allocation4], 256
    $region37: #{tpu_custom_call.1} parent=1 // pred_fallthru
      _
    %3822 = vsyncpa [#allocation3], 1
    %3823 = vsyncpa [#allocation6], 1
    %3824 = vsyncpa [#allocation4], 1

</llo_original>
